<compile_context>
chip_gen: v7x
topology: tpu7x:2x2x1
jax: 0.10.0
libtpu: 0.0.40
codegen_flags: <defaults>
</compile_context>

<pallas_src>
import math

import jax
import jax.numpy as jnp
import numpy as np
from jax.experimental import pallas as pl
from jax.experimental.pallas import tpu as pltpu

A_PAD = 128          # lane-dense logits slab width (final head has only 4 real outputs)
OUT_W = 2 * A_PAD    # single fused output slab: [logits | emb | zero pad]

# ---- fvec row layout (shared by prepare_kernel_params and the kernel) --------------
_ROW_KVB = 0
_OFF_SA_B, _OFF_Q_B, _OFF_CO_B, _OFF_FF2_B = 0, 1, 2, 3
_OFF_N1W, _OFF_N1B, _OFF_N2W, _OFF_N2B, _OFF_N3W, _OFF_N3B = 4, 5, 6, 7, 8, 9
_ROWS_PER_LAYER = 10


def _row_layer(l, off):
    return 1 + _ROWS_PER_LAYER * l + off


def _row_linw(L):
    # sublane-aligned start for the (D, A_PAD) final-head weight rows
    return -(-(1 + _ROWS_PER_LAYER * L) // 8) * 8


def _row_linb(L, D):
    return _row_linw(L) + D


def _fvec_rows(L, D):
    return _row_linb(L, D) + 1


# --------------------------------------------------------------------------------------
# Pallas kernel: all 3 TransformerDecoderLayers (post-norm, ReLU FFN) + final head.
# --------------------------------------------------------------------------------------
def _make_decoder_kernel(num_layers, d_model, nhead):
    L, D, H = num_layers, d_model, nhead
    HD = D // H
    inv_sqrt_hd = 1.0 / math.sqrt(HD)
    SEL, SELT = 3 * L, 3 * L + 1
    ROW_LINW, ROW_LINB = _row_linw(L), _row_linb(L, D)

    def mm(a, w):
        # native bf16 x bf16 MXU matmul, f32 accumulation.
        return jnp.dot(a.astype(jnp.bfloat16), w, preferred_element_type=jnp.float32)

    def layer_norm(v, w, b):  # LayerNorm over last dim, eps=1e-5, f32 VPU math
        mu = jnp.mean(v, axis=-1, keepdims=True)
        var = jnp.mean((v - mu) ** 2, axis=-1, keepdims=True)
        return (v - mu) * jax.lax.rsqrt(var + 1e-5) * w + b

    def kernel(tgt_ref, mem_ref, bias_ref, wpack_ref, kvw_ref,
               ff1w_ref, ff2w_ref, ff1b_ref, fvec_ref, out_ref):
        x = tgt_ref[...]                               # (B, D)   f32 running target
        mem = mem_ref[...].astype(jnp.bfloat16)        # (B, S, D) shared memory
        bias = bias_ref[...]                           # (B, S, H) additive key-pad bias
        sel = wpack_ref[SEL][:, :H]                    # (D, H) 0/1 bf16 head selector
        selt = wpack_ref[SELT][:H, :]                  # (H, D) 0/1 bf16 head selector^T

        # ---- hoisted, fused K/V projection: ONE MXU matmul covers all L layers ----
        kvw = kvw_ref[...]                             # (D, KV_PAD) bf16
        kv = (jnp.einsum('bsd,de->bse', mem, kvw,
                         preferred_element_type=jnp.float32)
              + fvec_ref[_ROW_KVB][:kvw.shape[1]])      # (B, S, KV_PAD) f32

        for l in range(L):                             # static unroll; weights VMEM-resident
            # ---- self-attention: tgt length == 1 => softmax == 1; V+out_proj folded ----
            sa = mm(x, wpack_ref[l]) + fvec_ref[_row_layer(l, _OFF_SA_B)][:D]
            x = layer_norm(x + sa,
                           fvec_ref[_row_layer(l, _OFF_N1W)][:D],
                           fvec_ref[_row_layer(l, _OFF_N1B)][:D])

            # ---- cross-attention (memory_key_padding_mask as additive bias) ----
            q = (mm(x, wpack_ref[L + l])
                 + fvec_ref[_row_layer(l, _OFF_Q_B)][:D]) * inv_sqrt_hd     # (B, D)
            k = kv[:, :, 2 * D * l: 2 * D * l + D]                          # (B, S, D)
            v = kv[:, :, 2 * D * l + D: 2 * D * (l + 1)]                    # (B, S, D)
            # per-head scores via block-diag 0/1 selector contraction on the bf16 MXU
            qk = (q[:, None, :] * k).astype(jnp.bfloat16)
            s = jnp.einsum('bsd,dh->bsh', qk, sel,
                           preferred_element_type=jnp.float32) + bias       # (B, S, H)
            s = s - jnp.max(s, axis=1, keepdims=True)                       # softmax over keys
            p = jnp.exp(s)
            # approx reciprocal on the EUP (free slot); ~2^-12 rel error << bf16 storage error
            p = p * pl.reciprocal(jnp.sum(p, axis=1, keepdims=True), approx=True)
            # broadcast each head's weights back onto its HD lanes, contract over keys
            p_full = jnp.einsum('bsh,hd->bsd', p.astype(jnp.bfloat16), selt,
                                preferred_element_type=jnp.float32)         # (B, S, D)
            ctx = jnp.sum(p_full * v, axis=1)                               # (B, D)
            ca = mm(ctx, wpack_ref[2 * L + l]) + fvec_ref[_row_layer(l, _OFF_CO_B)][:D]
            x = layer_norm(x + ca,
                           fvec_ref[_row_layer(l, _OFF_N2W)][:D],
                           fvec_ref[_row_layer(l, _OFF_N2B)][:D])

            # ---- feed-forward: Linear -> ReLU -> Linear (dropout identity in eval) ----
            h1 = jnp.maximum(mm(x, ff1w_ref[l]) + ff1b_ref[l], 0.0)         # (B, F)
            ff = mm(h1, ff2w_ref[l]) + fvec_ref[_row_layer(l, _OFF_FF2_B)][:D]
            x = layer_norm(x + ff,
                           fvec_ref[_row_layer(l, _OFF_N3W)][:D],
                           fvec_ref[_row_layer(l, _OFF_N3B)][:D])

        # ---- final head + single lane-dense output slab: [logits | emb | zero pad] ----
        lin_w = fvec_ref[pl.ds(ROW_LINW, D), pl.ds(0, A_PAD)].astype(jnp.bfloat16)
        logits = mm(x, lin_w) + fvec_ref[ROW_LINB][:A_PAD]                  # (B, A_PAD)
        zpad = jnp.zeros((x.shape[0], A_PAD - D), jnp.float32)
        out_ref[...] = jnp.concatenate([logits, x, zpad], axis=-1).astype(out_ref.dtype)

    return kernel


def transformer_decoder_forward(kparams, tgt, mem, bias_bsh, *, num_layers, d_model, nhead):
    B = tgt.shape[0]
    kernel = _make_decoder_kernel(num_layers, d_model, nhead)
    inputs = (tgt, mem, bias_bsh,
              kparams['wpack'], kparams['kv_w'],
              kparams['ff1_w'], kparams['ff2_w'], kparams['ff1_b'],
              kparams['fvec'])
    vmem = pl.BlockSpec(memory_space=pltpu.MemorySpace.VMEM)
    return pl.pallas_call(
        kernel,
        out_shape=jax.ShapeDtypeStruct((B, OUT_W), jnp.float32),
        in_specs=[vmem] * len(inputs),
        out_specs=vmem,
    )(*inputs)


# --------------------------------------------------------------------------------------
# Deterministic parameter init (shapes from the torch module's __init__).
# --------------------------------------------------------------------------------------
def init_params(key, d_model, num_layers, dim_ff, n_actions):
    D, F, L, A = d_model, dim_ff, num_layers, n_actions
    ks = jax.random.split(key, 14)

    def uni(k, shape, bound):
        return jax.random.uniform(k, shape, jnp.float32, -bound, bound)

    xav = math.sqrt(6.0 / (D + 3 * D))   # xavier_uniform-ish for in_proj_weight
    kd = 1.0 / math.sqrt(D)
    kf = 1.0 / math.sqrt(F)
    ones = lambda s: jnp.ones(s, jnp.float32)
    zeros = lambda s: jnp.zeros(s, jnp.float32)
    return {
        'sa_in_w':  uni(ks[0], (L, 3 * D, D), xav),
        'sa_in_b':  uni(ks[1], (L, 3 * D), kd),
        'sa_out_w': uni(ks[2], (L, D, D), kd),
        'sa_out_b': uni(ks[3], (L, D), kd),
        'ca_in_w':  uni(ks[4], (L, 3 * D, D), xav),
        'ca_in_b':  uni(ks[5], (L, 3 * D), kd),
        'ca_out_w': uni(ks[6], (L, D, D), kd),
        'ca_out_b': uni(ks[7], (L, D), kd),
        'ff1_w':    uni(ks[8], (L, F, D), kd),
        'ff1_b':    uni(ks[9], (L, F), kd),
        'ff2_w':    uni(ks[10], (L, D, F), kf),
        'ff2_b':    uni(ks[11], (L, D), kf),
        'n1_w': ones((L, D)), 'n1_b': zeros((L, D)),
        'n2_w': ones((L, D)), 'n2_b': zeros((L, D)),
        'n3_w': ones((L, D)), 'n3_b': zeros((L, D)),
        # nn.Linear(d_model, 4), with `weight /= 1000` as in the torch __init__
        'lin_w': uni(ks[12], (A, D), kd) / 1000.0,
        'lin_b': uni(ks[13], (A,), kd),
    }


def _bf16_round(w):
    return w.astype(jnp.bfloat16).astype(jnp.float32)


def quantize_params_for_reference(params):
    """Weight matrices as the kernel effectively sees them (bf16 storage / bf16 MXU)."""
    q = dict(params)
    for k in ('sa_in_w', 'sa_out_w', 'ca_in_w', 'ca_out_w', 'ff1_w', 'ff2_w', 'lin_w'):
        q[k] = _bf16_round(params[k])
    return q


def prepare_kernel_params(params, d_model, nhead, num_layers, n_actions):
    """Host-side fold / transpose / pack of the torch-layout parameters."""
    D, H, L = d_model, nhead, num_layers
    assert D % H == 0 and D <= A_PAD and n_actions <= A_PAD
    HD = D // H
    P = jax.lax.Precision.HIGHEST
    wdt = jnp.bfloat16

    def t(w):  # torch (out, in) -> kernel (in, out)
        return jnp.swapaxes(w, -1, -2)

    # self-attention fold (length-1 target => attention weights == 1):
    #   y = x @ Wv^T @ Wo^T + (bv @ Wo^T + bo)
    Wv = _bf16_round(params['sa_in_w'][:, 2 * D:, :])          # (L, D, D)  torch (out, in)
    Wo = _bf16_round(params['sa_out_w'])                       # (L, D, D)
    bv = params['sa_in_b'][:, 2 * D:]                          # (L, D)
    bo = params['sa_out_b']                                    # (L, D)
    sa_w = jnp.einsum('lvd,lov->ldo', Wv, Wo, precision=P)     # (L, D, D) pre-transposed
    sa_b = jnp.einsum('lv,lov->lo', bv, Wo, precision=P) + bo  # (L, D)

    q_w = t(params['ca_in_w'][:, :D, :])
    k_w = t(params['ca_in_w'][:, D:2 * D, :])
    v_w = t(params['ca_in_w'][:, 2 * D:, :])
    co_w = t(params['ca_out_w'])
    q_b = params['ca_in_b'][:, :D]
    k_b = params['ca_in_b'][:, D:2 * D]
    v_b = params['ca_in_b'][:, 2 * D:]
    co_b = params['ca_out_b']

    # ---- bf16 pack: [sa_w x L | q_w x L | co_w x L | sel | selt], one operand ----
    head_of = np.arange(D) // HD
    sel = (head_of[:, None] == np.arange(H)[None, :]).astype(np.float32)       # (D, H) 0/1
    sel_pad = np.zeros((D, D), np.float32); sel_pad[:, :H] = sel
    selt_pad = np.zeros((D, D), np.float32); selt_pad[:H, :] = sel.T
    wpack = jnp.concatenate(
        [sa_w, q_w, co_w, jnp.asarray(sel_pad)[None], jnp.asarray(selt_pad)[None]],
        axis=0).astype(wdt)                                                    # (3L+2, D, D)

    # ---- fused K/V weight across all layers (single matmul over `mem`), lane-padded ----
    kv_w = jnp.concatenate(
        [jnp.concatenate([k_w[l], v_w[l]], axis=1) for l in range(L)], axis=1)  # (D, 2DL)
    kv_b = jnp.concatenate(
        [jnp.concatenate([k_b[l], v_b[l]]) for l in range(L)])                  # (2DL,)
    kv_real = 2 * D * L
    kv_pad = -(-kv_real // 128) * 128
    kv_w = jnp.pad(kv_w, ((0, 0), (0, kv_pad - kv_real))).astype(wdt)

    # ---- one f32 slab for every small vector / matrix parameter ----
    fw = max(kv_pad, A_PAD)
    fvec = np.zeros((_fvec_rows(L, D), fw), np.float32)
    fvec[_ROW_KVB, :kv_real] = np.asarray(kv_b)
    per_layer = {
        _OFF_SA_B: np.asarray(sa_b), _OFF_Q_B: np.asarray(q_b),
        _OFF_CO_B: np.asarray(co_b), _OFF_FF2_B: np.asarray(params['ff2_b']),
        _OFF_N1W: np.asarray(params['n1_w']), _OFF_N1B: np.asarray(params['n1_b']),
        _OFF_N2W: np.asarray(params['n2_w']), _OFF_N2B: np.asarray(params['n2_b']),
        _OFF_N3W: np.asarray(params['n3_w']), _OFF_N3B: np.asarray(params['n3_b']),
    }
    for l in range(L):
        for off, arr in per_layer.items():
            fvec[_row_layer(l, off), :D] = arr[l]
    fvec[_row_linw(L):_row_linw(L) + D, :n_actions] = np.asarray(params['lin_w']).T
    fvec[_row_linb(L, D), :n_actions] = np.asarray(params['lin_b'])

    return {
        'wpack': wpack,
        'kv_w': kv_w,
        'ff1_w': t(params['ff1_w']).astype(wdt),        # (L, D, F)
        'ff2_w': t(params['ff2_w']).astype(wdt),        # (L, F, D)
        'ff1_b': params['ff1_b'].astype(jnp.float32),   # (L, F)
        'fvec': jnp.asarray(fvec),
    }


# --------------------------------------------------------------------------------------
# Stand-in for the injected `preprocess` module (deterministic, pure JAX glue).
# --------------------------------------------------------------------------------------
def make_preprocess():
    # TODO(synk): `preprocess` is an external module passed into __init__; replaced here
    # by a deterministic stand-in producing (lhs, kmask, last_positions).
    def preprocess(obs):
        lhs = obs                                            # (B, S, d_model)
        B, S, _ = obs.shape
        lengths = jnp.maximum(S - 3 * jnp.arange(B), 1)      # per-batch valid lengths
        kmask = jnp.arange(S)[None, :] < lengths[:, None]    # True == valid key
        last_positions = jnp.stack(
            [jnp.zeros((B,), jnp.int32), (lengths - 1).astype(jnp.int32)], axis=1)  # (B, 2)
        return lhs, kmask, last_positions
    return preprocess


class CrossAttentionActor:
    """JAX/Pallas port of v2/networks/AC.py::CrossAttentionActor (eval mode)."""

    def __init__(self, preprocess, d_model, nhead=4, num_layers=3,
                 dim_feedforward=2048, n_actions=4, key=None):
        if key is None:
            key = jax.random.PRNGKey(0)
        self.preprocess = preprocess
        self.d_model = d_model
        self.nhead = nhead
        self.num_layers = num_layers
        self.dim_ff = dim_feedforward
        self.n_actions = n_actions
        self.params = init_params(key, d_model, num_layers, dim_feedforward, n_actions)
        self.kparams = prepare_kernel_params(self.params, d_model, nhead, num_layers,
                                             n_actions)
        self._last_emb = None

    def __call__(self, obs):
        lhs, kmask, last_positions = self.preprocess(obs)[:3]
        B, S, _ = lhs.shape
        # tgt = lhs.gather(1, last_positions[:, [-1]].unsqueeze(-1).expand(-1,-1,D)) -> (B, D)
        idx = last_positions[:, -1]
        tgt = lhs[jnp.arange(B), idx]
        # kmask[0][0] = False  (same in-place mutation as the torch code)
        kmask = kmask.at[0, 0].set(False)
        # memory_key_padding_mask = ~kmask : True == ignore -> additive -1e9 bias
        bias = jnp.where(kmask, 0.0, -1e9).astype(jnp.float32)                 # (B, S)
        bias_bsh = jnp.broadcast_to(bias[:, :, None], (B, S, self.nhead))      # (B, S, H)

        out = transformer_decoder_forward(
            self.kparams, tgt.astype(jnp.float32), lhs.astype(jnp.float32), bias_bsh,
            num_layers=self.num_layers, d_model=self.d_model, nhead=self.nhead)
        self._last_emb = out[:, A_PAD:A_PAD + self.d_model]
        return out[:, :self.n_actions], None


# --------------------------------------------------------------------------------------
# Plain-JAX reference (full MHA, no single-token shortcut) for a correctness cross-check.
# --------------------------------------------------------------------------------------
def reference_forward(params, tgt, mem, attn_bias, *, d_model, nhead, num_layers):
    D, H = d_model, nhead
    HD = D // H
    P = jax.lax.Precision.HIGHEST
    x = tgt.astype(jnp.float32)

    def ln(v, w, b):
        mu = v.mean(-1, keepdims=True)
        var = ((v - mu) ** 2).mean(-1, keepdims=True)
        return (v - mu) / jnp.sqrt(var + 1e-5) * w + b

    def mha(q_in, kv_in, in_w, in_b, out_w, out_b, bias):
        q = jnp.einsum('btd,od->bto', q_in, in_w[:D], precision=P) + in_b[:D]
        k = jnp.einsum('bsd,od->bso', kv_in, in_w[D:2 * D], precision=P) + in_b[D:2 * D]
        v = jnp.einsum('bsd,od->bso', kv_in, in_w[2 * D:], precision=P) + in_b[2 * D:]
        B_, Tq, _ = q.shape
        Tk = k.shape[1]
        qh = q.reshape(B_, Tq, H, HD).transpose(0, 2, 1, 3)
        kh = k.reshape(B_, Tk, H, HD).transpose(0, 2, 1, 3)
        vh = v.reshape(B_, Tk, H, HD).transpose(0, 2, 1, 3)
        s = jnp.einsum('bhqd,bhkd->bhqk', qh, kh, precision=P) / math.sqrt(HD)
        if bias is not None:
            s = s + bias[:, None, None, :]
        p = jax.nn.softmax(s, axis=-1)
        o = jnp.einsum('bhqk,bhkd->bhqd', p, vh, precision=P)
        o = o.transpose(0, 2, 1, 3).reshape(B_, Tq, D)
        return jnp.einsum('bto,eo->bte', o, out_w, precision=P) + out_b

    for l in range(num_layers):
        sa = mha(x, x, params['sa_in_w'][l], params['sa_in_b'][l],
                 params['sa_out_w'][l], params['sa_out_b'][l], None)
        x = ln(x + sa, params['n1_w'][l], params['n1_b'][l])
        ca = mha(x, mem, params['ca_in_w'][l], params['ca_in_b'][l],
                 params['ca_out_w'][l], params['ca_out_b'][l], attn_bias)
        x = ln(x + ca, params['n2_w'][l], params['n2_b'][l])
        h1 = jnp.maximum(jnp.einsum('btd,fd->btf', x, params['ff1_w'][l], precision=P)
                         + params['ff1_b'][l], 0.0)
        ff = jnp.einsum('btf,df->btd', h1, params['ff2_w'][l], precision=P) + params['ff2_b'][l]
        x = ln(x + ff, params['n3_w'][l], params['n3_b'][l])
    emb = x[:, 0, :]
    logits = jnp.einsum('bd,ad->ba', emb, params['lin_w'], precision=P) + params['lin_b']
    return logits, emb


if __name__ == "__main__":
    B, S, D = 2, 16, 32
    obs = jax.random.normal(jax.random.PRNGKey(0), (B, S, D), jnp.float32)

    actor = CrossAttentionActor(make_preprocess(), d_model=D)
    logits, none_out = actor(obs)
    logits = jax.block_until_ready(logits)
    assert none_out is None
    assert logits.shape == (B, 4) and logits.dtype == jnp.float32

    # Cross-check against a plain-JAX full-MHA reference using the same (bf16-stored)
    # weights the kernel sees, so the comparison isolates kernel math/structure.
    lhs, kmask, last_positions = actor.preprocess(obs)
    idx = last_positions[:, -1]
    tgt = lhs[jnp.arange(B), idx][:, None, :]
    kmask = kmask.at[0, 0].set(False)
    attn_bias = jnp.where(kmask, 0.0, -1e9).astype(jnp.float32)
    ref_params = quantize_params_for_reference(actor.params)
    logits_ref, emb_ref = reference_forward(
        ref_params, tgt, lhs, attn_bias, d_model=D, nhead=4, num_layers=3)

    emb = jax.block_until_ready(actor._last_emb)
    assert np.allclose(np.asarray(emb), np.asarray(emb_ref), atol=5e-2, rtol=5e-2), \
        float(np.abs(np.asarray(emb) - np.asarray(emb_ref)).max())
    assert np.allclose(np.asarray(logits), np.asarray(logits_ref), atol=2e-3, rtol=2e-2), \
        float(np.abs(np.asarray(logits) - np.asarray(logits_ref)).max())

    print("KERNEL_OK")
</pallas_src>

<mosaic_0001>
module attributes {stable_mosaic.version = 11 : i64} {
  func.func @kernel(%arg0: memref<2x32xf32, #tpu.memory_space<vmem>>, %arg1: memref<2x16x32xf32, #tpu.memory_space<vmem>>, %arg2: memref<2x16x4xf32, #tpu.memory_space<vmem>>, %arg3: memref<11x32x32xbf16, #tpu.memory_space<vmem>>, %arg4: memref<32x256xbf16, #tpu.memory_space<vmem>>, %arg5: memref<3x32x2048xbf16, #tpu.memory_space<vmem>>, %arg6: memref<3x2048x32xbf16, #tpu.memory_space<vmem>>, %arg7: memref<3x2048xf32, #tpu.memory_space<vmem>>, %arg8: memref<65x256xf32, #tpu.memory_space<vmem>>, %arg9: memref<2x256xf32, #tpu.memory_space<vmem>>) attributes {dimension_semantics = [], scalar_prefetch = 0 : i64, scratch_operands = 0 : i64, tpu.core_type = #tpu.core_type<tc>} {
    %c0 = arith.constant 0 : index
    %c0_0 = arith.constant 0 : index
    %0 = vector.load %arg0[%c0, %c0_0] : memref<2x32xf32, #tpu.memory_space<vmem>>, vector<2x32xf32>
    %c0_1 = arith.constant 0 : index
    %c0_2 = arith.constant 0 : index
    %c0_3 = arith.constant 0 : index
    %1 = vector.load %arg1[%c0_1, %c0_2, %c0_3] : memref<2x16x32xf32, #tpu.memory_space<vmem>>, vector<2x16x32xf32>
    %2 = arith.truncf %1 : vector<2x16x32xf32> to vector<2x16x32xbf16>
    %c0_4 = arith.constant 0 : index
    %c0_5 = arith.constant 0 : index
    %c0_6 = arith.constant 0 : index
    %3 = vector.load %arg2[%c0_4, %c0_5, %c0_6] : memref<2x16x4xf32, #tpu.memory_space<vmem>>, vector<2x16x4xf32>
    %c9 = arith.constant 9 : index
    %c0_7 = arith.constant 0 : index
    %c0_8 = arith.constant 0 : index
    %4 = vector.load %arg3[%c9, %c0_7, %c0_8] : memref<11x32x32xbf16, #tpu.memory_space<vmem>>, vector<1x32x32xbf16>
    %5 = vector.shape_cast %4 : vector<1x32x32xbf16> to vector<32x32xbf16>
    %6 = vector.extract_strided_slice %5 {offsets = [0, 0], sizes = [32, 4], strides = [1, 1]} : vector<32x32xbf16> to vector<32x4xbf16>
    %c10 = arith.constant 10 : index
    %c0_9 = arith.constant 0 : index
    %c0_10 = arith.constant 0 : index
    %7 = vector.load %arg3[%c10, %c0_9, %c0_10] : memref<11x32x32xbf16, #tpu.memory_space<vmem>>, vector<1x32x32xbf16>
    %8 = vector.shape_cast %7 : vector<1x32x32xbf16> to vector<32x32xbf16>
    %9 = vector.extract_strided_slice %8 {offsets = [0, 0], sizes = [4, 32], strides = [1, 1]} : vector<32x32xbf16> to vector<4x32xbf16>
    %c0_11 = arith.constant 0 : index
    %c0_12 = arith.constant 0 : index
    %10 = vector.load %arg4[%c0_11, %c0_12] : memref<32x256xbf16, #tpu.memory_space<vmem>>, vector<32x256xbf16>
    "tpu.trace_start"() <{level = 10 : i32, message = "bsd,de->bse"}> : () -> ()
    %cst = arith.constant dense<0.000000e+00> : vector<2x16x256xf32>
    %11 = tpu.matmul %2, %10, %cst {dimension_numbers = #tpu.dot_dimension_numbers<[2], [0], [0, 1], [1], [0, 0, 0, 1, 1, 1], [], []>} : vector<2x16x32xbf16>, vector<32x256xbf16>, vector<2x16x256xf32> -> vector<2x16x256xf32>
    "tpu.trace_stop"() : () -> ()
    %c0_13 = arith.constant 0 : index
    %c0_14 = arith.constant 0 : index
    %12 = vector.load %arg8[%c0_13, %c0_14] : memref<65x256xf32, #tpu.memory_space<vmem>>, vector<1x256xf32>
    %13 = vector.shape_cast %12 : vector<1x256xf32> to vector<256xf32>
    %14 = vector.shape_cast %13 : vector<256xf32> to vector<1x1x256xf32>
    %15 = vector.broadcast %14 : vector<1x1x256xf32> to vector<2x16x256xf32>
    %16 = arith.addf %11, %15 : vector<2x16x256xf32>
    %c0_15 = arith.constant 0 : index
    %c0_16 = arith.constant 0 : index
    %c0_17 = arith.constant 0 : index
    %17 = vector.load %arg3[%c0_15, %c0_16, %c0_17] : memref<11x32x32xbf16, #tpu.memory_space<vmem>>, vector<1x32x32xbf16>
    %18 = vector.shape_cast %17 : vector<1x32x32xbf16> to vector<32x32xbf16>
    %19 = arith.truncf %0 : vector<2x32xf32> to vector<2x32xbf16>
    %cst_18 = arith.constant dense<0.000000e+00> : vector<2x32xf32>
    %20 = tpu.matmul %19, %18, %cst_18 {dimension_numbers = #tpu.dot_dimension_numbers<[1], [0], [0], [1], [0, 0, 1, 1], [], []>} : vector<2x32xbf16>, vector<32x32xbf16>, vector<2x32xf32> -> vector<2x32xf32>
    %c1 = arith.constant 1 : index
    %c0_19 = arith.constant 0 : index
    %21 = vector.load %arg8[%c1, %c0_19] : memref<65x256xf32, #tpu.memory_space<vmem>>, vector<1x256xf32>
    %22 = vector.shape_cast %21 : vector<1x256xf32> to vector<256xf32>
    %23 = vector.extract_strided_slice %22 {offsets = [0], sizes = [32], strides = [1]} : vector<256xf32> to vector<32xf32>
    %24 = vector.shape_cast %23 : vector<32xf32> to vector<1x32xf32>
    %25 = vector.broadcast %24 : vector<1x32xf32> to vector<2x32xf32>
    %26 = arith.addf %20, %25 : vector<2x32xf32>
    %27 = arith.addf %0, %26 : vector<2x32xf32>
    %c5 = arith.constant 5 : index
    %c0_20 = arith.constant 0 : index
    %28 = vector.load %arg8[%c5, %c0_20] : memref<65x256xf32, #tpu.memory_space<vmem>>, vector<1x256xf32>
    %29 = vector.shape_cast %28 : vector<1x256xf32> to vector<256xf32>
    %30 = vector.extract_strided_slice %29 {offsets = [0], sizes = [32], strides = [1]} : vector<256xf32> to vector<32xf32>
    %c6 = arith.constant 6 : index
    %c0_21 = arith.constant 0 : index
    %31 = vector.load %arg8[%c6, %c0_21] : memref<65x256xf32, #tpu.memory_space<vmem>>, vector<1x256xf32>
    %32 = vector.shape_cast %31 : vector<1x256xf32> to vector<256xf32>
    %33 = vector.extract_strided_slice %32 {offsets = [0], sizes = [32], strides = [1]} : vector<256xf32> to vector<32xf32>
    %cst_22 = arith.constant dense<0.000000e+00> : vector<2xf32>
    %34 = vector.multi_reduction <add>, %27, %cst_22 [1] : vector<2x32xf32> to vector<2xf32>
    %35 = vector.shape_cast %34 : vector<2xf32> to vector<2x1xf32>
    %cst_23 = arith.constant 3.200000e+01 : f32
    %36 = vector.broadcast %cst_23 : f32 to vector<2x1xf32>
    %37 = arith.divf %35, %36 : vector<2x1xf32>
    %38 = vector.broadcast %37 : vector<2x1xf32> to vector<2x32xf32>
    %39 = arith.subf %27, %38 : vector<2x32xf32>
    %40 = arith.mulf %39, %39 : vector<2x32xf32>
    %cst_24 = arith.constant dense<0.000000e+00> : vector<2xf32>
    %41 = vector.multi_reduction <add>, %40, %cst_24 [1] : vector<2x32xf32> to vector<2xf32>
    %42 = vector.shape_cast %41 : vector<2xf32> to vector<2x1xf32>
    %cst_25 = arith.constant 3.200000e+01 : f32
    %43 = vector.broadcast %cst_25 : f32 to vector<2x1xf32>
    %44 = arith.divf %42, %43 : vector<2x1xf32>
    %45 = vector.broadcast %37 : vector<2x1xf32> to vector<2x32xf32>
    %46 = arith.subf %27, %45 : vector<2x32xf32>
    %cst_26 = arith.constant 9.99999974E-6 : f32
    %47 = vector.broadcast %cst_26 : f32 to vector<2x1xf32>
    %48 = arith.addf %44, %47 : vector<2x1xf32>
    %49 = math.rsqrt %48 : vector<2x1xf32>
    %50 = vector.broadcast %49 : vector<2x1xf32> to vector<2x32xf32>
    %51 = arith.mulf %46, %50 : vector<2x32xf32>
    %52 = vector.shape_cast %30 : vector<32xf32> to vector<1x32xf32>
    %53 = vector.broadcast %52 : vector<1x32xf32> to vector<2x32xf32>
    %54 = arith.mulf %51, %53 : vector<2x32xf32>
    %55 = vector.shape_cast %33 : vector<32xf32> to vector<1x32xf32>
    %56 = vector.broadcast %55 : vector<1x32xf32> to vector<2x32xf32>
    %57 = arith.addf %54, %56 : vector<2x32xf32>
    %c3 = arith.constant 3 : index
    %c0_27 = arith.constant 0 : index
    %c0_28 = arith.constant 0 : index
    %58 = vector.load %arg3[%c3, %c0_27, %c0_28] : memref<11x32x32xbf16, #tpu.memory_space<vmem>>, vector<1x32x32xbf16>
    %59 = vector.shape_cast %58 : vector<1x32x32xbf16> to vector<32x32xbf16>
    %60 = arith.truncf %57 : vector<2x32xf32> to vector<2x32xbf16>
    %cst_29 = arith.constant dense<0.000000e+00> : vector<2x32xf32>
    %61 = tpu.matmul %60, %59, %cst_29 {dimension_numbers = #tpu.dot_dimension_numbers<[1], [0], [0], [1], [0, 0, 1, 1], [], []>} : vector<2x32xbf16>, vector<32x32xbf16>, vector<2x32xf32> -> vector<2x32xf32>
    %c2 = arith.constant 2 : index
    %c0_30 = arith.constant 0 : index
    %62 = vector.load %arg8[%c2, %c0_30] : memref<65x256xf32, #tpu.memory_space<vmem>>, vector<1x256xf32>
    %63 = vector.shape_cast %62 : vector<1x256xf32> to vector<256xf32>
    %64 = vector.extract_strided_slice %63 {offsets = [0], sizes = [32], strides = [1]} : vector<256xf32> to vector<32xf32>
    %65 = vector.shape_cast %64 : vector<32xf32> to vector<1x32xf32>
    %66 = vector.broadcast %65 : vector<1x32xf32> to vector<2x32xf32>
    %67 = arith.addf %61, %66 : vector<2x32xf32>
    %cst_31 = arith.constant 0.353553385 : f32
    %68 = vector.broadcast %cst_31 : f32 to vector<2x32xf32>
    %69 = arith.mulf %67, %68 : vector<2x32xf32>
    %70 = vector.extract_strided_slice %16 {offsets = [0, 0, 0], sizes = [2, 16, 32], strides = [1, 1, 1]} : vector<2x16x256xf32> to vector<2x16x32xf32>
    %71 = vector.extract_strided_slice %16 {offsets = [0, 0, 32], sizes = [2, 16, 32], strides = [1, 1, 1]} : vector<2x16x256xf32> to vector<2x16x32xf32>
    %72 = vector.shape_cast %69 : vector<2x32xf32> to vector<2x1x32xf32>
    %73 = vector.broadcast %72 : vector<2x1x32xf32> to vector<2x16x32xf32>
    %74 = arith.mulf %73, %70 : vector<2x16x32xf32>
    %75 = arith.truncf %74 : vector<2x16x32xf32> to vector<2x16x32xbf16>
    "tpu.trace_start"() <{level = 10 : i32, message = "bsd,dh->bsh"}> : () -> ()
    %cst_32 = arith.constant dense<0.000000e+00> : vector<2x16x4xf32>
    %76 = tpu.matmul %75, %6, %cst_32 {dimension_numbers = #tpu.dot_dimension_numbers<[2], [0], [0, 1], [1], [0, 0, 0, 1, 1, 1], [], []>} : vector<2x16x32xbf16>, vector<32x4xbf16>, vector<2x16x4xf32> -> vector<2x16x4xf32>
    "tpu.trace_stop"() : () -> ()
    %77 = arith.addf %76, %3 : vector<2x16x4xf32>
    %cst_33 = arith.constant dense<0xFF800000> : vector<2x4xf32>
    %78 = vector.multi_reduction <maximumf>, %77, %cst_33 [1] : vector<2x16x4xf32> to vector<2x4xf32>
    %79 = vector.shape_cast %78 : vector<2x4xf32> to vector<2x1x4xf32>
    %80 = vector.broadcast %79 : vector<2x1x4xf32> to vector<2x16x4xf32>
    %81 = arith.subf %77, %80 : vector<2x16x4xf32>
    %82 = math.exp %81 : vector<2x16x4xf32>
    %cst_34 = arith.constant dense<0.000000e+00> : vector<2x4xf32>
    %83 = vector.multi_reduction <add>, %82, %cst_34 [1] : vector<2x16x4xf32> to vector<2x4xf32>
    %84 = vector.shape_cast %83 : vector<2x4xf32> to vector<2x1x4xf32>
    %85 = tpu.reciprocal %84 {approx = true} : vector<2x1x4xf32> -> vector<2x1x4xf32>
    %86 = vector.broadcast %85 : vector<2x1x4xf32> to vector<2x16x4xf32>
    %87 = arith.mulf %82, %86 : vector<2x16x4xf32>
    %88 = arith.truncf %87 : vector<2x16x4xf32> to vector<2x16x4xbf16>
    "tpu.trace_start"() <{level = 10 : i32, message = "bsh,hd->bsd"}> : () -> ()
    %cst_35 = arith.constant dense<0.000000e+00> : vector<2x16x32xf32>
    %89 = tpu.matmul %88, %9, %cst_35 {dimension_numbers = #tpu.dot_dimension_numbers<[2], [0], [0, 1], [1], [0, 0, 0, 1, 1, 1], [], []>} : vector<2x16x4xbf16>, vector<4x32xbf16>, vector<2x16x32xf32> -> vector<2x16x32xf32>
    "tpu.trace_stop"() : () -> ()
    %90 = arith.mulf %89, %71 : vector<2x16x32xf32>
    %cst_36 = arith.constant dense<0.000000e+00> : vector<2x32xf32>
    %91 = vector.multi_reduction <add>, %90, %cst_36 [1] : vector<2x16x32xf32> to vector<2x32xf32>
    %c6_37 = arith.constant 6 : index
    %c0_38 = arith.constant 0 : index
    %c0_39 = arith.constant 0 : index
    %92 = vector.load %arg3[%c6_37, %c0_38, %c0_39] : memref<11x32x32xbf16, #tpu.memory_space<vmem>>, vector<1x32x32xbf16>
    %93 = vector.shape_cast %92 : vector<1x32x32xbf16> to vector<32x32xbf16>
    %94 = arith.truncf %91 : vector<2x32xf32> to vector<2x32xbf16>
    %cst_40 = arith.constant dense<0.000000e+00> : vector<2x32xf32>
    %95 = tpu.matmul %94, %93, %cst_40 {dimension_numbers = #tpu.dot_dimension_numbers<[1], [0], [0], [1], [0, 0, 1, 1], [], []>} : vector<2x32xbf16>, vector<32x32xbf16>, vector<2x32xf32> -> vector<2x32xf32>
    %c3_41 = arith.constant 3 : index
    %c0_42 = arith.constant 0 : index
    %96 = vector.load %arg8[%c3_41, %c0_42] : memref<65x256xf32, #tpu.memory_space<vmem>>, vector<1x256xf32>
    %97 = vector.shape_cast %96 : vector<1x256xf32> to vector<256xf32>
    %98 = vector.extract_strided_slice %97 {offsets = [0], sizes = [32], strides = [1]} : vector<256xf32> to vector<32xf32>
    %99 = vector.shape_cast %98 : vector<32xf32> to vector<1x32xf32>
    %100 = vector.broadcast %99 : vector<1x32xf32> to vector<2x32xf32>
    %101 = arith.addf %95, %100 : vector<2x32xf32>
    %102 = arith.addf %57, %101 : vector<2x32xf32>
    %c7 = arith.constant 7 : index
    %c0_43 = arith.constant 0 : index
    %103 = vector.load %arg8[%c7, %c0_43] : memref<65x256xf32, #tpu.memory_space<vmem>>, vector<1x256xf32>
    %104 = vector.shape_cast %103 : vector<1x256xf32> to vector<256xf32>
    %105 = vector.extract_strided_slice %104 {offsets = [0], sizes = [32], strides = [1]} : vector<256xf32> to vector<32xf32>
    %c8 = arith.constant 8 : index
    %c0_44 = arith.constant 0 : index
    %106 = vector.load %arg8[%c8, %c0_44] : memref<65x256xf32, #tpu.memory_space<vmem>>, vector<1x256xf32>
    %107 = vector.shape_cast %106 : vector<1x256xf32> to vector<256xf32>
    %108 = vector.extract_strided_slice %107 {offsets = [0], sizes = [32], strides = [1]} : vector<256xf32> to vector<32xf32>
    %cst_45 = arith.constant dense<0.000000e+00> : vector<2xf32>
    %109 = vector.multi_reduction <add>, %102, %cst_45 [1] : vector<2x32xf32> to vector<2xf32>
    %110 = vector.shape_cast %109 : vector<2xf32> to vector<2x1xf32>
    %cst_46 = arith.constant 3.200000e+01 : f32
    %111 = vector.broadcast %cst_46 : f32 to vector<2x1xf32>
    %112 = arith.divf %110, %111 : vector<2x1xf32>
    %113 = vector.broadcast %112 : vector<2x1xf32> to vector<2x32xf32>
    %114 = arith.subf %102, %113 : vector<2x32xf32>
    %115 = arith.mulf %114, %114 : vector<2x32xf32>
    %cst_47 = arith.constant dense<0.000000e+00> : vector<2xf32>
    %116 = vector.multi_reduction <add>, %115, %cst_47 [1] : vector<2x32xf32> to vector<2xf32>
    %117 = vector.shape_cast %116 : vector<2xf32> to vector<2x1xf32>
    %cst_48 = arith.constant 3.200000e+01 : f32
    %118 = vector.broadcast %cst_48 : f32 to vector<2x1xf32>
    %119 = arith.divf %117, %118 : vector<2x1xf32>
    %120 = vector.broadcast %112 : vector<2x1xf32> to vector<2x32xf32>
    %121 = arith.subf %102, %120 : vector<2x32xf32>
    %cst_49 = arith.constant 9.99999974E-6 : f32
    %122 = vector.broadcast %cst_49 : f32 to vector<2x1xf32>
    %123 = arith.addf %119, %122 : vector<2x1xf32>
    %124 = math.rsqrt %123 : vector<2x1xf32>
    %125 = vector.broadcast %124 : vector<2x1xf32> to vector<2x32xf32>
    %126 = arith.mulf %121, %125 : vector<2x32xf32>
    %127 = vector.shape_cast %105 : vector<32xf32> to vector<1x32xf32>
    %128 = vector.broadcast %127 : vector<1x32xf32> to vector<2x32xf32>
    %129 = arith.mulf %126, %128 : vector<2x32xf32>
    %130 = vector.shape_cast %108 : vector<32xf32> to vector<1x32xf32>
    %131 = vector.broadcast %130 : vector<1x32xf32> to vector<2x32xf32>
    %132 = arith.addf %129, %131 : vector<2x32xf32>
    %c0_50 = arith.constant 0 : index
    %c0_51 = arith.constant 0 : index
    %c0_52 = arith.constant 0 : index
    %133 = vector.load %arg5[%c0_50, %c0_51, %c0_52] : memref<3x32x2048xbf16, #tpu.memory_space<vmem>>, vector<1x32x2048xbf16>
    %134 = vector.shape_cast %133 : vector<1x32x2048xbf16> to vector<32x2048xbf16>
    %135 = arith.truncf %132 : vector<2x32xf32> to vector<2x32xbf16>
    %cst_53 = arith.constant dense<0.000000e+00> : vector<2x2048xf32>
    %136 = tpu.matmul %135, %134, %cst_53 {dimension_numbers = #tpu.dot_dimension_numbers<[1], [0], [0], [1], [0, 0, 1, 1], [], []>} : vector<2x32xbf16>, vector<32x2048xbf16>, vector<2x2048xf32> -> vector<2x2048xf32>
    %c0_54 = arith.constant 0 : index
    %c0_55 = arith.constant 0 : index
    %137 = vector.load %arg7[%c0_54, %c0_55] : memref<3x2048xf32, #tpu.memory_space<vmem>>, vector<1x2048xf32>
    %138 = vector.shape_cast %137 : vector<1x2048xf32> to vector<2048xf32>
    %139 = vector.shape_cast %138 : vector<2048xf32> to vector<1x2048xf32>
    %140 = vector.broadcast %139 : vector<1x2048xf32> to vector<2x2048xf32>
    %141 = arith.addf %136, %140 : vector<2x2048xf32>
    %cst_56 = arith.constant 0.000000e+00 : f32
    %142 = vector.broadcast %cst_56 : f32 to vector<2x2048xf32>
    %143 = arith.maximumf %141, %142 : vector<2x2048xf32>
    %c0_57 = arith.constant 0 : index
    %c0_58 = arith.constant 0 : index
    %c0_59 = arith.constant 0 : index
    %144 = vector.load %arg6[%c0_57, %c0_58, %c0_59] : memref<3x2048x32xbf16, #tpu.memory_space<vmem>>, vector<1x2048x32xbf16>
    %145 = vector.shape_cast %144 : vector<1x2048x32xbf16> to vector<2048x32xbf16>
    %146 = arith.truncf %143 : vector<2x2048xf32> to vector<2x2048xbf16>
    %cst_60 = arith.constant dense<0.000000e+00> : vector<2x32xf32>
    %147 = tpu.matmul %146, %145, %cst_60 {dimension_numbers = #tpu.dot_dimension_numbers<[1], [0], [0], [1], [0, 0, 1, 1], [], []>} : vector<2x2048xbf16>, vector<2048x32xbf16>, vector<2x32xf32> -> vector<2x32xf32>
    %c4 = arith.constant 4 : index
    %c0_61 = arith.constant 0 : index
    %148 = vector.load %arg8[%c4, %c0_61] : memref<65x256xf32, #tpu.memory_space<vmem>>, vector<1x256xf32>
    %149 = vector.shape_cast %148 : vector<1x256xf32> to vector<256xf32>
    %150 = vector.extract_strided_slice %149 {offsets = [0], sizes = [32], strides = [1]} : vector<256xf32> to vector<32xf32>
    %151 = vector.shape_cast %150 : vector<32xf32> to vector<1x32xf32>
    %152 = vector.broadcast %151 : vector<1x32xf32> to vector<2x32xf32>
    %153 = arith.addf %147, %152 : vector<2x32xf32>
    %154 = arith.addf %132, %153 : vector<2x32xf32>
    %c9_62 = arith.constant 9 : index
    %c0_63 = arith.constant 0 : index
    %155 = vector.load %arg8[%c9_62, %c0_63] : memref<65x256xf32, #tpu.memory_space<vmem>>, vector<1x256xf32>
    %156 = vector.shape_cast %155 : vector<1x256xf32> to vector<256xf32>
    %157 = vector.extract_strided_slice %156 {offsets = [0], sizes = [32], strides = [1]} : vector<256xf32> to vector<32xf32>
    %c10_64 = arith.constant 10 : index
    %c0_65 = arith.constant 0 : index
    %158 = vector.load %arg8[%c10_64, %c0_65] : memref<65x256xf32, #tpu.memory_space<vmem>>, vector<1x256xf32>
    %159 = vector.shape_cast %158 : vector<1x256xf32> to vector<256xf32>
    %160 = vector.extract_strided_slice %159 {offsets = [0], sizes = [32], strides = [1]} : vector<256xf32> to vector<32xf32>
    %cst_66 = arith.constant dense<0.000000e+00> : vector<2xf32>
    %161 = vector.multi_reduction <add>, %154, %cst_66 [1] : vector<2x32xf32> to vector<2xf32>
    %162 = vector.shape_cast %161 : vector<2xf32> to vector<2x1xf32>
    %cst_67 = arith.constant 3.200000e+01 : f32
    %163 = vector.broadcast %cst_67 : f32 to vector<2x1xf32>
    %164 = arith.divf %162, %163 : vector<2x1xf32>
    %165 = vector.broadcast %164 : vector<2x1xf32> to vector<2x32xf32>
    %166 = arith.subf %154, %165 : vector<2x32xf32>
    %167 = arith.mulf %166, %166 : vector<2x32xf32>
    %cst_68 = arith.constant dense<0.000000e+00> : vector<2xf32>
    %168 = vector.multi_reduction <add>, %167, %cst_68 [1] : vector<2x32xf32> to vector<2xf32>
    %169 = vector.shape_cast %168 : vector<2xf32> to vector<2x1xf32>
    %cst_69 = arith.constant 3.200000e+01 : f32
    %170 = vector.broadcast %cst_69 : f32 to vector<2x1xf32>
    %171 = arith.divf %169, %170 : vector<2x1xf32>
    %172 = vector.broadcast %164 : vector<2x1xf32> to vector<2x32xf32>
    %173 = arith.subf %154, %172 : vector<2x32xf32>
    %cst_70 = arith.constant 9.99999974E-6 : f32
    %174 = vector.broadcast %cst_70 : f32 to vector<2x1xf32>
    %175 = arith.addf %171, %174 : vector<2x1xf32>
    %176 = math.rsqrt %175 : vector<2x1xf32>
    %177 = vector.broadcast %176 : vector<2x1xf32> to vector<2x32xf32>
    %178 = arith.mulf %173, %177 : vector<2x32xf32>
    %179 = vector.shape_cast %157 : vector<32xf32> to vector<1x32xf32>
    %180 = vector.broadcast %179 : vector<1x32xf32> to vector<2x32xf32>
    %181 = arith.mulf %178, %180 : vector<2x32xf32>
    %182 = vector.shape_cast %160 : vector<32xf32> to vector<1x32xf32>
    %183 = vector.broadcast %182 : vector<1x32xf32> to vector<2x32xf32>
    %184 = arith.addf %181, %183 : vector<2x32xf32>
    %c1_71 = arith.constant 1 : index
    %c0_72 = arith.constant 0 : index
    %c0_73 = arith.constant 0 : index
    %185 = vector.load %arg3[%c1_71, %c0_72, %c0_73] : memref<11x32x32xbf16, #tpu.memory_space<vmem>>, vector<1x32x32xbf16>
    %186 = vector.shape_cast %185 : vector<1x32x32xbf16> to vector<32x32xbf16>
    %187 = arith.truncf %184 : vector<2x32xf32> to vector<2x32xbf16>
    %cst_74 = arith.constant dense<0.000000e+00> : vector<2x32xf32>
    %188 = tpu.matmul %187, %186, %cst_74 {dimension_numbers = #tpu.dot_dimension_numbers<[1], [0], [0], [1], [0, 0, 1, 1], [], []>} : vector<2x32xbf16>, vector<32x32xbf16>, vector<2x32xf32> -> vector<2x32xf32>
    %c11 = arith.constant 11 : index
    %c0_75 = arith.constant 0 : index
    %189 = vector.load %arg8[%c11, %c0_75] : memref<65x256xf32, #tpu.memory_space<vmem>>, vector<1x256xf32>
    %190 = vector.shape_cast %189 : vector<1x256xf32> to vector<256xf32>
    %191 = vector.extract_strided_slice %190 {offsets = [0], sizes = [32], strides = [1]} : vector<256xf32> to vector<32xf32>
    %192 = vector.shape_cast %191 : vector<32xf32> to vector<1x32xf32>
    %193 = vector.broadcast %192 : vector<1x32xf32> to vector<2x32xf32>
    %194 = arith.addf %188, %193 : vector<2x32xf32>
    %195 = arith.addf %184, %194 : vector<2x32xf32>
    %c15 = arith.constant 15 : index
    %c0_76 = arith.constant 0 : index
    %196 = vector.load %arg8[%c15, %c0_76] : memref<65x256xf32, #tpu.memory_space<vmem>>, vector<1x256xf32>
    %197 = vector.shape_cast %196 : vector<1x256xf32> to vector<256xf32>
    %198 = vector.extract_strided_slice %197 {offsets = [0], sizes = [32], strides = [1]} : vector<256xf32> to vector<32xf32>
    %c16 = arith.constant 16 : index
    %c0_77 = arith.constant 0 : index
    %199 = vector.load %arg8[%c16, %c0_77] : memref<65x256xf32, #tpu.memory_space<vmem>>, vector<1x256xf32>
    %200 = vector.shape_cast %199 : vector<1x256xf32> to vector<256xf32>
    %201 = vector.extract_strided_slice %200 {offsets = [0], sizes = [32], strides = [1]} : vector<256xf32> to vector<32xf32>
    %cst_78 = arith.constant dense<0.000000e+00> : vector<2xf32>
    %202 = vector.multi_reduction <add>, %195, %cst_78 [1] : vector<2x32xf32> to vector<2xf32>
    %203 = vector.shape_cast %202 : vector<2xf32> to vector<2x1xf32>
    %cst_79 = arith.constant 3.200000e+01 : f32
    %204 = vector.broadcast %cst_79 : f32 to vector<2x1xf32>
    %205 = arith.divf %203, %204 : vector<2x1xf32>
    %206 = vector.broadcast %205 : vector<2x1xf32> to vector<2x32xf32>
    %207 = arith.subf %195, %206 : vector<2x32xf32>
    %208 = arith.mulf %207, %207 : vector<2x32xf32>
    %cst_80 = arith.constant dense<0.000000e+00> : vector<2xf32>
    %209 = vector.multi_reduction <add>, %208, %cst_80 [1] : vector<2x32xf32> to vector<2xf32>
    %210 = vector.shape_cast %209 : vector<2xf32> to vector<2x1xf32>
    %cst_81 = arith.constant 3.200000e+01 : f32
    %211 = vector.broadcast %cst_81 : f32 to vector<2x1xf32>
    %212 = arith.divf %210, %211 : vector<2x1xf32>
    %213 = vector.broadcast %205 : vector<2x1xf32> to vector<2x32xf32>
    %214 = arith.subf %195, %213 : vector<2x32xf32>
    %cst_82 = arith.constant 9.99999974E-6 : f32
    %215 = vector.broadcast %cst_82 : f32 to vector<2x1xf32>
    %216 = arith.addf %212, %215 : vector<2x1xf32>
    %217 = math.rsqrt %216 : vector<2x1xf32>
    %218 = vector.broadcast %217 : vector<2x1xf32> to vector<2x32xf32>
    %219 = arith.mulf %214, %218 : vector<2x32xf32>
    %220 = vector.shape_cast %198 : vector<32xf32> to vector<1x32xf32>
    %221 = vector.broadcast %220 : vector<1x32xf32> to vector<2x32xf32>
    %222 = arith.mulf %219, %221 : vector<2x32xf32>
    %223 = vector.shape_cast %201 : vector<32xf32> to vector<1x32xf32>
    %224 = vector.broadcast %223 : vector<1x32xf32> to vector<2x32xf32>
    %225 = arith.addf %222, %224 : vector<2x32xf32>
    %c4_83 = arith.constant 4 : index
    %c0_84 = arith.constant 0 : index
    %c0_85 = arith.constant 0 : index
    %226 = vector.load %arg3[%c4_83, %c0_84, %c0_85] : memref<11x32x32xbf16, #tpu.memory_space<vmem>>, vector<1x32x32xbf16>
    %227 = vector.shape_cast %226 : vector<1x32x32xbf16> to vector<32x32xbf16>
    %228 = arith.truncf %225 : vector<2x32xf32> to vector<2x32xbf16>
    %cst_86 = arith.constant dense<0.000000e+00> : vector<2x32xf32>
    %229 = tpu.matmul %228, %227, %cst_86 {dimension_numbers = #tpu.dot_dimension_numbers<[1], [0], [0], [1], [0, 0, 1, 1], [], []>} : vector<2x32xbf16>, vector<32x32xbf16>, vector<2x32xf32> -> vector<2x32xf32>
    %c12 = arith.constant 12 : index
    %c0_87 = arith.constant 0 : index
    %230 = vector.load %arg8[%c12, %c0_87] : memref<65x256xf32, #tpu.memory_space<vmem>>, vector<1x256xf32>
    %231 = vector.shape_cast %230 : vector<1x256xf32> to vector<256xf32>
    %232 = vector.extract_strided_slice %231 {offsets = [0], sizes = [32], strides = [1]} : vector<256xf32> to vector<32xf32>
    %233 = vector.shape_cast %232 : vector<32xf32> to vector<1x32xf32>
    %234 = vector.broadcast %233 : vector<1x32xf32> to vector<2x32xf32>
    %235 = arith.addf %229, %234 : vector<2x32xf32>
    %cst_88 = arith.constant 0.353553385 : f32
    %236 = vector.broadcast %cst_88 : f32 to vector<2x32xf32>
    %237 = arith.mulf %235, %236 : vector<2x32xf32>
    %238 = vector.extract_strided_slice %16 {offsets = [0, 0, 64], sizes = [2, 16, 32], strides = [1, 1, 1]} : vector<2x16x256xf32> to vector<2x16x32xf32>
    %239 = vector.extract_strided_slice %16 {offsets = [0, 0, 96], sizes = [2, 16, 32], strides = [1, 1, 1]} : vector<2x16x256xf32> to vector<2x16x32xf32>
    %240 = vector.shape_cast %237 : vector<2x32xf32> to vector<2x1x32xf32>
    %241 = vector.broadcast %240 : vector<2x1x32xf32> to vector<2x16x32xf32>
    %242 = arith.mulf %241, %238 : vector<2x16x32xf32>
    %243 = arith.truncf %242 : vector<2x16x32xf32> to vector<2x16x32xbf16>
    "tpu.trace_start"() <{level = 10 : i32, message = "bsd,dh->bsh"}> : () -> ()
    %cst_89 = arith.constant dense<0.000000e+00> : vector<2x16x4xf32>
    %244 = tpu.matmul %243, %6, %cst_89 {dimension_numbers = #tpu.dot_dimension_numbers<[2], [0], [0, 1], [1], [0, 0, 0, 1, 1, 1], [], []>} : vector<2x16x32xbf16>, vector<32x4xbf16>, vector<2x16x4xf32> -> vector<2x16x4xf32>
    "tpu.trace_stop"() : () -> ()
    %245 = arith.addf %244, %3 : vector<2x16x4xf32>
    %cst_90 = arith.constant dense<0xFF800000> : vector<2x4xf32>
    %246 = vector.multi_reduction <maximumf>, %245, %cst_90 [1] : vector<2x16x4xf32> to vector<2x4xf32>
    %247 = vector.shape_cast %246 : vector<2x4xf32> to vector<2x1x4xf32>
    %248 = vector.broadcast %247 : vector<2x1x4xf32> to vector<2x16x4xf32>
    %249 = arith.subf %245, %248 : vector<2x16x4xf32>
    %250 = math.exp %249 : vector<2x16x4xf32>
    %cst_91 = arith.constant dense<0.000000e+00> : vector<2x4xf32>
    %251 = vector.multi_reduction <add>, %250, %cst_91 [1] : vector<2x16x4xf32> to vector<2x4xf32>
    %252 = vector.shape_cast %251 : vector<2x4xf32> to vector<2x1x4xf32>
    %253 = tpu.reciprocal %252 {approx = true} : vector<2x1x4xf32> -> vector<2x1x4xf32>
    %254 = vector.broadcast %253 : vector<2x1x4xf32> to vector<2x16x4xf32>
    %255 = arith.mulf %250, %254 : vector<2x16x4xf32>
    %256 = arith.truncf %255 : vector<2x16x4xf32> to vector<2x16x4xbf16>
    "tpu.trace_start"() <{level = 10 : i32, message = "bsh,hd->bsd"}> : () -> ()
    %cst_92 = arith.constant dense<0.000000e+00> : vector<2x16x32xf32>
    %257 = tpu.matmul %256, %9, %cst_92 {dimension_numbers = #tpu.dot_dimension_numbers<[2], [0], [0, 1], [1], [0, 0, 0, 1, 1, 1], [], []>} : vector<2x16x4xbf16>, vector<4x32xbf16>, vector<2x16x32xf32> -> vector<2x16x32xf32>
    "tpu.trace_stop"() : () -> ()
    %258 = arith.mulf %257, %239 : vector<2x16x32xf32>
    %cst_93 = arith.constant dense<0.000000e+00> : vector<2x32xf32>
    %259 = vector.multi_reduction <add>, %258, %cst_93 [1] : vector<2x16x32xf32> to vector<2x32xf32>
    %c7_94 = arith.constant 7 : index
    %c0_95 = arith.constant 0 : index
    %c0_96 = arith.constant 0 : index
    %260 = vector.load %arg3[%c7_94, %c0_95, %c0_96] : memref<11x32x32xbf16, #tpu.memory_space<vmem>>, vector<1x32x32xbf16>
    %261 = vector.shape_cast %260 : vector<1x32x32xbf16> to vector<32x32xbf16>
    %262 = arith.truncf %259 : vector<2x32xf32> to vector<2x32xbf16>
    %cst_97 = arith.constant dense<0.000000e+00> : vector<2x32xf32>
    %263 = tpu.matmul %262, %261, %cst_97 {dimension_numbers = #tpu.dot_dimension_numbers<[1], [0], [0], [1], [0, 0, 1, 1], [], []>} : vector<2x32xbf16>, vector<32x32xbf16>, vector<2x32xf32> -> vector<2x32xf32>
    %c13 = arith.constant 13 : index
    %c0_98 = arith.constant 0 : index
    %264 = vector.load %arg8[%c13, %c0_98] : memref<65x256xf32, #tpu.memory_space<vmem>>, vector<1x256xf32>
    %265 = vector.shape_cast %264 : vector<1x256xf32> to vector<256xf32>
    %266 = vector.extract_strided_slice %265 {offsets = [0], sizes = [32], strides = [1]} : vector<256xf32> to vector<32xf32>
    %267 = vector.shape_cast %266 : vector<32xf32> to vector<1x32xf32>
    %268 = vector.broadcast %267 : vector<1x32xf32> to vector<2x32xf32>
    %269 = arith.addf %263, %268 : vector<2x32xf32>
    %270 = arith.addf %225, %269 : vector<2x32xf32>
    %c17 = arith.constant 17 : index
    %c0_99 = arith.constant 0 : index
    %271 = vector.load %arg8[%c17, %c0_99] : memref<65x256xf32, #tpu.memory_space<vmem>>, vector<1x256xf32>
    %272 = vector.shape_cast %271 : vector<1x256xf32> to vector<256xf32>
    %273 = vector.extract_strided_slice %272 {offsets = [0], sizes = [32], strides = [1]} : vector<256xf32> to vector<32xf32>
    %c18 = arith.constant 18 : index
    %c0_100 = arith.constant 0 : index
    %274 = vector.load %arg8[%c18, %c0_100] : memref<65x256xf32, #tpu.memory_space<vmem>>, vector<1x256xf32>
    %275 = vector.shape_cast %274 : vector<1x256xf32> to vector<256xf32>
    %276 = vector.extract_strided_slice %275 {offsets = [0], sizes = [32], strides = [1]} : vector<256xf32> to vector<32xf32>
    %cst_101 = arith.constant dense<0.000000e+00> : vector<2xf32>
    %277 = vector.multi_reduction <add>, %270, %cst_101 [1] : vector<2x32xf32> to vector<2xf32>
    %278 = vector.shape_cast %277 : vector<2xf32> to vector<2x1xf32>
    %cst_102 = arith.constant 3.200000e+01 : f32
    %279 = vector.broadcast %cst_102 : f32 to vector<2x1xf32>
    %280 = arith.divf %278, %279 : vector<2x1xf32>
    %281 = vector.broadcast %280 : vector<2x1xf32> to vector<2x32xf32>
    %282 = arith.subf %270, %281 : vector<2x32xf32>
    %283 = arith.mulf %282, %282 : vector<2x32xf32>
    %cst_103 = arith.constant dense<0.000000e+00> : vector<2xf32>
    %284 = vector.multi_reduction <add>, %283, %cst_103 [1] : vector<2x32xf32> to vector<2xf32>
    %285 = vector.shape_cast %284 : vector<2xf32> to vector<2x1xf32>
    %cst_104 = arith.constant 3.200000e+01 : f32
    %286 = vector.broadcast %cst_104 : f32 to vector<2x1xf32>
    %287 = arith.divf %285, %286 : vector<2x1xf32>
    %288 = vector.broadcast %280 : vector<2x1xf32> to vector<2x32xf32>
    %289 = arith.subf %270, %288 : vector<2x32xf32>
    %cst_105 = arith.constant 9.99999974E-6 : f32
    %290 = vector.broadcast %cst_105 : f32 to vector<2x1xf32>
    %291 = arith.addf %287, %290 : vector<2x1xf32>
    %292 = math.rsqrt %291 : vector<2x1xf32>
    %293 = vector.broadcast %292 : vector<2x1xf32> to vector<2x32xf32>
    %294 = arith.mulf %289, %293 : vector<2x32xf32>
    %295 = vector.shape_cast %273 : vector<32xf32> to vector<1x32xf32>
    %296 = vector.broadcast %295 : vector<1x32xf32> to vector<2x32xf32>
    %297 = arith.mulf %294, %296 : vector<2x32xf32>
    %298 = vector.shape_cast %276 : vector<32xf32> to vector<1x32xf32>
    %299 = vector.broadcast %298 : vector<1x32xf32> to vector<2x32xf32>
    %300 = arith.addf %297, %299 : vector<2x32xf32>
    %c1_106 = arith.constant 1 : index
    %c0_107 = arith.constant 0 : index
    %c0_108 = arith.constant 0 : index
    %301 = vector.load %arg5[%c1_106, %c0_107, %c0_108] : memref<3x32x2048xbf16, #tpu.memory_space<vmem>>, vector<1x32x2048xbf16>
    %302 = vector.shape_cast %301 : vector<1x32x2048xbf16> to vector<32x2048xbf16>
    %303 = arith.truncf %300 : vector<2x32xf32> to vector<2x32xbf16>
    %cst_109 = arith.constant dense<0.000000e+00> : vector<2x2048xf32>
    %304 = tpu.matmul %303, %302, %cst_109 {dimension_numbers = #tpu.dot_dimension_numbers<[1], [0], [0], [1], [0, 0, 1, 1], [], []>} : vector<2x32xbf16>, vector<32x2048xbf16>, vector<2x2048xf32> -> vector<2x2048xf32>
    %c1_110 = arith.constant 1 : index
    %c0_111 = arith.constant 0 : index
    %305 = vector.load %arg7[%c1_110, %c0_111] : memref<3x2048xf32, #tpu.memory_space<vmem>>, vector<1x2048xf32>
    %306 = vector.shape_cast %305 : vector<1x2048xf32> to vector<2048xf32>
    %307 = vector.shape_cast %306 : vector<2048xf32> to vector<1x2048xf32>
    %308 = vector.broadcast %307 : vector<1x2048xf32> to vector<2x2048xf32>
    %309 = arith.addf %304, %308 : vector<2x2048xf32>
    %cst_112 = arith.constant 0.000000e+00 : f32
    %310 = vector.broadcast %cst_112 : f32 to vector<2x2048xf32>
    %311 = arith.maximumf %309, %310 : vector<2x2048xf32>
    %c1_113 = arith.constant 1 : index
    %c0_114 = arith.constant 0 : index
    %c0_115 = arith.constant 0 : index
    %312 = vector.load %arg6[%c1_113, %c0_114, %c0_115] : memref<3x2048x32xbf16, #tpu.memory_space<vmem>>, vector<1x2048x32xbf16>
    %313 = vector.shape_cast %312 : vector<1x2048x32xbf16> to vector<2048x32xbf16>
    %314 = arith.truncf %311 : vector<2x2048xf32> to vector<2x2048xbf16>
    %cst_116 = arith.constant dense<0.000000e+00> : vector<2x32xf32>
    %315 = tpu.matmul %314, %313, %cst_116 {dimension_numbers = #tpu.dot_dimension_numbers<[1], [0], [0], [1], [0, 0, 1, 1], [], []>} : vector<2x2048xbf16>, vector<2048x32xbf16>, vector<2x32xf32> -> vector<2x32xf32>
    %c14 = arith.constant 14 : index
    %c0_117 = arith.constant 0 : index
    %316 = vector.load %arg8[%c14, %c0_117] : memref<65x256xf32, #tpu.memory_space<vmem>>, vector<1x256xf32>
    %317 = vector.shape_cast %316 : vector<1x256xf32> to vector<256xf32>
    %318 = vector.extract_strided_slice %317 {offsets = [0], sizes = [32], strides = [1]} : vector<256xf32> to vector<32xf32>
    %319 = vector.shape_cast %318 : vector<32xf32> to vector<1x32xf32>
    %320 = vector.broadcast %319 : vector<1x32xf32> to vector<2x32xf32>
    %321 = arith.addf %315, %320 : vector<2x32xf32>
    %322 = arith.addf %300, %321 : vector<2x32xf32>
    %c19 = arith.constant 19 : index
    %c0_118 = arith.constant 0 : index
    %323 = vector.load %arg8[%c19, %c0_118] : memref<65x256xf32, #tpu.memory_space<vmem>>, vector<1x256xf32>
    %324 = vector.shape_cast %323 : vector<1x256xf32> to vector<256xf32>
    %325 = vector.extract_strided_slice %324 {offsets = [0], sizes = [32], strides = [1]} : vector<256xf32> to vector<32xf32>
    %c20 = arith.constant 20 : index
    %c0_119 = arith.constant 0 : index
    %326 = vector.load %arg8[%c20, %c0_119] : memref<65x256xf32, #tpu.memory_space<vmem>>, vector<1x256xf32>
    %327 = vector.shape_cast %326 : vector<1x256xf32> to vector<256xf32>
    %328 = vector.extract_strided_slice %327 {offsets = [0], sizes = [32], strides = [1]} : vector<256xf32> to vector<32xf32>
    %cst_120 = arith.constant dense<0.000000e+00> : vector<2xf32>
    %329 = vector.multi_reduction <add>, %322, %cst_120 [1] : vector<2x32xf32> to vector<2xf32>
    %330 = vector.shape_cast %329 : vector<2xf32> to vector<2x1xf32>
    %cst_121 = arith.constant 3.200000e+01 : f32
    %331 = vector.broadcast %cst_121 : f32 to vector<2x1xf32>
    %332 = arith.divf %330, %331 : vector<2x1xf32>
    %333 = vector.broadcast %332 : vector<2x1xf32> to vector<2x32xf32>
    %334 = arith.subf %322, %333 : vector<2x32xf32>
    %335 = arith.mulf %334, %334 : vector<2x32xf32>
    %cst_122 = arith.constant dense<0.000000e+00> : vector<2xf32>
    %336 = vector.multi_reduction <add>, %335, %cst_122 [1] : vector<2x32xf32> to vector<2xf32>
    %337 = vector.shape_cast %336 : vector<2xf32> to vector<2x1xf32>
    %cst_123 = arith.constant 3.200000e+01 : f32
    %338 = vector.broadcast %cst_123 : f32 to vector<2x1xf32>
    %339 = arith.divf %337, %338 : vector<2x1xf32>
    %340 = vector.broadcast %332 : vector<2x1xf32> to vector<2x32xf32>
    %341 = arith.subf %322, %340 : vector<2x32xf32>
    %cst_124 = arith.constant 9.99999974E-6 : f32
    %342 = vector.broadcast %cst_124 : f32 to vector<2x1xf32>
    %343 = arith.addf %339, %342 : vector<2x1xf32>
    %344 = math.rsqrt %343 : vector<2x1xf32>
    %345 = vector.broadcast %344 : vector<2x1xf32> to vector<2x32xf32>
    %346 = arith.mulf %341, %345 : vector<2x32xf32>
    %347 = vector.shape_cast %325 : vector<32xf32> to vector<1x32xf32>
    %348 = vector.broadcast %347 : vector<1x32xf32> to vector<2x32xf32>
    %349 = arith.mulf %346, %348 : vector<2x32xf32>
    %350 = vector.shape_cast %328 : vector<32xf32> to vector<1x32xf32>
    %351 = vector.broadcast %350 : vector<1x32xf32> to vector<2x32xf32>
    %352 = arith.addf %349, %351 : vector<2x32xf32>
    %c2_125 = arith.constant 2 : index
    %c0_126 = arith.constant 0 : index
    %c0_127 = arith.constant 0 : index
    %353 = vector.load %arg3[%c2_125, %c0_126, %c0_127] : memref<11x32x32xbf16, #tpu.memory_space<vmem>>, vector<1x32x32xbf16>
    %354 = vector.shape_cast %353 : vector<1x32x32xbf16> to vector<32x32xbf16>
    %355 = arith.truncf %352 : vector<2x32xf32> to vector<2x32xbf16>
    %cst_128 = arith.constant dense<0.000000e+00> : vector<2x32xf32>
    %356 = tpu.matmul %355, %354, %cst_128 {dimension_numbers = #tpu.dot_dimension_numbers<[1], [0], [0], [1], [0, 0, 1, 1], [], []>} : vector<2x32xbf16>, vector<32x32xbf16>, vector<2x32xf32> -> vector<2x32xf32>
    %c21 = arith.constant 21 : index
    %c0_129 = arith.constant 0 : index
    %357 = vector.load %arg8[%c21, %c0_129] : memref<65x256xf32, #tpu.memory_space<vmem>>, vector<1x256xf32>
    %358 = vector.shape_cast %357 : vector<1x256xf32> to vector<256xf32>
    %359 = vector.extract_strided_slice %358 {offsets = [0], sizes = [32], strides = [1]} : vector<256xf32> to vector<32xf32>
    %360 = vector.shape_cast %359 : vector<32xf32> to vector<1x32xf32>
    %361 = vector.broadcast %360 : vector<1x32xf32> to vector<2x32xf32>
    %362 = arith.addf %356, %361 : vector<2x32xf32>
    %363 = arith.addf %352, %362 : vector<2x32xf32>
    %c25 = arith.constant 25 : index
    %c0_130 = arith.constant 0 : index
    %364 = vector.load %arg8[%c25, %c0_130] : memref<65x256xf32, #tpu.memory_space<vmem>>, vector<1x256xf32>
    %365 = vector.shape_cast %364 : vector<1x256xf32> to vector<256xf32>
    %366 = vector.extract_strided_slice %365 {offsets = [0], sizes = [32], strides = [1]} : vector<256xf32> to vector<32xf32>
    %c26 = arith.constant 26 : index
    %c0_131 = arith.constant 0 : index
    %367 = vector.load %arg8[%c26, %c0_131] : memref<65x256xf32, #tpu.memory_space<vmem>>, vector<1x256xf32>
    %368 = vector.shape_cast %367 : vector<1x256xf32> to vector<256xf32>
    %369 = vector.extract_strided_slice %368 {offsets = [0], sizes = [32], strides = [1]} : vector<256xf32> to vector<32xf32>
    %cst_132 = arith.constant dense<0.000000e+00> : vector<2xf32>
    %370 = vector.multi_reduction <add>, %363, %cst_132 [1] : vector<2x32xf32> to vector<2xf32>
    %371 = vector.shape_cast %370 : vector<2xf32> to vector<2x1xf32>
    %cst_133 = arith.constant 3.200000e+01 : f32
    %372 = vector.broadcast %cst_133 : f32 to vector<2x1xf32>
    %373 = arith.divf %371, %372 : vector<2x1xf32>
    %374 = vector.broadcast %373 : vector<2x1xf32> to vector<2x32xf32>
    %375 = arith.subf %363, %374 : vector<2x32xf32>
    %376 = arith.mulf %375, %375 : vector<2x32xf32>
    %cst_134 = arith.constant dense<0.000000e+00> : vector<2xf32>
    %377 = vector.multi_reduction <add>, %376, %cst_134 [1] : vector<2x32xf32> to vector<2xf32>
    %378 = vector.shape_cast %377 : vector<2xf32> to vector<2x1xf32>
    %cst_135 = arith.constant 3.200000e+01 : f32
    %379 = vector.broadcast %cst_135 : f32 to vector<2x1xf32>
    %380 = arith.divf %378, %379 : vector<2x1xf32>
    %381 = vector.broadcast %373 : vector<2x1xf32> to vector<2x32xf32>
    %382 = arith.subf %363, %381 : vector<2x32xf32>
    %cst_136 = arith.constant 9.99999974E-6 : f32
    %383 = vector.broadcast %cst_136 : f32 to vector<2x1xf32>
    %384 = arith.addf %380, %383 : vector<2x1xf32>
    %385 = math.rsqrt %384 : vector<2x1xf32>
    %386 = vector.broadcast %385 : vector<2x1xf32> to vector<2x32xf32>
    %387 = arith.mulf %382, %386 : vector<2x32xf32>
    %388 = vector.shape_cast %366 : vector<32xf32> to vector<1x32xf32>
    %389 = vector.broadcast %388 : vector<1x32xf32> to vector<2x32xf32>
    %390 = arith.mulf %387, %389 : vector<2x32xf32>
    %391 = vector.shape_cast %369 : vector<32xf32> to vector<1x32xf32>
    %392 = vector.broadcast %391 : vector<1x32xf32> to vector<2x32xf32>
    %393 = arith.addf %390, %392 : vector<2x32xf32>
    %c5_137 = arith.constant 5 : index
    %c0_138 = arith.constant 0 : index
    %c0_139 = arith.constant 0 : index
    %394 = vector.load %arg3[%c5_137, %c0_138, %c0_139] : memref<11x32x32xbf16, #tpu.memory_space<vmem>>, vector<1x32x32xbf16>
    %395 = vector.shape_cast %394 : vector<1x32x32xbf16> to vector<32x32xbf16>
    %396 = arith.truncf %393 : vector<2x32xf32> to vector<2x32xbf16>
    %cst_140 = arith.constant dense<0.000000e+00> : vector<2x32xf32>
    %397 = tpu.matmul %396, %395, %cst_140 {dimension_numbers = #tpu.dot_dimension_numbers<[1], [0], [0], [1], [0, 0, 1, 1], [], []>} : vector<2x32xbf16>, vector<32x32xbf16>, vector<2x32xf32> -> vector<2x32xf32>
    %c22 = arith.constant 22 : index
    %c0_141 = arith.constant 0 : index
    %398 = vector.load %arg8[%c22, %c0_141] : memref<65x256xf32, #tpu.memory_space<vmem>>, vector<1x256xf32>
    %399 = vector.shape_cast %398 : vector<1x256xf32> to vector<256xf32>
    %400 = vector.extract_strided_slice %399 {offsets = [0], sizes = [32], strides = [1]} : vector<256xf32> to vector<32xf32>
    %401 = vector.shape_cast %400 : vector<32xf32> to vector<1x32xf32>
    %402 = vector.broadcast %401 : vector<1x32xf32> to vector<2x32xf32>
    %403 = arith.addf %397, %402 : vector<2x32xf32>
    %cst_142 = arith.constant 0.353553385 : f32
    %404 = vector.broadcast %cst_142 : f32 to vector<2x32xf32>
    %405 = arith.mulf %403, %404 : vector<2x32xf32>
    %406 = vector.extract_strided_slice %16 {offsets = [0, 0, 128], sizes = [2, 16, 32], strides = [1, 1, 1]} : vector<2x16x256xf32> to vector<2x16x32xf32>
    %407 = vector.extract_strided_slice %16 {offsets = [0, 0, 160], sizes = [2, 16, 32], strides = [1, 1, 1]} : vector<2x16x256xf32> to vector<2x16x32xf32>
    %408 = vector.shape_cast %405 : vector<2x32xf32> to vector<2x1x32xf32>
    %409 = vector.broadcast %408 : vector<2x1x32xf32> to vector<2x16x32xf32>
    %410 = arith.mulf %409, %406 : vector<2x16x32xf32>
    %411 = arith.truncf %410 : vector<2x16x32xf32> to vector<2x16x32xbf16>
    "tpu.trace_start"() <{level = 10 : i32, message = "bsd,dh->bsh"}> : () -> ()
    %cst_143 = arith.constant dense<0.000000e+00> : vector<2x16x4xf32>
    %412 = tpu.matmul %411, %6, %cst_143 {dimension_numbers = #tpu.dot_dimension_numbers<[2], [0], [0, 1], [1], [0, 0, 0, 1, 1, 1], [], []>} : vector<2x16x32xbf16>, vector<32x4xbf16>, vector<2x16x4xf32> -> vector<2x16x4xf32>
    "tpu.trace_stop"() : () -> ()
    %413 = arith.addf %412, %3 : vector<2x16x4xf32>
    %cst_144 = arith.constant dense<0xFF800000> : vector<2x4xf32>
    %414 = vector.multi_reduction <maximumf>, %413, %cst_144 [1] : vector<2x16x4xf32> to vector<2x4xf32>
    %415 = vector.shape_cast %414 : vector<2x4xf32> to vector<2x1x4xf32>
    %416 = vector.broadcast %415 : vector<2x1x4xf32> to vector<2x16x4xf32>
    %417 = arith.subf %413, %416 : vector<2x16x4xf32>
    %418 = math.exp %417 : vector<2x16x4xf32>
    %cst_145 = arith.constant dense<0.000000e+00> : vector<2x4xf32>
    %419 = vector.multi_reduction <add>, %418, %cst_145 [1] : vector<2x16x4xf32> to vector<2x4xf32>
    %420 = vector.shape_cast %419 : vector<2x4xf32> to vector<2x1x4xf32>
    %421 = tpu.reciprocal %420 {approx = true} : vector<2x1x4xf32> -> vector<2x1x4xf32>
    %422 = vector.broadcast %421 : vector<2x1x4xf32> to vector<2x16x4xf32>
    %423 = arith.mulf %418, %422 : vector<2x16x4xf32>
    %424 = arith.truncf %423 : vector<2x16x4xf32> to vector<2x16x4xbf16>
    "tpu.trace_start"() <{level = 10 : i32, message = "bsh,hd->bsd"}> : () -> ()
    %cst_146 = arith.constant dense<0.000000e+00> : vector<2x16x32xf32>
    %425 = tpu.matmul %424, %9, %cst_146 {dimension_numbers = #tpu.dot_dimension_numbers<[2], [0], [0, 1], [1], [0, 0, 0, 1, 1, 1], [], []>} : vector<2x16x4xbf16>, vector<4x32xbf16>, vector<2x16x32xf32> -> vector<2x16x32xf32>
    "tpu.trace_stop"() : () -> ()
    %426 = arith.mulf %425, %407 : vector<2x16x32xf32>
    %cst_147 = arith.constant dense<0.000000e+00> : vector<2x32xf32>
    %427 = vector.multi_reduction <add>, %426, %cst_147 [1] : vector<2x16x32xf32> to vector<2x32xf32>
    %c8_148 = arith.constant 8 : index
    %c0_149 = arith.constant 0 : index
    %c0_150 = arith.constant 0 : index
    %428 = vector.load %arg3[%c8_148, %c0_149, %c0_150] : memref<11x32x32xbf16, #tpu.memory_space<vmem>>, vector<1x32x32xbf16>
    %429 = vector.shape_cast %428 : vector<1x32x32xbf16> to vector<32x32xbf16>
    %430 = arith.truncf %427 : vector<2x32xf32> to vector<2x32xbf16>
    %cst_151 = arith.constant dense<0.000000e+00> : vector<2x32xf32>
    %431 = tpu.matmul %430, %429, %cst_151 {dimension_numbers = #tpu.dot_dimension_numbers<[1], [0], [0], [1], [0, 0, 1, 1], [], []>} : vector<2x32xbf16>, vector<32x32xbf16>, vector<2x32xf32> -> vector<2x32xf32>
    %c23 = arith.constant 23 : index
    %c0_152 = arith.constant 0 : index
    %432 = vector.load %arg8[%c23, %c0_152] : memref<65x256xf32, #tpu.memory_space<vmem>>, vector<1x256xf32>
    %433 = vector.shape_cast %432 : vector<1x256xf32> to vector<256xf32>
    %434 = vector.extract_strided_slice %433 {offsets = [0], sizes = [32], strides = [1]} : vector<256xf32> to vector<32xf32>
    %435 = vector.shape_cast %434 : vector<32xf32> to vector<1x32xf32>
    %436 = vector.broadcast %435 : vector<1x32xf32> to vector<2x32xf32>
    %437 = arith.addf %431, %436 : vector<2x32xf32>
    %438 = arith.addf %393, %437 : vector<2x32xf32>
    %c27 = arith.constant 27 : index
    %c0_153 = arith.constant 0 : index
    %439 = vector.load %arg8[%c27, %c0_153] : memref<65x256xf32, #tpu.memory_space<vmem>>, vector<1x256xf32>
    %440 = vector.shape_cast %439 : vector<1x256xf32> to vector<256xf32>
    %441 = vector.extract_strided_slice %440 {offsets = [0], sizes = [32], strides = [1]} : vector<256xf32> to vector<32xf32>
    %c28 = arith.constant 28 : index
    %c0_154 = arith.constant 0 : index
    %442 = vector.load %arg8[%c28, %c0_154] : memref<65x256xf32, #tpu.memory_space<vmem>>, vector<1x256xf32>
    %443 = vector.shape_cast %442 : vector<1x256xf32> to vector<256xf32>
    %444 = vector.extract_strided_slice %443 {offsets = [0], sizes = [32], strides = [1]} : vector<256xf32> to vector<32xf32>
    %cst_155 = arith.constant dense<0.000000e+00> : vector<2xf32>
    %445 = vector.multi_reduction <add>, %438, %cst_155 [1] : vector<2x32xf32> to vector<2xf32>
    %446 = vector.shape_cast %445 : vector<2xf32> to vector<2x1xf32>
    %cst_156 = arith.constant 3.200000e+01 : f32
    %447 = vector.broadcast %cst_156 : f32 to vector<2x1xf32>
    %448 = arith.divf %446, %447 : vector<2x1xf32>
    %449 = vector.broadcast %448 : vector<2x1xf32> to vector<2x32xf32>
    %450 = arith.subf %438, %449 : vector<2x32xf32>
    %451 = arith.mulf %450, %450 : vector<2x32xf32>
    %cst_157 = arith.constant dense<0.000000e+00> : vector<2xf32>
    %452 = vector.multi_reduction <add>, %451, %cst_157 [1] : vector<2x32xf32> to vector<2xf32>
    %453 = vector.shape_cast %452 : vector<2xf32> to vector<2x1xf32>
    %cst_158 = arith.constant 3.200000e+01 : f32
    %454 = vector.broadcast %cst_158 : f32 to vector<2x1xf32>
    %455 = arith.divf %453, %454 : vector<2x1xf32>
    %456 = vector.broadcast %448 : vector<2x1xf32> to vector<2x32xf32>
    %457 = arith.subf %438, %456 : vector<2x32xf32>
    %cst_159 = arith.constant 9.99999974E-6 : f32
    %458 = vector.broadcast %cst_159 : f32 to vector<2x1xf32>
    %459 = arith.addf %455, %458 : vector<2x1xf32>
    %460 = math.rsqrt %459 : vector<2x1xf32>
    %461 = vector.broadcast %460 : vector<2x1xf32> to vector<2x32xf32>
    %462 = arith.mulf %457, %461 : vector<2x32xf32>
    %463 = vector.shape_cast %441 : vector<32xf32> to vector<1x32xf32>
    %464 = vector.broadcast %463 : vector<1x32xf32> to vector<2x32xf32>
    %465 = arith.mulf %462, %464 : vector<2x32xf32>
    %466 = vector.shape_cast %444 : vector<32xf32> to vector<1x32xf32>
    %467 = vector.broadcast %466 : vector<1x32xf32> to vector<2x32xf32>
    %468 = arith.addf %465, %467 : vector<2x32xf32>
    %c2_160 = arith.constant 2 : index
    %c0_161 = arith.constant 0 : index
    %c0_162 = arith.constant 0 : index
    %469 = vector.load %arg5[%c2_160, %c0_161, %c0_162] : memref<3x32x2048xbf16, #tpu.memory_space<vmem>>, vector<1x32x2048xbf16>
    %470 = vector.shape_cast %469 : vector<1x32x2048xbf16> to vector<32x2048xbf16>
    %471 = arith.truncf %468 : vector<2x32xf32> to vector<2x32xbf16>
    %cst_163 = arith.constant dense<0.000000e+00> : vector<2x2048xf32>
    %472 = tpu.matmul %471, %470, %cst_163 {dimension_numbers = #tpu.dot_dimension_numbers<[1], [0], [0], [1], [0, 0, 1, 1], [], []>} : vector<2x32xbf16>, vector<32x2048xbf16>, vector<2x2048xf32> -> vector<2x2048xf32>
    %c2_164 = arith.constant 2 : index
    %c0_165 = arith.constant 0 : index
    %473 = vector.load %arg7[%c2_164, %c0_165] : memref<3x2048xf32, #tpu.memory_space<vmem>>, vector<1x2048xf32>
    %474 = vector.shape_cast %473 : vector<1x2048xf32> to vector<2048xf32>
    %475 = vector.shape_cast %474 : vector<2048xf32> to vector<1x2048xf32>
    %476 = vector.broadcast %475 : vector<1x2048xf32> to vector<2x2048xf32>
    %477 = arith.addf %472, %476 : vector<2x2048xf32>
    %cst_166 = arith.constant 0.000000e+00 : f32
    %478 = vector.broadcast %cst_166 : f32 to vector<2x2048xf32>
    %479 = arith.maximumf %477, %478 : vector<2x2048xf32>
    %c2_167 = arith.constant 2 : index
    %c0_168 = arith.constant 0 : index
    %c0_169 = arith.constant 0 : index
    %480 = vector.load %arg6[%c2_167, %c0_168, %c0_169] : memref<3x2048x32xbf16, #tpu.memory_space<vmem>>, vector<1x2048x32xbf16>
    %481 = vector.shape_cast %480 : vector<1x2048x32xbf16> to vector<2048x32xbf16>
    %482 = arith.truncf %479 : vector<2x2048xf32> to vector<2x2048xbf16>
    %cst_170 = arith.constant dense<0.000000e+00> : vector<2x32xf32>
    %483 = tpu.matmul %482, %481, %cst_170 {dimension_numbers = #tpu.dot_dimension_numbers<[1], [0], [0], [1], [0, 0, 1, 1], [], []>} : vector<2x2048xbf16>, vector<2048x32xbf16>, vector<2x32xf32> -> vector<2x32xf32>
    %c24 = arith.constant 24 : index
    %c0_171 = arith.constant 0 : index
    %484 = vector.load %arg8[%c24, %c0_171] : memref<65x256xf32, #tpu.memory_space<vmem>>, vector<1x256xf32>
    %485 = vector.shape_cast %484 : vector<1x256xf32> to vector<256xf32>
    %486 = vector.extract_strided_slice %485 {offsets = [0], sizes = [32], strides = [1]} : vector<256xf32> to vector<32xf32>
    %487 = vector.shape_cast %486 : vector<32xf32> to vector<1x32xf32>
    %488 = vector.broadcast %487 : vector<1x32xf32> to vector<2x32xf32>
    %489 = arith.addf %483, %488 : vector<2x32xf32>
    %490 = arith.addf %468, %489 : vector<2x32xf32>
    %c29 = arith.constant 29 : index
    %c0_172 = arith.constant 0 : index
    %491 = vector.load %arg8[%c29, %c0_172] : memref<65x256xf32, #tpu.memory_space<vmem>>, vector<1x256xf32>
    %492 = vector.shape_cast %491 : vector<1x256xf32> to vector<256xf32>
    %493 = vector.extract_strided_slice %492 {offsets = [0], sizes = [32], strides = [1]} : vector<256xf32> to vector<32xf32>
    %c30 = arith.constant 30 : index
    %c0_173 = arith.constant 0 : index
    %494 = vector.load %arg8[%c30, %c0_173] : memref<65x256xf32, #tpu.memory_space<vmem>>, vector<1x256xf32>
    %495 = vector.shape_cast %494 : vector<1x256xf32> to vector<256xf32>
    %496 = vector.extract_strided_slice %495 {offsets = [0], sizes = [32], strides = [1]} : vector<256xf32> to vector<32xf32>
    %cst_174 = arith.constant dense<0.000000e+00> : vector<2xf32>
    %497 = vector.multi_reduction <add>, %490, %cst_174 [1] : vector<2x32xf32> to vector<2xf32>
    %498 = vector.shape_cast %497 : vector<2xf32> to vector<2x1xf32>
    %cst_175 = arith.constant 3.200000e+01 : f32
    %499 = vector.broadcast %cst_175 : f32 to vector<2x1xf32>
    %500 = arith.divf %498, %499 : vector<2x1xf32>
    %501 = vector.broadcast %500 : vector<2x1xf32> to vector<2x32xf32>
    %502 = arith.subf %490, %501 : vector<2x32xf32>
    %503 = arith.mulf %502, %502 : vector<2x32xf32>
    %cst_176 = arith.constant dense<0.000000e+00> : vector<2xf32>
    %504 = vector.multi_reduction <add>, %503, %cst_176 [1] : vector<2x32xf32> to vector<2xf32>
    %505 = vector.shape_cast %504 : vector<2xf32> to vector<2x1xf32>
    %cst_177 = arith.constant 3.200000e+01 : f32
    %506 = vector.broadcast %cst_177 : f32 to vector<2x1xf32>
    %507 = arith.divf %505, %506 : vector<2x1xf32>
    %508 = vector.broadcast %500 : vector<2x1xf32> to vector<2x32xf32>
    %509 = arith.subf %490, %508 : vector<2x32xf32>
    %cst_178 = arith.constant 9.99999974E-6 : f32
    %510 = vector.broadcast %cst_178 : f32 to vector<2x1xf32>
    %511 = arith.addf %507, %510 : vector<2x1xf32>
    %512 = math.rsqrt %511 : vector<2x1xf32>
    %513 = vector.broadcast %512 : vector<2x1xf32> to vector<2x32xf32>
    %514 = arith.mulf %509, %513 : vector<2x32xf32>
    %515 = vector.shape_cast %493 : vector<32xf32> to vector<1x32xf32>
    %516 = vector.broadcast %515 : vector<1x32xf32> to vector<2x32xf32>
    %517 = arith.mulf %514, %516 : vector<2x32xf32>
    %518 = vector.shape_cast %496 : vector<32xf32> to vector<1x32xf32>
    %519 = vector.broadcast %518 : vector<1x32xf32> to vector<2x32xf32>
    %520 = arith.addf %517, %519 : vector<2x32xf32>
    %c32 = arith.constant 32 : index
    %c0_179 = arith.constant 0 : index
    %521 = vector.load %arg8[%c32, %c0_179] : memref<65x256xf32, #tpu.memory_space<vmem>>, vector<32x128xf32>
    %522 = arith.truncf %521 : vector<32x128xf32> to vector<32x128xbf16>
    %523 = arith.truncf %520 : vector<2x32xf32> to vector<2x32xbf16>
    %cst_180 = arith.constant dense<0.000000e+00> : vector<2x128xf32>
    %524 = tpu.matmul %523, %522, %cst_180 {dimension_numbers = #tpu.dot_dimension_numbers<[1], [0], [0], [1], [0, 0, 1, 1], [], []>} : vector<2x32xbf16>, vector<32x128xbf16>, vector<2x128xf32> -> vector<2x128xf32>
    %c64 = arith.constant 64 : index
    %c0_181 = arith.constant 0 : index
    %525 = vector.load %arg8[%c64, %c0_181] : memref<65x256xf32, #tpu.memory_space<vmem>>, vector<1x256xf32>
    %526 = vector.shape_cast %525 : vector<1x256xf32> to vector<256xf32>
    %527 = vector.extract_strided_slice %526 {offsets = [0], sizes = [128], strides = [1]} : vector<256xf32> to vector<128xf32>
    %528 = vector.shape_cast %527 : vector<128xf32> to vector<1x128xf32>
    %529 = vector.broadcast %528 : vector<1x128xf32> to vector<2x128xf32>
    %530 = arith.addf %524, %529 : vector<2x128xf32>
    %cst_182 = arith.constant 0.000000e+00 : f32
    %531 = vector.broadcast %cst_182 : f32 to vector<2x96xf32>
    %532 = tpu.concatenate %530, %520, %531 in 1 : vector<2x128xf32>, vector<2x32xf32>, vector<2x96xf32> -> vector<2x256xf32>
    %c0_183 = arith.constant 0 : index
    %c0_184 = arith.constant 0 : index
    %533 = vector.load %arg9[%c0_183, %c0_184] : memref<2x256xf32, #tpu.memory_space<vmem>>, vector<2x256xf32>
    tpu.vector_store %arg9[%c0_183, %c0_184], %532 {strides = array<i32>} : memref<2x256xf32, #tpu.memory_space<vmem>>, vector<2x256xf32>,
    return
  }
}

</mosaic_0001>

<llo_original>
// kernel: tpu_custom_call.1
$region0: #{tpu_custom_call.1}
  #allocation0 [shape = 'u32[]', space=smem, size = 0x4, offset = 0x4, fixed_abs, tag = 'smem constant byte address 0x4 - core index']
  #allocation1 [shape = 'u32[144,128]{1,0:T(1,128)}', space=vmem, size = 0x12000, scoped, tag = 'internal scratch']
  %s0 = inlined_call_operand.vmem [shape: f32[2,32], index: 0, kind: input, shape index: {}]
  %s1 = inlined_call_operand.vmem [shape: f32[2,16,32], index: 1, kind: input, shape index: {}]
  %s2 = inlined_call_operand.vmem [shape: f32[2,16,4], index: 2, kind: input, shape index: {}]
  %s3 = inlined_call_operand.vmem [shape: bf16[11,32,32], index: 3, kind: input, shape index: {}]
  %s4 = inlined_call_operand.vmem [shape: bf16[32,256], index: 4, kind: input, shape index: {}]
  %s5 = inlined_call_operand.vmem [shape: bf16[3,32,2048], index: 5, kind: input, shape index: {}]
  %s6 = inlined_call_operand.vmem [shape: bf16[3,2048,32], index: 6, kind: input, shape index: {}]
  %s7 = inlined_call_operand.vmem [shape: f32[3,2048], index: 7, kind: input, shape index: {}]
  %s8 = inlined_call_operand.vmem [shape: f32[65,256], index: 8, kind: input, shape index: {}]
  %s9 = inlined_call_operand.hbm [shape: f32[2,256], index: 9, kind: output, shape index: {}]
  %s10 = sld [smem:[#allocation0]]
  $region46: #{tpu_custom_call.1} parent=0
    _
  %s12 = ssub.s32 1, %s10
  %s13 = scalar_select 0, %s12, %s10
  $region1: #{tpu_custom_call.1} parent=0
    #allocation2 [shape = 'u8[2048]{0}', space=vmem, size = 0x800, scoped, tag = 'output window, operand 0, single buffered']
    #allocation3 [shape = 's32[1]{0}', space=sflag, size = 0x4, scoped, tag = 'scoped memory for tpu_custom_call.1']
    %14 = vsyncpa [#allocation3], 0
    // Predicated region
    $region2: #{tpu_custom_call.1} parent=1 // pred_check
      _
    $region3: #{tpu_custom_call.1} parent=1 // pred_check_branch
      %16 = sbr.rel (0) target = $region5
    $region4: #{tpu_custom_call.1} parent=1 // pred_region
      _
    $region5: #{tpu_custom_call.1} parent=1 // pred_fallthru
      _
    // Predicated region
    $region6: #{tpu_custom_call.1} parent=1 // pred_check
      _
    $region7: #{tpu_custom_call.1} parent=1 // pred_check_branch
      %18 = sbr.rel (0) target = $region9
    $region8: #{tpu_custom_call.1} parent=1 // pred_region
      _
    $region9: #{tpu_custom_call.1} parent=1 // pred_fallthru
      _
    // Predicated region
    $region10: #{tpu_custom_call.1} parent=1 // pred_check
      _
    $region11: #{tpu_custom_call.1} parent=1 // pred_check_branch
      %20 = sbr.rel (0) target = $region13
    $region12: #{tpu_custom_call.1} parent=1 // pred_region
      _
    $region13: #{tpu_custom_call.1} parent=1 // pred_fallthru
      _
    // Predicated region
    $region14: #{tpu_custom_call.1} parent=1 // pred_check
      _
    $region15: #{tpu_custom_call.1} parent=1 // pred_check_branch
      %22 = sbr.rel (0) target = $region17
    $region16: #{tpu_custom_call.1} parent=1 // pred_region
      _
    $region17: #{tpu_custom_call.1} parent=1 // pred_fallthru
      _
    // Predicated region
    $region18: #{tpu_custom_call.1} parent=1 // pred_check
      _
    $region19: #{tpu_custom_call.1} parent=1 // pred_check_branch
      %24 = sbr.rel (0) target = $region21
    $region20: #{tpu_custom_call.1} parent=1 // pred_region
      _
    $region21: #{tpu_custom_call.1} parent=1 // pred_fallthru
      _
    // Predicated region
    $region22: #{tpu_custom_call.1} parent=1 // pred_check
      _
    $region23: #{tpu_custom_call.1} parent=1 // pred_check_branch
      %26 = sbr.rel (0) target = $region25
    $region24: #{tpu_custom_call.1} parent=1 // pred_region
      _
    $region25: #{tpu_custom_call.1} parent=1 // pred_fallthru
      _
    // Predicated region
    $region26: #{tpu_custom_call.1} parent=1 // pred_check
      _
    $region27: #{tpu_custom_call.1} parent=1 // pred_check_branch
      %28 = sbr.rel (0) target = $region29
    $region28: #{tpu_custom_call.1} parent=1 // pred_region
      _
    $region29: #{tpu_custom_call.1} parent=1 // pred_fallthru
      _
    // Predicated region
    $region30: #{tpu_custom_call.1} parent=1 // pred_check
      _
    $region31: #{tpu_custom_call.1} parent=1 // pred_check_branch
      %30 = sbr.rel (0) target = $region33
    $region32: #{tpu_custom_call.1} parent=1 // pred_region
      _
    $region33: #{tpu_custom_call.1} parent=1 // pred_fallthru
      _
    // Predicated region
    $region34: #{tpu_custom_call.1} parent=1 // pred_check
      _
    $region35: #{tpu_custom_call.1} parent=1 // pred_check_branch
      %32 = sbr.rel (0) target = $region37
    $region36: #{tpu_custom_call.1} parent=1 // pred_region
      _
    $region37: #{tpu_custom_call.1} parent=1 // pred_fallthru
      _
    %v34 = vld [vmem:[%s0] sm:$0x3]
    %v35 = vld [vmem:[%s1] sm:$0xff]
    %v36 = vld [vmem:[%s1 + $0x8] sm:$0xff]
    %v37 = vld [vmem:[%s1 + $0x10] sm:$0xff]
    %v38 = vld [vmem:[%s1 + $0x18] sm:$0xff]
    %v39 = vpack.c.bf16 %v36, %v35
    %v40 = vpack.c.bf16 %v38, %v37
    %v41 = vld [vmem:[%s2] sm:$0xff]
    %v42 = vld [vmem:[%s2 + $0x8] sm:$0xff]
    %v43 = vld [vmem:[%s2 + $0x10] sm:$0xff]
    %v44 = vld [vmem:[%s2 + $0x18] sm:$0xff]
    %s45 = scalar_lea.vmem %s3, 144
    %v46 = vld [vmem:[%s45] sm:$0xf]
    %v47 = vld [vmem:[%s45 + $0x4] sm:$0xf]
    %v48 = vld [vmem:[%s45 + $0x8] sm:$0xf]
    %v49 = vld [vmem:[%s45 + $0xc] sm:$0xf]
    %s50 = scalar_lea.vmem %s3, 160
    %v51 = vld [vmem:[%s50] sm:$0xf]
    %v52 = vld [vmem:[%s4] sm:$0xff]
    %v53 = vld [vmem:[%s4 + $0x8] sm:$0xff]
    %v54 = vld [vmem:[%s4 + $0x10] sm:$0xff]
    %v55 = vld [vmem:[%s4 + $0x18] sm:$0xff]
    %v56 = vld [vmem:[%s8] ss:$8 sm:$0x3]
    %v58 = vlaneseq
    %v59 = vshrl.u32 %v58, 7
    %v60 = vsub.s32 0, %v59
    %v61 = vrot.slane %v56, %v60
    %v62 = vlaneseq
    %v63 = vshrl.u32 %v62, 7
    %v64 = vsub.s32 1, %v63
    %v65 = vrot.slane %v56, %v64
    %v72 = vunpack.c.l.b16 %v52
    %v73 = vunpack.c.h.b16 %v52
    %v74 = vunpack.c.l.b16 %v53
    %v75 = vunpack.c.h.b16 %v53
    %v76 = vunpack.c.l.b16 %v54
    %v77 = vunpack.c.h.b16 %v54
    %v78 = vunpack.c.l.b16 %v55
    %v79 = vunpack.c.h.b16 %v55
    %v80 = vpack.c.b16 %v74, %v72
    %v81 = vpack.c.b16 %v75, %v73
    %v82 = vpack.c.b16 %v78, %v76
    %v83 = vpack.c.b16 %v79, %v77
    %vm88 = vcmask 261120
    %v90 = vsel %vm88, %v39, 0
    %v93 = vsel %vm88, %v40, 0
    %95 = vmatprep.subr.bf16.mxu0 %v81
    %96 = vmatpush1.bf16.msra.mxu0 %v80
    %97 = vmatprep.subr.bf16.mxu0 %v83
    %98 = vmatpush1.bf16.msra.mxu0 %v82
    %99 = vmatprep.subr.bf16.mxu0 0
    %100 = vmatpush1.bf16.msra.mxu0 0
    %101 = vmatprep.subr.bf16.mxu0 0
    %102 = vmatpush1.bf16.msra.mxu0 0
    %103 = vmatprep.subr.bf16.mxu0 0
    %104 = vmatpush1.bf16.msra.mxu0 0
    %105 = vmatprep.subr.bf16.mxu0 0
    %106 = vmatpush1.bf16.msra.mxu0 0
    %107 = vmatprep.subr.bf16.mxu0 0
    %108 = vmatpush1.bf16.msra.mxu0 0
    %109 = vmatprep.subr.bf16.mxu0 0
    %110 = vmatpush1.bf16.msra.mxu0 0
    %111 = vmatprep.subr.bf16.mxu0 0
    %112 = vmatpush1.bf16.msra.mxu0 0
    %113 = vmatprep.subr.bf16.mxu0 0
    %114 = vmatpush1.bf16.msra.mxu0 0
    %115 = vmatprep.subr.bf16.mxu0 0
    %116 = vmatpush1.bf16.msra.mxu0 0
    %117 = vmatprep.subr.bf16.mxu0 0
    %118 = vmatpush1.bf16.msra.mxu0 0
    %119 = vmatprep.subr.bf16.mxu0 0
    %120 = vmatpush1.bf16.msra.mxu0 0
    %121 = vmatprep.subr.bf16.mxu0 0
    %122 = vmatpush1.bf16.msra.mxu0 0
    %123 = vmatprep.subr.bf16.mxu0 0
    %124 = vmatpush1.bf16.msra.mxu0 0
    %125 = vmatprep.subr.bf16.mxu0 0
    %126 = vmatpush1.bf16.msra.mxu0 0
    %127 = vmatprep.mubr.bf16.mxu0 0
    %128 = vmatmul.mubr.bf16.gmra.mrb[0].mxu0 %v90
    %v129 = vpop.f32.mrb[0].mxu0
    %v130 = vadd.f32 %v61, %v129
    %v131 = vpop.f32.mrb[0].mxu0
    %v132 = vadd.f32 %v65, %v131
    %v133 = vpop.f32.mrb[0].mxu0
    %v134 = vadd.f32 %v61, %v133
    %v135 = vpop.f32.mrb[0].mxu0
    %v136 = vadd.f32 %v65, %v135
    %137 = vmatprep.mubr.bf16.mxu0 0
    %138 = vmatmul.mubr.bf16.gmra.mrb[0].mxu0 %v93
    %v139 = vpop.f32.mrb[0].mxu0
    %v140 = vadd.f32 %v61, %v139
    %v141 = vpop.f32.mrb[0].mxu0
    %v142 = vadd.f32 %v65, %v141
    %v143 = vpop.f32.mrb[0].mxu0
    %v144 = vadd.f32 %v61, %v143
    %v145 = vpop.f32.mrb[0].mxu0
    %v146 = vadd.f32 %v65, %v145
    %147 = vdwg.mxu0
    %v148 = vld [vmem:[%s3] sm:$0xf]
    %v149 = vld [vmem:[%s3 + $0x4] sm:$0xf]
    %v150 = vld [vmem:[%s3 + $0x8] sm:$0xf]
    %v151 = vld [vmem:[%s3 + $0xc] sm:$0xf]
    %v152 = vpack.c.bf16 %v34, %v34
    %s153 = scalar_lea.vmem %s8, 1
    %v154 = vld [vmem:[%s153] ss:$8 sm:$0x3]
    %v156 = vlaneseq
    %v157 = vshrl.u32 %v156, 7
    %v158 = vsub.s32 0, %v157
    %v159 = vrot.slane %v154, %v158
    %v165 = vunpack.c.l.b16 %v148
    %v166 = vunpack.c.l.b16 %v149
    %v167 = vunpack.c.l.b16 %v150
    %v168 = vunpack.c.l.b16 %v151
    %v169 = vpack.c.b16 %v166, %v165
    %v170 = vpack.c.b16 %v168, %v167
    %v174 = vsel %vm88, %v152, 0
    %176 = vmatprep.subr.bf16.mxu0 0
    %177 = vmatpush1.bf16.msra.mxu0 %v169
    %178 = vmatprep.subr.bf16.mxu0 0
    %179 = vmatpush1.bf16.msra.mxu0 %v170
    %180 = vmatprep.subr.bf16.mxu0 0
    %181 = vmatpush1.bf16.msra.mxu0 0
    %182 = vmatprep.subr.bf16.mxu0 0
    %183 = vmatpush1.bf16.msra.mxu0 0
    %184 = vmatprep.subr.bf16.mxu0 0
    %185 = vmatpush1.bf16.msra.mxu0 0
    %186 = vmatprep.subr.bf16.mxu0 0
    %187 = vmatpush1.bf16.msra.mxu0 0
    %188 = vmatprep.subr.bf16.mxu0 0
    %189 = vmatpush1.bf16.msra.mxu0 0
    %190 = vmatprep.subr.bf16.mxu0 0
    %191 = vmatpush1.bf16.msra.mxu0 0
    %192 = vmatprep.subr.bf16.mxu0 0
    %193 = vmatpush1.bf16.msra.mxu0 0
    %194 = vmatprep.subr.bf16.mxu0 0
    %195 = vmatpush1.bf16.msra.mxu0 0
    %196 = vmatprep.subr.bf16.mxu0 0
    %197 = vmatpush1.bf16.msra.mxu0 0
    %198 = vmatprep.subr.bf16.mxu0 0
    %199 = vmatpush1.bf16.msra.mxu0 0
    %200 = vmatprep.subr.bf16.mxu0 0
    %201 = vmatpush1.bf16.msra.mxu0 0
    %202 = vmatprep.subr.bf16.mxu0 0
    %203 = vmatpush1.bf16.msra.mxu0 0
    %204 = vmatprep.subr.bf16.mxu0 0
    %205 = vmatpush1.bf16.msra.mxu0 0
    %206 = vmatprep.subr.bf16.mxu0 0
    %207 = vmatpush1.bf16.msra.mxu0 0
    %208 = vmatprep.mubr.bf16.mxu0 0
    %209 = vmatmul.mubr.bf16.gmra.mrb[0].mxu0 %v174
    %v210 = vpop.f32.mrb[0].mxu0
    %v211 = vadd.f32 %v159, %v210
    %v212 = vpop.f32.mrb[0].mxu0
    %v213 = vpop.f32.mrb[0].mxu0
    %v214 = vpop.f32.mrb[0].mxu0
    %215 = vdwg.mxu0
    %v216 = vadd.f32 %v34, %v211
    %s217 = scalar_lea.vmem %s8, 5
    %v218 = vld [vmem:[%s217] ss:$8 sm:$0x3]
    %s219 = scalar_lea.vmem %s8, 6
    %v220 = vld [vmem:[%s219] ss:$8 sm:$0x3]
    %vm221 = vcmask 254976
    %v222 = vsel %vm221, %v216, 0.0
    %223 = vadd.xlane.f32.xlu0 %v222
    %v224 = vpop.xlane.xlu0 %223
    %v225 = vrcp.pop 32.0
    %v226 = vmul.f32 %v224, %v225
    %v227 = vsub.f32 %v216, %v226
    %v228 = vmul.f32 %v227, %v227
    %v229 = vsel %vm221, %v228, 0.0
    %230 = vadd.xlane.f32.xlu0 %v229
    %v231 = vpop.xlane.xlu0 %230
    %v232 = vmul.f32 %v231, %v225
    %v233 = vadd.f32 %v232, 1e-05
    %v234 = vrsqrt.pop %v233
    %v235 = vmul.f32 %v227, %v234
    %v237 = vlaneseq
    %v238 = vshrl.u32 %v237, 7
    %v239 = vsub.s32 0, %v238
    %v240 = vrot.slane %v218, %v239
    %v242 = vmul.f32 %v235, %v240
    %v244 = vlaneseq
    %v245 = vshrl.u32 %v244, 7
    %v246 = vsub.s32 0, %v245
    %v247 = vrot.slane %v220, %v246
    %v249 = vadd.f32 %v242, %v247
    %s250 = scalar_lea.vmem %s3, 48
    %v251 = vld [vmem:[%s250] sm:$0xf]
    %v252 = vld [vmem:[%s250 + $0x4] sm:$0xf]
    %v253 = vld [vmem:[%s250 + $0x8] sm:$0xf]
    %v254 = vld [vmem:[%s250 + $0xc] sm:$0xf]
    %v255 = vpack.c.bf16 %v249, %v249
    %s256 = scalar_lea.vmem %s8, 2
    %v257 = vld [vmem:[%s256] ss:$8 sm:$0x3]
    %v259 = vlaneseq
    %v260 = vshrl.u32 %v259, 7
    %v261 = vsub.s32 0, %v260
    %v262 = vrot.slane %v257, %v261
    %v268 = vunpack.c.l.b16 %v251
    %v269 = vunpack.c.l.b16 %v252
    %v270 = vunpack.c.l.b16 %v253
    %v271 = vunpack.c.l.b16 %v254
    %v272 = vpack.c.b16 %v269, %v268
    %v273 = vpack.c.b16 %v271, %v270
    %v277 = vsel %vm88, %v255, 0
    %279 = vmatprep.subr.bf16.mxu0 0
    %280 = vmatpush1.bf16.msra.mxu0 %v272
    %281 = vmatprep.subr.bf16.mxu0 0
    %282 = vmatpush1.bf16.msra.mxu0 %v273
    %283 = vmatprep.subr.bf16.mxu0 0
    %284 = vmatpush1.bf16.msra.mxu0 0
    %285 = vmatprep.subr.bf16.mxu0 0
    %286 = vmatpush1.bf16.msra.mxu0 0
    %287 = vmatprep.subr.bf16.mxu0 0
    %288 = vmatpush1.bf16.msra.mxu0 0
    %289 = vmatprep.subr.bf16.mxu0 0
    %290 = vmatpush1.bf16.msra.mxu0 0
    %291 = vmatprep.subr.bf16.mxu0 0
    %292 = vmatpush1.bf16.msra.mxu0 0
    %293 = vmatprep.subr.bf16.mxu0 0
    %294 = vmatpush1.bf16.msra.mxu0 0
    %295 = vmatprep.subr.bf16.mxu0 0
    %296 = vmatpush1.bf16.msra.mxu0 0
    %297 = vmatprep.subr.bf16.mxu0 0
    %298 = vmatpush1.bf16.msra.mxu0 0
    %299 = vmatprep.subr.bf16.mxu0 0
    %300 = vmatpush1.bf16.msra.mxu0 0
    %301 = vmatprep.subr.bf16.mxu0 0
    %302 = vmatpush1.bf16.msra.mxu0 0
    %303 = vmatprep.subr.bf16.mxu0 0
    %304 = vmatpush1.bf16.msra.mxu0 0
    %305 = vmatprep.subr.bf16.mxu0 0
    %306 = vmatpush1.bf16.msra.mxu0 0
    %307 = vmatprep.subr.bf16.mxu0 0
    %308 = vmatpush1.bf16.msra.mxu0 0
    %309 = vmatprep.subr.bf16.mxu0 0
    %310 = vmatpush1.bf16.msra.mxu0 0
    %311 = vmatprep.mubr.bf16.mxu0 0
    %312 = vmatmul.mubr.bf16.gmra.mrb[0].mxu0 %v277
    %v313 = vpop.f32.mrb[0].mxu0
    %v314 = vadd.f32 %v262, %v313
    %v315 = vpop.f32.mrb[0].mxu0
    %v316 = vpop.f32.mrb[0].mxu0
    %v317 = vpop.f32.mrb[0].mxu0
    %318 = vdwg.mxu0
    %v319 = vmul.f32 %v314, 0.35355338
    %v322 = vunpack.c.l.s4 1966171168
    %v323 = vunpack.c.0.s8 %v322
    %v324 = vlaneseq
    %v325 = vshrl.u32 %v324, 7
    %v326 = vsub.s32 %v323, %v325
    %v327 = vrot.slane %v319, %v326
    %v328 = vcombine.high %v327, %v327
    %v330 = vunpack.c.l.s4 1966171168
    %v331 = vunpack.c.0.s8 %v330
    %v332 = vlaneseq
    %v333 = vshrl.u32 %v332, 7
    %v334 = vsub.s32 %v331, %v333
    %v335 = vrot.slane %v327, %v334
    %v337 = vunpack.c.l.s4 1966171168
    %v338 = vunpack.c.0.s8 %v337
    %v339 = vlaneseq
    %v340 = vshrl.u32 %v339, 7
    %v341 = vsub.s32 %v338, %v340
    %v342 = vrot.slane %v328, %v341
    %v343 = vlaneseq
    %v344 = vshrl.u32 %v343, 7
    %v345 = vsub.s32 0, %v344
    %v346 = vrot.slane %v335, %v345
    %v347 = vlaneseq
    %v348 = vshrl.u32 %v347, 7
    %v349 = vsub.s32 0, %v348
    %v350 = vrot.slane %v342, %v349
    %v353 = vmul.f32 %v346, %v130
    %v354 = vmul.f32 %v346, %v134
    %v355 = vmul.f32 %v350, %v140
    %v356 = vmul.f32 %v350, %v144
    %v357 = vpack.c.bf16 %v354, %v353
    %v358 = vpack.c.bf16 %v356, %v355
    %v363 = vunpack.c.l.b16 %v46
    %v364 = vunpack.c.l.b16 %v47
    %v365 = vunpack.c.l.b16 %v48
    %v366 = vunpack.c.l.b16 %v49
    %v367 = vpack.c.b16 %v364, %v363
    %v368 = vpack.c.b16 %v366, %v365
    %v372 = vsel %vm88, %v357, 0
    %v375 = vsel %vm88, %v358, 0
    %377 = vmatprep.subr.bf16.mxu0 0
    %378 = vmatpush1.bf16.msra.mxu0 %v367
    %379 = vmatprep.subr.bf16.mxu0 0
    %380 = vmatpush1.bf16.msra.mxu0 %v368
    %381 = vmatprep.subr.bf16.mxu0 0
    %382 = vmatpush1.bf16.msra.mxu0 0
    %383 = vmatprep.subr.bf16.mxu0 0
    %384 = vmatpush1.bf16.msra.mxu0 0
    %385 = vmatprep.subr.bf16.mxu0 0
    %386 = vmatpush1.bf16.msra.mxu0 0
    %387 = vmatprep.subr.bf16.mxu0 0
    %388 = vmatpush1.bf16.msra.mxu0 0
    %389 = vmatprep.subr.bf16.mxu0 0
    %390 = vmatpush1.bf16.msra.mxu0 0
    %391 = vmatprep.subr.bf16.mxu0 0
    %392 = vmatpush1.bf16.msra.mxu0 0
    %393 = vmatprep.subr.bf16.mxu0 0
    %394 = vmatpush1.bf16.msra.mxu0 0
    %395 = vmatprep.subr.bf16.mxu0 0
    %396 = vmatpush1.bf16.msra.mxu0 0
    %397 = vmatprep.subr.bf16.mxu0 0
    %398 = vmatpush1.bf16.msra.mxu0 0
    %399 = vmatprep.subr.bf16.mxu0 0
    %400 = vmatpush1.bf16.msra.mxu0 0
    %401 = vmatprep.subr.bf16.mxu0 0
    %402 = vmatpush1.bf16.msra.mxu0 0
    %403 = vmatprep.subr.bf16.mxu0 0
    %404 = vmatpush1.bf16.msra.mxu0 0
    %405 = vmatprep.subr.bf16.mxu0 0
    %406 = vmatpush1.bf16.msra.mxu0 0
    %407 = vmatprep.subr.bf16.mxu0 0
    %408 = vmatpush1.bf16.msra.mxu0 0
    %409 = vmatprep.mubr.bf16.mxu0 0
    %410 = vmatmul.mubr.bf16.gmra.mrb[0].mxu0 %v372
    %v411 = vpop.f32.mrb[0].mxu0
    %v412 = vadd.f32 %v41, %v411
    %v413 = vpop.f32.mrb[0].mxu0
    %v414 = vpop.f32.mrb[0].mxu0
    %v415 = vadd.f32 %v42, %v414
    %v416 = vpop.f32.mrb[0].mxu0
    %417 = vmatprep.mubr.bf16.mxu0 0
    %418 = vmatmul.mubr.bf16.gmra.mrb[0].mxu0 %v375
    %v419 = vpop.f32.mrb[0].mxu0
    %v420 = vadd.f32 %v43, %v419
    %v421 = vpop.f32.mrb[0].mxu0
    %v422 = vpop.f32.mrb[0].mxu0
    %v423 = vadd.f32 %v44, %v422
    %v424 = vpop.f32.mrb[0].mxu0
    %425 = vdwg.mxu0
    %vm426 = vcmask 31744
    %v427 = vsel %vm426, %v412, -inf
    %v428 = vsel %vm426, %v415, -inf
    %v429 = vmax.f32 %v427, %v428
    %v430 = vrot.slane %v429, 4
    %v431 = vmax.f32 %v429, %v430
    %v432 = vrot.slane %v431, 2
    %v433 = vmax.f32 %v431, %v432
    %v434 = vrot.slane %v433, 1
    %v435 = vmax.f32 %v433, %v434
    %v436 = vsel %vm426, %v420, -inf
    %v437 = vsel %vm426, %v423, -inf
    %v438 = vmax.f32 %v436, %v437
    %v439 = vrot.slane %v438, 4
    %v440 = vmax.f32 %v438, %v439
    %v441 = vrot.slane %v440, 2
    %v442 = vmax.f32 %v440, %v441
    %v443 = vrot.slane %v442, 1
    %v444 = vmax.f32 %v442, %v443
    %v445 = vsub.f32 %v412, %v435
    %v446 = vsub.f32 %v415, %v435
    %v447 = vsub.f32 %v420, %v444
    %v448 = vsub.f32 %v423, %v444
    %v449 = vmul.f32 %v445, 1.442695
    %v450 = vpow.pop %v449
    %v451 = vmul.f32 %v446, 1.442695
    %v452 = vpow.pop %v451
    %v453 = vmul.f32 %v447, 1.442695
    %v454 = vpow.pop %v453
    %v455 = vmul.f32 %v448, 1.442695
    %v456 = vpow.pop %v455
    %v457 = vsel %vm426, %v450, 0.0
    %v458 = vsel %vm426, %v452, 0.0
    %v459 = vadd.f32 %v457, %v458
    %v460 = vrot.slane %v459, 4
    %v461 = vadd.f32 %v459, %v460
    %v462 = vrot.slane %v461, 2
    %v463 = vadd.f32 %v461, %v462
    %v464 = vrot.slane %v463, 1
    %v465 = vadd.f32 %v463, %v464
    %v466 = vsel %vm426, %v454, 0.0
    %v467 = vsel %vm426, %v456, 0.0
    %v468 = vadd.f32 %v466, %v467
    %v469 = vrot.slane %v468, 4
    %v470 = vadd.f32 %v468, %v469
    %v471 = vrot.slane %v470, 2
    %v472 = vadd.f32 %v470, %v471
    %v473 = vrot.slane %v472, 1
    %v474 = vadd.f32 %v472, %v473
    %v475 = vrcp.pop %v465
    %v476 = vrcp.pop %v474
    %v477 = vmul.f32 %v450, %v475
    %v478 = vmul.f32 %v452, %v475
    %v479 = vmul.f32 %v454, %v476
    %v480 = vmul.f32 %v456, %v476
    %v481 = vpack.c.bf16 %v478, %v477
    %v482 = vpack.c.bf16 %v480, %v479
    %v484 = vsel %vm426, %v481, 0
    %v487 = vsel %vm426, %v482, 0
    %vm489 = vcmask 1041408
    %v491 = vsel %vm489, %v51, 0
    %493 = vmatprep.subr.bf16.mxu0 0
    %494 = vmatpush1.bf16.msra.mxu0 %v491
    %495 = vmatprep.subr.bf16.mxu0 0
    %496 = vmatpush1.bf16.msra.mxu0 0
    %497 = vmatprep.subr.bf16.mxu0 0
    %498 = vmatpush1.bf16.msra.mxu0 0
    %499 = vmatprep.subr.bf16.mxu0 0
    %500 = vmatpush1.bf16.msra.mxu0 0
    %501 = vmatprep.subr.bf16.mxu0 0
    %502 = vmatpush1.bf16.msra.mxu0 0
    %503 = vmatprep.subr.bf16.mxu0 0
    %504 = vmatpush1.bf16.msra.mxu0 0
    %505 = vmatprep.subr.bf16.mxu0 0
    %506 = vmatpush1.bf16.msra.mxu0 0
    %507 = vmatprep.subr.bf16.mxu0 0
    %508 = vmatpush1.bf16.msra.mxu0 0
    %509 = vmatprep.subr.bf16.mxu0 0
    %510 = vmatpush1.bf16.msra.mxu0 0
    %511 = vmatprep.subr.bf16.mxu0 0
    %512 = vmatpush1.bf16.msra.mxu0 0
    %513 = vmatprep.subr.bf16.mxu0 0
    %514 = vmatpush1.bf16.msra.mxu0 0
    %515 = vmatprep.subr.bf16.mxu0 0
    %516 = vmatpush1.bf16.msra.mxu0 0
    %517 = vmatprep.subr.bf16.mxu0 0
    %518 = vmatpush1.bf16.msra.mxu0 0
    %519 = vmatprep.subr.bf16.mxu0 0
    %520 = vmatpush1.bf16.msra.mxu0 0
    %521 = vmatprep.subr.bf16.mxu0 0
    %522 = vmatpush1.bf16.msra.mxu0 0
    %523 = vmatprep.subr.bf16.mxu0 0
    %524 = vmatpush1.bf16.msra.mxu0 0
    %525 = vmatprep.mubr.bf16.mxu0 0
    %526 = vmatmul.mubr.bf16.gmra.mrb[0].mxu0 %v484
    %v527 = vpop.f32.mrb[0].mxu0
    %v528 = vadd.f32 0.0, %v527
    %v529 = vpop.f32.mrb[0].mxu0
    %v530 = vpop.f32.mrb[0].mxu0
    %v531 = vadd.f32 0.0, %v530
    %v532 = vpop.f32.mrb[0].mxu0
    %533 = vmatprep.mubr.bf16.mxu0 0
    %534 = vmatmul.mubr.bf16.gmra.mrb[0].mxu0 %v487
    %v535 = vpop.f32.mrb[0].mxu0
    %v536 = vadd.f32 0.0, %v535
    %v537 = vpop.f32.mrb[0].mxu0
    %v538 = vpop.f32.mrb[0].mxu0
    %v539 = vadd.f32 0.0, %v538
    %v540 = vpop.f32.mrb[0].mxu0
    %541 = vdwg.mxu0
    %546 = vrot.lane.b32.xlu0 %v130, 96
    %v547 = vpop.permute.xlu0 %546
    %548 = vrot.lane.b32.xlu0 %v134, 96
    %v549 = vpop.permute.xlu0 %548
    %550 = vrot.lane.b32.xlu0 %v140, 96
    %v551 = vpop.permute.xlu0 %550
    %552 = vrot.lane.b32.xlu0 %v144, 96
    %v553 = vpop.permute.xlu0 %552
    %v558 = vmul.f32 %v528, %v547
    %v559 = vmul.f32 %v531, %v549
    %v560 = vmul.f32 %v536, %v551
    %v561 = vmul.f32 %v539, %v553
    %v562 = vsel %vm88, %v558, 0.0
    %v563 = vsel %vm88, %v559, 0.0
    %v564 = vadd.f32 %v562, %v563
    %v565 = vrot.slane %v564, 4
    %v566 = vadd.f32 %v564, %v565
    %v567 = vrot.slane %v566, 2
    %v568 = vadd.f32 %v566, %v567
    %v569 = vrot.slane %v568, 1
    %v570 = vadd.f32 %v568, %v569
    %v571 = vsel %vm88, %v560, 0.0
    %v572 = vsel %vm88, %v561, 0.0
    %v573 = vadd.f32 %v571, %v572
    %v574 = vrot.slane %v573, 4
    %v575 = vadd.f32 %v573, %v574
    %v576 = vrot.slane %v575, 2
    %v577 = vadd.f32 %v575, %v576
    %v578 = vrot.slane %v577, 1
    %v579 = vadd.f32 %v577, %v578
    %s580 = scalar_lea.vmem %s3, 96
    %v581 = vld [vmem:[%s580] sm:$0xf]
    %v582 = vld [vmem:[%s580 + $0x4] sm:$0xf]
    %v583 = vld [vmem:[%s580 + $0x8] sm:$0xf]
    %v584 = vld [vmem:[%s580 + $0xc] sm:$0xf]
    %v585 = vpack.c.bf16 %v570, %v570
    %v586 = vpack.c.bf16 %v579, %v579
    %s587 = scalar_lea.vmem %s8, 3
    %v588 = vld [vmem:[%s587] ss:$8 sm:$0x3]
    %v590 = vlaneseq
    %v591 = vshrl.u32 %v590, 7
    %v592 = vsub.s32 0, %v591
    %v593 = vrot.slane %v588, %v592
    %v597 = vunpack.c.l.b16 %v585
    %v598 = vunpack.c.l.b16 %v586
    %vm599 = vcmask 1041409
    %v600 = vsel %vm599, %v598, %v597
    %v601 = vpack.c.b16 %v600, %v600
    %v606 = vunpack.c.l.b16 %v581
    %v607 = vunpack.c.l.b16 %v582
    %v608 = vunpack.c.l.b16 %v583
    %v609 = vunpack.c.l.b16 %v584
    %v610 = vpack.c.b16 %v607, %v606
    %v611 = vpack.c.b16 %v609, %v608
    %v615 = vsel %vm88, %v601, 0
    %617 = vmatprep.subr.bf16.mxu0 0
    %618 = vmatpush1.bf16.msra.mxu0 %v610
    %619 = vmatprep.subr.bf16.mxu0 0
    %620 = vmatpush1.bf16.msra.mxu0 %v611
    %621 = vmatprep.subr.bf16.mxu0 0
    %622 = vmatpush1.bf16.msra.mxu0 0
    %623 = vmatprep.subr.bf16.mxu0 0
    %624 = vmatpush1.bf16.msra.mxu0 0
    %625 = vmatprep.subr.bf16.mxu0 0
    %626 = vmatpush1.bf16.msra.mxu0 0
    %627 = vmatprep.subr.bf16.mxu0 0
    %628 = vmatpush1.bf16.msra.mxu0 0
    %629 = vmatprep.subr.bf16.mxu0 0
    %630 = vmatpush1.bf16.msra.mxu0 0
    %631 = vmatprep.subr.bf16.mxu0 0
    %632 = vmatpush1.bf16.msra.mxu0 0
    %633 = vmatprep.subr.bf16.mxu0 0
    %634 = vmatpush1.bf16.msra.mxu0 0
    %635 = vmatprep.subr.bf16.mxu0 0
    %636 = vmatpush1.bf16.msra.mxu0 0
    %637 = vmatprep.subr.bf16.mxu0 0
    %638 = vmatpush1.bf16.msra.mxu0 0
    %639 = vmatprep.subr.bf16.mxu0 0
    %640 = vmatpush1.bf16.msra.mxu0 0
    %641 = vmatprep.subr.bf16.mxu0 0
    %642 = vmatpush1.bf16.msra.mxu0 0
    %643 = vmatprep.subr.bf16.mxu0 0
    %644 = vmatpush1.bf16.msra.mxu0 0
    %645 = vmatprep.subr.bf16.mxu0 0
    %646 = vmatpush1.bf16.msra.mxu0 0
    %647 = vmatprep.subr.bf16.mxu0 0
    %648 = vmatpush1.bf16.msra.mxu0 0
    %649 = vmatprep.mubr.bf16.mxu0 0
    %650 = vmatmul.mubr.bf16.gmra.mrb[0].mxu0 %v615
    %v651 = vpop.f32.mrb[0].mxu0
    %v652 = vadd.f32 %v593, %v651
    %v653 = vpop.f32.mrb[0].mxu0
    %v654 = vpop.f32.mrb[0].mxu0
    %v655 = vpop.f32.mrb[0].mxu0
    %656 = vdwg.mxu0
    %v657 = vadd.f32 %v249, %v652
    %s658 = scalar_lea.vmem %s8, 7
    %v659 = vld [vmem:[%s658] ss:$8 sm:$0x3]
    %s660 = scalar_lea.vmem %s8, 16
    %v661 = vld [vmem:[%s660] ss:$8 sm:$0x3]
    %v662 = vsel %vm221, %v657, 0.0
    %663 = vadd.xlane.f32.xlu0 %v662
    %v664 = vpop.xlane.xlu0 %663
    %v665 = vmul.f32 %v664, %v225
    %v666 = vsub.f32 %v657, %v665
    %v667 = vmul.f32 %v666, %v666
    %v668 = vsel %vm221, %v667, 0.0
    %669 = vadd.xlane.f32.xlu0 %v668
    %v670 = vpop.xlane.xlu0 %669
    %v671 = vmul.f32 %v670, %v225
    %v672 = vadd.f32 %v671, 1e-05
    %v673 = vrsqrt.pop %v672
    %v674 = vmul.f32 %v666, %v673
    %v676 = vlaneseq
    %v677 = vshrl.u32 %v676, 7
    %v678 = vsub.s32 0, %v677
    %v679 = vrot.slane %v659, %v678
    %v681 = vmul.f32 %v674, %v679
    %v683 = vlaneseq
    %v684 = vshrl.u32 %v683, 7
    %v685 = vsub.s32 0, %v684
    %v686 = vrot.slane %v661, %v685
    %v688 = vadd.f32 %v681, %v686
    %v689 = vld [vmem:[%s5] sm:$0xff]
    %v690 = vld [vmem:[%s5 + $0x8] sm:$0xff]
    %v691 = vld [vmem:[%s5 + $0x10] sm:$0xff]
    %v692 = vld [vmem:[%s5 + $0x18] sm:$0xff]
    %v693 = vld [vmem:[%s5 + $0x20] sm:$0xff]
    %v694 = vld [vmem:[%s5 + $0x28] sm:$0xff]
    %v695 = vld [vmem:[%s5 + $0x30] sm:$0xff]
    %v696 = vld [vmem:[%s5 + $0x38] sm:$0xff]
    %v697 = vld [vmem:[%s5 + $0x40] sm:$0xff]
    %v698 = vld [vmem:[%s5 + $0x48] sm:$0xff]
    %v699 = vld [vmem:[%s5 + $0x50] sm:$0xff]
    %v700 = vld [vmem:[%s5 + $0x58] sm:$0xff]
    %v701 = vld [vmem:[%s5 + $0x60] sm:$0xff]
    %v702 = vld [vmem:[%s5 + $0x68] sm:$0xff]
    %v703 = vld [vmem:[%s5 + $0x70] sm:$0xff]
    %v704 = vld [vmem:[%s5 + $0x78] sm:$0xff]
    %v705 = vld [vmem:[%s5 + $0x80] sm:$0xff]
    %v706 = vld [vmem:[%s5 + $0x88] sm:$0xff]
    %v707 = vld [vmem:[%s5 + $0x90] sm:$0xff]
    %v708 = vld [vmem:[%s5 + $0x98] sm:$0xff]
    %v709 = vld [vmem:[%s5 + $0xa0] sm:$0xff]
    %v710 = vld [vmem:[%s5 + $0xa8] sm:$0xff]
    %v711 = vld [vmem:[%s5 + $0xb0] sm:$0xff]
    %v712 = vld [vmem:[%s5 + $0xb8] sm:$0xff]
    %v713 = vld [vmem:[%s5 + $0xc0] sm:$0xff]
    %v714 = vld [vmem:[%s5 + $0xc8] sm:$0xff]
    %v715 = vld [vmem:[%s5 + $0xd0] sm:$0xff]
    %v716 = vld [vmem:[%s5 + $0xd8] sm:$0xff]
    %v717 = vld [vmem:[%s5 + $0xe0] sm:$0xff]
    %v718 = vld [vmem:[%s5 + $0xe8] sm:$0xff]
    %v719 = vld [vmem:[%s5 + $0xf0] sm:$0xff]
    %v720 = vld [vmem:[%s5 + $0xf8] sm:$0xff]
    %v721 = vpack.c.bf16 %v688, %v688
    %v722 = vld [vmem:[%s7] ss:$4 sm:$0xff]
    %s723 = scalar_lea.vmem %s7, 32
    %v724 = vld [vmem:[%s723] ss:$4 sm:$0xff]
    %v727 = vlaneseq
    %v728 = vshrl.u32 %v727, 7
    %v729 = vsub.s32 0, %v728
    %v730 = vrot.slane %v722, %v729
    %v731 = vlaneseq
    %v732 = vshrl.u32 %v731, 7
    %v733 = vsub.s32 1, %v732
    %v734 = vrot.slane %v722, %v733
    %v735 = vlaneseq
    %v736 = vshrl.u32 %v735, 7
    %v737 = vsub.s32 2, %v736
    %v738 = vrot.slane %v722, %v737
    %v739 = vlaneseq
    %v740 = vshrl.u32 %v739, 7
    %v741 = vsub.s32 3, %v740
    %v742 = vrot.slane %v722, %v741
    %v743 = vlaneseq
    %v744 = vshrl.u32 %v743, 7
    %v745 = vsub.s32 4, %v744
    %v746 = vrot.slane %v722, %v745
    %v747 = vlaneseq
    %v748 = vshrl.u32 %v747, 7
    %v749 = vsub.s32 5, %v748
    %v750 = vrot.slane %v722, %v749
    %v751 = vlaneseq
    %v752 = vshrl.u32 %v751, 7
    %v753 = vsub.s32 6, %v752
    %v754 = vrot.slane %v722, %v753
    %v755 = vlaneseq
    %v756 = vshrl.u32 %v755, 7
    %v757 = vsub.s32 7, %v756
    %v758 = vrot.slane %v722, %v757
    %v759 = vlaneseq
    %v760 = vshrl.u32 %v759, 7
    %v761 = vsub.s32 0, %v760
    %v762 = vrot.slane %v724, %v761
    %v763 = vlaneseq
    %v764 = vshrl.u32 %v763, 7
    %v765 = vsub.s32 1, %v764
    %v766 = vrot.slane %v724, %v765
    %v767 = vlaneseq
    %v768 = vshrl.u32 %v767, 7
    %v769 = vsub.s32 2, %v768
    %v770 = vrot.slane %v724, %v769
    %v771 = vlaneseq
    %v772 = vshrl.u32 %v771, 7
    %v773 = vsub.s32 3, %v772
    %v774 = vrot.slane %v724, %v773
    %v775 = vlaneseq
    %v776 = vshrl.u32 %v775, 7
    %v777 = vsub.s32 4, %v776
    %v778 = vrot.slane %v724, %v777
    %v779 = vlaneseq
    %v780 = vshrl.u32 %v779, 7
    %v781 = vsub.s32 5, %v780
    %v782 = vrot.slane %v724, %v781
    %v783 = vlaneseq
    %v784 = vshrl.u32 %v783, 7
    %v785 = vsub.s32 6, %v784
    %v786 = vrot.slane %v724, %v785
    %v787 = vlaneseq
    %v788 = vshrl.u32 %v787, 7
    %v789 = vsub.s32 7, %v788
    %v790 = vrot.slane %v724, %v789
    %v839 = vunpack.c.l.b16 %v689
    %v840 = vunpack.c.h.b16 %v689
    %v841 = vunpack.c.l.b16 %v690
    %v842 = vunpack.c.h.b16 %v690
    %v843 = vunpack.c.l.b16 %v691
    %v844 = vunpack.c.h.b16 %v691
    %v845 = vunpack.c.l.b16 %v692
    %v846 = vunpack.c.h.b16 %v692
    %v847 = vunpack.c.l.b16 %v693
    %v848 = vunpack.c.h.b16 %v693
    %v849 = vunpack.c.l.b16 %v694
    %v850 = vunpack.c.h.b16 %v694
    %v851 = vunpack.c.l.b16 %v695
    %v852 = vunpack.c.h.b16 %v695
    %v853 = vunpack.c.l.b16 %v696
    %v854 = vunpack.c.h.b16 %v696
    %v855 = vunpack.c.l.b16 %v697
    %v856 = vunpack.c.h.b16 %v697
    %v857 = vunpack.c.l.b16 %v698
    %v858 = vunpack.c.h.b16 %v698
    %v859 = vunpack.c.l.b16 %v699
    %v860 = vunpack.c.h.b16 %v699
    %v861 = vunpack.c.l.b16 %v700
    %v862 = vunpack.c.h.b16 %v700
    %v863 = vunpack.c.l.b16 %v701
    %v864 = vunpack.c.h.b16 %v701
    %v865 = vunpack.c.l.b16 %v702
    %v866 = vunpack.c.h.b16 %v702
    %v867 = vunpack.c.l.b16 %v703
    %v868 = vunpack.c.h.b16 %v703
    %v869 = vunpack.c.l.b16 %v704
    %v870 = vunpack.c.h.b16 %v704
    %v871 = vunpack.c.l.b16 %v705
    %v872 = vunpack.c.h.b16 %v705
    %v873 = vunpack.c.l.b16 %v706
    %v874 = vunpack.c.h.b16 %v706
    %v875 = vunpack.c.l.b16 %v707
    %v876 = vunpack.c.h.b16 %v707
    %v877 = vunpack.c.l.b16 %v708
    %v878 = vunpack.c.h.b16 %v708
    %v879 = vunpack.c.l.b16 %v709
    %v880 = vunpack.c.h.b16 %v709
    %v881 = vunpack.c.l.b16 %v710
    %v882 = vunpack.c.h.b16 %v710
    %v883 = vunpack.c.l.b16 %v711
    %v884 = vunpack.c.h.b16 %v711
    %v885 = vunpack.c.l.b16 %v712
    %v886 = vunpack.c.h.b16 %v712
    %v887 = vunpack.c.l.b16 %v713
    %v888 = vunpack.c.h.b16 %v713
    %v889 = vunpack.c.l.b16 %v714
    %v890 = vunpack.c.h.b16 %v714
    %v891 = vunpack.c.l.b16 %v715
    %v892 = vunpack.c.h.b16 %v715
    %v893 = vunpack.c.l.b16 %v716
    %v894 = vunpack.c.h.b16 %v716
    %v895 = vunpack.c.l.b16 %v717
    %v896 = vunpack.c.h.b16 %v717
    %v897 = vunpack.c.l.b16 %v718
    %v898 = vunpack.c.h.b16 %v718
    %v899 = vunpack.c.l.b16 %v719
    %v900 = vunpack.c.h.b16 %v719
    %v901 = vunpack.c.l.b16 %v720
    %v902 = vunpack.c.h.b16 %v720
    %v903 = vpack.c.b16 %v855, %v839
    %v904 = vpack.c.b16 %v856, %v840
    %v905 = vpack.c.b16 %v857, %v841
    %v906 = vpack.c.b16 %v858, %v842
    %v907 = vpack.c.b16 %v859, %v843
    %v908 = vpack.c.b16 %v860, %v844
    %v909 = vpack.c.b16 %v861, %v845
    %v910 = vpack.c.b16 %v862, %v846
    %v911 = vpack.c.b16 %v863, %v847
    %v912 = vpack.c.b16 %v864, %v848
    %v913 = vpack.c.b16 %v865, %v849
    %v914 = vpack.c.b16 %v866, %v850
    %v915 = vpack.c.b16 %v867, %v851
    %v916 = vpack.c.b16 %v868, %v852
    %v917 = vpack.c.b16 %v869, %v853
    %v918 = vpack.c.b16 %v870, %v854
    %v919 = vpack.c.b16 %v887, %v871
    %v920 = vpack.c.b16 %v888, %v872
    %v921 = vpack.c.b16 %v889, %v873
    %v922 = vpack.c.b16 %v890, %v874
    %v923 = vpack.c.b16 %v891, %v875
    %v924 = vpack.c.b16 %v892, %v876
    %v925 = vpack.c.b16 %v893, %v877
    %v926 = vpack.c.b16 %v894, %v878
    %v927 = vpack.c.b16 %v895, %v879
    %v928 = vpack.c.b16 %v896, %v880
    %v929 = vpack.c.b16 %v897, %v881
    %v930 = vpack.c.b16 %v898, %v882
    %v931 = vpack.c.b16 %v899, %v883
    %v932 = vpack.c.b16 %v900, %v884
    %v933 = vpack.c.b16 %v901, %v885
    %v934 = vpack.c.b16 %v902, %v886
    %v968 = vsel %vm88, %v721, 0
    %970 = vmatprep.subr.bf16.mxu0 %v904
    %971 = vmatpush1.bf16.msra.mxu0 %v903
    %972 = vmatprep.subr.bf16.mxu0 %v920
    %973 = vmatpush1.bf16.msra.mxu0 %v919
    %974 = vmatprep.subr.bf16.mxu0 0
    %975 = vmatpush1.bf16.msra.mxu0 0
    %976 = vmatprep.subr.bf16.mxu0 0
    %977 = vmatpush1.bf16.msra.mxu0 0
    %978 = vmatprep.subr.bf16.mxu0 0
    %979 = vmatpush1.bf16.msra.mxu0 0
    %980 = vmatprep.subr.bf16.mxu0 0
    %981 = vmatpush1.bf16.msra.mxu0 0
    %982 = vmatprep.subr.bf16.mxu0 0
    %983 = vmatpush1.bf16.msra.mxu0 0
    %984 = vmatprep.subr.bf16.mxu0 0
    %985 = vmatpush1.bf16.msra.mxu0 0
    %986 = vmatprep.subr.bf16.mxu0 0
    %987 = vmatpush1.bf16.msra.mxu0 0
    %988 = vmatprep.subr.bf16.mxu0 0
    %989 = vmatpush1.bf16.msra.mxu0 0
    %990 = vmatprep.subr.bf16.mxu0 0
    %991 = vmatpush1.bf16.msra.mxu0 0
    %992 = vmatprep.subr.bf16.mxu0 0
    %993 = vmatpush1.bf16.msra.mxu0 0
    %994 = vmatprep.subr.bf16.mxu0 0
    %995 = vmatpush1.bf16.msra.mxu0 0
    %996 = vmatprep.subr.bf16.mxu0 0
    %997 = vmatpush1.bf16.msra.mxu0 0
    %998 = vmatprep.subr.bf16.mxu0 0
    %999 = vmatpush1.bf16.msra.mxu0 0
    %1000 = vmatprep.subr.bf16.mxu0 0
    %1001 = vmatpush1.bf16.msra.mxu0 0
    %1002 = vmatprep.mubr.bf16.mxu0 0
    %1003 = vmatmul.mubr.bf16.gmra.mrb[0].mxu0 %v968
    %v1004 = vpop.f32.mrb[0].mxu0
    %v1005 = vadd.f32 %v730, %v1004
    %v1006 = vpop.f32.mrb[0].mxu0
    %v1007 = vadd.f32 %v734, %v1006
    %v1008 = vpop.f32.mrb[0].mxu0
    %v1009 = vpop.f32.mrb[0].mxu0
    %1010 = vdwg.mxu0
    %1011 = vmatprep.subr.bf16.mxu0 %v906
    %1012 = vmatpush1.bf16.msra.mxu0 %v905
    %1013 = vmatprep.subr.bf16.mxu0 %v922
    %1014 = vmatpush1.bf16.msra.mxu0 %v921
    %1015 = vmatprep.subr.bf16.mxu0 0
    %1016 = vmatpush1.bf16.msra.mxu0 0
    %1017 = vmatprep.subr.bf16.mxu0 0
    %1018 = vmatpush1.bf16.msra.mxu0 0
    %1019 = vmatprep.subr.bf16.mxu0 0
    %1020 = vmatpush1.bf16.msra.mxu0 0
    %1021 = vmatprep.subr.bf16.mxu0 0
    %1022 = vmatpush1.bf16.msra.mxu0 0
    %1023 = vmatprep.subr.bf16.mxu0 0
    %1024 = vmatpush1.bf16.msra.mxu0 0
    %1025 = vmatprep.subr.bf16.mxu0 0
    %1026 = vmatpush1.bf16.msra.mxu0 0
    %1027 = vmatprep.subr.bf16.mxu0 0
    %1028 = vmatpush1.bf16.msra.mxu0 0
    %1029 = vmatprep.subr.bf16.mxu0 0
    %1030 = vmatpush1.bf16.msra.mxu0 0
    %1031 = vmatprep.subr.bf16.mxu0 0
    %1032 = vmatpush1.bf16.msra.mxu0 0
    %1033 = vmatprep.subr.bf16.mxu0 0
    %1034 = vmatpush1.bf16.msra.mxu0 0
    %1035 = vmatprep.subr.bf16.mxu0 0
    %1036 = vmatpush1.bf16.msra.mxu0 0
    %1037 = vmatprep.subr.bf16.mxu0 0
    %1038 = vmatpush1.bf16.msra.mxu0 0
    %1039 = vmatprep.subr.bf16.mxu0 0
    %1040 = vmatpush1.bf16.msra.mxu0 0
    %1041 = vmatprep.subr.bf16.mxu0 0
    %1042 = vmatpush1.bf16.msra.mxu0 0
    %1043 = vmatprep.mubr.bf16.mxu0 0
    %1044 = vmatmul.mubr.bf16.gmra.mrb[0].mxu0 %v968
    %v1045 = vpop.f32.mrb[0].mxu0
    %v1046 = vadd.f32 %v738, %v1045
    %v1047 = vpop.f32.mrb[0].mxu0
    %v1048 = vadd.f32 %v742, %v1047
    %v1049 = vpop.f32.mrb[0].mxu0
    %v1050 = vpop.f32.mrb[0].mxu0
    %1051 = vdwg.mxu0
    %1052 = vmatprep.subr.bf16.mxu0 %v908
    %1053 = vmatpush1.bf16.msra.mxu0 %v907
    %1054 = vmatprep.subr.bf16.mxu0 %v924
    %1055 = vmatpush1.bf16.msra.mxu0 %v923
    %1056 = vmatprep.subr.bf16.mxu0 0
    %1057 = vmatpush1.bf16.msra.mxu0 0
    %1058 = vmatprep.subr.bf16.mxu0 0
    %1059 = vmatpush1.bf16.msra.mxu0 0
    %1060 = vmatprep.subr.bf16.mxu0 0
    %1061 = vmatpush1.bf16.msra.mxu0 0
    %1062 = vmatprep.subr.bf16.mxu0 0
    %1063 = vmatpush1.bf16.msra.mxu0 0
    %1064 = vmatprep.subr.bf16.mxu0 0
    %1065 = vmatpush1.bf16.msra.mxu0 0
    %1066 = vmatprep.subr.bf16.mxu0 0
    %1067 = vmatpush1.bf16.msra.mxu0 0
    %1068 = vmatprep.subr.bf16.mxu0 0
    %1069 = vmatpush1.bf16.msra.mxu0 0
    %1070 = vmatprep.subr.bf16.mxu0 0
    %1071 = vmatpush1.bf16.msra.mxu0 0
    %1072 = vmatprep.subr.bf16.mxu0 0
    %1073 = vmatpush1.bf16.msra.mxu0 0
    %1074 = vmatprep.subr.bf16.mxu0 0
    %1075 = vmatpush1.bf16.msra.mxu0 0
    %1076 = vmatprep.subr.bf16.mxu0 0
    %1077 = vmatpush1.bf16.msra.mxu0 0
    %1078 = vmatprep.subr.bf16.mxu0 0
    %1079 = vmatpush1.bf16.msra.mxu0 0
    %1080 = vmatprep.subr.bf16.mxu0 0
    %1081 = vmatpush1.bf16.msra.mxu0 0
    %1082 = vmatprep.subr.bf16.mxu0 0
    %1083 = vmatpush1.bf16.msra.mxu0 0
    %1084 = vmatprep.mubr.bf16.mxu0 0
    %1085 = vmatmul.mubr.bf16.gmra.mrb[0].mxu0 %v968
    %v1086 = vpop.f32.mrb[0].mxu0
    %v1087 = vadd.f32 %v746, %v1086
    %v1088 = vpop.f32.mrb[0].mxu0
    %v1089 = vadd.f32 %v750, %v1088
    %v1090 = vpop.f32.mrb[0].mxu0
    %v1091 = vpop.f32.mrb[0].mxu0
    %1092 = vdwg.mxu0
    %1093 = vmatprep.subr.bf16.mxu0 %v910
    %1094 = vmatpush1.bf16.msra.mxu0 %v909
    %1095 = vmatprep.subr.bf16.mxu0 %v926
    %1096 = vmatpush1.bf16.msra.mxu0 %v925
    %1097 = vmatprep.subr.bf16.mxu0 0
    %1098 = vmatpush1.bf16.msra.mxu0 0
    %1099 = vmatprep.subr.bf16.mxu0 0
    %1100 = vmatpush1.bf16.msra.mxu0 0
    %1101 = vmatprep.subr.bf16.mxu0 0
    %1102 = vmatpush1.bf16.msra.mxu0 0
    %1103 = vmatprep.subr.bf16.mxu0 0
    %1104 = vmatpush1.bf16.msra.mxu0 0
    %1105 = vmatprep.subr.bf16.mxu0 0
    %1106 = vmatpush1.bf16.msra.mxu0 0
    %1107 = vmatprep.subr.bf16.mxu0 0
    %1108 = vmatpush1.bf16.msra.mxu0 0
    %1109 = vmatprep.subr.bf16.mxu0 0
    %1110 = vmatpush1.bf16.msra.mxu0 0
    %1111 = vmatprep.subr.bf16.mxu0 0
    %1112 = vmatpush1.bf16.msra.mxu0 0
    %1113 = vmatprep.subr.bf16.mxu0 0
    %1114 = vmatpush1.bf16.msra.mxu0 0
    %1115 = vmatprep.subr.bf16.mxu0 0
    %1116 = vmatpush1.bf16.msra.mxu0 0
    %1117 = vmatprep.subr.bf16.mxu0 0
    %1118 = vmatpush1.bf16.msra.mxu0 0
    %1119 = vmatprep.subr.bf16.mxu0 0
    %1120 = vmatpush1.bf16.msra.mxu0 0
    %1121 = vmatprep.subr.bf16.mxu0 0
    %1122 = vmatpush1.bf16.msra.mxu0 0
    %1123 = vmatprep.subr.bf16.mxu0 0
    %1124 = vmatpush1.bf16.msra.mxu0 0
    %1125 = vmatprep.mubr.bf16.mxu0 0
    %1126 = vmatmul.mubr.bf16.gmra.mrb[0].mxu0 %v968
    %v1127 = vpop.f32.mrb[0].mxu0
    %v1128 = vadd.f32 %v754, %v1127
    %v1129 = vpop.f32.mrb[0].mxu0
    %v1130 = vadd.f32 %v758, %v1129
    %v1131 = vpop.f32.mrb[0].mxu0
    %v1132 = vpop.f32.mrb[0].mxu0
    %1133 = vdwg.mxu0
    %1134 = vmatprep.subr.bf16.mxu0 %v912
    %1135 = vmatpush1.bf16.msra.mxu0 %v911
    %1136 = vmatprep.subr.bf16.mxu0 %v928
    %1137 = vmatpush1.bf16.msra.mxu0 %v927
    %1138 = vmatprep.subr.bf16.mxu0 0
    %1139 = vmatpush1.bf16.msra.mxu0 0
    %1140 = vmatprep.subr.bf16.mxu0 0
    %1141 = vmatpush1.bf16.msra.mxu0 0
    %1142 = vmatprep.subr.bf16.mxu0 0
    %1143 = vmatpush1.bf16.msra.mxu0 0
    %1144 = vmatprep.subr.bf16.mxu0 0
    %1145 = vmatpush1.bf16.msra.mxu0 0
    %1146 = vmatprep.subr.bf16.mxu0 0
    %1147 = vmatpush1.bf16.msra.mxu0 0
    %1148 = vmatprep.subr.bf16.mxu0 0
    %1149 = vmatpush1.bf16.msra.mxu0 0
    %1150 = vmatprep.subr.bf16.mxu0 0
    %1151 = vmatpush1.bf16.msra.mxu0 0
    %1152 = vmatprep.subr.bf16.mxu0 0
    %1153 = vmatpush1.bf16.msra.mxu0 0
    %1154 = vmatprep.subr.bf16.mxu0 0
    %1155 = vmatpush1.bf16.msra.mxu0 0
    %1156 = vmatprep.subr.bf16.mxu0 0
    %1157 = vmatpush1.bf16.msra.mxu0 0
    %1158 = vmatprep.subr.bf16.mxu0 0
    %1159 = vmatpush1.bf16.msra.mxu0 0
    %1160 = vmatprep.subr.bf16.mxu0 0
    %1161 = vmatpush1.bf16.msra.mxu0 0
    %1162 = vmatprep.subr.bf16.mxu0 0
    %1163 = vmatpush1.bf16.msra.mxu0 0
    %1164 = vmatprep.subr.bf16.mxu0 0
    %1165 = vmatpush1.bf16.msra.mxu0 0
    %1166 = vmatprep.mubr.bf16.mxu0 0
    %1167 = vmatmul.mubr.bf16.gmra.mrb[0].mxu0 %v968
    %v1168 = vpop.f32.mrb[0].mxu0
    %v1169 = vadd.f32 %v762, %v1168
    %v1170 = vpop.f32.mrb[0].mxu0
    %v1171 = vadd.f32 %v766, %v1170
    %v1172 = vpop.f32.mrb[0].mxu0
    %v1173 = vpop.f32.mrb[0].mxu0
    %1174 = vdwg.mxu0
    %1175 = vmatprep.subr.bf16.mxu0 %v914
    %1176 = vmatpush1.bf16.msra.mxu0 %v913
    %1177 = vmatprep.subr.bf16.mxu0 %v930
    %1178 = vmatpush1.bf16.msra.mxu0 %v929
    %1179 = vmatprep.subr.bf16.mxu0 0
    %1180 = vmatpush1.bf16.msra.mxu0 0
    %1181 = vmatprep.subr.bf16.mxu0 0
    %1182 = vmatpush1.bf16.msra.mxu0 0
    %1183 = vmatprep.subr.bf16.mxu0 0
    %1184 = vmatpush1.bf16.msra.mxu0 0
    %1185 = vmatprep.subr.bf16.mxu0 0
    %1186 = vmatpush1.bf16.msra.mxu0 0
    %1187 = vmatprep.subr.bf16.mxu0 0
    %1188 = vmatpush1.bf16.msra.mxu0 0
    %1189 = vmatprep.subr.bf16.mxu0 0
    %1190 = vmatpush1.bf16.msra.mxu0 0
    %1191 = vmatprep.subr.bf16.mxu0 0
    %1192 = vmatpush1.bf16.msra.mxu0 0
    %1193 = vmatprep.subr.bf16.mxu0 0
    %1194 = vmatpush1.bf16.msra.mxu0 0
    %1195 = vmatprep.subr.bf16.mxu0 0
    %1196 = vmatpush1.bf16.msra.mxu0 0
    %1197 = vmatprep.subr.bf16.mxu0 0
    %1198 = vmatpush1.bf16.msra.mxu0 0
    %1199 = vmatprep.subr.bf16.mxu0 0
    %1200 = vmatpush1.bf16.msra.mxu0 0
    %1201 = vmatprep.subr.bf16.mxu0 0
    %1202 = vmatpush1.bf16.msra.mxu0 0
    %1203 = vmatprep.subr.bf16.mxu0 0
    %1204 = vmatpush1.bf16.msra.mxu0 0
    %1205 = vmatprep.subr.bf16.mxu0 0
    %1206 = vmatpush1.bf16.msra.mxu0 0
    %1207 = vmatprep.mubr.bf16.mxu0 0
    %1208 = vmatmul.mubr.bf16.gmra.mrb[0].mxu0 %v968
    %v1209 = vpop.f32.mrb[0].mxu0
    %v1210 = vadd.f32 %v770, %v1209
    %v1211 = vpop.f32.mrb[0].mxu0
    %v1212 = vadd.f32 %v774, %v1211
    %v1213 = vpop.f32.mrb[0].mxu0
    %v1214 = vpop.f32.mrb[0].mxu0
    %1215 = vdwg.mxu0
    %1216 = vmatprep.subr.bf16.mxu0 %v916
    %1217 = vmatpush1.bf16.msra.mxu0 %v915
    %1218 = vmatprep.subr.bf16.mxu0 %v932
    %1219 = vmatpush1.bf16.msra.mxu0 %v931
    %1220 = vmatprep.subr.bf16.mxu0 0
    %1221 = vmatpush1.bf16.msra.mxu0 0
    %1222 = vmatprep.subr.bf16.mxu0 0
    %1223 = vmatpush1.bf16.msra.mxu0 0
    %1224 = vmatprep.subr.bf16.mxu0 0
    %1225 = vmatpush1.bf16.msra.mxu0 0
    %1226 = vmatprep.subr.bf16.mxu0 0
    %1227 = vmatpush1.bf16.msra.mxu0 0
    %1228 = vmatprep.subr.bf16.mxu0 0
    %1229 = vmatpush1.bf16.msra.mxu0 0
    %1230 = vmatprep.subr.bf16.mxu0 0
    %1231 = vmatpush1.bf16.msra.mxu0 0
    %1232 = vmatprep.subr.bf16.mxu0 0
    %1233 = vmatpush1.bf16.msra.mxu0 0
    %1234 = vmatprep.subr.bf16.mxu0 0
    %1235 = vmatpush1.bf16.msra.mxu0 0
    %1236 = vmatprep.subr.bf16.mxu0 0
    %1237 = vmatpush1.bf16.msra.mxu0 0
    %1238 = vmatprep.subr.bf16.mxu0 0
    %1239 = vmatpush1.bf16.msra.mxu0 0
    %1240 = vmatprep.subr.bf16.mxu0 0
    %1241 = vmatpush1.bf16.msra.mxu0 0
    %1242 = vmatprep.subr.bf16.mxu0 0
    %1243 = vmatpush1.bf16.msra.mxu0 0
    %1244 = vmatprep.subr.bf16.mxu0 0
    %1245 = vmatpush1.bf16.msra.mxu0 0
    %1246 = vmatprep.subr.bf16.mxu0 0
    %1247 = vmatpush1.bf16.msra.mxu0 0
    %1248 = vmatprep.mubr.bf16.mxu0 0
    %1249 = vmatmul.mubr.bf16.gmra.mrb[0].mxu0 %v968
    %v1250 = vpop.f32.mrb[0].mxu0
    %v1251 = vadd.f32 %v778, %v1250
    %v1252 = vpop.f32.mrb[0].mxu0
    %v1253 = vadd.f32 %v782, %v1252
    %v1254 = vpop.f32.mrb[0].mxu0
    %v1255 = vpop.f32.mrb[0].mxu0
    %1256 = vdwg.mxu0
    %1257 = vmatprep.subr.bf16.mxu0 %v918
    %1258 = vmatpush1.bf16.msra.mxu0 %v917
    %1259 = vmatprep.subr.bf16.mxu0 %v934
    %1260 = vmatpush1.bf16.msra.mxu0 %v933
    %1261 = vmatprep.subr.bf16.mxu0 0
    %1262 = vmatpush1.bf16.msra.mxu0 0
    %1263 = vmatprep.subr.bf16.mxu0 0
    %1264 = vmatpush1.bf16.msra.mxu0 0
    %1265 = vmatprep.subr.bf16.mxu0 0
    %1266 = vmatpush1.bf16.msra.mxu0 0
    %1267 = vmatprep.subr.bf16.mxu0 0
    %1268 = vmatpush1.bf16.msra.mxu0 0
    %1269 = vmatprep.subr.bf16.mxu0 0
    %1270 = vmatpush1.bf16.msra.mxu0 0
    %1271 = vmatprep.subr.bf16.mxu0 0
    %1272 = vmatpush1.bf16.msra.mxu0 0
    %1273 = vmatprep.subr.bf16.mxu0 0
    %1274 = vmatpush1.bf16.msra.mxu0 0
    %1275 = vmatprep.subr.bf16.mxu0 0
    %1276 = vmatpush1.bf16.msra.mxu0 0
    %1277 = vmatprep.subr.bf16.mxu0 0
    %1278 = vmatpush1.bf16.msra.mxu0 0
    %1279 = vmatprep.subr.bf16.mxu0 0
    %1280 = vmatpush1.bf16.msra.mxu0 0
    %1281 = vmatprep.subr.bf16.mxu0 0
    %1282 = vmatpush1.bf16.msra.mxu0 0
    %1283 = vmatprep.subr.bf16.mxu0 0
    %1284 = vmatpush1.bf16.msra.mxu0 0
    %1285 = vmatprep.subr.bf16.mxu0 0
    %1286 = vmatpush1.bf16.msra.mxu0 0
    %1287 = vmatprep.subr.bf16.mxu0 0
    %1288 = vmatpush1.bf16.msra.mxu0 0
    %1289 = vmatprep.mubr.bf16.mxu0 0
    %1290 = vmatmul.mubr.bf16.gmra.mrb[0].mxu0 %v968
    %v1291 = vpop.f32.mrb[0].mxu0
    %v1292 = vadd.f32 %v786, %v1291
    %v1293 = vpop.f32.mrb[0].mxu0
    %v1294 = vadd.f32 %v790, %v1293
    %v1295 = vpop.f32.mrb[0].mxu0
    %v1296 = vpop.f32.mrb[0].mxu0
    %1297 = vdwg.mxu0
    %v1298 = vmax.f32 %v1005, 0.0
    %v1299 = vmax.f32 %v1007, 0.0
    %v1300 = vmax.f32 %v1046, 0.0
    %v1301 = vmax.f32 %v1048, 0.0
    %v1302 = vmax.f32 %v1087, 0.0
    %v1303 = vmax.f32 %v1089, 0.0
    %v1304 = vmax.f32 %v1128, 0.0
    %v1305 = vmax.f32 %v1130, 0.0
    %v1306 = vmax.f32 %v1169, 0.0
    %v1307 = vmax.f32 %v1171, 0.0
    %v1308 = vmax.f32 %v1210, 0.0
    %v1309 = vmax.f32 %v1212, 0.0
    %v1310 = vmax.f32 %v1251, 0.0
    %v1311 = vmax.f32 %v1253, 0.0
    %v1312 = vmax.f32 %v1292, 0.0
    %v1313 = vmax.f32 %v1294, 0.0
    %v1314 = vld [vmem:[%s6] sm:$0xf]
    %v1315 = vld [vmem:[%s6 + $0x4] sm:$0xf]
    %v1316 = vld [vmem:[%s6 + $0x8] sm:$0xf]
    %v1317 = vld [vmem:[%s6 + $0xc] sm:$0xf]
    %v1318 = vld [vmem:[%s6 + $0x10] sm:$0xf]
    %v1319 = vld [vmem:[%s6 + $0x14] sm:$0xf]
    %v1320 = vld [vmem:[%s6 + $0x18] sm:$0xf]
    %v1321 = vld [vmem:[%s6 + $0x1c] sm:$0xf]
    %v1322 = vld [vmem:[%s6 + $0x20] sm:$0xf]
    %v1323 = vld [vmem:[%s6 + $0x24] sm:$0xf]
    %v1324 = vld [vmem:[%s6 + $0x28] sm:$0xf]
    %v1325 = vld [vmem:[%s6 + $0x2c] sm:$0xf]
    %v1326 = vld [vmem:[%s6 + $0x30] sm:$0xf]
    %v1327 = vld [vmem:[%s6 + $0x34] sm:$0xf]
    %v1328 = vld [vmem:[%s6 + $0x38] sm:$0xf]
    %v1329 = vld [vmem:[%s6 + $0x3c] sm:$0xf]
    %v1330 = vld [vmem:[%s6 + $0x40] sm:$0xf]
    %v1331 = vld [vmem:[%s6 + $0x44] sm:$0xf]
    %v1332 = vld [vmem:[%s6 + $0x48] sm:$0xf]
    %v1333 = vld [vmem:[%s6 + $0x4c] sm:$0xf]
    %v1334 = vld [vmem:[%s6 + $0x50] sm:$0xf]
    %v1335 = vld [vmem:[%s6 + $0x54] sm:$0xf]
    %v1336 = vld [vmem:[%s6 + $0x58] sm:$0xf]
    %v1337 = vld [vmem:[%s6 + $0x5c] sm:$0xf]
    %v1338 = vld [vmem:[%s6 + $0x60] sm:$0xf]
    %v1339 = vld [vmem:[%s6 + $0x64] sm:$0xf]
    %v1340 = vld [vmem:[%s6 + $0x68] sm:$0xf]
    %v1341 = vld [vmem:[%s6 + $0x6c] sm:$0xf]
    %v1342 = vld [vmem:[%s6 + $0x70] sm:$0xf]
    %v1343 = vld [vmem:[%s6 + $0x74] sm:$0xf]
    %v1344 = vld [vmem:[%s6 + $0x78] sm:$0xf]
    %v1345 = vld [vmem:[%s6 + $0x7c] sm:$0xf]
    %v1346 = vld [vmem:[%s6 + $0x80] sm:$0xf]
    %v1347 = vld [vmem:[%s6 + $0x84] sm:$0xf]
    %v1348 = vld [vmem:[%s6 + $0x88] sm:$0xf]
    %v1349 = vld [vmem:[%s6 + $0x8c] sm:$0xf]
    %v1350 = vld [vmem:[%s6 + $0x90] sm:$0xf]
    %v1351 = vld [vmem:[%s6 + $0x94] sm:$0xf]
    %v1352 = vld [vmem:[%s6 + $0x98] sm:$0xf]
    %v1353 = vld [vmem:[%s6 + $0x9c] sm:$0xf]
    %v1354 = vld [vmem:[%s6 + $0xa0] sm:$0xf]
    %v1355 = vld [vmem:[%s6 + $0xa4] sm:$0xf]
    %v1356 = vld [vmem:[%s6 + $0xa8] sm:$0xf]
    %v1357 = vld [vmem:[%s6 + $0xac] sm:$0xf]
    %v1358 = vld [vmem:[%s6 + $0xb0] sm:$0xf]
    %v1359 = vld [vmem:[%s6 + $0xb4] sm:$0xf]
    %v1360 = vld [vmem:[%s6 + $0xb8] sm:$0xf]
    %v1361 = vld [vmem:[%s6 + $0xbc] sm:$0xf]
    %v1362 = vld [vmem:[%s6 + $0xc0] sm:$0xf]
    %v1363 = vld [vmem:[%s6 + $0xc4] sm:$0xf]
    %v1364 = vld [vmem:[%s6 + $0xc8] sm:$0xf]
    %v1365 = vld [vmem:[%s6 + $0xcc] sm:$0xf]
    %v1366 = vld [vmem:[%s6 + $0xd0] sm:$0xf]
    %v1367 = vld [vmem:[%s6 + $0xd4] sm:$0xf]
    %v1368 = vld [vmem:[%s6 + $0xd8] sm:$0xf]
    %v1369 = vld [vmem:[%s6 + $0xdc] sm:$0xf]
    %v1370 = vld [vmem:[%s6 + $0xe0] sm:$0xf]
    %v1371 = vld [vmem:[%s6 + $0xe4] sm:$0xf]
    %v1372 = vld [vmem:[%s6 + $0xe8] sm:$0xf]
    %v1373 = vld [vmem:[%s6 + $0xec] sm:$0xf]
    %v1374 = vld [vmem:[%s6 + $0xf0] sm:$0xf]
    %v1375 = vld [vmem:[%s6 + $0xf4] sm:$0xf]
    %v1376 = vld [vmem:[%s6 + $0xf8] sm:$0xf]
    %v1377 = vld [vmem:[%s6 + $0xfc] sm:$0xf]
    %v1378 = vld [vmem:[%s6 + $0x100] sm:$0xf]
    %v1379 = vld [vmem:[%s6 + $0x104] sm:$0xf]
    %v1380 = vld [vmem:[%s6 + $0x108] sm:$0xf]
    %v1381 = vld [vmem:[%s6 + $0x10c] sm:$0xf]
    %v1382 = vld [vmem:[%s6 + $0x110] sm:$0xf]
    %v1383 = vld [vmem:[%s6 + $0x114] sm:$0xf]
    %v1384 = vld [vmem:[%s6 + $0x118] sm:$0xf]
    %v1385 = vld [vmem:[%s6 + $0x11c] sm:$0xf]
    %v1386 = vld [vmem:[%s6 + $0x120] sm:$0xf]
    %v1387 = vld [vmem:[%s6 + $0x124] sm:$0xf]
    %v1388 = vld [vmem:[%s6 + $0x128] sm:$0xf]
    %v1389 = vld [vmem:[%s6 + $0x12c] sm:$0xf]
    %v1390 = vld [vmem:[%s6 + $0x130] sm:$0xf]
    %v1391 = vld [vmem:[%s6 + $0x134] sm:$0xf]
    %v1392 = vld [vmem:[%s6 + $0x138] sm:$0xf]
    %v1393 = vld [vmem:[%s6 + $0x13c] sm:$0xf]
    %v1394 = vld [vmem:[%s6 + $0x140] sm:$0xf]
    %v1395 = vld [vmem:[%s6 + $0x144] sm:$0xf]
    %v1396 = vld [vmem:[%s6 + $0x148] sm:$0xf]
    %v1397 = vld [vmem:[%s6 + $0x14c] sm:$0xf]
    %v1398 = vld [vmem:[%s6 + $0x150] sm:$0xf]
    %v1399 = vld [vmem:[%s6 + $0x154] sm:$0xf]
    %v1400 = vld [vmem:[%s6 + $0x158] sm:$0xf]
    %v1401 = vld [vmem:[%s6 + $0x15c] sm:$0xf]
    %v1402 = vld [vmem:[%s6 + $0x160] sm:$0xf]
    %v1403 = vld [vmem:[%s6 + $0x164] sm:$0xf]
    %v1404 = vld [vmem:[%s6 + $0x168] sm:$0xf]
    %v1405 = vld [vmem:[%s6 + $0x16c] sm:$0xf]
    %v1406 = vld [vmem:[%s6 + $0x170] sm:$0xf]
    %v1407 = vld [vmem:[%s6 + $0x174] sm:$0xf]
    %v1408 = vld [vmem:[%s6 + $0x178] sm:$0xf]
    %v1409 = vld [vmem:[%s6 + $0x17c] sm:$0xf]
    %v1410 = vld [vmem:[%s6 + $0x180] sm:$0xf]
    %v1411 = vld [vmem:[%s6 + $0x184] sm:$0xf]
    %v1412 = vld [vmem:[%s6 + $0x188] sm:$0xf]
    %v1413 = vld [vmem:[%s6 + $0x18c] sm:$0xf]
    %v1414 = vld [vmem:[%s6 + $0x190] sm:$0xf]
    %v1415 = vld [vmem:[%s6 + $0x194] sm:$0xf]
    %v1416 = vld [vmem:[%s6 + $0x198] sm:$0xf]
    %v1417 = vld [vmem:[%s6 + $0x19c] sm:$0xf]
    %v1418 = vld [vmem:[%s6 + $0x1a0] sm:$0xf]
    %v1419 = vld [vmem:[%s6 + $0x1a4] sm:$0xf]
    %v1420 = vld [vmem:[%s6 + $0x1a8] sm:$0xf]
    %v1421 = vld [vmem:[%s6 + $0x1ac] sm:$0xf]
    %v1422 = vld [vmem:[%s6 + $0x1b0] sm:$0xf]
    %v1423 = vld [vmem:[%s6 + $0x1b4] sm:$0xf]
    %v1424 = vld [vmem:[%s6 + $0x1b8] sm:$0xf]
    %v1425 = vld [vmem:[%s6 + $0x1bc] sm:$0xf]
    %v1426 = vld [vmem:[%s6 + $0x1c0] sm:$0xf]
    %v1427 = vld [vmem:[%s6 + $0x1c4] sm:$0xf]
    %v1428 = vld [vmem:[%s6 + $0x1c8] sm:$0xf]
    %v1429 = vld [vmem:[%s6 + $0x1cc] sm:$0xf]
    %v1430 = vld [vmem:[%s6 + $0x1d0] sm:$0xf]
    %v1431 = vld [vmem:[%s6 + $0x1d4] sm:$0xf]
    %v1432 = vld [vmem:[%s6 + $0x1d8] sm:$0xf]
    %v1433 = vld [vmem:[%s6 + $0x1dc] sm:$0xf]
    %v1434 = vld [vmem:[%s6 + $0x1e0] sm:$0xf]
    %v1435 = vld [vmem:[%s6 + $0x1e4] sm:$0xf]
    %v1436 = vld [vmem:[%s6 + $0x1e8] sm:$0xf]
    %v1437 = vld [vmem:[%s6 + $0x1ec] sm:$0xf]
    %v1438 = vld [vmem:[%s6 + $0x1f0] sm:$0xf]
    %v1439 = vld [vmem:[%s6 + $0x1f4] sm:$0xf]
    %v1440 = vld [vmem:[%s6 + $0x1f8] sm:$0xf]
    %v1441 = vld [vmem:[%s6 + $0x1fc] sm:$0xf]
    %v1442 = vld [vmem:[%s6 + $0x200] sm:$0xf]
    %v1443 = vld [vmem:[%s6 + $0x204] sm:$0xf]
    %v1444 = vld [vmem:[%s6 + $0x208] sm:$0xf]
    %v1445 = vld [vmem:[%s6 + $0x20c] sm:$0xf]
    %v1446 = vld [vmem:[%s6 + $0x210] sm:$0xf]
    %v1447 = vld [vmem:[%s6 + $0x214] sm:$0xf]
    %v1448 = vld [vmem:[%s6 + $0x218] sm:$0xf]
    %v1449 = vld [vmem:[%s6 + $0x21c] sm:$0xf]
    %v1450 = vld [vmem:[%s6 + $0x220] sm:$0xf]
    %v1451 = vld [vmem:[%s6 + $0x224] sm:$0xf]
    %v1452 = vld [vmem:[%s6 + $0x228] sm:$0xf]
    %v1453 = vld [vmem:[%s6 + $0x22c] sm:$0xf]
    %v1454 = vld [vmem:[%s6 + $0x230] sm:$0xf]
    %v1455 = vld [vmem:[%s6 + $0x234] sm:$0xf]
    %v1456 = vld [vmem:[%s6 + $0x238] sm:$0xf]
    %v1457 = vld [vmem:[%s6 + $0x23c] sm:$0xf]
    %v1458 = vld [vmem:[%s6 + $0x240] sm:$0xf]
    %v1459 = vld [vmem:[%s6 + $0x244] sm:$0xf]
    %v1460 = vld [vmem:[%s6 + $0x248] sm:$0xf]
    %v1461 = vld [vmem:[%s6 + $0x24c] sm:$0xf]
    %v1462 = vld [vmem:[%s6 + $0x250] sm:$0xf]
    %v1463 = vld [vmem:[%s6 + $0x254] sm:$0xf]
    %v1464 = vld [vmem:[%s6 + $0x258] sm:$0xf]
    %v1465 = vld [vmem:[%s6 + $0x25c] sm:$0xf]
    %v1466 = vld [vmem:[%s6 + $0x260] sm:$0xf]
    %v1467 = vld [vmem:[%s6 + $0x264] sm:$0xf]
    %v1468 = vld [vmem:[%s6 + $0x268] sm:$0xf]
    %v1469 = vld [vmem:[%s6 + $0x26c] sm:$0xf]
    %v1470 = vld [vmem:[%s6 + $0x270] sm:$0xf]
    %v1471 = vld [vmem:[%s6 + $0x274] sm:$0xf]
    %v1472 = vld [vmem:[%s6 + $0x278] sm:$0xf]
    %v1473 = vld [vmem:[%s6 + $0x27c] sm:$0xf]
    %v1474 = vld [vmem:[%s6 + $0x280] sm:$0xf]
    %v1475 = vld [vmem:[%s6 + $0x284] sm:$0xf]
    %v1476 = vld [vmem:[%s6 + $0x288] sm:$0xf]
    %v1477 = vld [vmem:[%s6 + $0x28c] sm:$0xf]
    %v1478 = vld [vmem:[%s6 + $0x290] sm:$0xf]
    %v1479 = vld [vmem:[%s6 + $0x294] sm:$0xf]
    %v1480 = vld [vmem:[%s6 + $0x298] sm:$0xf]
    %v1481 = vld [vmem:[%s6 + $0x29c] sm:$0xf]
    %v1482 = vld [vmem:[%s6 + $0x2a0] sm:$0xf]
    %v1483 = vld [vmem:[%s6 + $0x2a4] sm:$0xf]
    %v1484 = vld [vmem:[%s6 + $0x2a8] sm:$0xf]
    %v1485 = vld [vmem:[%s6 + $0x2ac] sm:$0xf]
    %v1486 = vld [vmem:[%s6 + $0x2b0] sm:$0xf]
    %v1487 = vld [vmem:[%s6 + $0x2b4] sm:$0xf]
    %v1488 = vld [vmem:[%s6 + $0x2b8] sm:$0xf]
    %v1489 = vld [vmem:[%s6 + $0x2bc] sm:$0xf]
    %v1490 = vld [vmem:[%s6 + $0x2c0] sm:$0xf]
    %v1491 = vld [vmem:[%s6 + $0x2c4] sm:$0xf]
    %v1492 = vld [vmem:[%s6 + $0x2c8] sm:$0xf]
    %v1493 = vld [vmem:[%s6 + $0x2cc] sm:$0xf]
    %v1494 = vld [vmem:[%s6 + $0x2d0] sm:$0xf]
    %v1495 = vld [vmem:[%s6 + $0x2d4] sm:$0xf]
    %v1496 = vld [vmem:[%s6 + $0x2d8] sm:$0xf]
    %v1497 = vld [vmem:[%s6 + $0x2dc] sm:$0xf]
    %v1498 = vld [vmem:[%s6 + $0x2e0] sm:$0xf]
    %v1499 = vld [vmem:[%s6 + $0x2e4] sm:$0xf]
    %v1500 = vld [vmem:[%s6 + $0x2e8] sm:$0xf]
    %v1501 = vld [vmem:[%s6 + $0x2ec] sm:$0xf]
    %v1502 = vld [vmem:[%s6 + $0x2f0] sm:$0xf]
    %v1503 = vld [vmem:[%s6 + $0x2f4] sm:$0xf]
    %v1504 = vld [vmem:[%s6 + $0x2f8] sm:$0xf]
    %v1505 = vld [vmem:[%s6 + $0x2fc] sm:$0xf]
    %v1506 = vld [vmem:[%s6 + $0x300] sm:$0xf]
    %v1507 = vld [vmem:[%s6 + $0x304] sm:$0xf]
    %v1508 = vld [vmem:[%s6 + $0x308] sm:$0xf]
    %v1509 = vld [vmem:[%s6 + $0x30c] sm:$0xf]
    %v1510 = vld [vmem:[%s6 + $0x310] sm:$0xf]
    %v1511 = vld [vmem:[%s6 + $0x314] sm:$0xf]
    %v1512 = vld [vmem:[%s6 + $0x318] sm:$0xf]
    %v1513 = vld [vmem:[%s6 + $0x31c] sm:$0xf]
    %v1514 = vld [vmem:[%s6 + $0x320] sm:$0xf]
    %v1515 = vld [vmem:[%s6 + $0x324] sm:$0xf]
    %v1516 = vld [vmem:[%s6 + $0x328] sm:$0xf]
    %v1517 = vld [vmem:[%s6 + $0x32c] sm:$0xf]
    %v1518 = vld [vmem:[%s6 + $0x330] sm:$0xf]
    %v1519 = vld [vmem:[%s6 + $0x334] sm:$0xf]
    %v1520 = vld [vmem:[%s6 + $0x338] sm:$0xf]
    %v1521 = vld [vmem:[%s6 + $0x33c] sm:$0xf]
    %v1522 = vld [vmem:[%s6 + $0x340] sm:$0xf]
    %v1523 = vld [vmem:[%s6 + $0x344] sm:$0xf]
    %v1524 = vld [vmem:[%s6 + $0x348] sm:$0xf]
    %v1525 = vld [vmem:[%s6 + $0x34c] sm:$0xf]
    %v1526 = vld [vmem:[%s6 + $0x350] sm:$0xf]
    %v1527 = vld [vmem:[%s6 + $0x354] sm:$0xf]
    %v1528 = vld [vmem:[%s6 + $0x358] sm:$0xf]
    %v1529 = vld [vmem:[%s6 + $0x35c] sm:$0xf]
    %v1530 = vld [vmem:[%s6 + $0x360] sm:$0xf]
    %v1531 = vld [vmem:[%s6 + $0x364] sm:$0xf]
    %v1532 = vld [vmem:[%s6 + $0x368] sm:$0xf]
    %v1533 = vld [vmem:[%s6 + $0x36c] sm:$0xf]
    %v1534 = vld [vmem:[%s6 + $0x370] sm:$0xf]
    %v1535 = vld [vmem:[%s6 + $0x374] sm:$0xf]
    %v1536 = vld [vmem:[%s6 + $0x378] sm:$0xf]
    %v1537 = vld [vmem:[%s6 + $0x37c] sm:$0xf]
    %v1538 = vld [vmem:[%s6 + $0x380] sm:$0xf]
    %v1539 = vld [vmem:[%s6 + $0x384] sm:$0xf]
    %v1540 = vld [vmem:[%s6 + $0x388] sm:$0xf]
    %v1541 = vld [vmem:[%s6 + $0x38c] sm:$0xf]
    %v1542 = vld [vmem:[%s6 + $0x390] sm:$0xf]
    %v1543 = vld [vmem:[%s6 + $0x394] sm:$0xf]
    %v1544 = vld [vmem:[%s6 + $0x398] sm:$0xf]
    %v1545 = vld [vmem:[%s6 + $0x39c] sm:$0xf]
    %v1546 = vld [vmem:[%s6 + $0x3a0] sm:$0xf]
    %v1547 = vld [vmem:[%s6 + $0x3a4] sm:$0xf]
    %v1548 = vld [vmem:[%s6 + $0x3a8] sm:$0xf]
    %v1549 = vld [vmem:[%s6 + $0x3ac] sm:$0xf]
    %v1550 = vld [vmem:[%s6 + $0x3b0] sm:$0xf]
    %v1551 = vld [vmem:[%s6 + $0x3b4] sm:$0xf]
    %v1552 = vld [vmem:[%s6 + $0x3b8] sm:$0xf]
    %v1553 = vld [vmem:[%s6 + $0x3bc] sm:$0xf]
    %v1554 = vld [vmem:[%s6 + $0x3c0] sm:$0xf]
    %v1555 = vld [vmem:[%s6 + $0x3c4] sm:$0xf]
    %v1556 = vld [vmem:[%s6 + $0x3c8] sm:$0xf]
    %v1557 = vld [vmem:[%s6 + $0x3cc] sm:$0xf]
    %v1558 = vld [vmem:[%s6 + $0x3d0] sm:$0xf]
    %v1559 = vld [vmem:[%s6 + $0x3d4] sm:$0xf]
    %v1560 = vld [vmem:[%s6 + $0x3d8] sm:$0xf]
    %v1561 = vld [vmem:[%s6 + $0x3dc] sm:$0xf]
    %v1562 = vld [vmem:[%s6 + $0x3e0] sm:$0xf]
    %v1563 = vld [vmem:[%s6 + $0x3e4] sm:$0xf]
    %v1564 = vld [vmem:[%s6 + $0x3e8] sm:$0xf]
    %v1565 = vld [vmem:[%s6 + $0x3ec] sm:$0xf]
    %v1566 = vld [vmem:[%s6 + $0x3f0] sm:$0xf]
    %v1567 = vld [vmem:[%s6 + $0x3f4] sm:$0xf]
    %v1568 = vld [vmem:[%s6 + $0x3f8] sm:$0xf]
    %v1569 = vld [vmem:[%s6 + $0x3fc] sm:$0xf]
    %v1570 = vpack.c.bf16 %v1298, %v1298
    %v1571 = vpack.c.bf16 %v1299, %v1299
    %v1572 = vpack.c.bf16 %v1300, %v1300
    %v1573 = vpack.c.bf16 %v1301, %v1301
    %v1574 = vpack.c.bf16 %v1302, %v1302
    %v1575 = vpack.c.bf16 %v1303, %v1303
    %v1576 = vpack.c.bf16 %v1304, %v1304
    %v1577 = vpack.c.bf16 %v1305, %v1305
    %v1578 = vpack.c.bf16 %v1306, %v1306
    %v1579 = vpack.c.bf16 %v1307, %v1307
    %v1580 = vpack.c.bf16 %v1308, %v1308
    %v1581 = vpack.c.bf16 %v1309, %v1309
    %v1582 = vpack.c.bf16 %v1310, %v1310
    %v1583 = vpack.c.bf16 %v1311, %v1311
    %v1584 = vpack.c.bf16 %v1312, %v1312
    %v1585 = vpack.c.bf16 %v1313, %v1313
    %s1586 = scalar_lea.vmem %s8, 4
    %v1587 = vld [vmem:[%s1586] ss:$8 sm:$0x3]
    %v1589 = vlaneseq
    %v1590 = vshrl.u32 %v1589, 7
    %v1591 = vsub.s32 0, %v1590
    %v1592 = vrot.slane %v1587, %v1591
    %v1850 = vunpack.c.l.b16 %v1314
    %v1851 = vunpack.c.l.b16 %v1315
    %v1852 = vunpack.c.l.b16 %v1316
    %v1853 = vunpack.c.l.b16 %v1317
    %v1854 = vunpack.c.l.b16 %v1318
    %v1855 = vunpack.c.l.b16 %v1319
    %v1856 = vunpack.c.l.b16 %v1320
    %v1857 = vunpack.c.l.b16 %v1321
    %v1858 = vunpack.c.l.b16 %v1322
    %v1859 = vunpack.c.l.b16 %v1323
    %v1860 = vunpack.c.l.b16 %v1324
    %v1861 = vunpack.c.l.b16 %v1325
    %v1862 = vunpack.c.l.b16 %v1326
    %v1863 = vunpack.c.l.b16 %v1327
    %v1864 = vunpack.c.l.b16 %v1328
    %v1865 = vunpack.c.l.b16 %v1329
    %v1866 = vunpack.c.l.b16 %v1330
    %v1867 = vunpack.c.l.b16 %v1331
    %v1868 = vunpack.c.l.b16 %v1332
    %v1869 = vunpack.c.l.b16 %v1333
    %v1870 = vunpack.c.l.b16 %v1334
    %v1871 = vunpack.c.l.b16 %v1335
    %v1872 = vunpack.c.l.b16 %v1336
    %v1873 = vunpack.c.l.b16 %v1337
    %v1874 = vunpack.c.l.b16 %v1338
    %v1875 = vunpack.c.l.b16 %v1339
    %v1876 = vunpack.c.l.b16 %v1340
    %v1877 = vunpack.c.l.b16 %v1341
    %v1878 = vunpack.c.l.b16 %v1342
    %v1879 = vunpack.c.l.b16 %v1343
    %v1880 = vunpack.c.l.b16 %v1344
    %v1881 = vunpack.c.l.b16 %v1345
    %v1882 = vunpack.c.l.b16 %v1346
    %v1883 = vunpack.c.l.b16 %v1347
    %v1884 = vunpack.c.l.b16 %v1348
    %v1885 = vunpack.c.l.b16 %v1349
    %v1886 = vunpack.c.l.b16 %v1350
    %v1887 = vunpack.c.l.b16 %v1351
    %v1888 = vunpack.c.l.b16 %v1352
    %v1889 = vunpack.c.l.b16 %v1353
    %v1890 = vunpack.c.l.b16 %v1354
    %v1891 = vunpack.c.l.b16 %v1355
    %v1892 = vunpack.c.l.b16 %v1356
    %v1893 = vunpack.c.l.b16 %v1357
    %v1894 = vunpack.c.l.b16 %v1358
    %v1895 = vunpack.c.l.b16 %v1359
    %v1896 = vunpack.c.l.b16 %v1360
    %v1897 = vunpack.c.l.b16 %v1361
    %v1898 = vunpack.c.l.b16 %v1362
    %v1899 = vunpack.c.l.b16 %v1363
    %v1900 = vunpack.c.l.b16 %v1364
    %v1901 = vunpack.c.l.b16 %v1365
    %v1902 = vunpack.c.l.b16 %v1366
    %v1903 = vunpack.c.l.b16 %v1367
    %v1904 = vunpack.c.l.b16 %v1368
    %v1905 = vunpack.c.l.b16 %v1369
    %v1906 = vunpack.c.l.b16 %v1370
    %v1907 = vunpack.c.l.b16 %v1371
    %v1908 = vunpack.c.l.b16 %v1372
    %v1909 = vunpack.c.l.b16 %v1373
    %v1910 = vunpack.c.l.b16 %v1374
    %v1911 = vunpack.c.l.b16 %v1375
    %v1912 = vunpack.c.l.b16 %v1376
    %v1913 = vunpack.c.l.b16 %v1377
    %v1914 = vunpack.c.l.b16 %v1378
    %v1915 = vunpack.c.l.b16 %v1379
    %v1916 = vunpack.c.l.b16 %v1380
    %v1917 = vunpack.c.l.b16 %v1381
    %v1918 = vunpack.c.l.b16 %v1382
    %v1919 = vunpack.c.l.b16 %v1383
    %v1920 = vunpack.c.l.b16 %v1384
    %v1921 = vunpack.c.l.b16 %v1385
    %v1922 = vunpack.c.l.b16 %v1386
    %v1923 = vunpack.c.l.b16 %v1387
    %v1924 = vunpack.c.l.b16 %v1388
    %v1925 = vunpack.c.l.b16 %v1389
    %v1926 = vunpack.c.l.b16 %v1390
    %v1927 = vunpack.c.l.b16 %v1391
    %v1928 = vunpack.c.l.b16 %v1392
    %v1929 = vunpack.c.l.b16 %v1393
    %v1930 = vunpack.c.l.b16 %v1394
    %v1931 = vunpack.c.l.b16 %v1395
    %v1932 = vunpack.c.l.b16 %v1396
    %v1933 = vunpack.c.l.b16 %v1397
    %v1934 = vunpack.c.l.b16 %v1398
    %v1935 = vunpack.c.l.b16 %v1399
    %v1936 = vunpack.c.l.b16 %v1400
    %v1937 = vunpack.c.l.b16 %v1401
    %v1938 = vunpack.c.l.b16 %v1402
    %v1939 = vunpack.c.l.b16 %v1403
    %v1940 = vunpack.c.l.b16 %v1404
    %v1941 = vunpack.c.l.b16 %v1405
    %v1942 = vunpack.c.l.b16 %v1406
    %v1943 = vunpack.c.l.b16 %v1407
    %v1944 = vunpack.c.l.b16 %v1408
    %v1945 = vunpack.c.l.b16 %v1409
    %v1946 = vunpack.c.l.b16 %v1410
    %v1947 = vunpack.c.l.b16 %v1411
    %v1948 = vunpack.c.l.b16 %v1412
    %v1949 = vunpack.c.l.b16 %v1413
    %v1950 = vunpack.c.l.b16 %v1414
    %v1951 = vunpack.c.l.b16 %v1415
    %v1952 = vunpack.c.l.b16 %v1416
    %v1953 = vunpack.c.l.b16 %v1417
    %v1954 = vunpack.c.l.b16 %v1418
    %v1955 = vunpack.c.l.b16 %v1419
    %v1956 = vunpack.c.l.b16 %v1420
    %v1957 = vunpack.c.l.b16 %v1421
    %v1958 = vunpack.c.l.b16 %v1422
    %v1959 = vunpack.c.l.b16 %v1423
    %v1960 = vunpack.c.l.b16 %v1424
    %v1961 = vunpack.c.l.b16 %v1425
    %v1962 = vunpack.c.l.b16 %v1426
    %v1963 = vunpack.c.l.b16 %v1427
    %v1964 = vunpack.c.l.b16 %v1428
    %v1965 = vunpack.c.l.b16 %v1429
    %v1966 = vunpack.c.l.b16 %v1430
    %v1967 = vunpack.c.l.b16 %v1431
    %v1968 = vunpack.c.l.b16 %v1432
    %v1969 = vunpack.c.l.b16 %v1433
    %v1970 = vunpack.c.l.b16 %v1434
    %v1971 = vunpack.c.l.b16 %v1435
    %v1972 = vunpack.c.l.b16 %v1436
    %v1973 = vunpack.c.l.b16 %v1437
    %v1974 = vunpack.c.l.b16 %v1438
    %v1975 = vunpack.c.l.b16 %v1439
    %v1976 = vunpack.c.l.b16 %v1440
    %v1977 = vunpack.c.l.b16 %v1441
    %v1978 = vunpack.c.l.b16 %v1442
    %v1979 = vunpack.c.l.b16 %v1443
    %v1980 = vunpack.c.l.b16 %v1444
    %v1981 = vunpack.c.l.b16 %v1445
    %v1982 = vunpack.c.l.b16 %v1446
    %v1983 = vunpack.c.l.b16 %v1447
    %v1984 = vunpack.c.l.b16 %v1448
    %v1985 = vunpack.c.l.b16 %v1449
    %v1986 = vunpack.c.l.b16 %v1450
    %v1987 = vunpack.c.l.b16 %v1451
    %v1988 = vunpack.c.l.b16 %v1452
    %v1989 = vunpack.c.l.b16 %v1453
    %v1990 = vunpack.c.l.b16 %v1454
    %v1991 = vunpack.c.l.b16 %v1455
    %v1992 = vunpack.c.l.b16 %v1456
    %v1993 = vunpack.c.l.b16 %v1457
    %v1994 = vunpack.c.l.b16 %v1458
    %v1995 = vunpack.c.l.b16 %v1459
    %v1996 = vunpack.c.l.b16 %v1460
    %v1997 = vunpack.c.l.b16 %v1461
    %v1998 = vunpack.c.l.b16 %v1462
    %v1999 = vunpack.c.l.b16 %v1463
    %v2000 = vunpack.c.l.b16 %v1464
    %v2001 = vunpack.c.l.b16 %v1465
    %v2002 = vunpack.c.l.b16 %v1466
    %v2003 = vunpack.c.l.b16 %v1467
    %v2004 = vunpack.c.l.b16 %v1468
    %v2005 = vunpack.c.l.b16 %v1469
    %v2006 = vunpack.c.l.b16 %v1470
    %v2007 = vunpack.c.l.b16 %v1471
    %v2008 = vunpack.c.l.b16 %v1472
    %v2009 = vunpack.c.l.b16 %v1473
    %v2010 = vunpack.c.l.b16 %v1474
    %v2011 = vunpack.c.l.b16 %v1475
    %v2012 = vunpack.c.l.b16 %v1476
    %v2013 = vunpack.c.l.b16 %v1477
    %v2014 = vunpack.c.l.b16 %v1478
    %v2015 = vunpack.c.l.b16 %v1479
    %v2016 = vunpack.c.l.b16 %v1480
    %v2017 = vunpack.c.l.b16 %v1481
    %v2018 = vunpack.c.l.b16 %v1482
    %v2019 = vunpack.c.l.b16 %v1483
    %v2020 = vunpack.c.l.b16 %v1484
    %v2021 = vunpack.c.l.b16 %v1485
    %v2022 = vunpack.c.l.b16 %v1486
    %v2023 = vunpack.c.l.b16 %v1487
    %v2024 = vunpack.c.l.b16 %v1488
    %v2025 = vunpack.c.l.b16 %v1489
    %v2026 = vunpack.c.l.b16 %v1490
    %v2027 = vunpack.c.l.b16 %v1491
    %v2028 = vunpack.c.l.b16 %v1492
    %v2029 = vunpack.c.l.b16 %v1493
    %v2030 = vunpack.c.l.b16 %v1494
    %v2031 = vunpack.c.l.b16 %v1495
    %v2032 = vunpack.c.l.b16 %v1496
    %v2033 = vunpack.c.l.b16 %v1497
    %v2034 = vunpack.c.l.b16 %v1498
    %v2035 = vunpack.c.l.b16 %v1499
    %v2036 = vunpack.c.l.b16 %v1500
    %v2037 = vunpack.c.l.b16 %v1501
    %v2038 = vunpack.c.l.b16 %v1502
    %v2039 = vunpack.c.l.b16 %v1503
    %v2040 = vunpack.c.l.b16 %v1504
    %v2041 = vunpack.c.l.b16 %v1505
    %v2042 = vunpack.c.l.b16 %v1506
    %v2043 = vunpack.c.l.b16 %v1507
    %v2044 = vunpack.c.l.b16 %v1508
    %v2045 = vunpack.c.l.b16 %v1509
    %v2046 = vunpack.c.l.b16 %v1510
    %v2047 = vunpack.c.l.b16 %v1511
    %v2048 = vunpack.c.l.b16 %v1512
    %v2049 = vunpack.c.l.b16 %v1513
    %v2050 = vunpack.c.l.b16 %v1514
    %v2051 = vunpack.c.l.b16 %v1515
    %v2052 = vunpack.c.l.b16 %v1516
    %v2053 = vunpack.c.l.b16 %v1517
    %v2054 = vunpack.c.l.b16 %v1518
    %v2055 = vunpack.c.l.b16 %v1519
    %v2056 = vunpack.c.l.b16 %v1520
    %v2057 = vunpack.c.l.b16 %v1521
    %v2058 = vunpack.c.l.b16 %v1522
    %v2059 = vunpack.c.l.b16 %v1523
    %v2060 = vunpack.c.l.b16 %v1524
    %v2061 = vunpack.c.l.b16 %v1525
    %v2062 = vunpack.c.l.b16 %v1526
    %v2063 = vunpack.c.l.b16 %v1527
    %v2064 = vunpack.c.l.b16 %v1528
    %v2065 = vunpack.c.l.b16 %v1529
    %v2066 = vunpack.c.l.b16 %v1530
    %v2067 = vunpack.c.l.b16 %v1531
    %v2068 = vunpack.c.l.b16 %v1532
    %v2069 = vunpack.c.l.b16 %v1533
    %v2070 = vunpack.c.l.b16 %v1534
    %v2071 = vunpack.c.l.b16 %v1535
    %v2072 = vunpack.c.l.b16 %v1536
    %v2073 = vunpack.c.l.b16 %v1537
    %v2074 = vunpack.c.l.b16 %v1538
    %v2075 = vunpack.c.l.b16 %v1539
    %v2076 = vunpack.c.l.b16 %v1540
    %v2077 = vunpack.c.l.b16 %v1541
    %v2078 = vunpack.c.l.b16 %v1542
    %v2079 = vunpack.c.l.b16 %v1543
    %v2080 = vunpack.c.l.b16 %v1544
    %v2081 = vunpack.c.l.b16 %v1545
    %v2082 = vunpack.c.l.b16 %v1546
    %v2083 = vunpack.c.l.b16 %v1547
    %v2084 = vunpack.c.l.b16 %v1548
    %v2085 = vunpack.c.l.b16 %v1549
    %v2086 = vunpack.c.l.b16 %v1550
    %v2087 = vunpack.c.l.b16 %v1551
    %v2088 = vunpack.c.l.b16 %v1552
    %v2089 = vunpack.c.l.b16 %v1553
    %v2090 = vunpack.c.l.b16 %v1554
    %v2091 = vunpack.c.l.b16 %v1555
    %v2092 = vunpack.c.l.b16 %v1556
    %v2093 = vunpack.c.l.b16 %v1557
    %v2094 = vunpack.c.l.b16 %v1558
    %v2095 = vunpack.c.l.b16 %v1559
    %v2096 = vunpack.c.l.b16 %v1560
    %v2097 = vunpack.c.l.b16 %v1561
    %v2098 = vunpack.c.l.b16 %v1562
    %v2099 = vunpack.c.l.b16 %v1563
    %v2100 = vunpack.c.l.b16 %v1564
    %v2101 = vunpack.c.l.b16 %v1565
    %v2102 = vunpack.c.l.b16 %v1566
    %v2103 = vunpack.c.l.b16 %v1567
    %v2104 = vunpack.c.l.b16 %v1568
    %v2105 = vunpack.c.l.b16 %v1569
    %v2106 = vpack.c.b16 %v1851, %v1850
    %v2107 = vpack.c.b16 %v1853, %v1852
    %v2108 = vpack.c.b16 %v1855, %v1854
    %v2109 = vpack.c.b16 %v1857, %v1856
    %v2110 = vpack.c.b16 %v1859, %v1858
    %v2111 = vpack.c.b16 %v1861, %v1860
    %v2112 = vpack.c.b16 %v1863, %v1862
    %v2113 = vpack.c.b16 %v1865, %v1864
    %v2114 = vpack.c.b16 %v1867, %v1866
    %v2115 = vpack.c.b16 %v1869, %v1868
    %v2116 = vpack.c.b16 %v1871, %v1870
    %v2117 = vpack.c.b16 %v1873, %v1872
    %v2118 = vpack.c.b16 %v1875, %v1874
    %v2119 = vpack.c.b16 %v1877, %v1876
    %v2120 = vpack.c.b16 %v1879, %v1878
    %v2121 = vpack.c.b16 %v1881, %v1880
    %v2122 = vpack.c.b16 %v1883, %v1882
    %v2123 = vpack.c.b16 %v1885, %v1884
    %v2124 = vpack.c.b16 %v1887, %v1886
    %v2125 = vpack.c.b16 %v1889, %v1888
    %v2126 = vpack.c.b16 %v1891, %v1890
    %v2127 = vpack.c.b16 %v1893, %v1892
    %v2128 = vpack.c.b16 %v1895, %v1894
    %v2129 = vpack.c.b16 %v1897, %v1896
    %v2130 = vpack.c.b16 %v1899, %v1898
    %v2131 = vpack.c.b16 %v1901, %v1900
    %v2132 = vpack.c.b16 %v1903, %v1902
    %v2133 = vpack.c.b16 %v1905, %v1904
    %v2134 = vpack.c.b16 %v1907, %v1906
    %v2135 = vpack.c.b16 %v1909, %v1908
    %v2136 = vpack.c.b16 %v1911, %v1910
    %v2137 = vpack.c.b16 %v1913, %v1912
    %v2138 = vpack.c.b16 %v1915, %v1914
    %v2139 = vpack.c.b16 %v1917, %v1916
    %v2140 = vpack.c.b16 %v1919, %v1918
    %v2141 = vpack.c.b16 %v1921, %v1920
    %v2142 = vpack.c.b16 %v1923, %v1922
    %v2143 = vpack.c.b16 %v1925, %v1924
    %v2144 = vpack.c.b16 %v1927, %v1926
    %v2145 = vpack.c.b16 %v1929, %v1928
    %v2146 = vpack.c.b16 %v1931, %v1930
    %v2147 = vpack.c.b16 %v1933, %v1932
    %v2148 = vpack.c.b16 %v1935, %v1934
    %v2149 = vpack.c.b16 %v1937, %v1936
    %v2150 = vpack.c.b16 %v1939, %v1938
    %v2151 = vpack.c.b16 %v1941, %v1940
    %v2152 = vpack.c.b16 %v1943, %v1942
    %v2153 = vpack.c.b16 %v1945, %v1944
    %v2154 = vpack.c.b16 %v1947, %v1946
    %v2155 = vpack.c.b16 %v1949, %v1948
    %v2156 = vpack.c.b16 %v1951, %v1950
    %v2157 = vpack.c.b16 %v1953, %v1952
    %v2158 = vpack.c.b16 %v1955, %v1954
    %v2159 = vpack.c.b16 %v1957, %v1956
    %v2160 = vpack.c.b16 %v1959, %v1958
    %v2161 = vpack.c.b16 %v1961, %v1960
    %v2162 = vpack.c.b16 %v1963, %v1962
    %v2163 = vpack.c.b16 %v1965, %v1964
    %v2164 = vpack.c.b16 %v1967, %v1966
    %v2165 = vpack.c.b16 %v1969, %v1968
    %v2166 = vpack.c.b16 %v1971, %v1970
    %v2167 = vpack.c.b16 %v1973, %v1972
    %v2168 = vpack.c.b16 %v1975, %v1974
    %v2169 = vpack.c.b16 %v1977, %v1976
    %v2170 = vpack.c.b16 %v1979, %v1978
    %v2171 = vpack.c.b16 %v1981, %v1980
    %v2172 = vpack.c.b16 %v1983, %v1982
    %v2173 = vpack.c.b16 %v1985, %v1984
    %v2174 = vpack.c.b16 %v1987, %v1986
    %v2175 = vpack.c.b16 %v1989, %v1988
    %v2176 = vpack.c.b16 %v1991, %v1990
    %v2177 = vpack.c.b16 %v1993, %v1992
    %v2178 = vpack.c.b16 %v1995, %v1994
    %v2179 = vpack.c.b16 %v1997, %v1996
    %v2180 = vpack.c.b16 %v1999, %v1998
    %v2181 = vpack.c.b16 %v2001, %v2000
    %v2182 = vpack.c.b16 %v2003, %v2002
    %v2183 = vpack.c.b16 %v2005, %v2004
    %v2184 = vpack.c.b16 %v2007, %v2006
    %v2185 = vpack.c.b16 %v2009, %v2008
    %v2186 = vpack.c.b16 %v2011, %v2010
    %v2187 = vpack.c.b16 %v2013, %v2012
    %v2188 = vpack.c.b16 %v2015, %v2014
    %v2189 = vpack.c.b16 %v2017, %v2016
    %v2190 = vpack.c.b16 %v2019, %v2018
    %v2191 = vpack.c.b16 %v2021, %v2020
    %v2192 = vpack.c.b16 %v2023, %v2022
    %v2193 = vpack.c.b16 %v2025, %v2024
    %v2194 = vpack.c.b16 %v2027, %v2026
    %v2195 = vpack.c.b16 %v2029, %v2028
    %v2196 = vpack.c.b16 %v2031, %v2030
    %v2197 = vpack.c.b16 %v2033, %v2032
    %v2198 = vpack.c.b16 %v2035, %v2034
    %v2199 = vpack.c.b16 %v2037, %v2036
    %v2200 = vpack.c.b16 %v2039, %v2038
    %v2201 = vpack.c.b16 %v2041, %v2040
    %v2202 = vpack.c.b16 %v2043, %v2042
    %v2203 = vpack.c.b16 %v2045, %v2044
    %v2204 = vpack.c.b16 %v2047, %v2046
    %v2205 = vpack.c.b16 %v2049, %v2048
    %v2206 = vpack.c.b16 %v2051, %v2050
    %v2207 = vpack.c.b16 %v2053, %v2052
    %v2208 = vpack.c.b16 %v2055, %v2054
    %v2209 = vpack.c.b16 %v2057, %v2056
    %v2210 = vpack.c.b16 %v2059, %v2058
    %v2211 = vpack.c.b16 %v2061, %v2060
    %v2212 = vpack.c.b16 %v2063, %v2062
    %v2213 = vpack.c.b16 %v2065, %v2064
    %v2214 = vpack.c.b16 %v2067, %v2066
    %v2215 = vpack.c.b16 %v2069, %v2068
    %v2216 = vpack.c.b16 %v2071, %v2070
    %v2217 = vpack.c.b16 %v2073, %v2072
    %v2218 = vpack.c.b16 %v2075, %v2074
    %v2219 = vpack.c.b16 %v2077, %v2076
    %v2220 = vpack.c.b16 %v2079, %v2078
    %v2221 = vpack.c.b16 %v2081, %v2080
    %v2222 = vpack.c.b16 %v2083, %v2082
    %v2223 = vpack.c.b16 %v2085, %v2084
    %v2224 = vpack.c.b16 %v2087, %v2086
    %v2225 = vpack.c.b16 %v2089, %v2088
    %v2226 = vpack.c.b16 %v2091, %v2090
    %v2227 = vpack.c.b16 %v2093, %v2092
    %v2228 = vpack.c.b16 %v2095, %v2094
    %v2229 = vpack.c.b16 %v2097, %v2096
    %v2230 = vpack.c.b16 %v2099, %v2098
    %v2231 = vpack.c.b16 %v2101, %v2100
    %v2232 = vpack.c.b16 %v2103, %v2102
    %v2233 = vpack.c.b16 %v2105, %v2104
    %2362 = vmatprep.subr.bf16.mxu0 0
    %2363 = vmatpush1.bf16.msra.mxu0 %v2106
    %2364 = vmatprep.subr.bf16.mxu0 0
    %2365 = vmatpush1.bf16.msra.mxu0 %v2107
    %2366 = vmatprep.subr.bf16.mxu0 0
    %2367 = vmatpush1.bf16.msra.mxu0 %v2108
    %2368 = vmatprep.subr.bf16.mxu0 0
    %2369 = vmatpush1.bf16.msra.mxu0 %v2109
    %2370 = vmatprep.subr.bf16.mxu0 0
    %2371 = vmatpush1.bf16.msra.mxu0 %v2110
    %2372 = vmatprep.subr.bf16.mxu0 0
    %2373 = vmatpush1.bf16.msra.mxu0 %v2111
    %2374 = vmatprep.subr.bf16.mxu0 0
    %2375 = vmatpush1.bf16.msra.mxu0 %v2112
    %2376 = vmatprep.subr.bf16.mxu0 0
    %2377 = vmatpush1.bf16.msra.mxu0 %v2113
    %2378 = vmatprep.subr.bf16.mxu0 0
    %2379 = vmatpush1.bf16.msra.mxu0 %v2114
    %2380 = vmatprep.subr.bf16.mxu0 0
    %2381 = vmatpush1.bf16.msra.mxu0 %v2115
    %2382 = vmatprep.subr.bf16.mxu0 0
    %2383 = vmatpush1.bf16.msra.mxu0 %v2116
    %2384 = vmatprep.subr.bf16.mxu0 0
    %2385 = vmatpush1.bf16.msra.mxu0 %v2117
    %2386 = vmatprep.subr.bf16.mxu0 0
    %2387 = vmatpush1.bf16.msra.mxu0 %v2118
    %2388 = vmatprep.subr.bf16.mxu0 0
    %2389 = vmatpush1.bf16.msra.mxu0 %v2119
    %2390 = vmatprep.subr.bf16.mxu0 0
    %2391 = vmatpush1.bf16.msra.mxu0 %v2120
    %2392 = vmatprep.subr.bf16.mxu0 0
    %2393 = vmatpush1.bf16.msra.mxu0 %v2121
    %2394 = vmatprep.mubr.bf16.mxu0 %v1571
    %2395 = vmatmul.mubr.bf16.gmra.mrb[0].mxu0 %v1570
    %v2396 = vpop.f32.mrb[0].mxu0
    %v2397 = vadd.f32 %v1592, %v2396
    %v2398 = vpop.f32.mrb[0].mxu0
    %v2399 = vpop.f32.mrb[0].mxu0
    %v2400 = vpop.f32.mrb[0].mxu0
    %2401 = vdwg.mxu0
    %2402 = vmatprep.subr.bf16.mxu0 0
    %2403 = vmatpush1.bf16.msra.mxu0 %v2122
    %2404 = vmatprep.subr.bf16.mxu0 0
    %2405 = vmatpush1.bf16.msra.mxu0 %v2123
    %2406 = vmatprep.subr.bf16.mxu0 0
    %2407 = vmatpush1.bf16.msra.mxu0 %v2124
    %2408 = vmatprep.subr.bf16.mxu0 0
    %2409 = vmatpush1.bf16.msra.mxu0 %v2125
    %2410 = vmatprep.subr.bf16.mxu0 0
    %2411 = vmatpush1.bf16.msra.mxu0 %v2126
    %2412 = vmatprep.subr.bf16.mxu0 0
    %2413 = vmatpush1.bf16.msra.mxu0 %v2127
    %2414 = vmatprep.subr.bf16.mxu0 0
    %2415 = vmatpush1.bf16.msra.mxu0 %v2128
    %2416 = vmatprep.subr.bf16.mxu0 0
    %2417 = vmatpush1.bf16.msra.mxu0 %v2129
    %2418 = vmatprep.subr.bf16.mxu0 0
    %2419 = vmatpush1.bf16.msra.mxu0 %v2130
    %2420 = vmatprep.subr.bf16.mxu0 0
    %2421 = vmatpush1.bf16.msra.mxu0 %v2131
    %2422 = vmatprep.subr.bf16.mxu0 0
    %2423 = vmatpush1.bf16.msra.mxu0 %v2132
    %2424 = vmatprep.subr.bf16.mxu0 0
    %2425 = vmatpush1.bf16.msra.mxu0 %v2133
    %2426 = vmatprep.subr.bf16.mxu0 0
    %2427 = vmatpush1.bf16.msra.mxu0 %v2134
    %2428 = vmatprep.subr.bf16.mxu0 0
    %2429 = vmatpush1.bf16.msra.mxu0 %v2135
    %2430 = vmatprep.subr.bf16.mxu0 0
    %2431 = vmatpush1.bf16.msra.mxu0 %v2136
    %2432 = vmatprep.subr.bf16.mxu0 0
    %2433 = vmatpush1.bf16.msra.mxu0 %v2137
    %2434 = vmatprep.mubr.bf16.mxu0 %v1573
    %2435 = vmatmul.mubr.bf16.gmra.mrb[0].mxu0 %v1572
    %v2436 = vpop.f32.mrb[0].mxu0
    %v2437 = vadd.f32 %v2397, %v2436
    %v2438 = vpop.f32.mrb[0].mxu0
    %v2439 = vpop.f32.mrb[0].mxu0
    %v2440 = vpop.f32.mrb[0].mxu0
    %2441 = vdwg.mxu0
    %2442 = vmatprep.subr.bf16.mxu0 0
    %2443 = vmatpush1.bf16.msra.mxu0 %v2138
    %2444 = vmatprep.subr.bf16.mxu0 0
    %2445 = vmatpush1.bf16.msra.mxu0 %v2139
    %2446 = vmatprep.subr.bf16.mxu0 0
    %2447 = vmatpush1.bf16.msra.mxu0 %v2140
    %2448 = vmatprep.subr.bf16.mxu0 0
    %2449 = vmatpush1.bf16.msra.mxu0 %v2141
    %2450 = vmatprep.subr.bf16.mxu0 0
    %2451 = vmatpush1.bf16.msra.mxu0 %v2142
    %2452 = vmatprep.subr.bf16.mxu0 0
    %2453 = vmatpush1.bf16.msra.mxu0 %v2143
    %2454 = vmatprep.subr.bf16.mxu0 0
    %2455 = vmatpush1.bf16.msra.mxu0 %v2144
    %2456 = vmatprep.subr.bf16.mxu0 0
    %2457 = vmatpush1.bf16.msra.mxu0 %v2145
    %2458 = vmatprep.subr.bf16.mxu0 0
    %2459 = vmatpush1.bf16.msra.mxu0 %v2146
    %2460 = vmatprep.subr.bf16.mxu0 0
    %2461 = vmatpush1.bf16.msra.mxu0 %v2147
    %2462 = vmatprep.subr.bf16.mxu0 0
    %2463 = vmatpush1.bf16.msra.mxu0 %v2148
    %2464 = vmatprep.subr.bf16.mxu0 0
    %2465 = vmatpush1.bf16.msra.mxu0 %v2149
    %2466 = vmatprep.subr.bf16.mxu0 0
    %2467 = vmatpush1.bf16.msra.mxu0 %v2150
    %2468 = vmatprep.subr.bf16.mxu0 0
    %2469 = vmatpush1.bf16.msra.mxu0 %v2151
    %2470 = vmatprep.subr.bf16.mxu0 0
    %2471 = vmatpush1.bf16.msra.mxu0 %v2152
    %2472 = vmatprep.subr.bf16.mxu0 0
    %2473 = vmatpush1.bf16.msra.mxu0 %v2153
    %2474 = vmatprep.mubr.bf16.mxu0 %v1575
    %2475 = vmatmul.mubr.bf16.gmra.mrb[0].mxu0 %v1574
    %v2476 = vpop.f32.mrb[0].mxu0
    %v2477 = vadd.f32 %v2437, %v2476
    %v2478 = vpop.f32.mrb[0].mxu0
    %v2479 = vpop.f32.mrb[0].mxu0
    %v2480 = vpop.f32.mrb[0].mxu0
    %2481 = vdwg.mxu0
    %2482 = vmatprep.subr.bf16.mxu0 0
    %2483 = vmatpush1.bf16.msra.mxu0 %v2154
    %2484 = vmatprep.subr.bf16.mxu0 0
    %2485 = vmatpush1.bf16.msra.mxu0 %v2155
    %2486 = vmatprep.subr.bf16.mxu0 0
    %2487 = vmatpush1.bf16.msra.mxu0 %v2156
    %2488 = vmatprep.subr.bf16.mxu0 0
    %2489 = vmatpush1.bf16.msra.mxu0 %v2157
    %2490 = vmatprep.subr.bf16.mxu0 0
    %2491 = vmatpush1.bf16.msra.mxu0 %v2158
    %2492 = vmatprep.subr.bf16.mxu0 0
    %2493 = vmatpush1.bf16.msra.mxu0 %v2159
    %2494 = vmatprep.subr.bf16.mxu0 0
    %2495 = vmatpush1.bf16.msra.mxu0 %v2160
    %2496 = vmatprep.subr.bf16.mxu0 0
    %2497 = vmatpush1.bf16.msra.mxu0 %v2161
    %2498 = vmatprep.subr.bf16.mxu0 0
    %2499 = vmatpush1.bf16.msra.mxu0 %v2162
    %2500 = vmatprep.subr.bf16.mxu0 0
    %2501 = vmatpush1.bf16.msra.mxu0 %v2163
    %2502 = vmatprep.subr.bf16.mxu0 0
    %2503 = vmatpush1.bf16.msra.mxu0 %v2164
    %2504 = vmatprep.subr.bf16.mxu0 0
    %2505 = vmatpush1.bf16.msra.mxu0 %v2165
    %2506 = vmatprep.subr.bf16.mxu0 0
    %2507 = vmatpush1.bf16.msra.mxu0 %v2166
    %2508 = vmatprep.subr.bf16.mxu0 0
    %2509 = vmatpush1.bf16.msra.mxu0 %v2167
    %2510 = vmatprep.subr.bf16.mxu0 0
    %2511 = vmatpush1.bf16.msra.mxu0 %v2168
    %2512 = vmatprep.subr.bf16.mxu0 0
    %2513 = vmatpush1.bf16.msra.mxu0 %v2169
    %2514 = vmatprep.mubr.bf16.mxu0 %v1577
    %2515 = vmatmul.mubr.bf16.gmra.mrb[0].mxu0 %v1576
    %v2516 = vpop.f32.mrb[0].mxu0
    %v2517 = vadd.f32 %v2477, %v2516
    %v2518 = vpop.f32.mrb[0].mxu0
    %v2519 = vpop.f32.mrb[0].mxu0
    %v2520 = vpop.f32.mrb[0].mxu0
    %2521 = vdwg.mxu0
    %2522 = vmatprep.subr.bf16.mxu0 0
    %2523 = vmatpush1.bf16.msra.mxu0 %v2170
    %2524 = vmatprep.subr.bf16.mxu0 0
    %2525 = vmatpush1.bf16.msra.mxu0 %v2171
    %2526 = vmatprep.subr.bf16.mxu0 0
    %2527 = vmatpush1.bf16.msra.mxu0 %v2172
    %2528 = vmatprep.subr.bf16.mxu0 0
    %2529 = vmatpush1.bf16.msra.mxu0 %v2173
    %2530 = vmatprep.subr.bf16.mxu0 0
    %2531 = vmatpush1.bf16.msra.mxu0 %v2174
    %2532 = vmatprep.subr.bf16.mxu0 0
    %2533 = vmatpush1.bf16.msra.mxu0 %v2175
    %2534 = vmatprep.subr.bf16.mxu0 0
    %2535 = vmatpush1.bf16.msra.mxu0 %v2176
    %2536 = vmatprep.subr.bf16.mxu0 0
    %2537 = vmatpush1.bf16.msra.mxu0 %v2177
    %2538 = vmatprep.subr.bf16.mxu0 0
    %2539 = vmatpush1.bf16.msra.mxu0 %v2178
    %2540 = vmatprep.subr.bf16.mxu0 0
    %2541 = vmatpush1.bf16.msra.mxu0 %v2179
    %2542 = vmatprep.subr.bf16.mxu0 0
    %2543 = vmatpush1.bf16.msra.mxu0 %v2180
    %2544 = vmatprep.subr.bf16.mxu0 0
    %2545 = vmatpush1.bf16.msra.mxu0 %v2181
    %2546 = vmatprep.subr.bf16.mxu0 0
    %2547 = vmatpush1.bf16.msra.mxu0 %v2182
    %2548 = vmatprep.subr.bf16.mxu0 0
    %2549 = vmatpush1.bf16.msra.mxu0 %v2183
    %2550 = vmatprep.subr.bf16.mxu0 0
    %2551 = vmatpush1.bf16.msra.mxu0 %v2184
    %2552 = vmatprep.subr.bf16.mxu0 0
    %2553 = vmatpush1.bf16.msra.mxu0 %v2185
    %2554 = vmatprep.mubr.bf16.mxu0 %v1579
    %2555 = vmatmul.mubr.bf16.gmra.mrb[0].mxu0 %v1578
    %v2556 = vpop.f32.mrb[0].mxu0
    %v2557 = vadd.f32 %v2517, %v2556
    %v2558 = vpop.f32.mrb[0].mxu0
    %v2559 = vpop.f32.mrb[0].mxu0
    %v2560 = vpop.f32.mrb[0].mxu0
    %2561 = vdwg.mxu0
    %2562 = vmatprep.subr.bf16.mxu0 0
    %2563 = vmatpush1.bf16.msra.mxu0 %v2186
    %2564 = vmatprep.subr.bf16.mxu0 0
    %2565 = vmatpush1.bf16.msra.mxu0 %v2187
    %2566 = vmatprep.subr.bf16.mxu0 0
    %2567 = vmatpush1.bf16.msra.mxu0 %v2188
    %2568 = vmatprep.subr.bf16.mxu0 0
    %2569 = vmatpush1.bf16.msra.mxu0 %v2189
    %2570 = vmatprep.subr.bf16.mxu0 0
    %2571 = vmatpush1.bf16.msra.mxu0 %v2190
    %2572 = vmatprep.subr.bf16.mxu0 0
    %2573 = vmatpush1.bf16.msra.mxu0 %v2191
    %2574 = vmatprep.subr.bf16.mxu0 0
    %2575 = vmatpush1.bf16.msra.mxu0 %v2192
    %2576 = vmatprep.subr.bf16.mxu0 0
    %2577 = vmatpush1.bf16.msra.mxu0 %v2193
    %2578 = vmatprep.subr.bf16.mxu0 0
    %2579 = vmatpush1.bf16.msra.mxu0 %v2194
    %2580 = vmatprep.subr.bf16.mxu0 0
    %2581 = vmatpush1.bf16.msra.mxu0 %v2195
    %2582 = vmatprep.subr.bf16.mxu0 0
    %2583 = vmatpush1.bf16.msra.mxu0 %v2196
    %2584 = vmatprep.subr.bf16.mxu0 0
    %2585 = vmatpush1.bf16.msra.mxu0 %v2197
    %2586 = vmatprep.subr.bf16.mxu0 0
    %2587 = vmatpush1.bf16.msra.mxu0 %v2198
    %2588 = vmatprep.subr.bf16.mxu0 0
    %2589 = vmatpush1.bf16.msra.mxu0 %v2199
    %2590 = vmatprep.subr.bf16.mxu0 0
    %2591 = vmatpush1.bf16.msra.mxu0 %v2200
    %2592 = vmatprep.subr.bf16.mxu0 0
    %2593 = vmatpush1.bf16.msra.mxu0 %v2201
    %2594 = vmatprep.mubr.bf16.mxu0 %v1581
    %2595 = vmatmul.mubr.bf16.gmra.mrb[0].mxu0 %v1580
    %v2596 = vpop.f32.mrb[0].mxu0
    %v2597 = vadd.f32 %v2557, %v2596
    %v2598 = vpop.f32.mrb[0].mxu0
    %v2599 = vpop.f32.mrb[0].mxu0
    %v2600 = vpop.f32.mrb[0].mxu0
    %2601 = vdwg.mxu0
    %2602 = vmatprep.subr.bf16.mxu0 0
    %2603 = vmatpush1.bf16.msra.mxu0 %v2202
    %2604 = vmatprep.subr.bf16.mxu0 0
    %2605 = vmatpush1.bf16.msra.mxu0 %v2203
    %2606 = vmatprep.subr.bf16.mxu0 0
    %2607 = vmatpush1.bf16.msra.mxu0 %v2204
    %2608 = vmatprep.subr.bf16.mxu0 0
    %2609 = vmatpush1.bf16.msra.mxu0 %v2205
    %2610 = vmatprep.subr.bf16.mxu0 0
    %2611 = vmatpush1.bf16.msra.mxu0 %v2206
    %2612 = vmatprep.subr.bf16.mxu0 0
    %2613 = vmatpush1.bf16.msra.mxu0 %v2207
    %2614 = vmatprep.subr.bf16.mxu0 0
    %2615 = vmatpush1.bf16.msra.mxu0 %v2208
    %2616 = vmatprep.subr.bf16.mxu0 0
    %2617 = vmatpush1.bf16.msra.mxu0 %v2209
    %2618 = vmatprep.subr.bf16.mxu0 0
    %2619 = vmatpush1.bf16.msra.mxu0 %v2210
    %2620 = vmatprep.subr.bf16.mxu0 0
    %2621 = vmatpush1.bf16.msra.mxu0 %v2211
    %2622 = vmatprep.subr.bf16.mxu0 0
    %2623 = vmatpush1.bf16.msra.mxu0 %v2212
    %2624 = vmatprep.subr.bf16.mxu0 0
    %2625 = vmatpush1.bf16.msra.mxu0 %v2213
    %2626 = vmatprep.subr.bf16.mxu0 0
    %2627 = vmatpush1.bf16.msra.mxu0 %v2214
    %2628 = vmatprep.subr.bf16.mxu0 0
    %2629 = vmatpush1.bf16.msra.mxu0 %v2215
    %2630 = vmatprep.subr.bf16.mxu0 0
    %2631 = vmatpush1.bf16.msra.mxu0 %v2216
    %2632 = vmatprep.subr.bf16.mxu0 0
    %2633 = vmatpush1.bf16.msra.mxu0 %v2217
    %2634 = vmatprep.mubr.bf16.mxu0 %v1583
    %2635 = vmatmul.mubr.bf16.gmra.mrb[0].mxu0 %v1582
    %v2636 = vpop.f32.mrb[0].mxu0
    %v2637 = vadd.f32 %v2597, %v2636
    %v2638 = vpop.f32.mrb[0].mxu0
    %v2639 = vpop.f32.mrb[0].mxu0
    %v2640 = vpop.f32.mrb[0].mxu0
    %2641 = vdwg.mxu0
    %2642 = vmatprep.subr.bf16.mxu0 0
    %2643 = vmatpush1.bf16.msra.mxu0 %v2218
    %2644 = vmatprep.subr.bf16.mxu0 0
    %2645 = vmatpush1.bf16.msra.mxu0 %v2219
    %2646 = vmatprep.subr.bf16.mxu0 0
    %2647 = vmatpush1.bf16.msra.mxu0 %v2220
    %2648 = vmatprep.subr.bf16.mxu0 0
    %2649 = vmatpush1.bf16.msra.mxu0 %v2221
    %2650 = vmatprep.subr.bf16.mxu0 0
    %2651 = vmatpush1.bf16.msra.mxu0 %v2222
    %2652 = vmatprep.subr.bf16.mxu0 0
    %2653 = vmatpush1.bf16.msra.mxu0 %v2223
    %2654 = vmatprep.subr.bf16.mxu0 0
    %2655 = vmatpush1.bf16.msra.mxu0 %v2224
    %2656 = vmatprep.subr.bf16.mxu0 0
    %2657 = vmatpush1.bf16.msra.mxu0 %v2225
    %2658 = vmatprep.subr.bf16.mxu0 0
    %2659 = vmatpush1.bf16.msra.mxu0 %v2226
    %2660 = vmatprep.subr.bf16.mxu0 0
    %2661 = vmatpush1.bf16.msra.mxu0 %v2227
    %2662 = vmatprep.subr.bf16.mxu0 0
    %2663 = vmatpush1.bf16.msra.mxu0 %v2228
    %2664 = vmatprep.subr.bf16.mxu0 0
    %2665 = vmatpush1.bf16.msra.mxu0 %v2229
    %2666 = vmatprep.subr.bf16.mxu0 0
    %2667 = vmatpush1.bf16.msra.mxu0 %v2230
    %2668 = vmatprep.subr.bf16.mxu0 0
    %2669 = vmatpush1.bf16.msra.mxu0 %v2231
    %2670 = vmatprep.subr.bf16.mxu0 0
    %2671 = vmatpush1.bf16.msra.mxu0 %v2232
    %2672 = vmatprep.subr.bf16.mxu0 0
    %2673 = vmatpush1.bf16.msra.mxu0 %v2233
    %2674 = vmatprep.mubr.bf16.mxu0 %v1585
    %2675 = vmatmul.mubr.bf16.gmra.mrb[0].mxu0 %v1584
    %v2676 = vpop.f32.mrb[0].mxu0
    %v2677 = vadd.f32 %v2637, %v2676
    %v2678 = vpop.f32.mrb[0].mxu0
    %v2679 = vpop.f32.mrb[0].mxu0
    %v2680 = vpop.f32.mrb[0].mxu0
    %2681 = vdwg.mxu0
    %v2682 = vadd.f32 %v688, %v2677
    %s2683 = scalar_lea.vmem %s8, 17
    %v2684 = vld [vmem:[%s2683] ss:$8 sm:$0x3]
    %s2685 = scalar_lea.vmem %s8, 18
    %v2686 = vld [vmem:[%s2685] ss:$8 sm:$0x3]
    %v2687 = vsel %vm221, %v2682, 0.0
    %2688 = vadd.xlane.f32.xlu0 %v2687
    %v2689 = vpop.xlane.xlu0 %2688
    %v2690 = vmul.f32 %v2689, %v225
    %v2691 = vsub.f32 %v2682, %v2690
    %v2692 = vmul.f32 %v2691, %v2691
    %v2693 = vsel %vm221, %v2692, 0.0
    %2694 = vadd.xlane.f32.xlu0 %v2693
    %v2695 = vpop.xlane.xlu0 %2694
    %v2696 = vmul.f32 %v2695, %v225
    %v2697 = vadd.f32 %v2696, 1e-05
    %v2698 = vrsqrt.pop %v2697
    %v2699 = vmul.f32 %v2691, %v2698
    %v2701 = vlaneseq
    %v2702 = vshrl.u32 %v2701, 7
    %v2703 = vsub.s32 0, %v2702
    %v2704 = vrot.slane %v2684, %v2703
    %v2706 = vmul.f32 %v2699, %v2704
    %v2708 = vlaneseq
    %v2709 = vshrl.u32 %v2708, 7
    %v2710 = vsub.s32 0, %v2709
    %v2711 = vrot.slane %v2686, %v2710
    %v2713 = vadd.f32 %v2706, %v2711
    %s2714 = scalar_lea.vmem %s3, 16
    %v2715 = vld [vmem:[%s2714] sm:$0xf]
    %v2716 = vld [vmem:[%s2714 + $0x4] sm:$0xf]
    %v2717 = vld [vmem:[%s2714 + $0x8] sm:$0xf]
    %v2718 = vld [vmem:[%s2714 + $0xc] sm:$0xf]
    %v2719 = vpack.c.bf16 %v2713, %v2713
    %s2720 = scalar_lea.vmem %s8, 19
    %v2721 = vld [vmem:[%s2720] ss:$8 sm:$0x3]
    %v2723 = vlaneseq
    %v2724 = vshrl.u32 %v2723, 7
    %v2725 = vsub.s32 0, %v2724
    %v2726 = vrot.slane %v2721, %v2725
    %v2732 = vunpack.c.l.b16 %v2715
    %v2733 = vunpack.c.l.b16 %v2716
    %v2734 = vunpack.c.l.b16 %v2717
    %v2735 = vunpack.c.l.b16 %v2718
    %v2736 = vpack.c.b16 %v2733, %v2732
    %v2737 = vpack.c.b16 %v2735, %v2734
    %v2741 = vsel %vm88, %v2719, 0
    %2743 = vmatprep.subr.bf16.mxu0 0
    %2744 = vmatpush1.bf16.msra.mxu0 %v2736
    %2745 = vmatprep.subr.bf16.mxu0 0
    %2746 = vmatpush1.bf16.msra.mxu0 %v2737
    %2747 = vmatprep.subr.bf16.mxu0 0
    %2748 = vmatpush1.bf16.msra.mxu0 0
    %2749 = vmatprep.subr.bf16.mxu0 0
    %2750 = vmatpush1.bf16.msra.mxu0 0
    %2751 = vmatprep.subr.bf16.mxu0 0
    %2752 = vmatpush1.bf16.msra.mxu0 0
    %2753 = vmatprep.subr.bf16.mxu0 0
    %2754 = vmatpush1.bf16.msra.mxu0 0
    %2755 = vmatprep.subr.bf16.mxu0 0
    %2756 = vmatpush1.bf16.msra.mxu0 0
    %2757 = vmatprep.subr.bf16.mxu0 0
    %2758 = vmatpush1.bf16.msra.mxu0 0
    %2759 = vmatprep.subr.bf16.mxu0 0
    %2760 = vmatpush1.bf16.msra.mxu0 0
    %2761 = vmatprep.subr.bf16.mxu0 0
    %2762 = vmatpush1.bf16.msra.mxu0 0
    %2763 = vmatprep.subr.bf16.mxu0 0
    %2764 = vmatpush1.bf16.msra.mxu0 0
    %2765 = vmatprep.subr.bf16.mxu0 0
    %2766 = vmatpush1.bf16.msra.mxu0 0
    %2767 = vmatprep.subr.bf16.mxu0 0
    %2768 = vmatpush1.bf16.msra.mxu0 0
    %2769 = vmatprep.subr.bf16.mxu0 0
    %2770 = vmatpush1.bf16.msra.mxu0 0
    %2771 = vmatprep.subr.bf16.mxu0 0
    %2772 = vmatpush1.bf16.msra.mxu0 0
    %2773 = vmatprep.subr.bf16.mxu0 0
    %2774 = vmatpush1.bf16.msra.mxu0 0
    %2775 = vmatprep.mubr.bf16.mxu0 0
    %2776 = vmatmul.mubr.bf16.gmra.mrb[0].mxu0 %v2741
    %v2777 = vpop.f32.mrb[0].mxu0
    %v2778 = vadd.f32 %v2726, %v2777
    %v2779 = vpop.f32.mrb[0].mxu0
    %v2780 = vpop.f32.mrb[0].mxu0
    %v2781 = vpop.f32.mrb[0].mxu0
    %2782 = vdwg.mxu0
    %v2783 = vadd.f32 %v2713, %v2778
    %s2784 = scalar_lea.vmem %s8, 23
    %v2785 = vld [vmem:[%s2784] ss:$8 sm:$0x3]
    %s2786 = scalar_lea.vmem %s8, 32
    %v2787 = vld [vmem:[%s2786] ss:$8 sm:$0x3]
    %v2788 = vsel %vm221, %v2783, 0.0
    %2789 = vadd.xlane.f32.xlu0 %v2788
    %v2790 = vpop.xlane.xlu0 %2789
    %v2791 = vmul.f32 %v2790, %v225
    %v2792 = vsub.f32 %v2783, %v2791
    %v2793 = vmul.f32 %v2792, %v2792
    %v2794 = vsel %vm221, %v2793, 0.0
    %2795 = vadd.xlane.f32.xlu0 %v2794
    %v2796 = vpop.xlane.xlu0 %2795
    %v2797 = vmul.f32 %v2796, %v225
    %v2798 = vadd.f32 %v2797, 1e-05
    %v2799 = vrsqrt.pop %v2798
    %v2800 = vmul.f32 %v2792, %v2799
    %v2802 = vlaneseq
    %v2803 = vshrl.u32 %v2802, 7
    %v2804 = vsub.s32 0, %v2803
    %v2805 = vrot.slane %v2785, %v2804
    %v2807 = vmul.f32 %v2800, %v2805
    %v2809 = vlaneseq
    %v2810 = vshrl.u32 %v2809, 7
    %v2811 = vsub.s32 0, %v2810
    %v2812 = vrot.slane %v2787, %v2811
    %v2814 = vadd.f32 %v2807, %v2812
    %s2815 = scalar_lea.vmem %s3, 64
    %v2816 = vld [vmem:[%s2815] sm:$0xf]
    %v2817 = vld [vmem:[%s2815 + $0x4] sm:$0xf]
    %v2818 = vld [vmem:[%s2815 + $0x8] sm:$0xf]
    %v2819 = vld [vmem:[%s2815 + $0xc] sm:$0xf]
    %v2820 = vpack.c.bf16 %v2814, %v2814
    %s2821 = scalar_lea.vmem %s8, 20
    %v2822 = vld [vmem:[%s2821] ss:$8 sm:$0x3]
    %v2824 = vlaneseq
    %v2825 = vshrl.u32 %v2824, 7
    %v2826 = vsub.s32 0, %v2825
    %v2827 = vrot.slane %v2822, %v2826
    %v2833 = vunpack.c.l.b16 %v2816
    %v2834 = vunpack.c.l.b16 %v2817
    %v2835 = vunpack.c.l.b16 %v2818
    %v2836 = vunpack.c.l.b16 %v2819
    %v2837 = vpack.c.b16 %v2834, %v2833
    %v2838 = vpack.c.b16 %v2836, %v2835
    %v2842 = vsel %vm88, %v2820, 0
    %2844 = vmatprep.subr.bf16.mxu0 0
    %2845 = vmatpush1.bf16.msra.mxu0 %v2837
    %2846 = vmatprep.subr.bf16.mxu0 0
    %2847 = vmatpush1.bf16.msra.mxu0 %v2838
    %2848 = vmatprep.subr.bf16.mxu0 0
    %2849 = vmatpush1.bf16.msra.mxu0 0
    %2850 = vmatprep.subr.bf16.mxu0 0
    %2851 = vmatpush1.bf16.msra.mxu0 0
    %2852 = vmatprep.subr.bf16.mxu0 0
    %2853 = vmatpush1.bf16.msra.mxu0 0
    %2854 = vmatprep.subr.bf16.mxu0 0
    %2855 = vmatpush1.bf16.msra.mxu0 0
    %2856 = vmatprep.subr.bf16.mxu0 0
    %2857 = vmatpush1.bf16.msra.mxu0 0
    %2858 = vmatprep.subr.bf16.mxu0 0
    %2859 = vmatpush1.bf16.msra.mxu0 0
    %2860 = vmatprep.subr.bf16.mxu0 0
    %2861 = vmatpush1.bf16.msra.mxu0 0
    %2862 = vmatprep.subr.bf16.mxu0 0
    %2863 = vmatpush1.bf16.msra.mxu0 0
    %2864 = vmatprep.subr.bf16.mxu0 0
    %2865 = vmatpush1.bf16.msra.mxu0 0
    %2866 = vmatprep.subr.bf16.mxu0 0
    %2867 = vmatpush1.bf16.msra.mxu0 0
    %2868 = vmatprep.subr.bf16.mxu0 0
    %2869 = vmatpush1.bf16.msra.mxu0 0
    %2870 = vmatprep.subr.bf16.mxu0 0
    %2871 = vmatpush1.bf16.msra.mxu0 0
    %2872 = vmatprep.subr.bf16.mxu0 0
    %2873 = vmatpush1.bf16.msra.mxu0 0
    %2874 = vmatprep.subr.bf16.mxu0 0
    %2875 = vmatpush1.bf16.msra.mxu0 0
    %2876 = vmatprep.mubr.bf16.mxu0 0
    %2877 = vmatmul.mubr.bf16.gmra.mrb[0].mxu0 %v2842
    %v2878 = vpop.f32.mrb[0].mxu0
    %v2879 = vadd.f32 %v2827, %v2878
    %v2880 = vpop.f32.mrb[0].mxu0
    %v2881 = vpop.f32.mrb[0].mxu0
    %v2882 = vpop.f32.mrb[0].mxu0
    %2883 = vdwg.mxu0
    %v2884 = vmul.f32 %v2879, 0.35355338
    %v2887 = vunpack.c.l.s4 1966171168
    %v2888 = vunpack.c.0.s8 %v2887
    %v2889 = vlaneseq
    %v2890 = vshrl.u32 %v2889, 7
    %v2891 = vsub.s32 %v2888, %v2890
    %v2892 = vrot.slane %v2884, %v2891
    %v2893 = vcombine.high %v2892, %v2892
    %v2895 = vunpack.c.l.s4 1966171168
    %v2896 = vunpack.c.0.s8 %v2895
    %v2897 = vlaneseq
    %v2898 = vshrl.u32 %v2897, 7
    %v2899 = vsub.s32 %v2896, %v2898
    %v2900 = vrot.slane %v2892, %v2899
    %v2902 = vunpack.c.l.s4 1966171168
    %v2903 = vunpack.c.0.s8 %v2902
    %v2904 = vlaneseq
    %v2905 = vshrl.u32 %v2904, 7
    %v2906 = vsub.s32 %v2903, %v2905
    %v2907 = vrot.slane %v2893, %v2906
    %v2908 = vlaneseq
    %v2909 = vshrl.u32 %v2908, 7
    %v2910 = vsub.s32 0, %v2909
    %v2911 = vrot.slane %v2900, %v2910
    %v2912 = vlaneseq
    %v2913 = vshrl.u32 %v2912, 7
    %v2914 = vsub.s32 0, %v2913
    %v2915 = vrot.slane %v2907, %v2914
    %2918 = vrot.lane.b32.xlu0 %v130, 64
    %v2919 = vpop.permute.xlu0 %2918
    %2920 = vrot.lane.b32.xlu0 %v134, 64
    %v2921 = vpop.permute.xlu0 %2920
    %2922 = vrot.lane.b32.xlu0 %v140, 64
    %v2923 = vpop.permute.xlu0 %2922
    %2924 = vrot.lane.b32.xlu0 %v144, 64
    %v2925 = vpop.permute.xlu0 %2924
    %v2930 = vmul.f32 %v2911, %v2919
    %v2931 = vmul.f32 %v2911, %v2921
    %v2932 = vmul.f32 %v2915, %v2923
    %v2933 = vmul.f32 %v2915, %v2925
    %v2934 = vpack.c.bf16 %v2931, %v2930
    %v2935 = vpack.c.bf16 %v2933, %v2932
    %v2937 = vsel %vm88, %v2934, 0
    %v2940 = vsel %vm88, %v2935, 0
    %2942 = vmatprep.subr.bf16.mxu0 0
    %2943 = vmatpush1.bf16.msra.mxu0 %v367
    %2944 = vmatprep.subr.bf16.mxu0 0
    %2945 = vmatpush1.bf16.msra.mxu0 %v368
    %2946 = vmatprep.subr.bf16.mxu0 0
    %2947 = vmatpush1.bf16.msra.mxu0 0
    %2948 = vmatprep.subr.bf16.mxu0 0
    %2949 = vmatpush1.bf16.msra.mxu0 0
    %2950 = vmatprep.subr.bf16.mxu0 0
    %2951 = vmatpush1.bf16.msra.mxu0 0
    %2952 = vmatprep.subr.bf16.mxu0 0
    %2953 = vmatpush1.bf16.msra.mxu0 0
    %2954 = vmatprep.subr.bf16.mxu0 0
    %2955 = vmatpush1.bf16.msra.mxu0 0
    %2956 = vmatprep.subr.bf16.mxu0 0
    %2957 = vmatpush1.bf16.msra.mxu0 0
    %2958 = vmatprep.subr.bf16.mxu0 0
    %2959 = vmatpush1.bf16.msra.mxu0 0
    %2960 = vmatprep.subr.bf16.mxu0 0
    %2961 = vmatpush1.bf16.msra.mxu0 0
    %2962 = vmatprep.subr.bf16.mxu0 0
    %2963 = vmatpush1.bf16.msra.mxu0 0
    %2964 = vmatprep.subr.bf16.mxu0 0
    %2965 = vmatpush1.bf16.msra.mxu0 0
    %2966 = vmatprep.subr.bf16.mxu0 0
    %2967 = vmatpush1.bf16.msra.mxu0 0
    %2968 = vmatprep.subr.bf16.mxu0 0
    %2969 = vmatpush1.bf16.msra.mxu0 0
    %2970 = vmatprep.subr.bf16.mxu0 0
    %2971 = vmatpush1.bf16.msra.mxu0 0
    %2972 = vmatprep.subr.bf16.mxu0 0
    %2973 = vmatpush1.bf16.msra.mxu0 0
    %2974 = vmatprep.mubr.bf16.mxu0 0
    %2975 = vmatmul.mubr.bf16.gmra.mrb[0].mxu0 %v2937
    %v2976 = vpop.f32.mrb[0].mxu0
    %v2977 = vadd.f32 %v41, %v2976
    %v2978 = vpop.f32.mrb[0].mxu0
    %v2979 = vpop.f32.mrb[0].mxu0
    %v2980 = vadd.f32 %v42, %v2979
    %v2981 = vpop.f32.mrb[0].mxu0
    %2982 = vmatprep.mubr.bf16.mxu0 0
    %2983 = vmatmul.mubr.bf16.gmra.mrb[0].mxu0 %v2940
    %v2984 = vpop.f32.mrb[0].mxu0
    %v2985 = vadd.f32 %v43, %v2984
    %v2986 = vpop.f32.mrb[0].mxu0
    %v2987 = vpop.f32.mrb[0].mxu0
    %v2988 = vadd.f32 %v44, %v2987
    %v2989 = vpop.f32.mrb[0].mxu0
    %2990 = vdwg.mxu0
    %v2991 = vsel %vm426, %v2977, -inf
    %v2992 = vsel %vm426, %v2980, -inf
    %v2993 = vmax.f32 %v2991, %v2992
    %v2994 = vrot.slane %v2993, 4
    %v2995 = vmax.f32 %v2993, %v2994
    %v2996 = vrot.slane %v2995, 2
    %v2997 = vmax.f32 %v2995, %v2996
    %v2998 = vrot.slane %v2997, 1
    %v2999 = vmax.f32 %v2997, %v2998
    %v3000 = vsel %vm426, %v2985, -inf
    %v3001 = vsel %vm426, %v2988, -inf
    %v3002 = vmax.f32 %v3000, %v3001
    %v3003 = vrot.slane %v3002, 4
    %v3004 = vmax.f32 %v3002, %v3003
    %v3005 = vrot.slane %v3004, 2
    %v3006 = vmax.f32 %v3004, %v3005
    %v3007 = vrot.slane %v3006, 1
    %v3008 = vmax.f32 %v3006, %v3007
    %v3009 = vsub.f32 %v2977, %v2999
    %v3010 = vsub.f32 %v2980, %v2999
    %v3011 = vsub.f32 %v2985, %v3008
    %v3012 = vsub.f32 %v2988, %v3008
    %v3013 = vmul.f32 %v3009, 1.442695
    %v3014 = vpow.pop %v3013
    %v3015 = vmul.f32 %v3010, 1.442695
    %v3016 = vpow.pop %v3015
    %v3017 = vmul.f32 %v3011, 1.442695
    %v3018 = vpow.pop %v3017
    %v3019 = vmul.f32 %v3012, 1.442695
    %v3020 = vpow.pop %v3019
    %v3021 = vsel %vm426, %v3014, 0.0
    %v3022 = vsel %vm426, %v3016, 0.0
    %v3023 = vadd.f32 %v3021, %v3022
    %v3024 = vrot.slane %v3023, 4
    %v3025 = vadd.f32 %v3023, %v3024
    %v3026 = vrot.slane %v3025, 2
    %v3027 = vadd.f32 %v3025, %v3026
    %v3028 = vrot.slane %v3027, 1
    %v3029 = vadd.f32 %v3027, %v3028
    %v3030 = vsel %vm426, %v3018, 0.0
    %v3031 = vsel %vm426, %v3020, 0.0
    %v3032 = vadd.f32 %v3030, %v3031
    %v3033 = vrot.slane %v3032, 4
    %v3034 = vadd.f32 %v3032, %v3033
    %v3035 = vrot.slane %v3034, 2
    %v3036 = vadd.f32 %v3034, %v3035
    %v3037 = vrot.slane %v3036, 1
    %v3038 = vadd.f32 %v3036, %v3037
    %v3039 = vrcp.pop %v3029
    %v3040 = vrcp.pop %v3038
    %v3041 = vmul.f32 %v3014, %v3039
    %v3042 = vmul.f32 %v3016, %v3039
    %v3043 = vmul.f32 %v3018, %v3040
    %v3044 = vmul.f32 %v3020, %v3040
    %v3045 = vpack.c.bf16 %v3042, %v3041
    %v3046 = vpack.c.bf16 %v3044, %v3043
    %v3048 = vsel %vm426, %v3045, 0
    %v3051 = vsel %vm426, %v3046, 0
    %3053 = vmatprep.subr.bf16.mxu0 0
    %3054 = vmatpush1.bf16.msra.mxu0 %v491
    %3055 = vmatprep.subr.bf16.mxu0 0
    %3056 = vmatpush1.bf16.msra.mxu0 0
    %3057 = vmatprep.subr.bf16.mxu0 0
    %3058 = vmatpush1.bf16.msra.mxu0 0
    %3059 = vmatprep.subr.bf16.mxu0 0
    %3060 = vmatpush1.bf16.msra.mxu0 0
    %3061 = vmatprep.subr.bf16.mxu0 0
    %3062 = vmatpush1.bf16.msra.mxu0 0
    %3063 = vmatprep.subr.bf16.mxu0 0
    %3064 = vmatpush1.bf16.msra.mxu0 0
    %3065 = vmatprep.subr.bf16.mxu0 0
    %3066 = vmatpush1.bf16.msra.mxu0 0
    %3067 = vmatprep.subr.bf16.mxu0 0
    %3068 = vmatpush1.bf16.msra.mxu0 0
    %3069 = vmatprep.subr.bf16.mxu0 0
    %3070 = vmatpush1.bf16.msra.mxu0 0
    %3071 = vmatprep.subr.bf16.mxu0 0
    %3072 = vmatpush1.bf16.msra.mxu0 0
    %3073 = vmatprep.subr.bf16.mxu0 0
    %3074 = vmatpush1.bf16.msra.mxu0 0
    %3075 = vmatprep.subr.bf16.mxu0 0
    %3076 = vmatpush1.bf16.msra.mxu0 0
    %3077 = vmatprep.subr.bf16.mxu0 0
    %3078 = vmatpush1.bf16.msra.mxu0 0
    %3079 = vmatprep.subr.bf16.mxu0 0
    %3080 = vmatpush1.bf16.msra.mxu0 0
    %3081 = vmatprep.subr.bf16.mxu0 0
    %3082 = vmatpush1.bf16.msra.mxu0 0
    %3083 = vmatprep.subr.bf16.mxu0 0
    %3084 = vmatpush1.bf16.msra.mxu0 0
    %3085 = vmatprep.mubr.bf16.mxu0 0
    %3086 = vmatmul.mubr.bf16.gmra.mrb[0].mxu0 %v3048
    %v3087 = vpop.f32.mrb[0].mxu0
    %v3088 = vadd.f32 0.0, %v3087
    %v3089 = vpop.f32.mrb[0].mxu0
    %v3090 = vpop.f32.mrb[0].mxu0
    %v3091 = vadd.f32 0.0, %v3090
    %v3092 = vpop.f32.mrb[0].mxu0
    %3093 = vmatprep.mubr.bf16.mxu0 0
    %3094 = vmatmul.mubr.bf16.gmra.mrb[0].mxu0 %v3051
    %v3095 = vpop.f32.mrb[0].mxu0
    %v3096 = vadd.f32 0.0, %v3095
    %v3097 = vpop.f32.mrb[0].mxu0
    %v3098 = vpop.f32.mrb[0].mxu0
    %v3099 = vadd.f32 0.0, %v3098
    %v3100 = vpop.f32.mrb[0].mxu0
    %3101 = vdwg.mxu0
    %3102 = vrot.lane.b32.xlu0 %v130, 32
    %v3103 = vpop.permute.xlu0 %3102
    %3104 = vrot.lane.b32.xlu0 %v134, 32
    %v3105 = vpop.permute.xlu0 %3104
    %3106 = vrot.lane.b32.xlu0 %v140, 32
    %v3107 = vpop.permute.xlu0 %3106
    %3108 = vrot.lane.b32.xlu0 %v144, 32
    %v3109 = vpop.permute.xlu0 %3108
    %v3114 = vmul.f32 %v3088, %v3103
    %v3115 = vmul.f32 %v3091, %v3105
    %v3116 = vmul.f32 %v3096, %v3107
    %v3117 = vmul.f32 %v3099, %v3109
    %v3118 = vsel %vm88, %v3114, 0.0
    %v3119 = vsel %vm88, %v3115, 0.0
    %v3120 = vadd.f32 %v3118, %v3119
    %v3121 = vrot.slane %v3120, 4
    %v3122 = vadd.f32 %v3120, %v3121
    %v3123 = vrot.slane %v3122, 2
    %v3124 = vadd.f32 %v3122, %v3123
    %v3125 = vrot.slane %v3124, 1
    %v3126 = vadd.f32 %v3124, %v3125
    %v3127 = vsel %vm88, %v3116, 0.0
    %v3128 = vsel %vm88, %v3117, 0.0
    %v3129 = vadd.f32 %v3127, %v3128
    %v3130 = vrot.slane %v3129, 4
    %v3131 = vadd.f32 %v3129, %v3130
    %v3132 = vrot.slane %v3131, 2
    %v3133 = vadd.f32 %v3131, %v3132
    %v3134 = vrot.slane %v3133, 1
    %v3135 = vadd.f32 %v3133, %v3134
    %s3136 = scalar_lea.vmem %s3, 112
    %v3137 = vld [vmem:[%s3136] sm:$0xf]
    %v3138 = vld [vmem:[%s3136 + $0x4] sm:$0xf]
    %v3139 = vld [vmem:[%s3136 + $0x8] sm:$0xf]
    %v3140 = vld [vmem:[%s3136 + $0xc] sm:$0xf]
    %v3141 = vpack.c.bf16 %v3126, %v3126
    %v3142 = vpack.c.bf16 %v3135, %v3135
    %s3143 = scalar_lea.vmem %s8, 21
    %v3144 = vld [vmem:[%s3143] ss:$8 sm:$0x3]
    %v3146 = vlaneseq
    %v3147 = vshrl.u32 %v3146, 7
    %v3148 = vsub.s32 0, %v3147
    %v3149 = vrot.slane %v3144, %v3148
    %v3153 = vunpack.c.l.b16 %v3141
    %v3154 = vunpack.c.l.b16 %v3142
    %v3155 = vsel %vm599, %v3154, %v3153
    %v3156 = vpack.c.b16 %v3155, %v3155
    %v3161 = vunpack.c.l.b16 %v3137
    %v3162 = vunpack.c.l.b16 %v3138
    %v3163 = vunpack.c.l.b16 %v3139
    %v3164 = vunpack.c.l.b16 %v3140
    %v3165 = vpack.c.b16 %v3162, %v3161
    %v3166 = vpack.c.b16 %v3164, %v3163
    %v3170 = vsel %vm88, %v3156, 0
    %3172 = vmatprep.subr.bf16.mxu0 0
    %3173 = vmatpush1.bf16.msra.mxu0 %v3165
    %3174 = vmatprep.subr.bf16.mxu0 0
    %3175 = vmatpush1.bf16.msra.mxu0 %v3166
    %3176 = vmatprep.subr.bf16.mxu0 0
    %3177 = vmatpush1.bf16.msra.mxu0 0
    %3178 = vmatprep.subr.bf16.mxu0 0
    %3179 = vmatpush1.bf16.msra.mxu0 0
    %3180 = vmatprep.subr.bf16.mxu0 0
    %3181 = vmatpush1.bf16.msra.mxu0 0
    %3182 = vmatprep.subr.bf16.mxu0 0
    %3183 = vmatpush1.bf16.msra.mxu0 0
    %3184 = vmatprep.subr.bf16.mxu0 0
    %3185 = vmatpush1.bf16.msra.mxu0 0
    %3186 = vmatprep.subr.bf16.mxu0 0
    %3187 = vmatpush1.bf16.msra.mxu0 0
    %3188 = vmatprep.subr.bf16.mxu0 0
    %3189 = vmatpush1.bf16.msra.mxu0 0
    %3190 = vmatprep.subr.bf16.mxu0 0
    %3191 = vmatpush1.bf16.msra.mxu0 0
    %3192 = vmatprep.subr.bf16.mxu0 0
    %3193 = vmatpush1.bf16.msra.mxu0 0
    %3194 = vmatprep.subr.bf16.mxu0 0
    %3195 = vmatpush1.bf16.msra.mxu0 0
    %3196 = vmatprep.subr.bf16.mxu0 0
    %3197 = vmatpush1.bf16.msra.mxu0 0
    %3198 = vmatprep.subr.bf16.mxu0 0
    %3199 = vmatpush1.bf16.msra.mxu0 0
    %3200 = vmatprep.subr.bf16.mxu0 0
    %3201 = vmatpush1.bf16.msra.mxu0 0
    %3202 = vmatprep.subr.bf16.mxu0 0
    %3203 = vmatpush1.bf16.msra.mxu0 0
    %3204 = vmatprep.mubr.bf16.mxu0 0
    %3205 = vmatmul.mubr.bf16.gmra.mrb[0].mxu0 %v3170
    %v3206 = vpop.f32.mrb[0].mxu0
    %v3207 = vadd.f32 %v3149, %v3206
    %v3208 = vpop.f32.mrb[0].mxu0
    %v3209 = vpop.f32.mrb[0].mxu0
    %v3210 = vpop.f32.mrb[0].mxu0
    %3211 = vdwg.mxu0
    %v3212 = vadd.f32 %v2814, %v3207
    %s3213 = scalar_lea.vmem %s8, 33
    %v3214 = vld [vmem:[%s3213] ss:$8 sm:$0x3]
    %s3215 = scalar_lea.vmem %s8, 34
    %v3216 = vld [vmem:[%s3215] ss:$8 sm:$0x3]
    %v3217 = vsel %vm221, %v3212, 0.0
    %3218 = vadd.xlane.f32.xlu0 %v3217
    %v3219 = vpop.xlane.xlu0 %3218
    %v3220 = vmul.f32 %v3219, %v225
    %v3221 = vsub.f32 %v3212, %v3220
    %v3222 = vmul.f32 %v3221, %v3221
    %v3223 = vsel %vm221, %v3222, 0.0
    %3224 = vadd.xlane.f32.xlu0 %v3223
    %v3225 = vpop.xlane.xlu0 %3224
    %v3226 = vmul.f32 %v3225, %v225
    %v3227 = vadd.f32 %v3226, 1e-05
    %v3228 = vrsqrt.pop %v3227
    %v3229 = vmul.f32 %v3221, %v3228
    %v3231 = vlaneseq
    %v3232 = vshrl.u32 %v3231, 7
    %v3233 = vsub.s32 0, %v3232
    %v3234 = vrot.slane %v3214, %v3233
    %v3236 = vmul.f32 %v3229, %v3234
    %v3238 = vlaneseq
    %v3239 = vshrl.u32 %v3238, 7
    %v3240 = vsub.s32 0, %v3239
    %v3241 = vrot.slane %v3216, %v3240
    %v3243 = vadd.f32 %v3236, %v3241
    %s3244 = scalar_lea.vmem %s5, 256
    %v3245 = vld [vmem:[%s3244] sm:$0xff]
    %v3246 = vld [vmem:[%s3244 + $0x8] sm:$0xff]
    %v3247 = vld [vmem:[%s3244 + $0x10] sm:$0xff]
    %v3248 = vld [vmem:[%s3244 + $0x18] sm:$0xff]
    %v3249 = vld [vmem:[%s3244 + $0x20] sm:$0xff]
    %v3250 = vld [vmem:[%s3244 + $0x28] sm:$0xff]
    %v3251 = vld [vmem:[%s3244 + $0x30] sm:$0xff]
    %v3252 = vld [vmem:[%s3244 + $0x38] sm:$0xff]
    %v3253 = vld [vmem:[%s3244 + $0x40] sm:$0xff]
    %v3254 = vld [vmem:[%s3244 + $0x48] sm:$0xff]
    %v3255 = vld [vmem:[%s3244 + $0x50] sm:$0xff]
    %v3256 = vld [vmem:[%s3244 + $0x58] sm:$0xff]
    %v3257 = vld [vmem:[%s3244 + $0x60] sm:$0xff]
    %v3258 = vld [vmem:[%s3244 + $0x68] sm:$0xff]
    %v3259 = vld [vmem:[%s3244 + $0x70] sm:$0xff]
    %v3260 = vld [vmem:[%s3244 + $0x78] sm:$0xff]
    %v3261 = vld [vmem:[%s3244 + $0x80] sm:$0xff]
    %v3262 = vld [vmem:[%s3244 + $0x88] sm:$0xff]
    %v3263 = vld [vmem:[%s3244 + $0x90] sm:$0xff]
    %v3264 = vld [vmem:[%s3244 + $0x98] sm:$0xff]
    %v3265 = vld [vmem:[%s3244 + $0xa0] sm:$0xff]
    %v3266 = vld [vmem:[%s3244 + $0xa8] sm:$0xff]
    %v3267 = vld [vmem:[%s3244 + $0xb0] sm:$0xff]
    %v3268 = vld [vmem:[%s3244 + $0xb8] sm:$0xff]
    %v3269 = vld [vmem:[%s3244 + $0xc0] sm:$0xff]
    %v3270 = vld [vmem:[%s3244 + $0xc8] sm:$0xff]
    %v3271 = vld [vmem:[%s3244 + $0xd0] sm:$0xff]
    %v3272 = vld [vmem:[%s3244 + $0xd8] sm:$0xff]
    %v3273 = vld [vmem:[%s3244 + $0xe0] sm:$0xff]
    %v3274 = vld [vmem:[%s3244 + $0xe8] sm:$0xff]
    %v3275 = vld [vmem:[%s3244 + $0xf0] sm:$0xff]
    %v3276 = vld [vmem:[%s3244 + $0xf8] sm:$0xff]
    %v3277 = vpack.c.bf16 %v3243, %v3243
    %s3278 = scalar_lea.vmem %s7, 1
    %v3279 = vld [vmem:[%s3278] ss:$4 sm:$0xff]
    %s3280 = scalar_lea.vmem %s7, 33
    %v3281 = vld [vmem:[%s3280] ss:$4 sm:$0xff]
    %v3284 = vlaneseq
    %v3285 = vshrl.u32 %v3284, 7
    %v3286 = vsub.s32 0, %v3285
    %v3287 = vrot.slane %v3279, %v3286
    %v3288 = vlaneseq
    %v3289 = vshrl.u32 %v3288, 7
    %v3290 = vsub.s32 1, %v3289
    %v3291 = vrot.slane %v3279, %v3290
    %v3292 = vlaneseq
    %v3293 = vshrl.u32 %v3292, 7
    %v3294 = vsub.s32 2, %v3293
    %v3295 = vrot.slane %v3279, %v3294
    %v3296 = vlaneseq
    %v3297 = vshrl.u32 %v3296, 7
    %v3298 = vsub.s32 3, %v3297
    %v3299 = vrot.slane %v3279, %v3298
    %v3300 = vlaneseq
    %v3301 = vshrl.u32 %v3300, 7
    %v3302 = vsub.s32 4, %v3301
    %v3303 = vrot.slane %v3279, %v3302
    %v3304 = vlaneseq
    %v3305 = vshrl.u32 %v3304, 7
    %v3306 = vsub.s32 5, %v3305
    %v3307 = vrot.slane %v3279, %v3306
    %v3308 = vlaneseq
    %v3309 = vshrl.u32 %v3308, 7
    %v3310 = vsub.s32 6, %v3309
    %v3311 = vrot.slane %v3279, %v3310
    %v3312 = vlaneseq
    %v3313 = vshrl.u32 %v3312, 7
    %v3314 = vsub.s32 7, %v3313
    %v3315 = vrot.slane %v3279, %v3314
    %v3316 = vlaneseq
    %v3317 = vshrl.u32 %v3316, 7
    %v3318 = vsub.s32 0, %v3317
    %v3319 = vrot.slane %v3281, %v3318
    %v3320 = vlaneseq
    %v3321 = vshrl.u32 %v3320, 7
    %v3322 = vsub.s32 1, %v3321
    %v3323 = vrot.slane %v3281, %v3322
    %v3324 = vlaneseq
    %v3325 = vshrl.u32 %v3324, 7
    %v3326 = vsub.s32 2, %v3325
    %v3327 = vrot.slane %v3281, %v3326
    %v3328 = vlaneseq
    %v3329 = vshrl.u32 %v3328, 7
    %v3330 = vsub.s32 3, %v3329
    %v3331 = vrot.slane %v3281, %v3330
    %v3332 = vlaneseq
    %v3333 = vshrl.u32 %v3332, 7
    %v3334 = vsub.s32 4, %v3333
    %v3335 = vrot.slane %v3281, %v3334
    %v3336 = vlaneseq
    %v3337 = vshrl.u32 %v3336, 7
    %v3338 = vsub.s32 5, %v3337
    %v3339 = vrot.slane %v3281, %v3338
    %v3340 = vlaneseq
    %v3341 = vshrl.u32 %v3340, 7
    %v3342 = vsub.s32 6, %v3341
    %v3343 = vrot.slane %v3281, %v3342
    %v3344 = vlaneseq
    %v3345 = vshrl.u32 %v3344, 7
    %v3346 = vsub.s32 7, %v3345
    %v3347 = vrot.slane %v3281, %v3346
    %v3396 = vunpack.c.l.b16 %v3245
    %v3397 = vunpack.c.h.b16 %v3245
    %v3398 = vunpack.c.l.b16 %v3246
    %v3399 = vunpack.c.h.b16 %v3246
    %v3400 = vunpack.c.l.b16 %v3247
    %v3401 = vunpack.c.h.b16 %v3247
    %v3402 = vunpack.c.l.b16 %v3248
    %v3403 = vunpack.c.h.b16 %v3248
    %v3404 = vunpack.c.l.b16 %v3249
    %v3405 = vunpack.c.h.b16 %v3249
    %v3406 = vunpack.c.l.b16 %v3250
    %v3407 = vunpack.c.h.b16 %v3250
    %v3408 = vunpack.c.l.b16 %v3251
    %v3409 = vunpack.c.h.b16 %v3251
    %v3410 = vunpack.c.l.b16 %v3252
    %v3411 = vunpack.c.h.b16 %v3252
    %v3412 = vunpack.c.l.b16 %v3253
    %v3413 = vunpack.c.h.b16 %v3253
    %v3414 = vunpack.c.l.b16 %v3254
    %v3415 = vunpack.c.h.b16 %v3254
    %v3416 = vunpack.c.l.b16 %v3255
    %v3417 = vunpack.c.h.b16 %v3255
    %v3418 = vunpack.c.l.b16 %v3256
    %v3419 = vunpack.c.h.b16 %v3256
    %v3420 = vunpack.c.l.b16 %v3257
    %v3421 = vunpack.c.h.b16 %v3257
    %v3422 = vunpack.c.l.b16 %v3258
    %v3423 = vunpack.c.h.b16 %v3258
    %v3424 = vunpack.c.l.b16 %v3259
    %v3425 = vunpack.c.h.b16 %v3259
    %v3426 = vunpack.c.l.b16 %v3260
    %v3427 = vunpack.c.h.b16 %v3260
    %v3428 = vunpack.c.l.b16 %v3261
    %v3429 = vunpack.c.h.b16 %v3261
    %v3430 = vunpack.c.l.b16 %v3262
    %v3431 = vunpack.c.h.b16 %v3262
    %v3432 = vunpack.c.l.b16 %v3263
    %v3433 = vunpack.c.h.b16 %v3263
    %v3434 = vunpack.c.l.b16 %v3264
    %v3435 = vunpack.c.h.b16 %v3264
    %v3436 = vunpack.c.l.b16 %v3265
    %v3437 = vunpack.c.h.b16 %v3265
    %v3438 = vunpack.c.l.b16 %v3266
    %v3439 = vunpack.c.h.b16 %v3266
    %v3440 = vunpack.c.l.b16 %v3267
    %v3441 = vunpack.c.h.b16 %v3267
    %v3442 = vunpack.c.l.b16 %v3268
    %v3443 = vunpack.c.h.b16 %v3268
    %v3444 = vunpack.c.l.b16 %v3269
    %v3445 = vunpack.c.h.b16 %v3269
    %v3446 = vunpack.c.l.b16 %v3270
    %v3447 = vunpack.c.h.b16 %v3270
    %v3448 = vunpack.c.l.b16 %v3271
    %v3449 = vunpack.c.h.b16 %v3271
    %v3450 = vunpack.c.l.b16 %v3272
    %v3451 = vunpack.c.h.b16 %v3272
    %v3452 = vunpack.c.l.b16 %v3273
    %v3453 = vunpack.c.h.b16 %v3273
    %v3454 = vunpack.c.l.b16 %v3274
    %v3455 = vunpack.c.h.b16 %v3274
    %v3456 = vunpack.c.l.b16 %v3275
    %v3457 = vunpack.c.h.b16 %v3275
    %v3458 = vunpack.c.l.b16 %v3276
    %v3459 = vunpack.c.h.b16 %v3276
    %v3460 = vpack.c.b16 %v3412, %v3396
    %v3461 = vpack.c.b16 %v3413, %v3397
    %v3462 = vpack.c.b16 %v3414, %v3398
    %v3463 = vpack.c.b16 %v3415, %v3399
    %v3464 = vpack.c.b16 %v3416, %v3400
    %v3465 = vpack.c.b16 %v3417, %v3401
    %v3466 = vpack.c.b16 %v3418, %v3402
    %v3467 = vpack.c.b16 %v3419, %v3403
    %v3468 = vpack.c.b16 %v3420, %v3404
    %v3469 = vpack.c.b16 %v3421, %v3405
    %v3470 = vpack.c.b16 %v3422, %v3406
    %v3471 = vpack.c.b16 %v3423, %v3407
    %v3472 = vpack.c.b16 %v3424, %v3408
    %v3473 = vpack.c.b16 %v3425, %v3409
    %v3474 = vpack.c.b16 %v3426, %v3410
    %v3475 = vpack.c.b16 %v3427, %v3411
    %v3476 = vpack.c.b16 %v3444, %v3428
    %v3477 = vpack.c.b16 %v3445, %v3429
    %v3478 = vpack.c.b16 %v3446, %v3430
    %v3479 = vpack.c.b16 %v3447, %v3431
    %v3480 = vpack.c.b16 %v3448, %v3432
    %v3481 = vpack.c.b16 %v3449, %v3433
    %v3482 = vpack.c.b16 %v3450, %v3434
    %v3483 = vpack.c.b16 %v3451, %v3435
    %v3484 = vpack.c.b16 %v3452, %v3436
    %v3485 = vpack.c.b16 %v3453, %v3437
    %v3486 = vpack.c.b16 %v3454, %v3438
    %v3487 = vpack.c.b16 %v3455, %v3439
    %v3488 = vpack.c.b16 %v3456, %v3440
    %v3489 = vpack.c.b16 %v3457, %v3441
    %v3490 = vpack.c.b16 %v3458, %v3442
    %v3491 = vpack.c.b16 %v3459, %v3443
    %v3525 = vsel %vm88, %v3277, 0
    %3527 = vmatprep.subr.bf16.mxu0 %v3461
    %3528 = vmatpush1.bf16.msra.mxu0 %v3460
    %3529 = vmatprep.subr.bf16.mxu0 %v3477
    %3530 = vmatpush1.bf16.msra.mxu0 %v3476
    %3531 = vmatprep.subr.bf16.mxu0 0
    %3532 = vmatpush1.bf16.msra.mxu0 0
    %3533 = vmatprep.subr.bf16.mxu0 0
    %3534 = vmatpush1.bf16.msra.mxu0 0
    %3535 = vmatprep.subr.bf16.mxu0 0
    %3536 = vmatpush1.bf16.msra.mxu0 0
    %3537 = vmatprep.subr.bf16.mxu0 0
    %3538 = vmatpush1.bf16.msra.mxu0 0
    %3539 = vmatprep.subr.bf16.mxu0 0
    %3540 = vmatpush1.bf16.msra.mxu0 0
    %3541 = vmatprep.subr.bf16.mxu0 0
    %3542 = vmatpush1.bf16.msra.mxu0 0
    %3543 = vmatprep.subr.bf16.mxu0 0
    %3544 = vmatpush1.bf16.msra.mxu0 0
    %3545 = vmatprep.subr.bf16.mxu0 0
    %3546 = vmatpush1.bf16.msra.mxu0 0
    %3547 = vmatprep.subr.bf16.mxu0 0
    %3548 = vmatpush1.bf16.msra.mxu0 0
    %3549 = vmatprep.subr.bf16.mxu0 0
    %3550 = vmatpush1.bf16.msra.mxu0 0
    %3551 = vmatprep.subr.bf16.mxu0 0
    %3552 = vmatpush1.bf16.msra.mxu0 0
    %3553 = vmatprep.subr.bf16.mxu0 0
    %3554 = vmatpush1.bf16.msra.mxu0 0
    %3555 = vmatprep.subr.bf16.mxu0 0
    %3556 = vmatpush1.bf16.msra.mxu0 0
    %3557 = vmatprep.subr.bf16.mxu0 0
    %3558 = vmatpush1.bf16.msra.mxu0 0
    %3559 = vmatprep.mubr.bf16.mxu0 0
    %3560 = vmatmul.mubr.bf16.gmra.mrb[0].mxu0 %v3525
    %v3561 = vpop.f32.mrb[0].mxu0
    %v3562 = vadd.f32 %v3287, %v3561
    %v3563 = vpop.f32.mrb[0].mxu0
    %v3564 = vadd.f32 %v3291, %v3563
    %v3565 = vpop.f32.mrb[0].mxu0
    %v3566 = vpop.f32.mrb[0].mxu0
    %3567 = vdwg.mxu0
    %3568 = vmatprep.subr.bf16.mxu0 %v3463
    %3569 = vmatpush1.bf16.msra.mxu0 %v3462
    %3570 = vmatprep.subr.bf16.mxu0 %v3479
    %3571 = vmatpush1.bf16.msra.mxu0 %v3478
    %3572 = vmatprep.subr.bf16.mxu0 0
    %3573 = vmatpush1.bf16.msra.mxu0 0
    %3574 = vmatprep.subr.bf16.mxu0 0
    %3575 = vmatpush1.bf16.msra.mxu0 0
    %3576 = vmatprep.subr.bf16.mxu0 0
    %3577 = vmatpush1.bf16.msra.mxu0 0
    %3578 = vmatprep.subr.bf16.mxu0 0
    %3579 = vmatpush1.bf16.msra.mxu0 0
    %3580 = vmatprep.subr.bf16.mxu0 0
    %3581 = vmatpush1.bf16.msra.mxu0 0
    %3582 = vmatprep.subr.bf16.mxu0 0
    %3583 = vmatpush1.bf16.msra.mxu0 0
    %3584 = vmatprep.subr.bf16.mxu0 0
    %3585 = vmatpush1.bf16.msra.mxu0 0
    %3586 = vmatprep.subr.bf16.mxu0 0
    %3587 = vmatpush1.bf16.msra.mxu0 0
    %3588 = vmatprep.subr.bf16.mxu0 0
    %3589 = vmatpush1.bf16.msra.mxu0 0
    %3590 = vmatprep.subr.bf16.mxu0 0
    %3591 = vmatpush1.bf16.msra.mxu0 0
    %3592 = vmatprep.subr.bf16.mxu0 0
    %3593 = vmatpush1.bf16.msra.mxu0 0
    %3594 = vmatprep.subr.bf16.mxu0 0
    %3595 = vmatpush1.bf16.msra.mxu0 0
    %3596 = vmatprep.subr.bf16.mxu0 0
    %3597 = vmatpush1.bf16.msra.mxu0 0
    %3598 = vmatprep.subr.bf16.mxu0 0
    %3599 = vmatpush1.bf16.msra.mxu0 0
    %3600 = vmatprep.mubr.bf16.mxu0 0
    %3601 = vmatmul.mubr.bf16.gmra.mrb[0].mxu0 %v3525
    %v3602 = vpop.f32.mrb[0].mxu0
    %v3603 = vadd.f32 %v3295, %v3602
    %v3604 = vpop.f32.mrb[0].mxu0
    %v3605 = vadd.f32 %v3299, %v3604
    %v3606 = vpop.f32.mrb[0].mxu0
    %v3607 = vpop.f32.mrb[0].mxu0
    %3608 = vdwg.mxu0
    %3609 = vmatprep.subr.bf16.mxu0 %v3465
    %3610 = vmatpush1.bf16.msra.mxu0 %v3464
    %3611 = vmatprep.subr.bf16.mxu0 %v3481
    %3612 = vmatpush1.bf16.msra.mxu0 %v3480
    %3613 = vmatprep.subr.bf16.mxu0 0
    %3614 = vmatpush1.bf16.msra.mxu0 0
    %3615 = vmatprep.subr.bf16.mxu0 0
    %3616 = vmatpush1.bf16.msra.mxu0 0
    %3617 = vmatprep.subr.bf16.mxu0 0
    %3618 = vmatpush1.bf16.msra.mxu0 0
    %3619 = vmatprep.subr.bf16.mxu0 0
    %3620 = vmatpush1.bf16.msra.mxu0 0
    %3621 = vmatprep.subr.bf16.mxu0 0
    %3622 = vmatpush1.bf16.msra.mxu0 0
    %3623 = vmatprep.subr.bf16.mxu0 0
    %3624 = vmatpush1.bf16.msra.mxu0 0
    %3625 = vmatprep.subr.bf16.mxu0 0
    %3626 = vmatpush1.bf16.msra.mxu0 0
    %3627 = vmatprep.subr.bf16.mxu0 0
    %3628 = vmatpush1.bf16.msra.mxu0 0
    %3629 = vmatprep.subr.bf16.mxu0 0
    %3630 = vmatpush1.bf16.msra.mxu0 0
    %3631 = vmatprep.subr.bf16.mxu0 0
    %3632 = vmatpush1.bf16.msra.mxu0 0
    %3633 = vmatprep.subr.bf16.mxu0 0
    %3634 = vmatpush1.bf16.msra.mxu0 0
    %3635 = vmatprep.subr.bf16.mxu0 0
    %3636 = vmatpush1.bf16.msra.mxu0 0
    %3637 = vmatprep.subr.bf16.mxu0 0
    %3638 = vmatpush1.bf16.msra.mxu0 0
    %3639 = vmatprep.subr.bf16.mxu0 0
    %3640 = vmatpush1.bf16.msra.mxu0 0
    %3641 = vmatprep.mubr.bf16.mxu0 0
    %3642 = vmatmul.mubr.bf16.gmra.mrb[0].mxu0 %v3525
    %v3643 = vpop.f32.mrb[0].mxu0
    %v3644 = vadd.f32 %v3303, %v3643
    %v3645 = vpop.f32.mrb[0].mxu0
    %v3646 = vadd.f32 %v3307, %v3645
    %v3647 = vpop.f32.mrb[0].mxu0
    %v3648 = vpop.f32.mrb[0].mxu0
    %3649 = vdwg.mxu0
    %3650 = vmatprep.subr.bf16.mxu0 %v3467
    %3651 = vmatpush1.bf16.msra.mxu0 %v3466
    %3652 = vmatprep.subr.bf16.mxu0 %v3483
    %3653 = vmatpush1.bf16.msra.mxu0 %v3482
    %3654 = vmatprep.subr.bf16.mxu0 0
    %3655 = vmatpush1.bf16.msra.mxu0 0
    %3656 = vmatprep.subr.bf16.mxu0 0
    %3657 = vmatpush1.bf16.msra.mxu0 0
    %3658 = vmatprep.subr.bf16.mxu0 0
    %3659 = vmatpush1.bf16.msra.mxu0 0
    %3660 = vmatprep.subr.bf16.mxu0 0
    %3661 = vmatpush1.bf16.msra.mxu0 0
    %3662 = vmatprep.subr.bf16.mxu0 0
    %3663 = vmatpush1.bf16.msra.mxu0 0
    %3664 = vmatprep.subr.bf16.mxu0 0
    %3665 = vmatpush1.bf16.msra.mxu0 0
    %3666 = vmatprep.subr.bf16.mxu0 0
    %3667 = vmatpush1.bf16.msra.mxu0 0
    %3668 = vmatprep.subr.bf16.mxu0 0
    %3669 = vmatpush1.bf16.msra.mxu0 0
    %3670 = vmatprep.subr.bf16.mxu0 0
    %3671 = vmatpush1.bf16.msra.mxu0 0
    %3672 = vmatprep.subr.bf16.mxu0 0
    %3673 = vmatpush1.bf16.msra.mxu0 0
    %3674 = vmatprep.subr.bf16.mxu0 0
    %3675 = vmatpush1.bf16.msra.mxu0 0
    %3676 = vmatprep.subr.bf16.mxu0 0
    %3677 = vmatpush1.bf16.msra.mxu0 0
    %3678 = vmatprep.subr.bf16.mxu0 0
    %3679 = vmatpush1.bf16.msra.mxu0 0
    %3680 = vmatprep.subr.bf16.mxu0 0
    %3681 = vmatpush1.bf16.msra.mxu0 0
    %3682 = vmatprep.mubr.bf16.mxu0 0
    %3683 = vmatmul.mubr.bf16.gmra.mrb[0].mxu0 %v3525
    %v3684 = vpop.f32.mrb[0].mxu0
    %v3685 = vadd.f32 %v3311, %v3684
    %v3686 = vpop.f32.mrb[0].mxu0
    %v3687 = vadd.f32 %v3315, %v3686
    %v3688 = vpop.f32.mrb[0].mxu0
    %v3689 = vpop.f32.mrb[0].mxu0
    %3690 = vdwg.mxu0
    %3691 = vmatprep.subr.bf16.mxu0 %v3469
    %3692 = vmatpush1.bf16.msra.mxu0 %v3468
    %3693 = vmatprep.subr.bf16.mxu0 %v3485
    %3694 = vmatpush1.bf16.msra.mxu0 %v3484
    %3695 = vmatprep.subr.bf16.mxu0 0
    %3696 = vmatpush1.bf16.msra.mxu0 0
    %3697 = vmatprep.subr.bf16.mxu0 0
    %3698 = vmatpush1.bf16.msra.mxu0 0
    %3699 = vmatprep.subr.bf16.mxu0 0
    %3700 = vmatpush1.bf16.msra.mxu0 0
    %3701 = vmatprep.subr.bf16.mxu0 0
    %3702 = vmatpush1.bf16.msra.mxu0 0
    %3703 = vmatprep.subr.bf16.mxu0 0
    %3704 = vmatpush1.bf16.msra.mxu0 0
    %3705 = vmatprep.subr.bf16.mxu0 0
    %3706 = vmatpush1.bf16.msra.mxu0 0
    %3707 = vmatprep.subr.bf16.mxu0 0
    %3708 = vmatpush1.bf16.msra.mxu0 0
    %3709 = vmatprep.subr.bf16.mxu0 0
    %3710 = vmatpush1.bf16.msra.mxu0 0
    %3711 = vmatprep.subr.bf16.mxu0 0
    %3712 = vmatpush1.bf16.msra.mxu0 0
    %3713 = vmatprep.subr.bf16.mxu0 0
    %3714 = vmatpush1.bf16.msra.mxu0 0
    %3715 = vmatprep.subr.bf16.mxu0 0
    %3716 = vmatpush1.bf16.msra.mxu0 0
    %3717 = vmatprep.subr.bf16.mxu0 0
    %3718 = vmatpush1.bf16.msra.mxu0 0
    %3719 = vmatprep.subr.bf16.mxu0 0
    %3720 = vmatpush1.bf16.msra.mxu0 0
    %3721 = vmatprep.subr.bf16.mxu0 0
    %3722 = vmatpush1.bf16.msra.mxu0 0
    %3723 = vmatprep.mubr.bf16.mxu0 0
    %3724 = vmatmul.mubr.bf16.gmra.mrb[0].mxu0 %v3525
    %v3725 = vpop.f32.mrb[0].mxu0
    %v3726 = vadd.f32 %v3319, %v3725
    %v3727 = vpop.f32.mrb[0].mxu0
    %v3728 = vadd.f32 %v3323, %v3727
    %v3729 = vpop.f32.mrb[0].mxu0
    %v3730 = vpop.f32.mrb[0].mxu0
    %3731 = vdwg.mxu0
    %3732 = vmatprep.subr.bf16.mxu0 %v3471
    %3733 = vmatpush1.bf16.msra.mxu0 %v3470
    %3734 = vmatprep.subr.bf16.mxu0 %v3487
    %3735 = vmatpush1.bf16.msra.mxu0 %v3486
    %3736 = vmatprep.subr.bf16.mxu0 0
    %3737 = vmatpush1.bf16.msra.mxu0 0
    %3738 = vmatprep.subr.bf16.mxu0 0
    %3739 = vmatpush1.bf16.msra.mxu0 0
    %3740 = vmatprep.subr.bf16.mxu0 0
    %3741 = vmatpush1.bf16.msra.mxu0 0
    %3742 = vmatprep.subr.bf16.mxu0 0
    %3743 = vmatpush1.bf16.msra.mxu0 0
    %3744 = vmatprep.subr.bf16.mxu0 0
    %3745 = vmatpush1.bf16.msra.mxu0 0
    %3746 = vmatprep.subr.bf16.mxu0 0
    %3747 = vmatpush1.bf16.msra.mxu0 0
    %3748 = vmatprep.subr.bf16.mxu0 0
    %3749 = vmatpush1.bf16.msra.mxu0 0
    %3750 = vmatprep.subr.bf16.mxu0 0
    %3751 = vmatpush1.bf16.msra.mxu0 0
    %3752 = vmatprep.subr.bf16.mxu0 0
    %3753 = vmatpush1.bf16.msra.mxu0 0
    %3754 = vmatprep.subr.bf16.mxu0 0
    %3755 = vmatpush1.bf16.msra.mxu0 0
    %3756 = vmatprep.subr.bf16.mxu0 0
    %3757 = vmatpush1.bf16.msra.mxu0 0
    %3758 = vmatprep.subr.bf16.mxu0 0
    %3759 = vmatpush1.bf16.msra.mxu0 0
    %3760 = vmatprep.subr.bf16.mxu0 0
    %3761 = vmatpush1.bf16.msra.mxu0 0
    %3762 = vmatprep.subr.bf16.mxu0 0
    %3763 = vmatpush1.bf16.msra.mxu0 0
    %3764 = vmatprep.mubr.bf16.mxu0 0
    %3765 = vmatmul.mubr.bf16.gmra.mrb[0].mxu0 %v3525
    %v3766 = vpop.f32.mrb[0].mxu0
    %v3767 = vadd.f32 %v3327, %v3766
    %v3768 = vpop.f32.mrb[0].mxu0
    %v3769 = vadd.f32 %v3331, %v3768
    %v3770 = vpop.f32.mrb[0].mxu0
    %v3771 = vpop.f32.mrb[0].mxu0
    %3772 = vdwg.mxu0
    %3773 = vmatprep.subr.bf16.mxu0 %v3473
    %3774 = vmatpush1.bf16.msra.mxu0 %v3472
    %3775 = vmatprep.subr.bf16.mxu0 %v3489
    %3776 = vmatpush1.bf16.msra.mxu0 %v3488
    %3777 = vmatprep.subr.bf16.mxu0 0
    %3778 = vmatpush1.bf16.msra.mxu0 0
    %3779 = vmatprep.subr.bf16.mxu0 0
    %3780 = vmatpush1.bf16.msra.mxu0 0
    %3781 = vmatprep.subr.bf16.mxu0 0
    %3782 = vmatpush1.bf16.msra.mxu0 0
    %3783 = vmatprep.subr.bf16.mxu0 0
    %3784 = vmatpush1.bf16.msra.mxu0 0
    %3785 = vmatprep.subr.bf16.mxu0 0
    %3786 = vmatpush1.bf16.msra.mxu0 0
    %3787 = vmatprep.subr.bf16.mxu0 0
    %3788 = vmatpush1.bf16.msra.mxu0 0
    %3789 = vmatprep.subr.bf16.mxu0 0
    %3790 = vmatpush1.bf16.msra.mxu0 0
    %3791 = vmatprep.subr.bf16.mxu0 0
    %3792 = vmatpush1.bf16.msra.mxu0 0
    %3793 = vmatprep.subr.bf16.mxu0 0
    %3794 = vmatpush1.bf16.msra.mxu0 0
    %3795 = vmatprep.subr.bf16.mxu0 0
    %3796 = vmatpush1.bf16.msra.mxu0 0
    %3797 = vmatprep.subr.bf16.mxu0 0
    %3798 = vmatpush1.bf16.msra.mxu0 0
    %3799 = vmatprep.subr.bf16.mxu0 0
    %3800 = vmatpush1.bf16.msra.mxu0 0
    %3801 = vmatprep.subr.bf16.mxu0 0
    %3802 = vmatpush1.bf16.msra.mxu0 0
    %3803 = vmatprep.subr.bf16.mxu0 0
    %3804 = vmatpush1.bf16.msra.mxu0 0
    %3805 = vmatprep.mubr.bf16.mxu0 0
    %3806 = vmatmul.mubr.bf16.gmra.mrb[0].mxu0 %v3525
    %v3807 = vpop.f32.mrb[0].mxu0
    %v3808 = vadd.f32 %v3335, %v3807
    %v3809 = vpop.f32.mrb[0].mxu0
    %v3810 = vadd.f32 %v3339, %v3809
    %v3811 = vpop.f32.mrb[0].mxu0
    %v3812 = vpop.f32.mrb[0].mxu0
    %3813 = vdwg.mxu0
    %3814 = vmatprep.subr.bf16.mxu0 %v3475
    %3815 = vmatpush1.bf16.msra.mxu0 %v3474
    %3816 = vmatprep.subr.bf16.mxu0 %v3491
    %3817 = vmatpush1.bf16.msra.mxu0 %v3490
    %3818 = vmatprep.subr.bf16.mxu0 0
    %3819 = vmatpush1.bf16.msra.mxu0 0
    %3820 = vmatprep.subr.bf16.mxu0 0
    %3821 = vmatpush1.bf16.msra.mxu0 0
    %3822 = vmatprep.subr.bf16.mxu0 0
    %3823 = vmatpush1.bf16.msra.mxu0 0
    %3824 = vmatprep.subr.bf16.mxu0 0
    %3825 = vmatpush1.bf16.msra.mxu0 0
    %3826 = vmatprep.subr.bf16.mxu0 0
    %3827 = vmatpush1.bf16.msra.mxu0 0
    %3828 = vmatprep.subr.bf16.mxu0 0
    %3829 = vmatpush1.bf16.msra.mxu0 0
    %3830 = vmatprep.subr.bf16.mxu0 0
    %3831 = vmatpush1.bf16.msra.mxu0 0
    %3832 = vmatprep.subr.bf16.mxu0 0
    %3833 = vmatpush1.bf16.msra.mxu0 0
    %3834 = vmatprep.subr.bf16.mxu0 0
    %3835 = vmatpush1.bf16.msra.mxu0 0
    %3836 = vmatprep.subr.bf16.mxu0 0
    %3837 = vmatpush1.bf16.msra.mxu0 0
    %3838 = vmatprep.subr.bf16.mxu0 0
    %3839 = vmatpush1.bf16.msra.mxu0 0
    %3840 = vmatprep.subr.bf16.mxu0 0
    %3841 = vmatpush1.bf16.msra.mxu0 0
    %3842 = vmatprep.subr.bf16.mxu0 0
    %3843 = vmatpush1.bf16.msra.mxu0 0
    %3844 = vmatprep.subr.bf16.mxu0 0
    %3845 = vmatpush1.bf16.msra.mxu0 0
    %3846 = vmatprep.mubr.bf16.mxu0 0
    %3847 = vmatmul.mubr.bf16.gmra.mrb[0].mxu0 %v3525
    %v3848 = vpop.f32.mrb[0].mxu0
    %v3849 = vadd.f32 %v3343, %v3848
    %v3850 = vpop.f32.mrb[0].mxu0
    %v3851 = vadd.f32 %v3347, %v3850
    %v3852 = vpop.f32.mrb[0].mxu0
    %v3853 = vpop.f32.mrb[0].mxu0
    %3854 = vdwg.mxu0
    %v3855 = vmax.f32 %v3562, 0.0
    %v3856 = vmax.f32 %v3564, 0.0
    %v3857 = vmax.f32 %v3603, 0.0
    %v3858 = vmax.f32 %v3605, 0.0
    %v3859 = vmax.f32 %v3644, 0.0
    %v3860 = vmax.f32 %v3646, 0.0
    %v3861 = vmax.f32 %v3685, 0.0
    %v3862 = vmax.f32 %v3687, 0.0
    %v3863 = vmax.f32 %v3726, 0.0
    %v3864 = vmax.f32 %v3728, 0.0
    %v3865 = vmax.f32 %v3767, 0.0
    %v3866 = vmax.f32 %v3769, 0.0
    %v3867 = vmax.f32 %v3808, 0.0
    %v3868 = vmax.f32 %v3810, 0.0
    %v3869 = vmax.f32 %v3849, 0.0
    %v3870 = vmax.f32 %v3851, 0.0
    %s3871 = scalar_lea.vmem %s6, 1024
    %v3872 = vld [vmem:[%s3871] sm:$0xf]
    %v3873 = vld [vmem:[%s3871 + $0x4] sm:$0xf]
    %v3874 = vld [vmem:[%s3871 + $0x8] sm:$0xf]
    %v3875 = vld [vmem:[%s3871 + $0xc] sm:$0xf]
    %v3876 = vld [vmem:[%s3871 + $0x10] sm:$0xf]
    %v3877 = vld [vmem:[%s3871 + $0x14] sm:$0xf]
    %v3878 = vld [vmem:[%s3871 + $0x18] sm:$0xf]
    %v3879 = vld [vmem:[%s3871 + $0x1c] sm:$0xf]
    %v3880 = vld [vmem:[%s3871 + $0x20] sm:$0xf]
    %v3881 = vld [vmem:[%s3871 + $0x24] sm:$0xf]
    %v3882 = vld [vmem:[%s3871 + $0x28] sm:$0xf]
    %v3883 = vld [vmem:[%s3871 + $0x2c] sm:$0xf]
    %v3884 = vld [vmem:[%s3871 + $0x30] sm:$0xf]
    %v3885 = vld [vmem:[%s3871 + $0x34] sm:$0xf]
    %v3886 = vld [vmem:[%s3871 + $0x38] sm:$0xf]
    %v3887 = vld [vmem:[%s3871 + $0x3c] sm:$0xf]
    %v3888 = vld [vmem:[%s3871 + $0x40] sm:$0xf]
    %v3889 = vld [vmem:[%s3871 + $0x44] sm:$0xf]
    %v3890 = vld [vmem:[%s3871 + $0x48] sm:$0xf]
    %v3891 = vld [vmem:[%s3871 + $0x4c] sm:$0xf]
    %v3892 = vld [vmem:[%s3871 + $0x50] sm:$0xf]
    %v3893 = vld [vmem:[%s3871 + $0x54] sm:$0xf]
    %v3894 = vld [vmem:[%s3871 + $0x58] sm:$0xf]
    %v3895 = vld [vmem:[%s3871 + $0x5c] sm:$0xf]
    %v3896 = vld [vmem:[%s3871 + $0x60] sm:$0xf]
    %v3897 = vld [vmem:[%s3871 + $0x64] sm:$0xf]
    %v3898 = vld [vmem:[%s3871 + $0x68] sm:$0xf]
    %v3899 = vld [vmem:[%s3871 + $0x6c] sm:$0xf]
    %v3900 = vld [vmem:[%s3871 + $0x70] sm:$0xf]
    %v3901 = vld [vmem:[%s3871 + $0x74] sm:$0xf]
    %v3902 = vld [vmem:[%s3871 + $0x78] sm:$0xf]
    %v3903 = vld [vmem:[%s3871 + $0x7c] sm:$0xf]
    %v3904 = vld [vmem:[%s3871 + $0x80] sm:$0xf]
    %v3905 = vld [vmem:[%s3871 + $0x84] sm:$0xf]
    %v3906 = vld [vmem:[%s3871 + $0x88] sm:$0xf]
    %v3907 = vld [vmem:[%s3871 + $0x8c] sm:$0xf]
    %v3908 = vld [vmem:[%s3871 + $0x90] sm:$0xf]
    %v3909 = vld [vmem:[%s3871 + $0x94] sm:$0xf]
    %v3910 = vld [vmem:[%s3871 + $0x98] sm:$0xf]
    %v3911 = vld [vmem:[%s3871 + $0x9c] sm:$0xf]
    %v3912 = vld [vmem:[%s3871 + $0xa0] sm:$0xf]
    %v3913 = vld [vmem:[%s3871 + $0xa4] sm:$0xf]
    %v3914 = vld [vmem:[%s3871 + $0xa8] sm:$0xf]
    %v3915 = vld [vmem:[%s3871 + $0xac] sm:$0xf]
    %v3916 = vld [vmem:[%s3871 + $0xb0] sm:$0xf]
    %v3917 = vld [vmem:[%s3871 + $0xb4] sm:$0xf]
    %v3918 = vld [vmem:[%s3871 + $0xb8] sm:$0xf]
    %v3919 = vld [vmem:[%s3871 + $0xbc] sm:$0xf]
    %v3920 = vld [vmem:[%s3871 + $0xc0] sm:$0xf]
    %v3921 = vld [vmem:[%s3871 + $0xc4] sm:$0xf]
    %v3922 = vld [vmem:[%s3871 + $0xc8] sm:$0xf]
    %v3923 = vld [vmem:[%s3871 + $0xcc] sm:$0xf]
    %v3924 = vld [vmem:[%s3871 + $0xd0] sm:$0xf]
    %v3925 = vld [vmem:[%s3871 + $0xd4] sm:$0xf]
    %v3926 = vld [vmem:[%s3871 + $0xd8] sm:$0xf]
    %v3927 = vld [vmem:[%s3871 + $0xdc] sm:$0xf]
    %v3928 = vld [vmem:[%s3871 + $0xe0] sm:$0xf]
    %v3929 = vld [vmem:[%s3871 + $0xe4] sm:$0xf]
    %v3930 = vld [vmem:[%s3871 + $0xe8] sm:$0xf]
    %v3931 = vld [vmem:[%s3871 + $0xec] sm:$0xf]
    %v3932 = vld [vmem:[%s3871 + $0xf0] sm:$0xf]
    %v3933 = vld [vmem:[%s3871 + $0xf4] sm:$0xf]
    %v3934 = vld [vmem:[%s3871 + $0xf8] sm:$0xf]
    %v3935 = vld [vmem:[%s3871 + $0xfc] sm:$0xf]
    %v3936 = vld [vmem:[%s3871 + $0x100] sm:$0xf]
    %v3937 = vld [vmem:[%s3871 + $0x104] sm:$0xf]
    %v3938 = vld [vmem:[%s3871 + $0x108] sm:$0xf]
    %v3939 = vld [vmem:[%s3871 + $0x10c] sm:$0xf]
    %v3940 = vld [vmem:[%s3871 + $0x110] sm:$0xf]
    %v3941 = vld [vmem:[%s3871 + $0x114] sm:$0xf]
    %v3942 = vld [vmem:[%s3871 + $0x118] sm:$0xf]
    %v3943 = vld [vmem:[%s3871 + $0x11c] sm:$0xf]
    %v3944 = vld [vmem:[%s3871 + $0x120] sm:$0xf]
    %v3945 = vld [vmem:[%s3871 + $0x124] sm:$0xf]
    %v3946 = vld [vmem:[%s3871 + $0x128] sm:$0xf]
    %v3947 = vld [vmem:[%s3871 + $0x12c] sm:$0xf]
    %v3948 = vld [vmem:[%s3871 + $0x130] sm:$0xf]
    %v3949 = vld [vmem:[%s3871 + $0x134] sm:$0xf]
    %v3950 = vld [vmem:[%s3871 + $0x138] sm:$0xf]
    %v3951 = vld [vmem:[%s3871 + $0x13c] sm:$0xf]
    %v3952 = vld [vmem:[%s3871 + $0x140] sm:$0xf]
    %v3953 = vld [vmem:[%s3871 + $0x144] sm:$0xf]
    %v3954 = vld [vmem:[%s3871 + $0x148] sm:$0xf]
    %v3955 = vld [vmem:[%s3871 + $0x14c] sm:$0xf]
    %v3956 = vld [vmem:[%s3871 + $0x150] sm:$0xf]
    %v3957 = vld [vmem:[%s3871 + $0x154] sm:$0xf]
    %v3958 = vld [vmem:[%s3871 + $0x158] sm:$0xf]
    %v3959 = vld [vmem:[%s3871 + $0x15c] sm:$0xf]
    %v3960 = vld [vmem:[%s3871 + $0x160] sm:$0xf]
    %v3961 = vld [vmem:[%s3871 + $0x164] sm:$0xf]
    %v3962 = vld [vmem:[%s3871 + $0x168] sm:$0xf]
    %v3963 = vld [vmem:[%s3871 + $0x16c] sm:$0xf]
    %v3964 = vld [vmem:[%s3871 + $0x170] sm:$0xf]
    %v3965 = vld [vmem:[%s3871 + $0x174] sm:$0xf]
    %v3966 = vld [vmem:[%s3871 + $0x178] sm:$0xf]
    %v3967 = vld [vmem:[%s3871 + $0x17c] sm:$0xf]
    %v3968 = vld [vmem:[%s3871 + $0x180] sm:$0xf]
    %v3969 = vld [vmem:[%s3871 + $0x184] sm:$0xf]
    %v3970 = vld [vmem:[%s3871 + $0x188] sm:$0xf]
    %v3971 = vld [vmem:[%s3871 + $0x18c] sm:$0xf]
    %v3972 = vld [vmem:[%s3871 + $0x190] sm:$0xf]
    %v3973 = vld [vmem:[%s3871 + $0x194] sm:$0xf]
    %v3974 = vld [vmem:[%s3871 + $0x198] sm:$0xf]
    %v3975 = vld [vmem:[%s3871 + $0x19c] sm:$0xf]
    %v3976 = vld [vmem:[%s3871 + $0x1a0] sm:$0xf]
    %v3977 = vld [vmem:[%s3871 + $0x1a4] sm:$0xf]
    %v3978 = vld [vmem:[%s3871 + $0x1a8] sm:$0xf]
    %v3979 = vld [vmem:[%s3871 + $0x1ac] sm:$0xf]
    %v3980 = vld [vmem:[%s3871 + $0x1b0] sm:$0xf]
    %v3981 = vld [vmem:[%s3871 + $0x1b4] sm:$0xf]
    %v3982 = vld [vmem:[%s3871 + $0x1b8] sm:$0xf]
    %v3983 = vld [vmem:[%s3871 + $0x1bc] sm:$0xf]
    %v3984 = vld [vmem:[%s3871 + $0x1c0] sm:$0xf]
    %v3985 = vld [vmem:[%s3871 + $0x1c4] sm:$0xf]
    %v3986 = vld [vmem:[%s3871 + $0x1c8] sm:$0xf]
    %v3987 = vld [vmem:[%s3871 + $0x1cc] sm:$0xf]
    %v3988 = vld [vmem:[%s3871 + $0x1d0] sm:$0xf]
    %v3989 = vld [vmem:[%s3871 + $0x1d4] sm:$0xf]
    %v3990 = vld [vmem:[%s3871 + $0x1d8] sm:$0xf]
    %v3991 = vld [vmem:[%s3871 + $0x1dc] sm:$0xf]
    %v3992 = vld [vmem:[%s3871 + $0x1e0] sm:$0xf]
    %v3993 = vld [vmem:[%s3871 + $0x1e4] sm:$0xf]
    %v3994 = vld [vmem:[%s3871 + $0x1e8] sm:$0xf]
    %v3995 = vld [vmem:[%s3871 + $0x1ec] sm:$0xf]
    %v3996 = vld [vmem:[%s3871 + $0x1f0] sm:$0xf]
    %v3997 = vld [vmem:[%s3871 + $0x1f4] sm:$0xf]
    %v3998 = vld [vmem:[%s3871 + $0x1f8] sm:$0xf]
    %v3999 = vld [vmem:[%s3871 + $0x1fc] sm:$0xf]
    %v4000 = vld [vmem:[%s3871 + $0x200] sm:$0xf]
    %v4001 = vld [vmem:[%s3871 + $0x204] sm:$0xf]
    %v4002 = vld [vmem:[%s3871 + $0x208] sm:$0xf]
    %v4003 = vld [vmem:[%s3871 + $0x20c] sm:$0xf]
    %v4004 = vld [vmem:[%s3871 + $0x210] sm:$0xf]
    %v4005 = vld [vmem:[%s3871 + $0x214] sm:$0xf]
    %v4006 = vld [vmem:[%s3871 + $0x218] sm:$0xf]
    %v4007 = vld [vmem:[%s3871 + $0x21c] sm:$0xf]
    %v4008 = vld [vmem:[%s3871 + $0x220] sm:$0xf]
    %v4009 = vld [vmem:[%s3871 + $0x224] sm:$0xf]
    %v4010 = vld [vmem:[%s3871 + $0x228] sm:$0xf]
    %v4011 = vld [vmem:[%s3871 + $0x22c] sm:$0xf]
    %v4012 = vld [vmem:[%s3871 + $0x230] sm:$0xf]
    %v4013 = vld [vmem:[%s3871 + $0x234] sm:$0xf]
    %v4014 = vld [vmem:[%s3871 + $0x238] sm:$0xf]
    %v4015 = vld [vmem:[%s3871 + $0x23c] sm:$0xf]
    %v4016 = vld [vmem:[%s3871 + $0x240] sm:$0xf]
    %v4017 = vld [vmem:[%s3871 + $0x244] sm:$0xf]
    %v4018 = vld [vmem:[%s3871 + $0x248] sm:$0xf]
    %v4019 = vld [vmem:[%s3871 + $0x24c] sm:$0xf]
    %v4020 = vld [vmem:[%s3871 + $0x250] sm:$0xf]
    %v4021 = vld [vmem:[%s3871 + $0x254] sm:$0xf]
    %v4022 = vld [vmem:[%s3871 + $0x258] sm:$0xf]
    %v4023 = vld [vmem:[%s3871 + $0x25c] sm:$0xf]
    %v4024 = vld [vmem:[%s3871 + $0x260] sm:$0xf]
    %v4025 = vld [vmem:[%s3871 + $0x264] sm:$0xf]
    %v4026 = vld [vmem:[%s3871 + $0x268] sm:$0xf]
    %v4027 = vld [vmem:[%s3871 + $0x26c] sm:$0xf]
    %v4028 = vld [vmem:[%s3871 + $0x270] sm:$0xf]
    %v4029 = vld [vmem:[%s3871 + $0x274] sm:$0xf]
    %v4030 = vld [vmem:[%s3871 + $0x278] sm:$0xf]
    %v4031 = vld [vmem:[%s3871 + $0x27c] sm:$0xf]
    %v4032 = vld [vmem:[%s3871 + $0x280] sm:$0xf]
    %v4033 = vld [vmem:[%s3871 + $0x284] sm:$0xf]
    %v4034 = vld [vmem:[%s3871 + $0x288] sm:$0xf]
    %v4035 = vld [vmem:[%s3871 + $0x28c] sm:$0xf]
    %v4036 = vld [vmem:[%s3871 + $0x290] sm:$0xf]
    %v4037 = vld [vmem:[%s3871 + $0x294] sm:$0xf]
    %v4038 = vld [vmem:[%s3871 + $0x298] sm:$0xf]
    %v4039 = vld [vmem:[%s3871 + $0x29c] sm:$0xf]
    %v4040 = vld [vmem:[%s3871 + $0x2a0] sm:$0xf]
    %v4041 = vld [vmem:[%s3871 + $0x2a4] sm:$0xf]
    %v4042 = vld [vmem:[%s3871 + $0x2a8] sm:$0xf]
    %v4043 = vld [vmem:[%s3871 + $0x2ac] sm:$0xf]
    %v4044 = vld [vmem:[%s3871 + $0x2b0] sm:$0xf]
    %v4045 = vld [vmem:[%s3871 + $0x2b4] sm:$0xf]
    %v4046 = vld [vmem:[%s3871 + $0x2b8] sm:$0xf]
    %v4047 = vld [vmem:[%s3871 + $0x2bc] sm:$0xf]
    %v4048 = vld [vmem:[%s3871 + $0x2c0] sm:$0xf]
    %v4049 = vld [vmem:[%s3871 + $0x2c4] sm:$0xf]
    %v4050 = vld [vmem:[%s3871 + $0x2c8] sm:$0xf]
    %v4051 = vld [vmem:[%s3871 + $0x2cc] sm:$0xf]
    %v4052 = vld [vmem:[%s3871 + $0x2d0] sm:$0xf]
    %v4053 = vld [vmem:[%s3871 + $0x2d4] sm:$0xf]
    %v4054 = vld [vmem:[%s3871 + $0x2d8] sm:$0xf]
    %v4055 = vld [vmem:[%s3871 + $0x2dc] sm:$0xf]
    %v4056 = vld [vmem:[%s3871 + $0x2e0] sm:$0xf]
    %v4057 = vld [vmem:[%s3871 + $0x2e4] sm:$0xf]
    %v4058 = vld [vmem:[%s3871 + $0x2e8] sm:$0xf]
    %v4059 = vld [vmem:[%s3871 + $0x2ec] sm:$0xf]
    %v4060 = vld [vmem:[%s3871 + $0x2f0] sm:$0xf]
    %v4061 = vld [vmem:[%s3871 + $0x2f4] sm:$0xf]
    %v4062 = vld [vmem:[%s3871 + $0x2f8] sm:$0xf]
    %v4063 = vld [vmem:[%s3871 + $0x2fc] sm:$0xf]
    %v4064 = vld [vmem:[%s3871 + $0x300] sm:$0xf]
    %v4065 = vld [vmem:[%s3871 + $0x304] sm:$0xf]
    %v4066 = vld [vmem:[%s3871 + $0x308] sm:$0xf]
    %v4067 = vld [vmem:[%s3871 + $0x30c] sm:$0xf]
    %v4068 = vld [vmem:[%s3871 + $0x310] sm:$0xf]
    %v4069 = vld [vmem:[%s3871 + $0x314] sm:$0xf]
    %v4070 = vld [vmem:[%s3871 + $0x318] sm:$0xf]
    %v4071 = vld [vmem:[%s3871 + $0x31c] sm:$0xf]
    %v4072 = vld [vmem:[%s3871 + $0x320] sm:$0xf]
    %v4073 = vld [vmem:[%s3871 + $0x324] sm:$0xf]
    %v4074 = vld [vmem:[%s3871 + $0x328] sm:$0xf]
    %v4075 = vld [vmem:[%s3871 + $0x32c] sm:$0xf]
    %v4076 = vld [vmem:[%s3871 + $0x330] sm:$0xf]
    %v4077 = vld [vmem:[%s3871 + $0x334] sm:$0xf]
    %v4078 = vld [vmem:[%s3871 + $0x338] sm:$0xf]
    %v4079 = vld [vmem:[%s3871 + $0x33c] sm:$0xf]
    %v4080 = vld [vmem:[%s3871 + $0x340] sm:$0xf]
    %v4081 = vld [vmem:[%s3871 + $0x344] sm:$0xf]
    %v4082 = vld [vmem:[%s3871 + $0x348] sm:$0xf]
    %v4083 = vld [vmem:[%s3871 + $0x34c] sm:$0xf]
    %v4084 = vld [vmem:[%s3871 + $0x350] sm:$0xf]
    %v4085 = vld [vmem:[%s3871 + $0x354] sm:$0xf]
    %v4086 = vld [vmem:[%s3871 + $0x358] sm:$0xf]
    %v4087 = vld [vmem:[%s3871 + $0x35c] sm:$0xf]
    %v4088 = vld [vmem:[%s3871 + $0x360] sm:$0xf]
    %v4089 = vld [vmem:[%s3871 + $0x364] sm:$0xf]
    %v4090 = vld [vmem:[%s3871 + $0x368] sm:$0xf]
    %v4091 = vld [vmem:[%s3871 + $0x36c] sm:$0xf]
    %v4092 = vld [vmem:[%s3871 + $0x370] sm:$0xf]
    %v4093 = vld [vmem:[%s3871 + $0x374] sm:$0xf]
    %v4094 = vld [vmem:[%s3871 + $0x378] sm:$0xf]
    %v4095 = vld [vmem:[%s3871 + $0x37c] sm:$0xf]
    %v4096 = vld [vmem:[%s3871 + $0x380] sm:$0xf]
    %v4097 = vld [vmem:[%s3871 + $0x384] sm:$0xf]
    %v4098 = vld [vmem:[%s3871 + $0x388] sm:$0xf]
    %v4099 = vld [vmem:[%s3871 + $0x38c] sm:$0xf]
    %v4100 = vld [vmem:[%s3871 + $0x390] sm:$0xf]
    %v4101 = vld [vmem:[%s3871 + $0x394] sm:$0xf]
    %v4102 = vld [vmem:[%s3871 + $0x398] sm:$0xf]
    %v4103 = vld [vmem:[%s3871 + $0x39c] sm:$0xf]
    %v4104 = vld [vmem:[%s3871 + $0x3a0] sm:$0xf]
    %v4105 = vld [vmem:[%s3871 + $0x3a4] sm:$0xf]
    %v4106 = vld [vmem:[%s3871 + $0x3a8] sm:$0xf]
    %v4107 = vld [vmem:[%s3871 + $0x3ac] sm:$0xf]
    %v4108 = vld [vmem:[%s3871 + $0x3b0] sm:$0xf]
    %v4109 = vld [vmem:[%s3871 + $0x3b4] sm:$0xf]
    %v4110 = vld [vmem:[%s3871 + $0x3b8] sm:$0xf]
    %v4111 = vld [vmem:[%s3871 + $0x3bc] sm:$0xf]
    %v4112 = vld [vmem:[%s3871 + $0x3c0] sm:$0xf]
    %v4113 = vld [vmem:[%s3871 + $0x3c4] sm:$0xf]
    %v4114 = vld [vmem:[%s3871 + $0x3c8] sm:$0xf]
    %v4115 = vld [vmem:[%s3871 + $0x3cc] sm:$0xf]
    %v4116 = vld [vmem:[%s3871 + $0x3d0] sm:$0xf]
    %v4117 = vld [vmem:[%s3871 + $0x3d4] sm:$0xf]
    %v4118 = vld [vmem:[%s3871 + $0x3d8] sm:$0xf]
    %v4119 = vld [vmem:[%s3871 + $0x3dc] sm:$0xf]
    %v4120 = vld [vmem:[%s3871 + $0x3e0] sm:$0xf]
    %v4121 = vld [vmem:[%s3871 + $0x3e4] sm:$0xf]
    %v4122 = vld [vmem:[%s3871 + $0x3e8] sm:$0xf]
    %v4123 = vld [vmem:[%s3871 + $0x3ec] sm:$0xf]
    %v4124 = vld [vmem:[%s3871 + $0x3f0] sm:$0xf]
    %v4125 = vld [vmem:[%s3871 + $0x3f4] sm:$0xf]
    %v4126 = vld [vmem:[%s3871 + $0x3f8] sm:$0xf]
    %v4127 = vld [vmem:[%s3871 + $0x3fc] sm:$0xf]
    %v4128 = vpack.c.bf16 %v3855, %v3855
    %v4129 = vpack.c.bf16 %v3856, %v3856
    %v4130 = vpack.c.bf16 %v3857, %v3857
    %v4131 = vpack.c.bf16 %v3858, %v3858
    %v4132 = vpack.c.bf16 %v3859, %v3859
    %v4133 = vpack.c.bf16 %v3860, %v3860
    %v4134 = vpack.c.bf16 %v3861, %v3861
    %v4135 = vpack.c.bf16 %v3862, %v3862
    %v4136 = vpack.c.bf16 %v3863, %v3863
    %v4137 = vpack.c.bf16 %v3864, %v3864
    %v4138 = vpack.c.bf16 %v3865, %v3865
    %v4139 = vpack.c.bf16 %v3866, %v3866
    %v4140 = vpack.c.bf16 %v3867, %v3867
    %v4141 = vpack.c.bf16 %v3868, %v3868
    %v4142 = vpack.c.bf16 %v3869, %v3869
    %v4143 = vpack.c.bf16 %v3870, %v3870
    %s4144 = scalar_lea.vmem %s8, 22
    %v4145 = vld [vmem:[%s4144] ss:$8 sm:$0x3]
    %v4147 = vlaneseq
    %v4148 = vshrl.u32 %v4147, 7
    %v4149 = vsub.s32 0, %v4148
    %v4150 = vrot.slane %v4145, %v4149
    %v4408 = vunpack.c.l.b16 %v3872
    %v4409 = vunpack.c.l.b16 %v3873
    %v4410 = vunpack.c.l.b16 %v3874
    %v4411 = vunpack.c.l.b16 %v3875
    %v4412 = vunpack.c.l.b16 %v3876
    %v4413 = vunpack.c.l.b16 %v3877
    %v4414 = vunpack.c.l.b16 %v3878
    %v4415 = vunpack.c.l.b16 %v3879
    %v4416 = vunpack.c.l.b16 %v3880
    %v4417 = vunpack.c.l.b16 %v3881
    %v4418 = vunpack.c.l.b16 %v3882
    %v4419 = vunpack.c.l.b16 %v3883
    %v4420 = vunpack.c.l.b16 %v3884
    %v4421 = vunpack.c.l.b16 %v3885
    %v4422 = vunpack.c.l.b16 %v3886
    %v4423 = vunpack.c.l.b16 %v3887
    %v4424 = vunpack.c.l.b16 %v3888
    %v4425 = vunpack.c.l.b16 %v3889
    %v4426 = vunpack.c.l.b16 %v3890
    %v4427 = vunpack.c.l.b16 %v3891
    %v4428 = vunpack.c.l.b16 %v3892
    %v4429 = vunpack.c.l.b16 %v3893
    %v4430 = vunpack.c.l.b16 %v3894
    %v4431 = vunpack.c.l.b16 %v3895
    %v4432 = vunpack.c.l.b16 %v3896
    %v4433 = vunpack.c.l.b16 %v3897
    %v4434 = vunpack.c.l.b16 %v3898
    %v4435 = vunpack.c.l.b16 %v3899
    %v4436 = vunpack.c.l.b16 %v3900
    %v4437 = vunpack.c.l.b16 %v3901
    %v4438 = vunpack.c.l.b16 %v3902
    %v4439 = vunpack.c.l.b16 %v3903
    %v4440 = vunpack.c.l.b16 %v3904
    %v4441 = vunpack.c.l.b16 %v3905
    %v4442 = vunpack.c.l.b16 %v3906
    %v4443 = vunpack.c.l.b16 %v3907
    %v4444 = vunpack.c.l.b16 %v3908
    %v4445 = vunpack.c.l.b16 %v3909
    %v4446 = vunpack.c.l.b16 %v3910
    %v4447 = vunpack.c.l.b16 %v3911
    %v4448 = vunpack.c.l.b16 %v3912
    %v4449 = vunpack.c.l.b16 %v3913
    %v4450 = vunpack.c.l.b16 %v3914
    %v4451 = vunpack.c.l.b16 %v3915
    %v4452 = vunpack.c.l.b16 %v3916
    %v4453 = vunpack.c.l.b16 %v3917
    %v4454 = vunpack.c.l.b16 %v3918
    %v4455 = vunpack.c.l.b16 %v3919
    %v4456 = vunpack.c.l.b16 %v3920
    %v4457 = vunpack.c.l.b16 %v3921
    %v4458 = vunpack.c.l.b16 %v3922
    %v4459 = vunpack.c.l.b16 %v3923
    %v4460 = vunpack.c.l.b16 %v3924
    %v4461 = vunpack.c.l.b16 %v3925
    %v4462 = vunpack.c.l.b16 %v3926
    %v4463 = vunpack.c.l.b16 %v3927
    %v4464 = vunpack.c.l.b16 %v3928
    %v4465 = vunpack.c.l.b16 %v3929
    %v4466 = vunpack.c.l.b16 %v3930
    %v4467 = vunpack.c.l.b16 %v3931
    %v4468 = vunpack.c.l.b16 %v3932
    %v4469 = vunpack.c.l.b16 %v3933
    %v4470 = vunpack.c.l.b16 %v3934
    %v4471 = vunpack.c.l.b16 %v3935
    %v4472 = vunpack.c.l.b16 %v3936
    %v4473 = vunpack.c.l.b16 %v3937
    %v4474 = vunpack.c.l.b16 %v3938
    %v4475 = vunpack.c.l.b16 %v3939
    %v4476 = vunpack.c.l.b16 %v3940
    %v4477 = vunpack.c.l.b16 %v3941
    %v4478 = vunpack.c.l.b16 %v3942
    %v4479 = vunpack.c.l.b16 %v3943
    %v4480 = vunpack.c.l.b16 %v3944
    %v4481 = vunpack.c.l.b16 %v3945
    %v4482 = vunpack.c.l.b16 %v3946
    %v4483 = vunpack.c.l.b16 %v3947
    %v4484 = vunpack.c.l.b16 %v3948
    %v4485 = vunpack.c.l.b16 %v3949
    %v4486 = vunpack.c.l.b16 %v3950
    %v4487 = vunpack.c.l.b16 %v3951
    %v4488 = vunpack.c.l.b16 %v3952
    %v4489 = vunpack.c.l.b16 %v3953
    %v4490 = vunpack.c.l.b16 %v3954
    %v4491 = vunpack.c.l.b16 %v3955
    %v4492 = vunpack.c.l.b16 %v3956
    %v4493 = vunpack.c.l.b16 %v3957
    %v4494 = vunpack.c.l.b16 %v3958
    %v4495 = vunpack.c.l.b16 %v3959
    %v4496 = vunpack.c.l.b16 %v3960
    %v4497 = vunpack.c.l.b16 %v3961
    %v4498 = vunpack.c.l.b16 %v3962
    %v4499 = vunpack.c.l.b16 %v3963
    %v4500 = vunpack.c.l.b16 %v3964
    %v4501 = vunpack.c.l.b16 %v3965
    %v4502 = vunpack.c.l.b16 %v3966
    %v4503 = vunpack.c.l.b16 %v3967
    %v4504 = vunpack.c.l.b16 %v3968
    %v4505 = vunpack.c.l.b16 %v3969
    %v4506 = vunpack.c.l.b16 %v3970
    %v4507 = vunpack.c.l.b16 %v3971
    %v4508 = vunpack.c.l.b16 %v3972
    %v4509 = vunpack.c.l.b16 %v3973
    %v4510 = vunpack.c.l.b16 %v3974
    %v4511 = vunpack.c.l.b16 %v3975
    %v4512 = vunpack.c.l.b16 %v3976
    %v4513 = vunpack.c.l.b16 %v3977
    %v4514 = vunpack.c.l.b16 %v3978
    %v4515 = vunpack.c.l.b16 %v3979
    %v4516 = vunpack.c.l.b16 %v3980
    %v4517 = vunpack.c.l.b16 %v3981
    %v4518 = vunpack.c.l.b16 %v3982
    %v4519 = vunpack.c.l.b16 %v3983
    %v4520 = vunpack.c.l.b16 %v3984
    %v4521 = vunpack.c.l.b16 %v3985
    %v4522 = vunpack.c.l.b16 %v3986
    %v4523 = vunpack.c.l.b16 %v3987
    %v4524 = vunpack.c.l.b16 %v3988
    %v4525 = vunpack.c.l.b16 %v3989
    %v4526 = vunpack.c.l.b16 %v3990
    %v4527 = vunpack.c.l.b16 %v3991
    %v4528 = vunpack.c.l.b16 %v3992
    %v4529 = vunpack.c.l.b16 %v3993
    %v4530 = vunpack.c.l.b16 %v3994
    %v4531 = vunpack.c.l.b16 %v3995
    %v4532 = vunpack.c.l.b16 %v3996
    %v4533 = vunpack.c.l.b16 %v3997
    %v4534 = vunpack.c.l.b16 %v3998
    %v4535 = vunpack.c.l.b16 %v3999
    %v4536 = vunpack.c.l.b16 %v4000
    %v4537 = vunpack.c.l.b16 %v4001
    %v4538 = vunpack.c.l.b16 %v4002
    %v4539 = vunpack.c.l.b16 %v4003
    %v4540 = vunpack.c.l.b16 %v4004
    %v4541 = vunpack.c.l.b16 %v4005
    %v4542 = vunpack.c.l.b16 %v4006
    %v4543 = vunpack.c.l.b16 %v4007
    %v4544 = vunpack.c.l.b16 %v4008
    %v4545 = vunpack.c.l.b16 %v4009
    %v4546 = vunpack.c.l.b16 %v4010
    %v4547 = vunpack.c.l.b16 %v4011
    %v4548 = vunpack.c.l.b16 %v4012
    %v4549 = vunpack.c.l.b16 %v4013
    %v4550 = vunpack.c.l.b16 %v4014
    %v4551 = vunpack.c.l.b16 %v4015
    %v4552 = vunpack.c.l.b16 %v4016
    %v4553 = vunpack.c.l.b16 %v4017
    %v4554 = vunpack.c.l.b16 %v4018
    %v4555 = vunpack.c.l.b16 %v4019
    %v4556 = vunpack.c.l.b16 %v4020
    %v4557 = vunpack.c.l.b16 %v4021
    %v4558 = vunpack.c.l.b16 %v4022
    %v4559 = vunpack.c.l.b16 %v4023
    %v4560 = vunpack.c.l.b16 %v4024
    %v4561 = vunpack.c.l.b16 %v4025
    %v4562 = vunpack.c.l.b16 %v4026
    %v4563 = vunpack.c.l.b16 %v4027
    %v4564 = vunpack.c.l.b16 %v4028
    %v4565 = vunpack.c.l.b16 %v4029
    %v4566 = vunpack.c.l.b16 %v4030
    %v4567 = vunpack.c.l.b16 %v4031
    %v4568 = vunpack.c.l.b16 %v4032
    %v4569 = vunpack.c.l.b16 %v4033
    %v4570 = vunpack.c.l.b16 %v4034
    %v4571 = vunpack.c.l.b16 %v4035
    %v4572 = vunpack.c.l.b16 %v4036
    %v4573 = vunpack.c.l.b16 %v4037
    %v4574 = vunpack.c.l.b16 %v4038
    %v4575 = vunpack.c.l.b16 %v4039
    %v4576 = vunpack.c.l.b16 %v4040
    %v4577 = vunpack.c.l.b16 %v4041
    %v4578 = vunpack.c.l.b16 %v4042
    %v4579 = vunpack.c.l.b16 %v4043
    %v4580 = vunpack.c.l.b16 %v4044
    %v4581 = vunpack.c.l.b16 %v4045
    %v4582 = vunpack.c.l.b16 %v4046
    %v4583 = vunpack.c.l.b16 %v4047
    %v4584 = vunpack.c.l.b16 %v4048
    %v4585 = vunpack.c.l.b16 %v4049
    %v4586 = vunpack.c.l.b16 %v4050
    %v4587 = vunpack.c.l.b16 %v4051
    %v4588 = vunpack.c.l.b16 %v4052
    %v4589 = vunpack.c.l.b16 %v4053
    %v4590 = vunpack.c.l.b16 %v4054
    %v4591 = vunpack.c.l.b16 %v4055
    %v4592 = vunpack.c.l.b16 %v4056
    %v4593 = vunpack.c.l.b16 %v4057
    %v4594 = vunpack.c.l.b16 %v4058
    %v4595 = vunpack.c.l.b16 %v4059
    %v4596 = vunpack.c.l.b16 %v4060
    %v4597 = vunpack.c.l.b16 %v4061
    %v4598 = vunpack.c.l.b16 %v4062
    %v4599 = vunpack.c.l.b16 %v4063
    %v4600 = vunpack.c.l.b16 %v4064
    %v4601 = vunpack.c.l.b16 %v4065
    %v4602 = vunpack.c.l.b16 %v4066
    %v4603 = vunpack.c.l.b16 %v4067
    %v4604 = vunpack.c.l.b16 %v4068
    %v4605 = vunpack.c.l.b16 %v4069
    %v4606 = vunpack.c.l.b16 %v4070
    %v4607 = vunpack.c.l.b16 %v4071
    %v4608 = vunpack.c.l.b16 %v4072
    %v4609 = vunpack.c.l.b16 %v4073
    %v4610 = vunpack.c.l.b16 %v4074
    %v4611 = vunpack.c.l.b16 %v4075
    %v4612 = vunpack.c.l.b16 %v4076
    %v4613 = vunpack.c.l.b16 %v4077
    %v4614 = vunpack.c.l.b16 %v4078
    %v4615 = vunpack.c.l.b16 %v4079
    %v4616 = vunpack.c.l.b16 %v4080
    %v4617 = vunpack.c.l.b16 %v4081
    %v4618 = vunpack.c.l.b16 %v4082
    %v4619 = vunpack.c.l.b16 %v4083
    %v4620 = vunpack.c.l.b16 %v4084
    %v4621 = vunpack.c.l.b16 %v4085
    %v4622 = vunpack.c.l.b16 %v4086
    %v4623 = vunpack.c.l.b16 %v4087
    %v4624 = vunpack.c.l.b16 %v4088
    %v4625 = vunpack.c.l.b16 %v4089
    %v4626 = vunpack.c.l.b16 %v4090
    %v4627 = vunpack.c.l.b16 %v4091
    %v4628 = vunpack.c.l.b16 %v4092
    %v4629 = vunpack.c.l.b16 %v4093
    %v4630 = vunpack.c.l.b16 %v4094
    %v4631 = vunpack.c.l.b16 %v4095
    %v4632 = vunpack.c.l.b16 %v4096
    %v4633 = vunpack.c.l.b16 %v4097
    %v4634 = vunpack.c.l.b16 %v4098
    %v4635 = vunpack.c.l.b16 %v4099
    %v4636 = vunpack.c.l.b16 %v4100
    %v4637 = vunpack.c.l.b16 %v4101
    %v4638 = vunpack.c.l.b16 %v4102
    %v4639 = vunpack.c.l.b16 %v4103
    %v4640 = vunpack.c.l.b16 %v4104
    %v4641 = vunpack.c.l.b16 %v4105
    %v4642 = vunpack.c.l.b16 %v4106
    %v4643 = vunpack.c.l.b16 %v4107
    %v4644 = vunpack.c.l.b16 %v4108
    %v4645 = vunpack.c.l.b16 %v4109
    %v4646 = vunpack.c.l.b16 %v4110
    %v4647 = vunpack.c.l.b16 %v4111
    %v4648 = vunpack.c.l.b16 %v4112
    %v4649 = vunpack.c.l.b16 %v4113
    %v4650 = vunpack.c.l.b16 %v4114
    %v4651 = vunpack.c.l.b16 %v4115
    %v4652 = vunpack.c.l.b16 %v4116
    %v4653 = vunpack.c.l.b16 %v4117
    %v4654 = vunpack.c.l.b16 %v4118
    %v4655 = vunpack.c.l.b16 %v4119
    %v4656 = vunpack.c.l.b16 %v4120
    %v4657 = vunpack.c.l.b16 %v4121
    %v4658 = vunpack.c.l.b16 %v4122
    %v4659 = vunpack.c.l.b16 %v4123
    %v4660 = vunpack.c.l.b16 %v4124
    %v4661 = vunpack.c.l.b16 %v4125
    %v4662 = vunpack.c.l.b16 %v4126
    %v4663 = vunpack.c.l.b16 %v4127
    %v4664 = vpack.c.b16 %v4409, %v4408
    %v4665 = vpack.c.b16 %v4411, %v4410
    %v4666 = vpack.c.b16 %v4413, %v4412
    %v4667 = vpack.c.b16 %v4415, %v4414
    %v4668 = vpack.c.b16 %v4417, %v4416
    %v4669 = vpack.c.b16 %v4419, %v4418
    %v4670 = vpack.c.b16 %v4421, %v4420
    %v4671 = vpack.c.b16 %v4423, %v4422
    %v4672 = vpack.c.b16 %v4425, %v4424
    %v4673 = vpack.c.b16 %v4427, %v4426
    %v4674 = vpack.c.b16 %v4429, %v4428
    %v4675 = vpack.c.b16 %v4431, %v4430
    %v4676 = vpack.c.b16 %v4433, %v4432
    %v4677 = vpack.c.b16 %v4435, %v4434
    %v4678 = vpack.c.b16 %v4437, %v4436
    %v4679 = vpack.c.b16 %v4439, %v4438
    %v4680 = vpack.c.b16 %v4441, %v4440
    %v4681 = vpack.c.b16 %v4443, %v4442
    %v4682 = vpack.c.b16 %v4445, %v4444
    %v4683 = vpack.c.b16 %v4447, %v4446
    %v4684 = vpack.c.b16 %v4449, %v4448
    %v4685 = vpack.c.b16 %v4451, %v4450
    %v4686 = vpack.c.b16 %v4453, %v4452
    %v4687 = vpack.c.b16 %v4455, %v4454
    %v4688 = vpack.c.b16 %v4457, %v4456
    %v4689 = vpack.c.b16 %v4459, %v4458
    %v4690 = vpack.c.b16 %v4461, %v4460
    %v4691 = vpack.c.b16 %v4463, %v4462
    %v4692 = vpack.c.b16 %v4465, %v4464
    %v4693 = vpack.c.b16 %v4467, %v4466
    %v4694 = vpack.c.b16 %v4469, %v4468
    %v4695 = vpack.c.b16 %v4471, %v4470
    %v4696 = vpack.c.b16 %v4473, %v4472
    %v4697 = vpack.c.b16 %v4475, %v4474
    %v4698 = vpack.c.b16 %v4477, %v4476
    %v4699 = vpack.c.b16 %v4479, %v4478
    %v4700 = vpack.c.b16 %v4481, %v4480
    %v4701 = vpack.c.b16 %v4483, %v4482
    %v4702 = vpack.c.b16 %v4485, %v4484
    %v4703 = vpack.c.b16 %v4487, %v4486
    %v4704 = vpack.c.b16 %v4489, %v4488
    %v4705 = vpack.c.b16 %v4491, %v4490
    %v4706 = vpack.c.b16 %v4493, %v4492
    %v4707 = vpack.c.b16 %v4495, %v4494
    %v4708 = vpack.c.b16 %v4497, %v4496
    %v4709 = vpack.c.b16 %v4499, %v4498
    %v4710 = vpack.c.b16 %v4501, %v4500
    %v4711 = vpack.c.b16 %v4503, %v4502
    %v4712 = vpack.c.b16 %v4505, %v4504
    %v4713 = vpack.c.b16 %v4507, %v4506
    %v4714 = vpack.c.b16 %v4509, %v4508
    %v4715 = vpack.c.b16 %v4511, %v4510
    %v4716 = vpack.c.b16 %v4513, %v4512
    %v4717 = vpack.c.b16 %v4515, %v4514
    %v4718 = vpack.c.b16 %v4517, %v4516
    %v4719 = vpack.c.b16 %v4519, %v4518
    %v4720 = vpack.c.b16 %v4521, %v4520
    %v4721 = vpack.c.b16 %v4523, %v4522
    %v4722 = vpack.c.b16 %v4525, %v4524
    %v4723 = vpack.c.b16 %v4527, %v4526
    %v4724 = vpack.c.b16 %v4529, %v4528
    %v4725 = vpack.c.b16 %v4531, %v4530
    %v4726 = vpack.c.b16 %v4533, %v4532
    %v4727 = vpack.c.b16 %v4535, %v4534
    %v4728 = vpack.c.b16 %v4537, %v4536
    %v4729 = vpack.c.b16 %v4539, %v4538
    %v4730 = vpack.c.b16 %v4541, %v4540
    %v4731 = vpack.c.b16 %v4543, %v4542
    %v4732 = vpack.c.b16 %v4545, %v4544
    %v4733 = vpack.c.b16 %v4547, %v4546
    %v4734 = vpack.c.b16 %v4549, %v4548
    %v4735 = vpack.c.b16 %v4551, %v4550
    %v4736 = vpack.c.b16 %v4553, %v4552
    %v4737 = vpack.c.b16 %v4555, %v4554
    %v4738 = vpack.c.b16 %v4557, %v4556
    %v4739 = vpack.c.b16 %v4559, %v4558
    %v4740 = vpack.c.b16 %v4561, %v4560
    %v4741 = vpack.c.b16 %v4563, %v4562
    %v4742 = vpack.c.b16 %v4565, %v4564
    %v4743 = vpack.c.b16 %v4567, %v4566
    %v4744 = vpack.c.b16 %v4569, %v4568
    %v4745 = vpack.c.b16 %v4571, %v4570
    %v4746 = vpack.c.b16 %v4573, %v4572
    %v4747 = vpack.c.b16 %v4575, %v4574
    %v4748 = vpack.c.b16 %v4577, %v4576
    %v4749 = vpack.c.b16 %v4579, %v4578
    %v4750 = vpack.c.b16 %v4581, %v4580
    %v4751 = vpack.c.b16 %v4583, %v4582
    %v4752 = vpack.c.b16 %v4585, %v4584
    %v4753 = vpack.c.b16 %v4587, %v4586
    %v4754 = vpack.c.b16 %v4589, %v4588
    %v4755 = vpack.c.b16 %v4591, %v4590
    %v4756 = vpack.c.b16 %v4593, %v4592
    %v4757 = vpack.c.b16 %v4595, %v4594
    %v4758 = vpack.c.b16 %v4597, %v4596
    %v4759 = vpack.c.b16 %v4599, %v4598
    %v4760 = vpack.c.b16 %v4601, %v4600
    %v4761 = vpack.c.b16 %v4603, %v4602
    %v4762 = vpack.c.b16 %v4605, %v4604
    %v4763 = vpack.c.b16 %v4607, %v4606
    %v4764 = vpack.c.b16 %v4609, %v4608
    %v4765 = vpack.c.b16 %v4611, %v4610
    %v4766 = vpack.c.b16 %v4613, %v4612
    %v4767 = vpack.c.b16 %v4615, %v4614
    %v4768 = vpack.c.b16 %v4617, %v4616
    %v4769 = vpack.c.b16 %v4619, %v4618
    %v4770 = vpack.c.b16 %v4621, %v4620
    %v4771 = vpack.c.b16 %v4623, %v4622
    %v4772 = vpack.c.b16 %v4625, %v4624
    %v4773 = vpack.c.b16 %v4627, %v4626
    %v4774 = vpack.c.b16 %v4629, %v4628
    %v4775 = vpack.c.b16 %v4631, %v4630
    %v4776 = vpack.c.b16 %v4633, %v4632
    %v4777 = vpack.c.b16 %v4635, %v4634
    %v4778 = vpack.c.b16 %v4637, %v4636
    %v4779 = vpack.c.b16 %v4639, %v4638
    %v4780 = vpack.c.b16 %v4641, %v4640
    %v4781 = vpack.c.b16 %v4643, %v4642
    %v4782 = vpack.c.b16 %v4645, %v4644
    %v4783 = vpack.c.b16 %v4647, %v4646
    %v4784 = vpack.c.b16 %v4649, %v4648
    %v4785 = vpack.c.b16 %v4651, %v4650
    %v4786 = vpack.c.b16 %v4653, %v4652
    %v4787 = vpack.c.b16 %v4655, %v4654
    %v4788 = vpack.c.b16 %v4657, %v4656
    %v4789 = vpack.c.b16 %v4659, %v4658
    %v4790 = vpack.c.b16 %v4661, %v4660
    %v4791 = vpack.c.b16 %v4663, %v4662
    %4920 = vmatprep.subr.bf16.mxu0 0
    %4921 = vmatpush1.bf16.msra.mxu0 %v4664
    %4922 = vmatprep.subr.bf16.mxu0 0
    %4923 = vmatpush1.bf16.msra.mxu0 %v4665
    %4924 = vmatprep.subr.bf16.mxu0 0
    %4925 = vmatpush1.bf16.msra.mxu0 %v4666
    %4926 = vmatprep.subr.bf16.mxu0 0
    %4927 = vmatpush1.bf16.msra.mxu0 %v4667
    %4928 = vmatprep.subr.bf16.mxu0 0
    %4929 = vmatpush1.bf16.msra.mxu0 %v4668
    %4930 = vmatprep.subr.bf16.mxu0 0
    %4931 = vmatpush1.bf16.msra.mxu0 %v4669
    %4932 = vmatprep.subr.bf16.mxu0 0
    %4933 = vmatpush1.bf16.msra.mxu0 %v4670
    %4934 = vmatprep.subr.bf16.mxu0 0
    %4935 = vmatpush1.bf16.msra.mxu0 %v4671
    %4936 = vmatprep.subr.bf16.mxu0 0
    %4937 = vmatpush1.bf16.msra.mxu0 %v4672
    %4938 = vmatprep.subr.bf16.mxu0 0
    %4939 = vmatpush1.bf16.msra.mxu0 %v4673
    %4940 = vmatprep.subr.bf16.mxu0 0
    %4941 = vmatpush1.bf16.msra.mxu0 %v4674
    %4942 = vmatprep.subr.bf16.mxu0 0
    %4943 = vmatpush1.bf16.msra.mxu0 %v4675
    %4944 = vmatprep.subr.bf16.mxu0 0
    %4945 = vmatpush1.bf16.msra.mxu0 %v4676
    %4946 = vmatprep.subr.bf16.mxu0 0
    %4947 = vmatpush1.bf16.msra.mxu0 %v4677
    %4948 = vmatprep.subr.bf16.mxu0 0
    %4949 = vmatpush1.bf16.msra.mxu0 %v4678
    %4950 = vmatprep.subr.bf16.mxu0 0
    %4951 = vmatpush1.bf16.msra.mxu0 %v4679
    %4952 = vmatprep.mubr.bf16.mxu0 %v4129
    %4953 = vmatmul.mubr.bf16.gmra.mrb[0].mxu0 %v4128
    %v4954 = vpop.f32.mrb[0].mxu0
    %v4955 = vadd.f32 %v4150, %v4954
    %v4956 = vpop.f32.mrb[0].mxu0
    %v4957 = vpop.f32.mrb[0].mxu0
    %v4958 = vpop.f32.mrb[0].mxu0
    %4959 = vdwg.mxu0
    %4960 = vmatprep.subr.bf16.mxu0 0
    %4961 = vmatpush1.bf16.msra.mxu0 %v4680
    %4962 = vmatprep.subr.bf16.mxu0 0
    %4963 = vmatpush1.bf16.msra.mxu0 %v4681
    %4964 = vmatprep.subr.bf16.mxu0 0
    %4965 = vmatpush1.bf16.msra.mxu0 %v4682
    %4966 = vmatprep.subr.bf16.mxu0 0
    %4967 = vmatpush1.bf16.msra.mxu0 %v4683
    %4968 = vmatprep.subr.bf16.mxu0 0
    %4969 = vmatpush1.bf16.msra.mxu0 %v4684
    %4970 = vmatprep.subr.bf16.mxu0 0
    %4971 = vmatpush1.bf16.msra.mxu0 %v4685
    %4972 = vmatprep.subr.bf16.mxu0 0
    %4973 = vmatpush1.bf16.msra.mxu0 %v4686
    %4974 = vmatprep.subr.bf16.mxu0 0
    %4975 = vmatpush1.bf16.msra.mxu0 %v4687
    %4976 = vmatprep.subr.bf16.mxu0 0
    %4977 = vmatpush1.bf16.msra.mxu0 %v4688
    %4978 = vmatprep.subr.bf16.mxu0 0
    %4979 = vmatpush1.bf16.msra.mxu0 %v4689
    %4980 = vmatprep.subr.bf16.mxu0 0
    %4981 = vmatpush1.bf16.msra.mxu0 %v4690
    %4982 = vmatprep.subr.bf16.mxu0 0
    %4983 = vmatpush1.bf16.msra.mxu0 %v4691
    %4984 = vmatprep.subr.bf16.mxu0 0
    %4985 = vmatpush1.bf16.msra.mxu0 %v4692
    %4986 = vmatprep.subr.bf16.mxu0 0
    %4987 = vmatpush1.bf16.msra.mxu0 %v4693
    %4988 = vmatprep.subr.bf16.mxu0 0
    %4989 = vmatpush1.bf16.msra.mxu0 %v4694
    %4990 = vmatprep.subr.bf16.mxu0 0
    %4991 = vmatpush1.bf16.msra.mxu0 %v4695
    %4992 = vmatprep.mubr.bf16.mxu0 %v4131
    %4993 = vmatmul.mubr.bf16.gmra.mrb[0].mxu0 %v4130
    %v4994 = vpop.f32.mrb[0].mxu0
    %v4995 = vadd.f32 %v4955, %v4994
    %v4996 = vpop.f32.mrb[0].mxu0
    %v4997 = vpop.f32.mrb[0].mxu0
    %v4998 = vpop.f32.mrb[0].mxu0
    %4999 = vdwg.mxu0
    %5000 = vmatprep.subr.bf16.mxu0 0
    %5001 = vmatpush1.bf16.msra.mxu0 %v4696
    %5002 = vmatprep.subr.bf16.mxu0 0
    %5003 = vmatpush1.bf16.msra.mxu0 %v4697
    %5004 = vmatprep.subr.bf16.mxu0 0
    %5005 = vmatpush1.bf16.msra.mxu0 %v4698
    %5006 = vmatprep.subr.bf16.mxu0 0
    %5007 = vmatpush1.bf16.msra.mxu0 %v4699
    %5008 = vmatprep.subr.bf16.mxu0 0
    %5009 = vmatpush1.bf16.msra.mxu0 %v4700
    %5010 = vmatprep.subr.bf16.mxu0 0
    %5011 = vmatpush1.bf16.msra.mxu0 %v4701
    %5012 = vmatprep.subr.bf16.mxu0 0
    %5013 = vmatpush1.bf16.msra.mxu0 %v4702
    %5014 = vmatprep.subr.bf16.mxu0 0
    %5015 = vmatpush1.bf16.msra.mxu0 %v4703
    %5016 = vmatprep.subr.bf16.mxu0 0
    %5017 = vmatpush1.bf16.msra.mxu0 %v4704
    %5018 = vmatprep.subr.bf16.mxu0 0
    %5019 = vmatpush1.bf16.msra.mxu0 %v4705
    %5020 = vmatprep.subr.bf16.mxu0 0
    %5021 = vmatpush1.bf16.msra.mxu0 %v4706
    %5022 = vmatprep.subr.bf16.mxu0 0
    %5023 = vmatpush1.bf16.msra.mxu0 %v4707
    %5024 = vmatprep.subr.bf16.mxu0 0
    %5025 = vmatpush1.bf16.msra.mxu0 %v4708
    %5026 = vmatprep.subr.bf16.mxu0 0
    %5027 = vmatpush1.bf16.msra.mxu0 %v4709
    %5028 = vmatprep.subr.bf16.mxu0 0
    %5029 = vmatpush1.bf16.msra.mxu0 %v4710
    %5030 = vmatprep.subr.bf16.mxu0 0
    %5031 = vmatpush1.bf16.msra.mxu0 %v4711
    %5032 = vmatprep.mubr.bf16.mxu0 %v4133
    %5033 = vmatmul.mubr.bf16.gmra.mrb[0].mxu0 %v4132
    %v5034 = vpop.f32.mrb[0].mxu0
    %v5035 = vadd.f32 %v4995, %v5034
    %v5036 = vpop.f32.mrb[0].mxu0
    %v5037 = vpop.f32.mrb[0].mxu0
    %v5038 = vpop.f32.mrb[0].mxu0
    %5039 = vdwg.mxu0
    %5040 = vmatprep.subr.bf16.mxu0 0
    %5041 = vmatpush1.bf16.msra.mxu0 %v4712
    %5042 = vmatprep.subr.bf16.mxu0 0
    %5043 = vmatpush1.bf16.msra.mxu0 %v4713
    %5044 = vmatprep.subr.bf16.mxu0 0
    %5045 = vmatpush1.bf16.msra.mxu0 %v4714
    %5046 = vmatprep.subr.bf16.mxu0 0
    %5047 = vmatpush1.bf16.msra.mxu0 %v4715
    %5048 = vmatprep.subr.bf16.mxu0 0
    %5049 = vmatpush1.bf16.msra.mxu0 %v4716
    %5050 = vmatprep.subr.bf16.mxu0 0
    %5051 = vmatpush1.bf16.msra.mxu0 %v4717
    %5052 = vmatprep.subr.bf16.mxu0 0
    %5053 = vmatpush1.bf16.msra.mxu0 %v4718
    %5054 = vmatprep.subr.bf16.mxu0 0
    %5055 = vmatpush1.bf16.msra.mxu0 %v4719
    %5056 = vmatprep.subr.bf16.mxu0 0
    %5057 = vmatpush1.bf16.msra.mxu0 %v4720
    %5058 = vmatprep.subr.bf16.mxu0 0
    %5059 = vmatpush1.bf16.msra.mxu0 %v4721
    %5060 = vmatprep.subr.bf16.mxu0 0
    %5061 = vmatpush1.bf16.msra.mxu0 %v4722
    %5062 = vmatprep.subr.bf16.mxu0 0
    %5063 = vmatpush1.bf16.msra.mxu0 %v4723
    %5064 = vmatprep.subr.bf16.mxu0 0
    %5065 = vmatpush1.bf16.msra.mxu0 %v4724
    %5066 = vmatprep.subr.bf16.mxu0 0
    %5067 = vmatpush1.bf16.msra.mxu0 %v4725
    %5068 = vmatprep.subr.bf16.mxu0 0
    %5069 = vmatpush1.bf16.msra.mxu0 %v4726
    %5070 = vmatprep.subr.bf16.mxu0 0
    %5071 = vmatpush1.bf16.msra.mxu0 %v4727
    %5072 = vmatprep.mubr.bf16.mxu0 %v4135
    %5073 = vmatmul.mubr.bf16.gmra.mrb[0].mxu0 %v4134
    %v5074 = vpop.f32.mrb[0].mxu0
    %v5075 = vadd.f32 %v5035, %v5074
    %v5076 = vpop.f32.mrb[0].mxu0
    %v5077 = vpop.f32.mrb[0].mxu0
    %v5078 = vpop.f32.mrb[0].mxu0
    %5079 = vdwg.mxu0
    %5080 = vmatprep.subr.bf16.mxu0 0
    %5081 = vmatpush1.bf16.msra.mxu0 %v4728
    %5082 = vmatprep.subr.bf16.mxu0 0
    %5083 = vmatpush1.bf16.msra.mxu0 %v4729
    %5084 = vmatprep.subr.bf16.mxu0 0
    %5085 = vmatpush1.bf16.msra.mxu0 %v4730
    %5086 = vmatprep.subr.bf16.mxu0 0
    %5087 = vmatpush1.bf16.msra.mxu0 %v4731
    %5088 = vmatprep.subr.bf16.mxu0 0
    %5089 = vmatpush1.bf16.msra.mxu0 %v4732
    %5090 = vmatprep.subr.bf16.mxu0 0
    %5091 = vmatpush1.bf16.msra.mxu0 %v4733
    %5092 = vmatprep.subr.bf16.mxu0 0
    %5093 = vmatpush1.bf16.msra.mxu0 %v4734
    %5094 = vmatprep.subr.bf16.mxu0 0
    %5095 = vmatpush1.bf16.msra.mxu0 %v4735
    %5096 = vmatprep.subr.bf16.mxu0 0
    %5097 = vmatpush1.bf16.msra.mxu0 %v4736
    %5098 = vmatprep.subr.bf16.mxu0 0
    %5099 = vmatpush1.bf16.msra.mxu0 %v4737
    %5100 = vmatprep.subr.bf16.mxu0 0
    %5101 = vmatpush1.bf16.msra.mxu0 %v4738
    %5102 = vmatprep.subr.bf16.mxu0 0
    %5103 = vmatpush1.bf16.msra.mxu0 %v4739
    %5104 = vmatprep.subr.bf16.mxu0 0
    %5105 = vmatpush1.bf16.msra.mxu0 %v4740
    %5106 = vmatprep.subr.bf16.mxu0 0
    %5107 = vmatpush1.bf16.msra.mxu0 %v4741
    %5108 = vmatprep.subr.bf16.mxu0 0
    %5109 = vmatpush1.bf16.msra.mxu0 %v4742
    %5110 = vmatprep.subr.bf16.mxu0 0
    %5111 = vmatpush1.bf16.msra.mxu0 %v4743
    %5112 = vmatprep.mubr.bf16.mxu0 %v4137
    %5113 = vmatmul.mubr.bf16.gmra.mrb[0].mxu0 %v4136
    %v5114 = vpop.f32.mrb[0].mxu0
    %v5115 = vadd.f32 %v5075, %v5114
    %v5116 = vpop.f32.mrb[0].mxu0
    %v5117 = vpop.f32.mrb[0].mxu0
    %v5118 = vpop.f32.mrb[0].mxu0
    %5119 = vdwg.mxu0
    %5120 = vmatprep.subr.bf16.mxu0 0
    %5121 = vmatpush1.bf16.msra.mxu0 %v4744
    %5122 = vmatprep.subr.bf16.mxu0 0
    %5123 = vmatpush1.bf16.msra.mxu0 %v4745
    %5124 = vmatprep.subr.bf16.mxu0 0
    %5125 = vmatpush1.bf16.msra.mxu0 %v4746
    %5126 = vmatprep.subr.bf16.mxu0 0
    %5127 = vmatpush1.bf16.msra.mxu0 %v4747
    %5128 = vmatprep.subr.bf16.mxu0 0
    %5129 = vmatpush1.bf16.msra.mxu0 %v4748
    %5130 = vmatprep.subr.bf16.mxu0 0
    %5131 = vmatpush1.bf16.msra.mxu0 %v4749
    %5132 = vmatprep.subr.bf16.mxu0 0
    %5133 = vmatpush1.bf16.msra.mxu0 %v4750
    %5134 = vmatprep.subr.bf16.mxu0 0
    %5135 = vmatpush1.bf16.msra.mxu0 %v4751
    %5136 = vmatprep.subr.bf16.mxu0 0
    %5137 = vmatpush1.bf16.msra.mxu0 %v4752
    %5138 = vmatprep.subr.bf16.mxu0 0
    %5139 = vmatpush1.bf16.msra.mxu0 %v4753
    %5140 = vmatprep.subr.bf16.mxu0 0
    %5141 = vmatpush1.bf16.msra.mxu0 %v4754
    %5142 = vmatprep.subr.bf16.mxu0 0
    %5143 = vmatpush1.bf16.msra.mxu0 %v4755
    %5144 = vmatprep.subr.bf16.mxu0 0
    %5145 = vmatpush1.bf16.msra.mxu0 %v4756
    %5146 = vmatprep.subr.bf16.mxu0 0
    %5147 = vmatpush1.bf16.msra.mxu0 %v4757
    %5148 = vmatprep.subr.bf16.mxu0 0
    %5149 = vmatpush1.bf16.msra.mxu0 %v4758
    %5150 = vmatprep.subr.bf16.mxu0 0
    %5151 = vmatpush1.bf16.msra.mxu0 %v4759
    %5152 = vmatprep.mubr.bf16.mxu0 %v4139
    %5153 = vmatmul.mubr.bf16.gmra.mrb[0].mxu0 %v4138
    %v5154 = vpop.f32.mrb[0].mxu0
    %v5155 = vadd.f32 %v5115, %v5154
    %v5156 = vpop.f32.mrb[0].mxu0
    %v5157 = vpop.f32.mrb[0].mxu0
    %v5158 = vpop.f32.mrb[0].mxu0
    %5159 = vdwg.mxu0
    %5160 = vmatprep.subr.bf16.mxu0 0
    %5161 = vmatpush1.bf16.msra.mxu0 %v4760
    %5162 = vmatprep.subr.bf16.mxu0 0
    %5163 = vmatpush1.bf16.msra.mxu0 %v4761
    %5164 = vmatprep.subr.bf16.mxu0 0
    %5165 = vmatpush1.bf16.msra.mxu0 %v4762
    %5166 = vmatprep.subr.bf16.mxu0 0
    %5167 = vmatpush1.bf16.msra.mxu0 %v4763
    %5168 = vmatprep.subr.bf16.mxu0 0
    %5169 = vmatpush1.bf16.msra.mxu0 %v4764
    %5170 = vmatprep.subr.bf16.mxu0 0
    %5171 = vmatpush1.bf16.msra.mxu0 %v4765
    %5172 = vmatprep.subr.bf16.mxu0 0
    %5173 = vmatpush1.bf16.msra.mxu0 %v4766
    %5174 = vmatprep.subr.bf16.mxu0 0
    %5175 = vmatpush1.bf16.msra.mxu0 %v4767
    %5176 = vmatprep.subr.bf16.mxu0 0
    %5177 = vmatpush1.bf16.msra.mxu0 %v4768
    %5178 = vmatprep.subr.bf16.mxu0 0
    %5179 = vmatpush1.bf16.msra.mxu0 %v4769
    %5180 = vmatprep.subr.bf16.mxu0 0
    %5181 = vmatpush1.bf16.msra.mxu0 %v4770
    %5182 = vmatprep.subr.bf16.mxu0 0
    %5183 = vmatpush1.bf16.msra.mxu0 %v4771
    %5184 = vmatprep.subr.bf16.mxu0 0
    %5185 = vmatpush1.bf16.msra.mxu0 %v4772
    %5186 = vmatprep.subr.bf16.mxu0 0
    %5187 = vmatpush1.bf16.msra.mxu0 %v4773
    %5188 = vmatprep.subr.bf16.mxu0 0
    %5189 = vmatpush1.bf16.msra.mxu0 %v4774
    %5190 = vmatprep.subr.bf16.mxu0 0
    %5191 = vmatpush1.bf16.msra.mxu0 %v4775
    %5192 = vmatprep.mubr.bf16.mxu0 %v4141
    %5193 = vmatmul.mubr.bf16.gmra.mrb[0].mxu0 %v4140
    %v5194 = vpop.f32.mrb[0].mxu0
    %v5195 = vadd.f32 %v5155, %v5194
    %v5196 = vpop.f32.mrb[0].mxu0
    %v5197 = vpop.f32.mrb[0].mxu0
    %v5198 = vpop.f32.mrb[0].mxu0
    %5199 = vdwg.mxu0
    %5200 = vmatprep.subr.bf16.mxu0 0
    %5201 = vmatpush1.bf16.msra.mxu0 %v4776
    %5202 = vmatprep.subr.bf16.mxu0 0
    %5203 = vmatpush1.bf16.msra.mxu0 %v4777
    %5204 = vmatprep.subr.bf16.mxu0 0
    %5205 = vmatpush1.bf16.msra.mxu0 %v4778
    %5206 = vmatprep.subr.bf16.mxu0 0
    %5207 = vmatpush1.bf16.msra.mxu0 %v4779
    %5208 = vmatprep.subr.bf16.mxu0 0
    %5209 = vmatpush1.bf16.msra.mxu0 %v4780
    %5210 = vmatprep.subr.bf16.mxu0 0
    %5211 = vmatpush1.bf16.msra.mxu0 %v4781
    %5212 = vmatprep.subr.bf16.mxu0 0
    %5213 = vmatpush1.bf16.msra.mxu0 %v4782
    %5214 = vmatprep.subr.bf16.mxu0 0
    %5215 = vmatpush1.bf16.msra.mxu0 %v4783
    %5216 = vmatprep.subr.bf16.mxu0 0
    %5217 = vmatpush1.bf16.msra.mxu0 %v4784
    %5218 = vmatprep.subr.bf16.mxu0 0
    %5219 = vmatpush1.bf16.msra.mxu0 %v4785
    %5220 = vmatprep.subr.bf16.mxu0 0
    %5221 = vmatpush1.bf16.msra.mxu0 %v4786
    %5222 = vmatprep.subr.bf16.mxu0 0
    %5223 = vmatpush1.bf16.msra.mxu0 %v4787
    %5224 = vmatprep.subr.bf16.mxu0 0
    %5225 = vmatpush1.bf16.msra.mxu0 %v4788
    %5226 = vmatprep.subr.bf16.mxu0 0
    %5227 = vmatpush1.bf16.msra.mxu0 %v4789
    %5228 = vmatprep.subr.bf16.mxu0 0
    %5229 = vmatpush1.bf16.msra.mxu0 %v4790
    %5230 = vmatprep.subr.bf16.mxu0 0
    %5231 = vmatpush1.bf16.msra.mxu0 %v4791
    %5232 = vmatprep.mubr.bf16.mxu0 %v4143
    %5233 = vmatmul.mubr.bf16.gmra.mrb[0].mxu0 %v4142
    %v5234 = vpop.f32.mrb[0].mxu0
    %v5235 = vadd.f32 %v5195, %v5234
    %v5236 = vpop.f32.mrb[0].mxu0
    %v5237 = vpop.f32.mrb[0].mxu0
    %v5238 = vpop.f32.mrb[0].mxu0
    %5239 = vdwg.mxu0
    %v5240 = vadd.f32 %v3243, %v5235
    %s5241 = scalar_lea.vmem %s8, 35
    %v5242 = vld [vmem:[%s5241] ss:$8 sm:$0x3]
    %s5243 = scalar_lea.vmem %s8, 36
    %v5244 = vld [vmem:[%s5243] ss:$8 sm:$0x3]
    %v5245 = vsel %vm221, %v5240, 0.0
    %5246 = vadd.xlane.f32.xlu0 %v5245
    %v5247 = vpop.xlane.xlu0 %5246
    %v5248 = vmul.f32 %v5247, %v225
    %v5249 = vsub.f32 %v5240, %v5248
    %v5250 = vmul.f32 %v5249, %v5249
    %v5251 = vsel %vm221, %v5250, 0.0
    %5252 = vadd.xlane.f32.xlu0 %v5251
    %v5253 = vpop.xlane.xlu0 %5252
    %v5254 = vmul.f32 %v5253, %v225
    %v5255 = vadd.f32 %v5254, 1e-05
    %v5256 = vrsqrt.pop %v5255
    %v5257 = vmul.f32 %v5249, %v5256
    %v5259 = vlaneseq
    %v5260 = vshrl.u32 %v5259, 7
    %v5261 = vsub.s32 0, %v5260
    %v5262 = vrot.slane %v5242, %v5261
    %v5264 = vmul.f32 %v5257, %v5262
    %v5266 = vlaneseq
    %v5267 = vshrl.u32 %v5266, 7
    %v5268 = vsub.s32 0, %v5267
    %v5269 = vrot.slane %v5244, %v5268
    %v5271 = vadd.f32 %v5264, %v5269
    %s5272 = scalar_lea.vmem %s3, 32
    %v5273 = vld [vmem:[%s5272] sm:$0xf]
    %v5274 = vld [vmem:[%s5272 + $0x4] sm:$0xf]
    %v5275 = vld [vmem:[%s5272 + $0x8] sm:$0xf]
    %v5276 = vld [vmem:[%s5272 + $0xc] sm:$0xf]
    %v5277 = vpack.c.bf16 %v5271, %v5271
    %s5278 = scalar_lea.vmem %s8, 37
    %v5279 = vld [vmem:[%s5278] ss:$8 sm:$0x3]
    %v5281 = vlaneseq
    %v5282 = vshrl.u32 %v5281, 7
    %v5283 = vsub.s32 0, %v5282
    %v5284 = vrot.slane %v5279, %v5283
    %v5290 = vunpack.c.l.b16 %v5273
    %v5291 = vunpack.c.l.b16 %v5274
    %v5292 = vunpack.c.l.b16 %v5275
    %v5293 = vunpack.c.l.b16 %v5276
    %v5294 = vpack.c.b16 %v5291, %v5290
    %v5295 = vpack.c.b16 %v5293, %v5292
    %v5299 = vsel %vm88, %v5277, 0
    %5301 = vmatprep.subr.bf16.mxu0 0
    %5302 = vmatpush1.bf16.msra.mxu0 %v5294
    %5303 = vmatprep.subr.bf16.mxu0 0
    %5304 = vmatpush1.bf16.msra.mxu0 %v5295
    %5305 = vmatprep.subr.bf16.mxu0 0
    %5306 = vmatpush1.bf16.msra.mxu0 0
    %5307 = vmatprep.subr.bf16.mxu0 0
    %5308 = vmatpush1.bf16.msra.mxu0 0
    %5309 = vmatprep.subr.bf16.mxu0 0
    %5310 = vmatpush1.bf16.msra.mxu0 0
    %5311 = vmatprep.subr.bf16.mxu0 0
    %5312 = vmatpush1.bf16.msra.mxu0 0
    %5313 = vmatprep.subr.bf16.mxu0 0
    %5314 = vmatpush1.bf16.msra.mxu0 0
    %5315 = vmatprep.subr.bf16.mxu0 0
    %5316 = vmatpush1.bf16.msra.mxu0 0
    %5317 = vmatprep.subr.bf16.mxu0 0
    %5318 = vmatpush1.bf16.msra.mxu0 0
    %5319 = vmatprep.subr.bf16.mxu0 0
    %5320 = vmatpush1.bf16.msra.mxu0 0
    %5321 = vmatprep.subr.bf16.mxu0 0
    %5322 = vmatpush1.bf16.msra.mxu0 0
    %5323 = vmatprep.subr.bf16.mxu0 0
    %5324 = vmatpush1.bf16.msra.mxu0 0
    %5325 = vmatprep.subr.bf16.mxu0 0
    %5326 = vmatpush1.bf16.msra.mxu0 0
    %5327 = vmatprep.subr.bf16.mxu0 0
    %5328 = vmatpush1.bf16.msra.mxu0 0
    %5329 = vmatprep.subr.bf16.mxu0 0
    %5330 = vmatpush1.bf16.msra.mxu0 0
    %5331 = vmatprep.subr.bf16.mxu0 0
    %5332 = vmatpush1.bf16.msra.mxu0 0
    %5333 = vmatprep.mubr.bf16.mxu0 0
    %5334 = vmatmul.mubr.bf16.gmra.mrb[0].mxu0 %v5299
    %v5335 = vpop.f32.mrb[0].mxu0
    %v5336 = vadd.f32 %v5284, %v5335
    %v5337 = vpop.f32.mrb[0].mxu0
    %v5338 = vpop.f32.mrb[0].mxu0
    %v5339 = vpop.f32.mrb[0].mxu0
    %5340 = vdwg.mxu0
    %v5341 = vadd.f32 %v5271, %v5336
    %s5342 = scalar_lea.vmem %s8, 49
    %v5343 = vld [vmem:[%s5342] ss:$8 sm:$0x3]
    %s5344 = scalar_lea.vmem %s8, 50
    %v5345 = vld [vmem:[%s5344] ss:$8 sm:$0x3]
    %v5346 = vsel %vm221, %v5341, 0.0
    %5347 = vadd.xlane.f32.xlu0 %v5346
    %v5348 = vpop.xlane.xlu0 %5347
    %v5349 = vmul.f32 %v5348, %v225
    %v5350 = vsub.f32 %v5341, %v5349
    %v5351 = vmul.f32 %v5350, %v5350
    %v5352 = vsel %vm221, %v5351, 0.0
    %5353 = vadd.xlane.f32.xlu0 %v5352
    %v5354 = vpop.xlane.xlu0 %5353
    %v5355 = vmul.f32 %v5354, %v225
    %v5356 = vadd.f32 %v5355, 1e-05
    %v5357 = vrsqrt.pop %v5356
    %v5358 = vmul.f32 %v5350, %v5357
    %v5360 = vlaneseq
    %v5361 = vshrl.u32 %v5360, 7
    %v5362 = vsub.s32 0, %v5361
    %v5363 = vrot.slane %v5343, %v5362
    %v5365 = vmul.f32 %v5358, %v5363
    %v5367 = vlaneseq
    %v5368 = vshrl.u32 %v5367, 7
    %v5369 = vsub.s32 0, %v5368
    %v5370 = vrot.slane %v5345, %v5369
    %v5372 = vadd.f32 %v5365, %v5370
    %s5373 = scalar_lea.vmem %s3, 80
    %v5374 = vld [vmem:[%s5373] sm:$0xf]
    %v5375 = vld [vmem:[%s5373 + $0x4] sm:$0xf]
    %v5376 = vld [vmem:[%s5373 + $0x8] sm:$0xf]
    %v5377 = vld [vmem:[%s5373 + $0xc] sm:$0xf]
    %v5378 = vpack.c.bf16 %v5372, %v5372
    %s5379 = scalar_lea.vmem %s8, 38
    %v5380 = vld [vmem:[%s5379] ss:$8 sm:$0x3]
    %v5382 = vlaneseq
    %v5383 = vshrl.u32 %v5382, 7
    %v5384 = vsub.s32 0, %v5383
    %v5385 = vrot.slane %v5380, %v5384
    %v5391 = vunpack.c.l.b16 %v5374
    %v5392 = vunpack.c.l.b16 %v5375
    %v5393 = vunpack.c.l.b16 %v5376
    %v5394 = vunpack.c.l.b16 %v5377
    %v5395 = vpack.c.b16 %v5392, %v5391
    %v5396 = vpack.c.b16 %v5394, %v5393
    %v5400 = vsel %vm88, %v5378, 0
    %5402 = vmatprep.subr.bf16.mxu0 0
    %5403 = vmatpush1.bf16.msra.mxu0 %v5395
    %5404 = vmatprep.subr.bf16.mxu0 0
    %5405 = vmatpush1.bf16.msra.mxu0 %v5396
    %5406 = vmatprep.subr.bf16.mxu0 0
    %5407 = vmatpush1.bf16.msra.mxu0 0
    %5408 = vmatprep.subr.bf16.mxu0 0
    %5409 = vmatpush1.bf16.msra.mxu0 0
    %5410 = vmatprep.subr.bf16.mxu0 0
    %5411 = vmatpush1.bf16.msra.mxu0 0
    %5412 = vmatprep.subr.bf16.mxu0 0
    %5413 = vmatpush1.bf16.msra.mxu0 0
    %5414 = vmatprep.subr.bf16.mxu0 0
    %5415 = vmatpush1.bf16.msra.mxu0 0
    %5416 = vmatprep.subr.bf16.mxu0 0
    %5417 = vmatpush1.bf16.msra.mxu0 0
    %5418 = vmatprep.subr.bf16.mxu0 0
    %5419 = vmatpush1.bf16.msra.mxu0 0
    %5420 = vmatprep.subr.bf16.mxu0 0
    %5421 = vmatpush1.bf16.msra.mxu0 0
    %5422 = vmatprep.subr.bf16.mxu0 0
    %5423 = vmatpush1.bf16.msra.mxu0 0
    %5424 = vmatprep.subr.bf16.mxu0 0
    %5425 = vmatpush1.bf16.msra.mxu0 0
    %5426 = vmatprep.subr.bf16.mxu0 0
    %5427 = vmatpush1.bf16.msra.mxu0 0
    %5428 = vmatprep.subr.bf16.mxu0 0
    %5429 = vmatpush1.bf16.msra.mxu0 0
    %5430 = vmatprep.subr.bf16.mxu0 0
    %5431 = vmatpush1.bf16.msra.mxu0 0
    %5432 = vmatprep.subr.bf16.mxu0 0
    %5433 = vmatpush1.bf16.msra.mxu0 0
    %5434 = vmatprep.mubr.bf16.mxu0 0
    %5435 = vmatmul.mubr.bf16.gmra.mrb[0].mxu0 %v5400
    %v5436 = vpop.f32.mrb[0].mxu0
    %v5437 = vadd.f32 %v5385, %v5436
    %v5438 = vpop.f32.mrb[0].mxu0
    %v5439 = vpop.f32.mrb[0].mxu0
    %v5440 = vpop.f32.mrb[0].mxu0
    %5441 = vdwg.mxu0
    %v5442 = vmul.f32 %v5437, 0.35355338
    %v5445 = vunpack.c.l.s4 1966171168
    %v5446 = vunpack.c.0.s8 %v5445
    %v5447 = vlaneseq
    %v5448 = vshrl.u32 %v5447, 7
    %v5449 = vsub.s32 %v5446, %v5448
    %v5450 = vrot.slane %v5442, %v5449
    %v5451 = vcombine.high %v5450, %v5450
    %v5453 = vunpack.c.l.s4 1966171168
    %v5454 = vunpack.c.0.s8 %v5453
    %v5455 = vlaneseq
    %v5456 = vshrl.u32 %v5455, 7
    %v5457 = vsub.s32 %v5454, %v5456
    %v5458 = vrot.slane %v5450, %v5457
    %v5460 = vunpack.c.l.s4 1966171168
    %v5461 = vunpack.c.0.s8 %v5460
    %v5462 = vlaneseq
    %v5463 = vshrl.u32 %v5462, 7
    %v5464 = vsub.s32 %v5461, %v5463
    %v5465 = vrot.slane %v5451, %v5464
    %v5466 = vlaneseq
    %v5467 = vshrl.u32 %v5466, 7
    %v5468 = vsub.s32 0, %v5467
    %v5469 = vrot.slane %v5458, %v5468
    %v5470 = vlaneseq
    %v5471 = vshrl.u32 %v5470, 7
    %v5472 = vsub.s32 0, %v5471
    %v5473 = vrot.slane %v5465, %v5472
    %v5476 = vmul.f32 %v5469, %v132
    %v5477 = vmul.f32 %v5469, %v136
    %v5478 = vmul.f32 %v5473, %v142
    %v5479 = vmul.f32 %v5473, %v146
    %v5480 = vpack.c.bf16 %v5477, %v5476
    %v5481 = vpack.c.bf16 %v5479, %v5478
    %v5483 = vsel %vm88, %v5480, 0
    %v5486 = vsel %vm88, %v5481, 0
    %5488 = vmatprep.subr.bf16.mxu0 0
    %5489 = vmatpush1.bf16.msra.mxu0 %v367
    %5490 = vmatprep.subr.bf16.mxu0 0
    %5491 = vmatpush1.bf16.msra.mxu0 %v368
    %5492 = vmatprep.subr.bf16.mxu0 0
    %5493 = vmatpush1.bf16.msra.mxu0 0
    %5494 = vmatprep.subr.bf16.mxu0 0
    %5495 = vmatpush1.bf16.msra.mxu0 0
    %5496 = vmatprep.subr.bf16.mxu0 0
    %5497 = vmatpush1.bf16.msra.mxu0 0
    %5498 = vmatprep.subr.bf16.mxu0 0
    %5499 = vmatpush1.bf16.msra.mxu0 0
    %5500 = vmatprep.subr.bf16.mxu0 0
    %5501 = vmatpush1.bf16.msra.mxu0 0
    %5502 = vmatprep.subr.bf16.mxu0 0
    %5503 = vmatpush1.bf16.msra.mxu0 0
    %5504 = vmatprep.subr.bf16.mxu0 0
    %5505 = vmatpush1.bf16.msra.mxu0 0
    %5506 = vmatprep.subr.bf16.mxu0 0
    %5507 = vmatpush1.bf16.msra.mxu0 0
    %5508 = vmatprep.subr.bf16.mxu0 0
    %5509 = vmatpush1.bf16.msra.mxu0 0
    %5510 = vmatprep.subr.bf16.mxu0 0
    %5511 = vmatpush1.bf16.msra.mxu0 0
    %5512 = vmatprep.subr.bf16.mxu0 0
    %5513 = vmatpush1.bf16.msra.mxu0 0
    %5514 = vmatprep.subr.bf16.mxu0 0
    %5515 = vmatpush1.bf16.msra.mxu0 0
    %5516 = vmatprep.subr.bf16.mxu0 0
    %5517 = vmatpush1.bf16.msra.mxu0 0
    %5518 = vmatprep.subr.bf16.mxu0 0
    %5519 = vmatpush1.bf16.msra.mxu0 0
    %5520 = vmatprep.mubr.bf16.mxu0 0
    %5521 = vmatmul.mubr.bf16.gmra.mrb[0].mxu0 %v5483
    %v5522 = vpop.f32.mrb[0].mxu0
    %v5523 = vadd.f32 %v41, %v5522
    %v5524 = vpop.f32.mrb[0].mxu0
    %v5525 = vpop.f32.mrb[0].mxu0
    %v5526 = vadd.f32 %v42, %v5525
    %v5527 = vpop.f32.mrb[0].mxu0
    %5528 = vmatprep.mubr.bf16.mxu0 0
    %5529 = vmatmul.mubr.bf16.gmra.mrb[0].mxu0 %v5486
    %v5530 = vpop.f32.mrb[0].mxu0
    %v5531 = vadd.f32 %v43, %v5530
    %v5532 = vpop.f32.mrb[0].mxu0
    %v5533 = vpop.f32.mrb[0].mxu0
    %v5534 = vadd.f32 %v44, %v5533
    %v5535 = vpop.f32.mrb[0].mxu0
    %5536 = vdwg.mxu0
    %v5537 = vsel %vm426, %v5523, -inf
    %v5538 = vsel %vm426, %v5526, -inf
    %v5539 = vmax.f32 %v5537, %v5538
    %v5540 = vrot.slane %v5539, 4
    %v5541 = vmax.f32 %v5539, %v5540
    %v5542 = vrot.slane %v5541, 2
    %v5543 = vmax.f32 %v5541, %v5542
    %v5544 = vrot.slane %v5543, 1
    %v5545 = vmax.f32 %v5543, %v5544
    %v5546 = vsel %vm426, %v5531, -inf
    %v5547 = vsel %vm426, %v5534, -inf
    %v5548 = vmax.f32 %v5546, %v5547
    %v5549 = vrot.slane %v5548, 4
    %v5550 = vmax.f32 %v5548, %v5549
    %v5551 = vrot.slane %v5550, 2
    %v5552 = vmax.f32 %v5550, %v5551
    %v5553 = vrot.slane %v5552, 1
    %v5554 = vmax.f32 %v5552, %v5553
    %v5555 = vsub.f32 %v5523, %v5545
    %v5556 = vsub.f32 %v5526, %v5545
    %v5557 = vsub.f32 %v5531, %v5554
    %v5558 = vsub.f32 %v5534, %v5554
    %v5559 = vmul.f32 %v5555, 1.442695
    %v5560 = vpow.pop %v5559
    %v5561 = vmul.f32 %v5556, 1.442695
    %v5562 = vpow.pop %v5561
    %v5563 = vmul.f32 %v5557, 1.442695
    %v5564 = vpow.pop %v5563
    %v5565 = vmul.f32 %v5558, 1.442695
    %v5566 = vpow.pop %v5565
    %v5567 = vsel %vm426, %v5560, 0.0
    %v5568 = vsel %vm426, %v5562, 0.0
    %v5569 = vadd.f32 %v5567, %v5568
    %v5570 = vrot.slane %v5569, 4
    %v5571 = vadd.f32 %v5569, %v5570
    %v5572 = vrot.slane %v5571, 2
    %v5573 = vadd.f32 %v5571, %v5572
    %v5574 = vrot.slane %v5573, 1
    %v5575 = vadd.f32 %v5573, %v5574
    %v5576 = vsel %vm426, %v5564, 0.0
    %v5577 = vsel %vm426, %v5566, 0.0
    %v5578 = vadd.f32 %v5576, %v5577
    %v5579 = vrot.slane %v5578, 4
    %v5580 = vadd.f32 %v5578, %v5579
    %v5581 = vrot.slane %v5580, 2
    %v5582 = vadd.f32 %v5580, %v5581
    %v5583 = vrot.slane %v5582, 1
    %v5584 = vadd.f32 %v5582, %v5583
    %v5585 = vrcp.pop %v5575
    %v5586 = vrcp.pop %v5584
    %v5587 = vmul.f32 %v5560, %v5585
    %v5588 = vmul.f32 %v5562, %v5585
    %v5589 = vmul.f32 %v5564, %v5586
    %v5590 = vmul.f32 %v5566, %v5586
    %v5591 = vpack.c.bf16 %v5588, %v5587
    %v5592 = vpack.c.bf16 %v5590, %v5589
    %v5594 = vsel %vm426, %v5591, 0
    %v5597 = vsel %vm426, %v5592, 0
    %5599 = vmatprep.subr.bf16.mxu0 0
    %5600 = vmatpush1.bf16.msra.mxu0 %v491
    %5601 = vmatprep.subr.bf16.mxu0 0
    %5602 = vmatpush1.bf16.msra.mxu0 0
    %5603 = vmatprep.subr.bf16.mxu0 0
    %5604 = vmatpush1.bf16.msra.mxu0 0
    %5605 = vmatprep.subr.bf16.mxu0 0
    %5606 = vmatpush1.bf16.msra.mxu0 0
    %5607 = vmatprep.subr.bf16.mxu0 0
    %5608 = vmatpush1.bf16.msra.mxu0 0
    %5609 = vmatprep.subr.bf16.mxu0 0
    %5610 = vmatpush1.bf16.msra.mxu0 0
    %5611 = vmatprep.subr.bf16.mxu0 0
    %5612 = vmatpush1.bf16.msra.mxu0 0
    %5613 = vmatprep.subr.bf16.mxu0 0
    %5614 = vmatpush1.bf16.msra.mxu0 0
    %5615 = vmatprep.subr.bf16.mxu0 0
    %5616 = vmatpush1.bf16.msra.mxu0 0
    %5617 = vmatprep.subr.bf16.mxu0 0
    %5618 = vmatpush1.bf16.msra.mxu0 0
    %5619 = vmatprep.subr.bf16.mxu0 0
    %5620 = vmatpush1.bf16.msra.mxu0 0
    %5621 = vmatprep.subr.bf16.mxu0 0
    %5622 = vmatpush1.bf16.msra.mxu0 0
    %5623 = vmatprep.subr.bf16.mxu0 0
    %5624 = vmatpush1.bf16.msra.mxu0 0
    %5625 = vmatprep.subr.bf16.mxu0 0
    %5626 = vmatpush1.bf16.msra.mxu0 0
    %5627 = vmatprep.subr.bf16.mxu0 0
    %5628 = vmatpush1.bf16.msra.mxu0 0
    %5629 = vmatprep.subr.bf16.mxu0 0
    %5630 = vmatpush1.bf16.msra.mxu0 0
    %5631 = vmatprep.mubr.bf16.mxu0 0
    %5632 = vmatmul.mubr.bf16.gmra.mrb[0].mxu0 %v5594
    %v5633 = vpop.f32.mrb[0].mxu0
    %v5634 = vadd.f32 0.0, %v5633
    %v5635 = vpop.f32.mrb[0].mxu0
    %v5636 = vpop.f32.mrb[0].mxu0
    %v5637 = vadd.f32 0.0, %v5636
    %v5638 = vpop.f32.mrb[0].mxu0
    %5639 = vmatprep.mubr.bf16.mxu0 0
    %5640 = vmatmul.mubr.bf16.gmra.mrb[0].mxu0 %v5597
    %v5641 = vpop.f32.mrb[0].mxu0
    %v5642 = vadd.f32 0.0, %v5641
    %v5643 = vpop.f32.mrb[0].mxu0
    %v5644 = vpop.f32.mrb[0].mxu0
    %v5645 = vadd.f32 0.0, %v5644
    %v5646 = vpop.f32.mrb[0].mxu0
    %5647 = vdwg.mxu0
    %5652 = vrot.lane.b32.xlu0 %v132, 96
    %v5653 = vpop.permute.xlu0 %5652
    %5654 = vrot.lane.b32.xlu0 %v136, 96
    %v5655 = vpop.permute.xlu0 %5654
    %5656 = vrot.lane.b32.xlu0 %v142, 96
    %v5657 = vpop.permute.xlu0 %5656
    %5658 = vrot.lane.b32.xlu0 %v146, 96
    %v5659 = vpop.permute.xlu0 %5658
    %v5664 = vmul.f32 %v5634, %v5653
    %v5665 = vmul.f32 %v5637, %v5655
    %v5666 = vmul.f32 %v5642, %v5657
    %v5667 = vmul.f32 %v5645, %v5659
    %v5668 = vsel %vm88, %v5664, 0.0
    %v5669 = vsel %vm88, %v5665, 0.0
    %v5670 = vadd.f32 %v5668, %v5669
    %v5671 = vrot.slane %v5670, 4
    %v5672 = vadd.f32 %v5670, %v5671
    %v5673 = vrot.slane %v5672, 2
    %v5674 = vadd.f32 %v5672, %v5673
    %v5675 = vrot.slane %v5674, 1
    %v5676 = vadd.f32 %v5674, %v5675
    %v5677 = vsel %vm88, %v5666, 0.0
    %v5678 = vsel %vm88, %v5667, 0.0
    %v5679 = vadd.f32 %v5677, %v5678
    %v5680 = vrot.slane %v5679, 4
    %v5681 = vadd.f32 %v5679, %v5680
    %v5682 = vrot.slane %v5681, 2
    %v5683 = vadd.f32 %v5681, %v5682
    %v5684 = vrot.slane %v5683, 1
    %v5685 = vadd.f32 %v5683, %v5684
    %s5686 = scalar_lea.vmem %s3, 128
    %v5687 = vld [vmem:[%s5686] sm:$0xf]
    %v5688 = vld [vmem:[%s5686 + $0x4] sm:$0xf]
    %v5689 = vld [vmem:[%s5686 + $0x8] sm:$0xf]
    %v5690 = vld [vmem:[%s5686 + $0xc] sm:$0xf]
    %v5691 = vpack.c.bf16 %v5676, %v5676
    %v5692 = vpack.c.bf16 %v5685, %v5685
    %s5693 = scalar_lea.vmem %s8, 39
    %v5694 = vld [vmem:[%s5693] ss:$8 sm:$0x3]
    %v5696 = vlaneseq
    %v5697 = vshrl.u32 %v5696, 7
    %v5698 = vsub.s32 0, %v5697
    %v5699 = vrot.slane %v5694, %v5698
    %v5703 = vunpack.c.l.b16 %v5691
    %v5704 = vunpack.c.l.b16 %v5692
    %v5705 = vsel %vm599, %v5704, %v5703
    %v5706 = vpack.c.b16 %v5705, %v5705
    %v5711 = vunpack.c.l.b16 %v5687
    %v5712 = vunpack.c.l.b16 %v5688
    %v5713 = vunpack.c.l.b16 %v5689
    %v5714 = vunpack.c.l.b16 %v5690
    %v5715 = vpack.c.b16 %v5712, %v5711
    %v5716 = vpack.c.b16 %v5714, %v5713
    %v5720 = vsel %vm88, %v5706, 0
    %5722 = vmatprep.subr.bf16.mxu0 0
    %5723 = vmatpush1.bf16.msra.mxu0 %v5715
    %5724 = vmatprep.subr.bf16.mxu0 0
    %5725 = vmatpush1.bf16.msra.mxu0 %v5716
    %5726 = vmatprep.subr.bf16.mxu0 0
    %5727 = vmatpush1.bf16.msra.mxu0 0
    %5728 = vmatprep.subr.bf16.mxu0 0
    %5729 = vmatpush1.bf16.msra.mxu0 0
    %5730 = vmatprep.subr.bf16.mxu0 0
    %5731 = vmatpush1.bf16.msra.mxu0 0
    %5732 = vmatprep.subr.bf16.mxu0 0
    %5733 = vmatpush1.bf16.msra.mxu0 0
    %5734 = vmatprep.subr.bf16.mxu0 0
    %5735 = vmatpush1.bf16.msra.mxu0 0
    %5736 = vmatprep.subr.bf16.mxu0 0
    %5737 = vmatpush1.bf16.msra.mxu0 0
    %5738 = vmatprep.subr.bf16.mxu0 0
    %5739 = vmatpush1.bf16.msra.mxu0 0
    %5740 = vmatprep.subr.bf16.mxu0 0
    %5741 = vmatpush1.bf16.msra.mxu0 0
    %5742 = vmatprep.subr.bf16.mxu0 0
    %5743 = vmatpush1.bf16.msra.mxu0 0
    %5744 = vmatprep.subr.bf16.mxu0 0
    %5745 = vmatpush1.bf16.msra.mxu0 0
    %5746 = vmatprep.subr.bf16.mxu0 0
    %5747 = vmatpush1.bf16.msra.mxu0 0
    %5748 = vmatprep.subr.bf16.mxu0 0
    %5749 = vmatpush1.bf16.msra.mxu0 0
    %5750 = vmatprep.subr.bf16.mxu0 0
    %5751 = vmatpush1.bf16.msra.mxu0 0
    %5752 = vmatprep.subr.bf16.mxu0 0
    %5753 = vmatpush1.bf16.msra.mxu0 0
    %5754 = vmatprep.mubr.bf16.mxu0 0
    %5755 = vmatmul.mubr.bf16.gmra.mrb[0].mxu0 %v5720
    %v5756 = vpop.f32.mrb[0].mxu0
    %v5757 = vadd.f32 %v5699, %v5756
    %v5758 = vpop.f32.mrb[0].mxu0
    %v5759 = vpop.f32.mrb[0].mxu0
    %v5760 = vpop.f32.mrb[0].mxu0
    %5761 = vdwg.mxu0
    %v5762 = vadd.f32 %v5372, %v5757
    %s5763 = scalar_lea.vmem %s8, 51
    %v5764 = vld [vmem:[%s5763] ss:$8 sm:$0x3]
    %s5765 = scalar_lea.vmem %s8, 52
    %v5766 = vld [vmem:[%s5765] ss:$8 sm:$0x3]
    %v5767 = vsel %vm221, %v5762, 0.0
    %5768 = vadd.xlane.f32.xlu0 %v5767
    %v5769 = vpop.xlane.xlu0 %5768
    %v5770 = vmul.f32 %v5769, %v225
    %v5771 = vsub.f32 %v5762, %v5770
    %v5772 = vmul.f32 %v5771, %v5771
    %v5773 = vsel %vm221, %v5772, 0.0
    %5774 = vadd.xlane.f32.xlu0 %v5773
    %v5775 = vpop.xlane.xlu0 %5774
    %v5776 = vmul.f32 %v5775, %v225
    %v5777 = vadd.f32 %v5776, 1e-05
    %v5778 = vrsqrt.pop %v5777
    %v5779 = vmul.f32 %v5771, %v5778
    %v5781 = vlaneseq
    %v5782 = vshrl.u32 %v5781, 7
    %v5783 = vsub.s32 0, %v5782
    %v5784 = vrot.slane %v5764, %v5783
    %v5786 = vmul.f32 %v5779, %v5784
    %v5788 = vlaneseq
    %v5789 = vshrl.u32 %v5788, 7
    %v5790 = vsub.s32 0, %v5789
    %v5791 = vrot.slane %v5766, %v5790
    %v5793 = vadd.f32 %v5786, %v5791
    %s5794 = scalar_lea.vmem %s5, 512
    %v5795 = vld [vmem:[%s5794] sm:$0xff]
    %v5796 = vld [vmem:[%s5794 + $0x8] sm:$0xff]
    %v5797 = vld [vmem:[%s5794 + $0x10] sm:$0xff]
    %v5798 = vld [vmem:[%s5794 + $0x18] sm:$0xff]
    %v5799 = vld [vmem:[%s5794 + $0x20] sm:$0xff]
    %v5800 = vld [vmem:[%s5794 + $0x28] sm:$0xff]
    %v5801 = vld [vmem:[%s5794 + $0x30] sm:$0xff]
    %v5802 = vld [vmem:[%s5794 + $0x38] sm:$0xff]
    %v5803 = vld [vmem:[%s5794 + $0x40] sm:$0xff]
    %v5804 = vld [vmem:[%s5794 + $0x48] sm:$0xff]
    %v5805 = vld [vmem:[%s5794 + $0x50] sm:$0xff]
    %v5806 = vld [vmem:[%s5794 + $0x58] sm:$0xff]
    %v5807 = vld [vmem:[%s5794 + $0x60] sm:$0xff]
    %v5808 = vld [vmem:[%s5794 + $0x68] sm:$0xff]
    %v5809 = vld [vmem:[%s5794 + $0x70] sm:$0xff]
    %v5810 = vld [vmem:[%s5794 + $0x78] sm:$0xff]
    %v5811 = vld [vmem:[%s5794 + $0x80] sm:$0xff]
    %v5812 = vld [vmem:[%s5794 + $0x88] sm:$0xff]
    %v5813 = vld [vmem:[%s5794 + $0x90] sm:$0xff]
    %v5814 = vld [vmem:[%s5794 + $0x98] sm:$0xff]
    %v5815 = vld [vmem:[%s5794 + $0xa0] sm:$0xff]
    %v5816 = vld [vmem:[%s5794 + $0xa8] sm:$0xff]
    %v5817 = vld [vmem:[%s5794 + $0xb0] sm:$0xff]
    %v5818 = vld [vmem:[%s5794 + $0xb8] sm:$0xff]
    %v5819 = vld [vmem:[%s5794 + $0xc0] sm:$0xff]
    %v5820 = vld [vmem:[%s5794 + $0xc8] sm:$0xff]
    %v5821 = vld [vmem:[%s5794 + $0xd0] sm:$0xff]
    %v5822 = vld [vmem:[%s5794 + $0xd8] sm:$0xff]
    %v5823 = vld [vmem:[%s5794 + $0xe0] sm:$0xff]
    %v5824 = vld [vmem:[%s5794 + $0xe8] sm:$0xff]
    %v5825 = vld [vmem:[%s5794 + $0xf0] sm:$0xff]
    %v5826 = vld [vmem:[%s5794 + $0xf8] sm:$0xff]
    %v5827 = vpack.c.bf16 %v5793, %v5793
    %s5828 = scalar_lea.vmem %s7, 2
    %v5829 = vld [vmem:[%s5828] ss:$4 sm:$0xff]
    %s5830 = scalar_lea.vmem %s7, 34
    %v5831 = vld [vmem:[%s5830] ss:$4 sm:$0xff]
    %v5834 = vlaneseq
    %v5835 = vshrl.u32 %v5834, 7
    %v5836 = vsub.s32 0, %v5835
    %v5837 = vrot.slane %v5829, %v5836
    %v5838 = vlaneseq
    %v5839 = vshrl.u32 %v5838, 7
    %v5840 = vsub.s32 1, %v5839
    %v5841 = vrot.slane %v5829, %v5840
    %v5842 = vlaneseq
    %v5843 = vshrl.u32 %v5842, 7
    %v5844 = vsub.s32 2, %v5843
    %v5845 = vrot.slane %v5829, %v5844
    %v5846 = vlaneseq
    %v5847 = vshrl.u32 %v5846, 7
    %v5848 = vsub.s32 3, %v5847
    %v5849 = vrot.slane %v5829, %v5848
    %v5850 = vlaneseq
    %v5851 = vshrl.u32 %v5850, 7
    %v5852 = vsub.s32 4, %v5851
    %v5853 = vrot.slane %v5829, %v5852
    %v5854 = vlaneseq
    %v5855 = vshrl.u32 %v5854, 7
    %v5856 = vsub.s32 5, %v5855
    %v5857 = vrot.slane %v5829, %v5856
    %v5858 = vlaneseq
    %v5859 = vshrl.u32 %v5858, 7
    %v5860 = vsub.s32 6, %v5859
    %v5861 = vrot.slane %v5829, %v5860
    %v5862 = vlaneseq
    %v5863 = vshrl.u32 %v5862, 7
    %v5864 = vsub.s32 7, %v5863
    %v5865 = vrot.slane %v5829, %v5864
    %v5866 = vlaneseq
    %v5867 = vshrl.u32 %v5866, 7
    %v5868 = vsub.s32 0, %v5867
    %v5869 = vrot.slane %v5831, %v5868
    %v5870 = vlaneseq
    %v5871 = vshrl.u32 %v5870, 7
    %v5872 = vsub.s32 1, %v5871
    %v5873 = vrot.slane %v5831, %v5872
    %v5874 = vlaneseq
    %v5875 = vshrl.u32 %v5874, 7
    %v5876 = vsub.s32 2, %v5875
    %v5877 = vrot.slane %v5831, %v5876
    %v5878 = vlaneseq
    %v5879 = vshrl.u32 %v5878, 7
    %v5880 = vsub.s32 3, %v5879
    %v5881 = vrot.slane %v5831, %v5880
    %v5882 = vlaneseq
    %v5883 = vshrl.u32 %v5882, 7
    %v5884 = vsub.s32 4, %v5883
    %v5885 = vrot.slane %v5831, %v5884
    %v5886 = vlaneseq
    %v5887 = vshrl.u32 %v5886, 7
    %v5888 = vsub.s32 5, %v5887
    %v5889 = vrot.slane %v5831, %v5888
    %v5890 = vlaneseq
    %v5891 = vshrl.u32 %v5890, 7
    %v5892 = vsub.s32 6, %v5891
    %v5893 = vrot.slane %v5831, %v5892
    %v5894 = vlaneseq
    %v5895 = vshrl.u32 %v5894, 7
    %v5896 = vsub.s32 7, %v5895
    %v5897 = vrot.slane %v5831, %v5896
    %v5946 = vunpack.c.l.b16 %v5795
    %v5947 = vunpack.c.h.b16 %v5795
    %v5948 = vunpack.c.l.b16 %v5796
    %v5949 = vunpack.c.h.b16 %v5796
    %v5950 = vunpack.c.l.b16 %v5797
    %v5951 = vunpack.c.h.b16 %v5797
    %v5952 = vunpack.c.l.b16 %v5798
    %v5953 = vunpack.c.h.b16 %v5798
    %v5954 = vunpack.c.l.b16 %v5799
    %v5955 = vunpack.c.h.b16 %v5799
    %v5956 = vunpack.c.l.b16 %v5800
    %v5957 = vunpack.c.h.b16 %v5800
    %v5958 = vunpack.c.l.b16 %v5801
    %v5959 = vunpack.c.h.b16 %v5801
    %v5960 = vunpack.c.l.b16 %v5802
    %v5961 = vunpack.c.h.b16 %v5802
    %v5962 = vunpack.c.l.b16 %v5803
    %v5963 = vunpack.c.h.b16 %v5803
    %v5964 = vunpack.c.l.b16 %v5804
    %v5965 = vunpack.c.h.b16 %v5804
    %v5966 = vunpack.c.l.b16 %v5805
    %v5967 = vunpack.c.h.b16 %v5805
    %v5968 = vunpack.c.l.b16 %v5806
    %v5969 = vunpack.c.h.b16 %v5806
    %v5970 = vunpack.c.l.b16 %v5807
    %v5971 = vunpack.c.h.b16 %v5807
    %v5972 = vunpack.c.l.b16 %v5808
    %v5973 = vunpack.c.h.b16 %v5808
    %v5974 = vunpack.c.l.b16 %v5809
    %v5975 = vunpack.c.h.b16 %v5809
    %v5976 = vunpack.c.l.b16 %v5810
    %v5977 = vunpack.c.h.b16 %v5810
    %v5978 = vunpack.c.l.b16 %v5811
    %v5979 = vunpack.c.h.b16 %v5811
    %v5980 = vunpack.c.l.b16 %v5812
    %v5981 = vunpack.c.h.b16 %v5812
    %v5982 = vunpack.c.l.b16 %v5813
    %v5983 = vunpack.c.h.b16 %v5813
    %v5984 = vunpack.c.l.b16 %v5814
    %v5985 = vunpack.c.h.b16 %v5814
    %v5986 = vunpack.c.l.b16 %v5815
    %v5987 = vunpack.c.h.b16 %v5815
    %v5988 = vunpack.c.l.b16 %v5816
    %v5989 = vunpack.c.h.b16 %v5816
    %v5990 = vunpack.c.l.b16 %v5817
    %v5991 = vunpack.c.h.b16 %v5817
    %v5992 = vunpack.c.l.b16 %v5818
    %v5993 = vunpack.c.h.b16 %v5818
    %v5994 = vunpack.c.l.b16 %v5819
    %v5995 = vunpack.c.h.b16 %v5819
    %v5996 = vunpack.c.l.b16 %v5820
    %v5997 = vunpack.c.h.b16 %v5820
    %v5998 = vunpack.c.l.b16 %v5821
    %v5999 = vunpack.c.h.b16 %v5821
    %v6000 = vunpack.c.l.b16 %v5822
    %v6001 = vunpack.c.h.b16 %v5822
    %v6002 = vunpack.c.l.b16 %v5823
    %v6003 = vunpack.c.h.b16 %v5823
    %v6004 = vunpack.c.l.b16 %v5824
    %v6005 = vunpack.c.h.b16 %v5824
    %v6006 = vunpack.c.l.b16 %v5825
    %v6007 = vunpack.c.h.b16 %v5825
    %v6008 = vunpack.c.l.b16 %v5826
    %v6009 = vunpack.c.h.b16 %v5826
    %v6010 = vpack.c.b16 %v5962, %v5946
    %v6011 = vpack.c.b16 %v5963, %v5947
    %v6012 = vpack.c.b16 %v5964, %v5948
    %v6013 = vpack.c.b16 %v5965, %v5949
    %v6014 = vpack.c.b16 %v5966, %v5950
    %v6015 = vpack.c.b16 %v5967, %v5951
    %v6016 = vpack.c.b16 %v5968, %v5952
    %v6017 = vpack.c.b16 %v5969, %v5953
    %v6018 = vpack.c.b16 %v5970, %v5954
    %v6019 = vpack.c.b16 %v5971, %v5955
    %v6020 = vpack.c.b16 %v5972, %v5956
    %v6021 = vpack.c.b16 %v5973, %v5957
    %v6022 = vpack.c.b16 %v5974, %v5958
    %v6023 = vpack.c.b16 %v5975, %v5959
    %v6024 = vpack.c.b16 %v5976, %v5960
    %v6025 = vpack.c.b16 %v5977, %v5961
    %v6026 = vpack.c.b16 %v5994, %v5978
    %v6027 = vpack.c.b16 %v5995, %v5979
    %v6028 = vpack.c.b16 %v5996, %v5980
    %v6029 = vpack.c.b16 %v5997, %v5981
    %v6030 = vpack.c.b16 %v5998, %v5982
    %v6031 = vpack.c.b16 %v5999, %v5983
    %v6032 = vpack.c.b16 %v6000, %v5984
    %v6033 = vpack.c.b16 %v6001, %v5985
    %v6034 = vpack.c.b16 %v6002, %v5986
    %v6035 = vpack.c.b16 %v6003, %v5987
    %v6036 = vpack.c.b16 %v6004, %v5988
    %v6037 = vpack.c.b16 %v6005, %v5989
    %v6038 = vpack.c.b16 %v6006, %v5990
    %v6039 = vpack.c.b16 %v6007, %v5991
    %v6040 = vpack.c.b16 %v6008, %v5992
    %v6041 = vpack.c.b16 %v6009, %v5993
    %v6075 = vsel %vm88, %v5827, 0
    %6077 = vmatprep.subr.bf16.mxu0 %v6011
    %6078 = vmatpush1.bf16.msra.mxu0 %v6010
    %6079 = vmatprep.subr.bf16.mxu0 %v6027
    %6080 = vmatpush1.bf16.msra.mxu0 %v6026
    %6081 = vmatprep.subr.bf16.mxu0 0
    %6082 = vmatpush1.bf16.msra.mxu0 0
    %6083 = vmatprep.subr.bf16.mxu0 0
    %6084 = vmatpush1.bf16.msra.mxu0 0
    %6085 = vmatprep.subr.bf16.mxu0 0
    %6086 = vmatpush1.bf16.msra.mxu0 0
    %6087 = vmatprep.subr.bf16.mxu0 0
    %6088 = vmatpush1.bf16.msra.mxu0 0
    %6089 = vmatprep.subr.bf16.mxu0 0
    %6090 = vmatpush1.bf16.msra.mxu0 0
    %6091 = vmatprep.subr.bf16.mxu0 0
    %6092 = vmatpush1.bf16.msra.mxu0 0
    %6093 = vmatprep.subr.bf16.mxu0 0
    %6094 = vmatpush1.bf16.msra.mxu0 0
    %6095 = vmatprep.subr.bf16.mxu0 0
    %6096 = vmatpush1.bf16.msra.mxu0 0
    %6097 = vmatprep.subr.bf16.mxu0 0
    %6098 = vmatpush1.bf16.msra.mxu0 0
    %6099 = vmatprep.subr.bf16.mxu0 0
    %6100 = vmatpush1.bf16.msra.mxu0 0
    %6101 = vmatprep.subr.bf16.mxu0 0
    %6102 = vmatpush1.bf16.msra.mxu0 0
    %6103 = vmatprep.subr.bf16.mxu0 0
    %6104 = vmatpush1.bf16.msra.mxu0 0
    %6105 = vmatprep.subr.bf16.mxu0 0
    %6106 = vmatpush1.bf16.msra.mxu0 0
    %6107 = vmatprep.subr.bf16.mxu0 0
    %6108 = vmatpush1.bf16.msra.mxu0 0
    %6109 = vmatprep.mubr.bf16.mxu0 0
    %6110 = vmatmul.mubr.bf16.gmra.mrb[0].mxu0 %v6075
    %v6111 = vpop.f32.mrb[0].mxu0
    %v6112 = vadd.f32 %v5837, %v6111
    %v6113 = vpop.f32.mrb[0].mxu0
    %v6114 = vadd.f32 %v5841, %v6113
    %v6115 = vpop.f32.mrb[0].mxu0
    %v6116 = vpop.f32.mrb[0].mxu0
    %6117 = vdwg.mxu0
    %6118 = vmatprep.subr.bf16.mxu0 %v6013
    %6119 = vmatpush1.bf16.msra.mxu0 %v6012
    %6120 = vmatprep.subr.bf16.mxu0 %v6029
    %6121 = vmatpush1.bf16.msra.mxu0 %v6028
    %6122 = vmatprep.subr.bf16.mxu0 0
    %6123 = vmatpush1.bf16.msra.mxu0 0
    %6124 = vmatprep.subr.bf16.mxu0 0
    %6125 = vmatpush1.bf16.msra.mxu0 0
    %6126 = vmatprep.subr.bf16.mxu0 0
    %6127 = vmatpush1.bf16.msra.mxu0 0
    %6128 = vmatprep.subr.bf16.mxu0 0
    %6129 = vmatpush1.bf16.msra.mxu0 0
    %6130 = vmatprep.subr.bf16.mxu0 0
    %6131 = vmatpush1.bf16.msra.mxu0 0
    %6132 = vmatprep.subr.bf16.mxu0 0
    %6133 = vmatpush1.bf16.msra.mxu0 0
    %6134 = vmatprep.subr.bf16.mxu0 0
    %6135 = vmatpush1.bf16.msra.mxu0 0
    %6136 = vmatprep.subr.bf16.mxu0 0
    %6137 = vmatpush1.bf16.msra.mxu0 0
    %6138 = vmatprep.subr.bf16.mxu0 0
    %6139 = vmatpush1.bf16.msra.mxu0 0
    %6140 = vmatprep.subr.bf16.mxu0 0
    %6141 = vmatpush1.bf16.msra.mxu0 0
    %6142 = vmatprep.subr.bf16.mxu0 0
    %6143 = vmatpush1.bf16.msra.mxu0 0
    %6144 = vmatprep.subr.bf16.mxu0 0
    %6145 = vmatpush1.bf16.msra.mxu0 0
    %6146 = vmatprep.subr.bf16.mxu0 0
    %6147 = vmatpush1.bf16.msra.mxu0 0
    %6148 = vmatprep.subr.bf16.mxu0 0
    %6149 = vmatpush1.bf16.msra.mxu0 0
    %6150 = vmatprep.mubr.bf16.mxu0 0
    %6151 = vmatmul.mubr.bf16.gmra.mrb[0].mxu0 %v6075
    %v6152 = vpop.f32.mrb[0].mxu0
    %v6153 = vadd.f32 %v5845, %v6152
    %v6154 = vpop.f32.mrb[0].mxu0
    %v6155 = vadd.f32 %v5849, %v6154
    %v6156 = vpop.f32.mrb[0].mxu0
    %v6157 = vpop.f32.mrb[0].mxu0
    %6158 = vdwg.mxu0
    %6159 = vmatprep.subr.bf16.mxu0 %v6015
    %6160 = vmatpush1.bf16.msra.mxu0 %v6014
    %6161 = vmatprep.subr.bf16.mxu0 %v6031
    %6162 = vmatpush1.bf16.msra.mxu0 %v6030
    %6163 = vmatprep.subr.bf16.mxu0 0
    %6164 = vmatpush1.bf16.msra.mxu0 0
    %6165 = vmatprep.subr.bf16.mxu0 0
    %6166 = vmatpush1.bf16.msra.mxu0 0
    %6167 = vmatprep.subr.bf16.mxu0 0
    %6168 = vmatpush1.bf16.msra.mxu0 0
    %6169 = vmatprep.subr.bf16.mxu0 0
    %6170 = vmatpush1.bf16.msra.mxu0 0
    %6171 = vmatprep.subr.bf16.mxu0 0
    %6172 = vmatpush1.bf16.msra.mxu0 0
    %6173 = vmatprep.subr.bf16.mxu0 0
    %6174 = vmatpush1.bf16.msra.mxu0 0
    %6175 = vmatprep.subr.bf16.mxu0 0
    %6176 = vmatpush1.bf16.msra.mxu0 0
    %6177 = vmatprep.subr.bf16.mxu0 0
    %6178 = vmatpush1.bf16.msra.mxu0 0
    %6179 = vmatprep.subr.bf16.mxu0 0
    %6180 = vmatpush1.bf16.msra.mxu0 0
    %6181 = vmatprep.subr.bf16.mxu0 0
    %6182 = vmatpush1.bf16.msra.mxu0 0
    %6183 = vmatprep.subr.bf16.mxu0 0
    %6184 = vmatpush1.bf16.msra.mxu0 0
    %6185 = vmatprep.subr.bf16.mxu0 0
    %6186 = vmatpush1.bf16.msra.mxu0 0
    %6187 = vmatprep.subr.bf16.mxu0 0
    %6188 = vmatpush1.bf16.msra.mxu0 0
    %6189 = vmatprep.subr.bf16.mxu0 0
    %6190 = vmatpush1.bf16.msra.mxu0 0
    %6191 = vmatprep.mubr.bf16.mxu0 0
    %6192 = vmatmul.mubr.bf16.gmra.mrb[0].mxu0 %v6075
    %v6193 = vpop.f32.mrb[0].mxu0
    %v6194 = vadd.f32 %v5853, %v6193
    %v6195 = vpop.f32.mrb[0].mxu0
    %v6196 = vadd.f32 %v5857, %v6195
    %v6197 = vpop.f32.mrb[0].mxu0
    %v6198 = vpop.f32.mrb[0].mxu0
    %6199 = vdwg.mxu0
    %6200 = vmatprep.subr.bf16.mxu0 %v6017
    %6201 = vmatpush1.bf16.msra.mxu0 %v6016
    %6202 = vmatprep.subr.bf16.mxu0 %v6033
    %6203 = vmatpush1.bf16.msra.mxu0 %v6032
    %6204 = vmatprep.subr.bf16.mxu0 0
    %6205 = vmatpush1.bf16.msra.mxu0 0
    %6206 = vmatprep.subr.bf16.mxu0 0
    %6207 = vmatpush1.bf16.msra.mxu0 0
    %6208 = vmatprep.subr.bf16.mxu0 0
    %6209 = vmatpush1.bf16.msra.mxu0 0
    %6210 = vmatprep.subr.bf16.mxu0 0
    %6211 = vmatpush1.bf16.msra.mxu0 0
    %6212 = vmatprep.subr.bf16.mxu0 0
    %6213 = vmatpush1.bf16.msra.mxu0 0
    %6214 = vmatprep.subr.bf16.mxu0 0
    %6215 = vmatpush1.bf16.msra.mxu0 0
    %6216 = vmatprep.subr.bf16.mxu0 0
    %6217 = vmatpush1.bf16.msra.mxu0 0
    %6218 = vmatprep.subr.bf16.mxu0 0
    %6219 = vmatpush1.bf16.msra.mxu0 0
    %6220 = vmatprep.subr.bf16.mxu0 0
    %6221 = vmatpush1.bf16.msra.mxu0 0
    %6222 = vmatprep.subr.bf16.mxu0 0
    %6223 = vmatpush1.bf16.msra.mxu0 0
    %6224 = vmatprep.subr.bf16.mxu0 0
    %6225 = vmatpush1.bf16.msra.mxu0 0
    %6226 = vmatprep.subr.bf16.mxu0 0
    %6227 = vmatpush1.bf16.msra.mxu0 0
    %6228 = vmatprep.subr.bf16.mxu0 0
    %6229 = vmatpush1.bf16.msra.mxu0 0
    %6230 = vmatprep.subr.bf16.mxu0 0
    %6231 = vmatpush1.bf16.msra.mxu0 0
    %6232 = vmatprep.mubr.bf16.mxu0 0
    %6233 = vmatmul.mubr.bf16.gmra.mrb[0].mxu0 %v6075
    %v6234 = vpop.f32.mrb[0].mxu0
    %v6235 = vadd.f32 %v5861, %v6234
    %v6236 = vpop.f32.mrb[0].mxu0
    %v6237 = vadd.f32 %v5865, %v6236
    %v6238 = vpop.f32.mrb[0].mxu0
    %v6239 = vpop.f32.mrb[0].mxu0
    %6240 = vdwg.mxu0
    %6241 = vmatprep.subr.bf16.mxu0 %v6019
    %6242 = vmatpush1.bf16.msra.mxu0 %v6018
    %6243 = vmatprep.subr.bf16.mxu0 %v6035
    %6244 = vmatpush1.bf16.msra.mxu0 %v6034
    %6245 = vmatprep.subr.bf16.mxu0 0
    %6246 = vmatpush1.bf16.msra.mxu0 0
    %6247 = vmatprep.subr.bf16.mxu0 0
    %6248 = vmatpush1.bf16.msra.mxu0 0
    %6249 = vmatprep.subr.bf16.mxu0 0
    %6250 = vmatpush1.bf16.msra.mxu0 0
    %6251 = vmatprep.subr.bf16.mxu0 0
    %6252 = vmatpush1.bf16.msra.mxu0 0
    %6253 = vmatprep.subr.bf16.mxu0 0
    %6254 = vmatpush1.bf16.msra.mxu0 0
    %6255 = vmatprep.subr.bf16.mxu0 0
    %6256 = vmatpush1.bf16.msra.mxu0 0
    %6257 = vmatprep.subr.bf16.mxu0 0
    %6258 = vmatpush1.bf16.msra.mxu0 0
    %6259 = vmatprep.subr.bf16.mxu0 0
    %6260 = vmatpush1.bf16.msra.mxu0 0
    %6261 = vmatprep.subr.bf16.mxu0 0
    %6262 = vmatpush1.bf16.msra.mxu0 0
    %6263 = vmatprep.subr.bf16.mxu0 0
    %6264 = vmatpush1.bf16.msra.mxu0 0
    %6265 = vmatprep.subr.bf16.mxu0 0
    %6266 = vmatpush1.bf16.msra.mxu0 0
    %6267 = vmatprep.subr.bf16.mxu0 0
    %6268 = vmatpush1.bf16.msra.mxu0 0
    %6269 = vmatprep.subr.bf16.mxu0 0
    %6270 = vmatpush1.bf16.msra.mxu0 0
    %6271 = vmatprep.subr.bf16.mxu0 0
    %6272 = vmatpush1.bf16.msra.mxu0 0
    %6273 = vmatprep.mubr.bf16.mxu0 0
    %6274 = vmatmul.mubr.bf16.gmra.mrb[0].mxu0 %v6075
    %v6275 = vpop.f32.mrb[0].mxu0
    %v6276 = vadd.f32 %v5869, %v6275
    %v6277 = vpop.f32.mrb[0].mxu0
    %v6278 = vadd.f32 %v5873, %v6277
    %v6279 = vpop.f32.mrb[0].mxu0
    %v6280 = vpop.f32.mrb[0].mxu0
    %6281 = vdwg.mxu0
    %6282 = vmatprep.subr.bf16.mxu0 %v6021
    %6283 = vmatpush1.bf16.msra.mxu0 %v6020
    %6284 = vmatprep.subr.bf16.mxu0 %v6037
    %6285 = vmatpush1.bf16.msra.mxu0 %v6036
    %6286 = vmatprep.subr.bf16.mxu0 0
    %6287 = vmatpush1.bf16.msra.mxu0 0
    %6288 = vmatprep.subr.bf16.mxu0 0
    %6289 = vmatpush1.bf16.msra.mxu0 0
    %6290 = vmatprep.subr.bf16.mxu0 0
    %6291 = vmatpush1.bf16.msra.mxu0 0
    %6292 = vmatprep.subr.bf16.mxu0 0
    %6293 = vmatpush1.bf16.msra.mxu0 0
    %6294 = vmatprep.subr.bf16.mxu0 0
    %6295 = vmatpush1.bf16.msra.mxu0 0
    %6296 = vmatprep.subr.bf16.mxu0 0
    %6297 = vmatpush1.bf16.msra.mxu0 0
    %6298 = vmatprep.subr.bf16.mxu0 0
    %6299 = vmatpush1.bf16.msra.mxu0 0
    %6300 = vmatprep.subr.bf16.mxu0 0
    %6301 = vmatpush1.bf16.msra.mxu0 0
    %6302 = vmatprep.subr.bf16.mxu0 0
    %6303 = vmatpush1.bf16.msra.mxu0 0
    %6304 = vmatprep.subr.bf16.mxu0 0
    %6305 = vmatpush1.bf16.msra.mxu0 0
    %6306 = vmatprep.subr.bf16.mxu0 0
    %6307 = vmatpush1.bf16.msra.mxu0 0
    %6308 = vmatprep.subr.bf16.mxu0 0
    %6309 = vmatpush1.bf16.msra.mxu0 0
    %6310 = vmatprep.subr.bf16.mxu0 0
    %6311 = vmatpush1.bf16.msra.mxu0 0
    %6312 = vmatprep.subr.bf16.mxu0 0
    %6313 = vmatpush1.bf16.msra.mxu0 0
    %6314 = vmatprep.mubr.bf16.mxu0 0
    %6315 = vmatmul.mubr.bf16.gmra.mrb[0].mxu0 %v6075
    %v6316 = vpop.f32.mrb[0].mxu0
    %v6317 = vadd.f32 %v5877, %v6316
    %v6318 = vpop.f32.mrb[0].mxu0
    %v6319 = vadd.f32 %v5881, %v6318
    %v6320 = vpop.f32.mrb[0].mxu0
    %v6321 = vpop.f32.mrb[0].mxu0
    %6322 = vdwg.mxu0
    %6323 = vmatprep.subr.bf16.mxu0 %v6023
    %6324 = vmatpush1.bf16.msra.mxu0 %v6022
    %6325 = vmatprep.subr.bf16.mxu0 %v6039
    %6326 = vmatpush1.bf16.msra.mxu0 %v6038
    %6327 = vmatprep.subr.bf16.mxu0 0
    %6328 = vmatpush1.bf16.msra.mxu0 0
    %6329 = vmatprep.subr.bf16.mxu0 0
    %6330 = vmatpush1.bf16.msra.mxu0 0
    %6331 = vmatprep.subr.bf16.mxu0 0
    %6332 = vmatpush1.bf16.msra.mxu0 0
    %6333 = vmatprep.subr.bf16.mxu0 0
    %6334 = vmatpush1.bf16.msra.mxu0 0
    %6335 = vmatprep.subr.bf16.mxu0 0
    %6336 = vmatpush1.bf16.msra.mxu0 0
    %6337 = vmatprep.subr.bf16.mxu0 0
    %6338 = vmatpush1.bf16.msra.mxu0 0
    %6339 = vmatprep.subr.bf16.mxu0 0
    %6340 = vmatpush1.bf16.msra.mxu0 0
    %6341 = vmatprep.subr.bf16.mxu0 0
    %6342 = vmatpush1.bf16.msra.mxu0 0
    %6343 = vmatprep.subr.bf16.mxu0 0
    %6344 = vmatpush1.bf16.msra.mxu0 0
    %6345 = vmatprep.subr.bf16.mxu0 0
    %6346 = vmatpush1.bf16.msra.mxu0 0
    %6347 = vmatprep.subr.bf16.mxu0 0
    %6348 = vmatpush1.bf16.msra.mxu0 0
    %6349 = vmatprep.subr.bf16.mxu0 0
    %6350 = vmatpush1.bf16.msra.mxu0 0
    %6351 = vmatprep.subr.bf16.mxu0 0
    %6352 = vmatpush1.bf16.msra.mxu0 0
    %6353 = vmatprep.subr.bf16.mxu0 0
    %6354 = vmatpush1.bf16.msra.mxu0 0
    %6355 = vmatprep.mubr.bf16.mxu0 0
    %6356 = vmatmul.mubr.bf16.gmra.mrb[0].mxu0 %v6075
    %v6357 = vpop.f32.mrb[0].mxu0
    %v6358 = vadd.f32 %v5885, %v6357
    %v6359 = vpop.f32.mrb[0].mxu0
    %v6360 = vadd.f32 %v5889, %v6359
    %v6361 = vpop.f32.mrb[0].mxu0
    %v6362 = vpop.f32.mrb[0].mxu0
    %6363 = vdwg.mxu0
    %6364 = vmatprep.subr.bf16.mxu0 %v6025
    %6365 = vmatpush1.bf16.msra.mxu0 %v6024
    %6366 = vmatprep.subr.bf16.mxu0 %v6041
    %6367 = vmatpush1.bf16.msra.mxu0 %v6040
    %6368 = vmatprep.subr.bf16.mxu0 0
    %6369 = vmatpush1.bf16.msra.mxu0 0
    %6370 = vmatprep.subr.bf16.mxu0 0
    %6371 = vmatpush1.bf16.msra.mxu0 0
    %6372 = vmatprep.subr.bf16.mxu0 0
    %6373 = vmatpush1.bf16.msra.mxu0 0
    %6374 = vmatprep.subr.bf16.mxu0 0
    %6375 = vmatpush1.bf16.msra.mxu0 0
    %6376 = vmatprep.subr.bf16.mxu0 0
    %6377 = vmatpush1.bf16.msra.mxu0 0
    %6378 = vmatprep.subr.bf16.mxu0 0
    %6379 = vmatpush1.bf16.msra.mxu0 0
    %6380 = vmatprep.subr.bf16.mxu0 0
    %6381 = vmatpush1.bf16.msra.mxu0 0
    %6382 = vmatprep.subr.bf16.mxu0 0
    %6383 = vmatpush1.bf16.msra.mxu0 0
    %6384 = vmatprep.subr.bf16.mxu0 0
    %6385 = vmatpush1.bf16.msra.mxu0 0
    %6386 = vmatprep.subr.bf16.mxu0 0
    %6387 = vmatpush1.bf16.msra.mxu0 0
    %6388 = vmatprep.subr.bf16.mxu0 0
    %6389 = vmatpush1.bf16.msra.mxu0 0
    %6390 = vmatprep.subr.bf16.mxu0 0
    %6391 = vmatpush1.bf16.msra.mxu0 0
    %6392 = vmatprep.subr.bf16.mxu0 0
    %6393 = vmatpush1.bf16.msra.mxu0 0
    %6394 = vmatprep.subr.bf16.mxu0 0
    %6395 = vmatpush1.bf16.msra.mxu0 0
    %6396 = vmatprep.mubr.bf16.mxu0 0
    %6397 = vmatmul.mubr.bf16.gmra.mrb[0].mxu0 %v6075
    %v6398 = vpop.f32.mrb[0].mxu0
    %v6399 = vadd.f32 %v5893, %v6398
    %v6400 = vpop.f32.mrb[0].mxu0
    %v6401 = vadd.f32 %v5897, %v6400
    %v6402 = vpop.f32.mrb[0].mxu0
    %v6403 = vpop.f32.mrb[0].mxu0
    %6404 = vdwg.mxu0
    %v6405 = vmax.f32 %v6112, 0.0
    %v6406 = vmax.f32 %v6114, 0.0
    %v6407 = vmax.f32 %v6153, 0.0
    %v6408 = vmax.f32 %v6155, 0.0
    %v6409 = vmax.f32 %v6194, 0.0
    %v6410 = vmax.f32 %v6196, 0.0
    %v6411 = vmax.f32 %v6235, 0.0
    %v6412 = vmax.f32 %v6237, 0.0
    %v6413 = vmax.f32 %v6276, 0.0
    %v6414 = vmax.f32 %v6278, 0.0
    %v6415 = vmax.f32 %v6317, 0.0
    %v6416 = vmax.f32 %v6319, 0.0
    %v6417 = vmax.f32 %v6358, 0.0
    %v6418 = vmax.f32 %v6360, 0.0
    %v6419 = vmax.f32 %v6399, 0.0
    %v6420 = vmax.f32 %v6401, 0.0
    %s6421 = scalar_lea.vmem %s6, 2048
    %v6422 = vld [vmem:[%s6421] sm:$0xf]
    %v6423 = vld [vmem:[%s6421 + $0x4] sm:$0xf]
    %v6424 = vld [vmem:[%s6421 + $0x8] sm:$0xf]
    %v6425 = vld [vmem:[%s6421 + $0xc] sm:$0xf]
    %v6426 = vld [vmem:[%s6421 + $0x10] sm:$0xf]
    %v6427 = vld [vmem:[%s6421 + $0x14] sm:$0xf]
    %v6428 = vld [vmem:[%s6421 + $0x18] sm:$0xf]
    %v6429 = vld [vmem:[%s6421 + $0x1c] sm:$0xf]
    %v6430 = vld [vmem:[%s6421 + $0x20] sm:$0xf]
    %v6431 = vld [vmem:[%s6421 + $0x24] sm:$0xf]
    %v6432 = vld [vmem:[%s6421 + $0x28] sm:$0xf]
    %v6433 = vld [vmem:[%s6421 + $0x2c] sm:$0xf]
    %v6434 = vld [vmem:[%s6421 + $0x30] sm:$0xf]
    %v6435 = vld [vmem:[%s6421 + $0x34] sm:$0xf]
    %v6436 = vld [vmem:[%s6421 + $0x38] sm:$0xf]
    %v6437 = vld [vmem:[%s6421 + $0x3c] sm:$0xf]
    %v6438 = vld [vmem:[%s6421 + $0x40] sm:$0xf]
    %v6439 = vld [vmem:[%s6421 + $0x44] sm:$0xf]
    %v6440 = vld [vmem:[%s6421 + $0x48] sm:$0xf]
    %v6441 = vld [vmem:[%s6421 + $0x4c] sm:$0xf]
    %v6442 = vld [vmem:[%s6421 + $0x50] sm:$0xf]
    %v6443 = vld [vmem:[%s6421 + $0x54] sm:$0xf]
    %v6444 = vld [vmem:[%s6421 + $0x58] sm:$0xf]
    %v6445 = vld [vmem:[%s6421 + $0x5c] sm:$0xf]
    %v6446 = vld [vmem:[%s6421 + $0x60] sm:$0xf]
    %v6447 = vld [vmem:[%s6421 + $0x64] sm:$0xf]
    %v6448 = vld [vmem:[%s6421 + $0x68] sm:$0xf]
    %v6449 = vld [vmem:[%s6421 + $0x6c] sm:$0xf]
    %v6450 = vld [vmem:[%s6421 + $0x70] sm:$0xf]
    %v6451 = vld [vmem:[%s6421 + $0x74] sm:$0xf]
    %v6452 = vld [vmem:[%s6421 + $0x78] sm:$0xf]
    %v6453 = vld [vmem:[%s6421 + $0x7c] sm:$0xf]
    %v6454 = vld [vmem:[%s6421 + $0x80] sm:$0xf]
    %v6455 = vld [vmem:[%s6421 + $0x84] sm:$0xf]
    %v6456 = vld [vmem:[%s6421 + $0x88] sm:$0xf]
    %v6457 = vld [vmem:[%s6421 + $0x8c] sm:$0xf]
    %v6458 = vld [vmem:[%s6421 + $0x90] sm:$0xf]
    %v6459 = vld [vmem:[%s6421 + $0x94] sm:$0xf]
    %v6460 = vld [vmem:[%s6421 + $0x98] sm:$0xf]
    %v6461 = vld [vmem:[%s6421 + $0x9c] sm:$0xf]
    %v6462 = vld [vmem:[%s6421 + $0xa0] sm:$0xf]
    %v6463 = vld [vmem:[%s6421 + $0xa4] sm:$0xf]
    %v6464 = vld [vmem:[%s6421 + $0xa8] sm:$0xf]
    %v6465 = vld [vmem:[%s6421 + $0xac] sm:$0xf]
    %v6466 = vld [vmem:[%s6421 + $0xb0] sm:$0xf]
    %v6467 = vld [vmem:[%s6421 + $0xb4] sm:$0xf]
    %v6468 = vld [vmem:[%s6421 + $0xb8] sm:$0xf]
    %v6469 = vld [vmem:[%s6421 + $0xbc] sm:$0xf]
    %v6470 = vld [vmem:[%s6421 + $0xc0] sm:$0xf]
    %v6471 = vld [vmem:[%s6421 + $0xc4] sm:$0xf]
    %v6472 = vld [vmem:[%s6421 + $0xc8] sm:$0xf]
    %v6473 = vld [vmem:[%s6421 + $0xcc] sm:$0xf]
    %v6474 = vld [vmem:[%s6421 + $0xd0] sm:$0xf]
    %v6475 = vld [vmem:[%s6421 + $0xd4] sm:$0xf]
    %v6476 = vld [vmem:[%s6421 + $0xd8] sm:$0xf]
    %v6477 = vld [vmem:[%s6421 + $0xdc] sm:$0xf]
    %v6478 = vld [vmem:[%s6421 + $0xe0] sm:$0xf]
    %v6479 = vld [vmem:[%s6421 + $0xe4] sm:$0xf]
    %v6480 = vld [vmem:[%s6421 + $0xe8] sm:$0xf]
    %v6481 = vld [vmem:[%s6421 + $0xec] sm:$0xf]
    %v6482 = vld [vmem:[%s6421 + $0xf0] sm:$0xf]
    %v6483 = vld [vmem:[%s6421 + $0xf4] sm:$0xf]
    %v6484 = vld [vmem:[%s6421 + $0xf8] sm:$0xf]
    %v6485 = vld [vmem:[%s6421 + $0xfc] sm:$0xf]
    %v6486 = vld [vmem:[%s6421 + $0x100] sm:$0xf]
    %v6487 = vld [vmem:[%s6421 + $0x104] sm:$0xf]
    %v6488 = vld [vmem:[%s6421 + $0x108] sm:$0xf]
    %v6489 = vld [vmem:[%s6421 + $0x10c] sm:$0xf]
    %v6490 = vld [vmem:[%s6421 + $0x110] sm:$0xf]
    %v6491 = vld [vmem:[%s6421 + $0x114] sm:$0xf]
    %v6492 = vld [vmem:[%s6421 + $0x118] sm:$0xf]
    %v6493 = vld [vmem:[%s6421 + $0x11c] sm:$0xf]
    %v6494 = vld [vmem:[%s6421 + $0x120] sm:$0xf]
    %v6495 = vld [vmem:[%s6421 + $0x124] sm:$0xf]
    %v6496 = vld [vmem:[%s6421 + $0x128] sm:$0xf]
    %v6497 = vld [vmem:[%s6421 + $0x12c] sm:$0xf]
    %v6498 = vld [vmem:[%s6421 + $0x130] sm:$0xf]
    %v6499 = vld [vmem:[%s6421 + $0x134] sm:$0xf]
    %v6500 = vld [vmem:[%s6421 + $0x138] sm:$0xf]
    %v6501 = vld [vmem:[%s6421 + $0x13c] sm:$0xf]
    %v6502 = vld [vmem:[%s6421 + $0x140] sm:$0xf]
    %v6503 = vld [vmem:[%s6421 + $0x144] sm:$0xf]
    %v6504 = vld [vmem:[%s6421 + $0x148] sm:$0xf]
    %v6505 = vld [vmem:[%s6421 + $0x14c] sm:$0xf]
    %v6506 = vld [vmem:[%s6421 + $0x150] sm:$0xf]
    %v6507 = vld [vmem:[%s6421 + $0x154] sm:$0xf]
    %v6508 = vld [vmem:[%s6421 + $0x158] sm:$0xf]
    %v6509 = vld [vmem:[%s6421 + $0x15c] sm:$0xf]
    %v6510 = vld [vmem:[%s6421 + $0x160] sm:$0xf]
    %v6511 = vld [vmem:[%s6421 + $0x164] sm:$0xf]
    %v6512 = vld [vmem:[%s6421 + $0x168] sm:$0xf]
    %v6513 = vld [vmem:[%s6421 + $0x16c] sm:$0xf]
    %v6514 = vld [vmem:[%s6421 + $0x170] sm:$0xf]
    %v6515 = vld [vmem:[%s6421 + $0x174] sm:$0xf]
    %v6516 = vld [vmem:[%s6421 + $0x178] sm:$0xf]
    %v6517 = vld [vmem:[%s6421 + $0x17c] sm:$0xf]
    %v6518 = vld [vmem:[%s6421 + $0x180] sm:$0xf]
    %v6519 = vld [vmem:[%s6421 + $0x184] sm:$0xf]
    %v6520 = vld [vmem:[%s6421 + $0x188] sm:$0xf]
    %v6521 = vld [vmem:[%s6421 + $0x18c] sm:$0xf]
    %v6522 = vld [vmem:[%s6421 + $0x190] sm:$0xf]
    %v6523 = vld [vmem:[%s6421 + $0x194] sm:$0xf]
    %v6524 = vld [vmem:[%s6421 + $0x198] sm:$0xf]
    %v6525 = vld [vmem:[%s6421 + $0x19c] sm:$0xf]
    %v6526 = vld [vmem:[%s6421 + $0x1a0] sm:$0xf]
    %v6527 = vld [vmem:[%s6421 + $0x1a4] sm:$0xf]
    %v6528 = vld [vmem:[%s6421 + $0x1a8] sm:$0xf]
    %v6529 = vld [vmem:[%s6421 + $0x1ac] sm:$0xf]
    %v6530 = vld [vmem:[%s6421 + $0x1b0] sm:$0xf]
    %v6531 = vld [vmem:[%s6421 + $0x1b4] sm:$0xf]
    %v6532 = vld [vmem:[%s6421 + $0x1b8] sm:$0xf]
    %v6533 = vld [vmem:[%s6421 + $0x1bc] sm:$0xf]
    %v6534 = vld [vmem:[%s6421 + $0x1c0] sm:$0xf]
    %v6535 = vld [vmem:[%s6421 + $0x1c4] sm:$0xf]
    %v6536 = vld [vmem:[%s6421 + $0x1c8] sm:$0xf]
    %v6537 = vld [vmem:[%s6421 + $0x1cc] sm:$0xf]
    %v6538 = vld [vmem:[%s6421 + $0x1d0] sm:$0xf]
    %v6539 = vld [vmem:[%s6421 + $0x1d4] sm:$0xf]
    %v6540 = vld [vmem:[%s6421 + $0x1d8] sm:$0xf]
    %v6541 = vld [vmem:[%s6421 + $0x1dc] sm:$0xf]
    %v6542 = vld [vmem:[%s6421 + $0x1e0] sm:$0xf]
    %v6543 = vld [vmem:[%s6421 + $0x1e4] sm:$0xf]
    %v6544 = vld [vmem:[%s6421 + $0x1e8] sm:$0xf]
    %v6545 = vld [vmem:[%s6421 + $0x1ec] sm:$0xf]
    %v6546 = vld [vmem:[%s6421 + $0x1f0] sm:$0xf]
    %v6547 = vld [vmem:[%s6421 + $0x1f4] sm:$0xf]
    %v6548 = vld [vmem:[%s6421 + $0x1f8] sm:$0xf]
    %v6549 = vld [vmem:[%s6421 + $0x1fc] sm:$0xf]
    %v6550 = vld [vmem:[%s6421 + $0x200] sm:$0xf]
    %v6551 = vld [vmem:[%s6421 + $0x204] sm:$0xf]
    %v6552 = vld [vmem:[%s6421 + $0x208] sm:$0xf]
    %v6553 = vld [vmem:[%s6421 + $0x20c] sm:$0xf]
    %v6554 = vld [vmem:[%s6421 + $0x210] sm:$0xf]
    %v6555 = vld [vmem:[%s6421 + $0x214] sm:$0xf]
    %v6556 = vld [vmem:[%s6421 + $0x218] sm:$0xf]
    %v6557 = vld [vmem:[%s6421 + $0x21c] sm:$0xf]
    %v6558 = vld [vmem:[%s6421 + $0x220] sm:$0xf]
    %v6559 = vld [vmem:[%s6421 + $0x224] sm:$0xf]
    %v6560 = vld [vmem:[%s6421 + $0x228] sm:$0xf]
    %v6561 = vld [vmem:[%s6421 + $0x22c] sm:$0xf]
    %v6562 = vld [vmem:[%s6421 + $0x230] sm:$0xf]
    %v6563 = vld [vmem:[%s6421 + $0x234] sm:$0xf]
    %v6564 = vld [vmem:[%s6421 + $0x238] sm:$0xf]
    %v6565 = vld [vmem:[%s6421 + $0x23c] sm:$0xf]
    %v6566 = vld [vmem:[%s6421 + $0x240] sm:$0xf]
    %v6567 = vld [vmem:[%s6421 + $0x244] sm:$0xf]
    %v6568 = vld [vmem:[%s6421 + $0x248] sm:$0xf]
    %v6569 = vld [vmem:[%s6421 + $0x24c] sm:$0xf]
    %v6570 = vld [vmem:[%s6421 + $0x250] sm:$0xf]
    %v6571 = vld [vmem:[%s6421 + $0x254] sm:$0xf]
    %v6572 = vld [vmem:[%s6421 + $0x258] sm:$0xf]
    %v6573 = vld [vmem:[%s6421 + $0x25c] sm:$0xf]
    %v6574 = vld [vmem:[%s6421 + $0x260] sm:$0xf]
    %v6575 = vld [vmem:[%s6421 + $0x264] sm:$0xf]
    %v6576 = vld [vmem:[%s6421 + $0x268] sm:$0xf]
    %v6577 = vld [vmem:[%s6421 + $0x26c] sm:$0xf]
    %v6578 = vld [vmem:[%s6421 + $0x270] sm:$0xf]
    %v6579 = vld [vmem:[%s6421 + $0x274] sm:$0xf]
    %v6580 = vld [vmem:[%s6421 + $0x278] sm:$0xf]
    %v6581 = vld [vmem:[%s6421 + $0x27c] sm:$0xf]
    %v6582 = vld [vmem:[%s6421 + $0x280] sm:$0xf]
    %v6583 = vld [vmem:[%s6421 + $0x284] sm:$0xf]
    %v6584 = vld [vmem:[%s6421 + $0x288] sm:$0xf]
    %v6585 = vld [vmem:[%s6421 + $0x28c] sm:$0xf]
    %v6586 = vld [vmem:[%s6421 + $0x290] sm:$0xf]
    %v6587 = vld [vmem:[%s6421 + $0x294] sm:$0xf]
    %v6588 = vld [vmem:[%s6421 + $0x298] sm:$0xf]
    %v6589 = vld [vmem:[%s6421 + $0x29c] sm:$0xf]
    %v6590 = vld [vmem:[%s6421 + $0x2a0] sm:$0xf]
    %v6591 = vld [vmem:[%s6421 + $0x2a4] sm:$0xf]
    %v6592 = vld [vmem:[%s6421 + $0x2a8] sm:$0xf]
    %v6593 = vld [vmem:[%s6421 + $0x2ac] sm:$0xf]
    %v6594 = vld [vmem:[%s6421 + $0x2b0] sm:$0xf]
    %v6595 = vld [vmem:[%s6421 + $0x2b4] sm:$0xf]
    %v6596 = vld [vmem:[%s6421 + $0x2b8] sm:$0xf]
    %v6597 = vld [vmem:[%s6421 + $0x2bc] sm:$0xf]
    %v6598 = vld [vmem:[%s6421 + $0x2c0] sm:$0xf]
    %v6599 = vld [vmem:[%s6421 + $0x2c4] sm:$0xf]
    %v6600 = vld [vmem:[%s6421 + $0x2c8] sm:$0xf]
    %v6601 = vld [vmem:[%s6421 + $0x2cc] sm:$0xf]
    %v6602 = vld [vmem:[%s6421 + $0x2d0] sm:$0xf]
    %v6603 = vld [vmem:[%s6421 + $0x2d4] sm:$0xf]
    %v6604 = vld [vmem:[%s6421 + $0x2d8] sm:$0xf]
    %v6605 = vld [vmem:[%s6421 + $0x2dc] sm:$0xf]
    %v6606 = vld [vmem:[%s6421 + $0x2e0] sm:$0xf]
    %v6607 = vld [vmem:[%s6421 + $0x2e4] sm:$0xf]
    %v6608 = vld [vmem:[%s6421 + $0x2e8] sm:$0xf]
    %v6609 = vld [vmem:[%s6421 + $0x2ec] sm:$0xf]
    %v6610 = vld [vmem:[%s6421 + $0x2f0] sm:$0xf]
    %v6611 = vld [vmem:[%s6421 + $0x2f4] sm:$0xf]
    %v6612 = vld [vmem:[%s6421 + $0x2f8] sm:$0xf]
    %v6613 = vld [vmem:[%s6421 + $0x2fc] sm:$0xf]
    %v6614 = vld [vmem:[%s6421 + $0x300] sm:$0xf]
    %v6615 = vld [vmem:[%s6421 + $0x304] sm:$0xf]
    %v6616 = vld [vmem:[%s6421 + $0x308] sm:$0xf]
    %v6617 = vld [vmem:[%s6421 + $0x30c] sm:$0xf]
    %v6618 = vld [vmem:[%s6421 + $0x310] sm:$0xf]
    %v6619 = vld [vmem:[%s6421 + $0x314] sm:$0xf]
    %v6620 = vld [vmem:[%s6421 + $0x318] sm:$0xf]
    %v6621 = vld [vmem:[%s6421 + $0x31c] sm:$0xf]
    %v6622 = vld [vmem:[%s6421 + $0x320] sm:$0xf]
    %v6623 = vld [vmem:[%s6421 + $0x324] sm:$0xf]
    %v6624 = vld [vmem:[%s6421 + $0x328] sm:$0xf]
    %v6625 = vld [vmem:[%s6421 + $0x32c] sm:$0xf]
    %v6626 = vld [vmem:[%s6421 + $0x330] sm:$0xf]
    %v6627 = vld [vmem:[%s6421 + $0x334] sm:$0xf]
    %v6628 = vld [vmem:[%s6421 + $0x338] sm:$0xf]
    %v6629 = vld [vmem:[%s6421 + $0x33c] sm:$0xf]
    %v6630 = vld [vmem:[%s6421 + $0x340] sm:$0xf]
    %v6631 = vld [vmem:[%s6421 + $0x344] sm:$0xf]
    %v6632 = vld [vmem:[%s6421 + $0x348] sm:$0xf]
    %v6633 = vld [vmem:[%s6421 + $0x34c] sm:$0xf]
    %v6634 = vld [vmem:[%s6421 + $0x350] sm:$0xf]
    %v6635 = vld [vmem:[%s6421 + $0x354] sm:$0xf]
    %v6636 = vld [vmem:[%s6421 + $0x358] sm:$0xf]
    %v6637 = vld [vmem:[%s6421 + $0x35c] sm:$0xf]
    %v6638 = vld [vmem:[%s6421 + $0x360] sm:$0xf]
    %v6639 = vld [vmem:[%s6421 + $0x364] sm:$0xf]
    %v6640 = vld [vmem:[%s6421 + $0x368] sm:$0xf]
    %v6641 = vld [vmem:[%s6421 + $0x36c] sm:$0xf]
    %v6642 = vld [vmem:[%s6421 + $0x370] sm:$0xf]
    %v6643 = vld [vmem:[%s6421 + $0x374] sm:$0xf]
    %v6644 = vld [vmem:[%s6421 + $0x378] sm:$0xf]
    %v6645 = vld [vmem:[%s6421 + $0x37c] sm:$0xf]
    %v6646 = vld [vmem:[%s6421 + $0x380] sm:$0xf]
    %v6647 = vld [vmem:[%s6421 + $0x384] sm:$0xf]
    %v6648 = vld [vmem:[%s6421 + $0x388] sm:$0xf]
    %v6649 = vld [vmem:[%s6421 + $0x38c] sm:$0xf]
    %v6650 = vld [vmem:[%s6421 + $0x390] sm:$0xf]
    %v6651 = vld [vmem:[%s6421 + $0x394] sm:$0xf]
    %v6652 = vld [vmem:[%s6421 + $0x398] sm:$0xf]
    %v6653 = vld [vmem:[%s6421 + $0x39c] sm:$0xf]
    %v6654 = vld [vmem:[%s6421 + $0x3a0] sm:$0xf]
    %v6655 = vld [vmem:[%s6421 + $0x3a4] sm:$0xf]
    %v6656 = vld [vmem:[%s6421 + $0x3a8] sm:$0xf]
    %v6657 = vld [vmem:[%s6421 + $0x3ac] sm:$0xf]
    %v6658 = vld [vmem:[%s6421 + $0x3b0] sm:$0xf]
    %v6659 = vld [vmem:[%s6421 + $0x3b4] sm:$0xf]
    %v6660 = vld [vmem:[%s6421 + $0x3b8] sm:$0xf]
    %v6661 = vld [vmem:[%s6421 + $0x3bc] sm:$0xf]
    %v6662 = vld [vmem:[%s6421 + $0x3c0] sm:$0xf]
    %v6663 = vld [vmem:[%s6421 + $0x3c4] sm:$0xf]
    %v6664 = vld [vmem:[%s6421 + $0x3c8] sm:$0xf]
    %v6665 = vld [vmem:[%s6421 + $0x3cc] sm:$0xf]
    %v6666 = vld [vmem:[%s6421 + $0x3d0] sm:$0xf]
    %v6667 = vld [vmem:[%s6421 + $0x3d4] sm:$0xf]
    %v6668 = vld [vmem:[%s6421 + $0x3d8] sm:$0xf]
    %v6669 = vld [vmem:[%s6421 + $0x3dc] sm:$0xf]
    %v6670 = vld [vmem:[%s6421 + $0x3e0] sm:$0xf]
    %v6671 = vld [vmem:[%s6421 + $0x3e4] sm:$0xf]
    %v6672 = vld [vmem:[%s6421 + $0x3e8] sm:$0xf]
    %v6673 = vld [vmem:[%s6421 + $0x3ec] sm:$0xf]
    %v6674 = vld [vmem:[%s6421 + $0x3f0] sm:$0xf]
    %v6675 = vld [vmem:[%s6421 + $0x3f4] sm:$0xf]
    %v6676 = vld [vmem:[%s6421 + $0x3f8] sm:$0xf]
    %v6677 = vld [vmem:[%s6421 + $0x3fc] sm:$0xf]
    %v6678 = vpack.c.bf16 %v6405, %v6405
    %v6679 = vpack.c.bf16 %v6406, %v6406
    %v6680 = vpack.c.bf16 %v6407, %v6407
    %v6681 = vpack.c.bf16 %v6408, %v6408
    %v6682 = vpack.c.bf16 %v6409, %v6409
    %v6683 = vpack.c.bf16 %v6410, %v6410
    %v6684 = vpack.c.bf16 %v6411, %v6411
    %v6685 = vpack.c.bf16 %v6412, %v6412
    %v6686 = vpack.c.bf16 %v6413, %v6413
    %v6687 = vpack.c.bf16 %v6414, %v6414
    %v6688 = vpack.c.bf16 %v6415, %v6415
    %v6689 = vpack.c.bf16 %v6416, %v6416
    %v6690 = vpack.c.bf16 %v6417, %v6417
    %v6691 = vpack.c.bf16 %v6418, %v6418
    %v6692 = vpack.c.bf16 %v6419, %v6419
    %v6693 = vpack.c.bf16 %v6420, %v6420
    %s6694 = scalar_lea.vmem %s8, 48
    %v6695 = vld [vmem:[%s6694] ss:$8 sm:$0x3]
    %v6697 = vlaneseq
    %v6698 = vshrl.u32 %v6697, 7
    %v6699 = vsub.s32 0, %v6698
    %v6700 = vrot.slane %v6695, %v6699
    %v6958 = vunpack.c.l.b16 %v6422
    %v6959 = vunpack.c.l.b16 %v6423
    %v6960 = vunpack.c.l.b16 %v6424
    %v6961 = vunpack.c.l.b16 %v6425
    %v6962 = vunpack.c.l.b16 %v6426
    %v6963 = vunpack.c.l.b16 %v6427
    %v6964 = vunpack.c.l.b16 %v6428
    %v6965 = vunpack.c.l.b16 %v6429
    %v6966 = vunpack.c.l.b16 %v6430
    %v6967 = vunpack.c.l.b16 %v6431
    %v6968 = vunpack.c.l.b16 %v6432
    %v6969 = vunpack.c.l.b16 %v6433
    %v6970 = vunpack.c.l.b16 %v6434
    %v6971 = vunpack.c.l.b16 %v6435
    %v6972 = vunpack.c.l.b16 %v6436
    %v6973 = vunpack.c.l.b16 %v6437
    %v6974 = vunpack.c.l.b16 %v6438
    %v6975 = vunpack.c.l.b16 %v6439
    %v6976 = vunpack.c.l.b16 %v6440
    %v6977 = vunpack.c.l.b16 %v6441
    %v6978 = vunpack.c.l.b16 %v6442
    %v6979 = vunpack.c.l.b16 %v6443
    %v6980 = vunpack.c.l.b16 %v6444
    %v6981 = vunpack.c.l.b16 %v6445
    %v6982 = vunpack.c.l.b16 %v6446
    %v6983 = vunpack.c.l.b16 %v6447
    %v6984 = vunpack.c.l.b16 %v6448
    %v6985 = vunpack.c.l.b16 %v6449
    %v6986 = vunpack.c.l.b16 %v6450
    %v6987 = vunpack.c.l.b16 %v6451
    %v6988 = vunpack.c.l.b16 %v6452
    %v6989 = vunpack.c.l.b16 %v6453
    %v6990 = vunpack.c.l.b16 %v6454
    %v6991 = vunpack.c.l.b16 %v6455
    %v6992 = vunpack.c.l.b16 %v6456
    %v6993 = vunpack.c.l.b16 %v6457
    %v6994 = vunpack.c.l.b16 %v6458
    %v6995 = vunpack.c.l.b16 %v6459
    %v6996 = vunpack.c.l.b16 %v6460
    %v6997 = vunpack.c.l.b16 %v6461
    %v6998 = vunpack.c.l.b16 %v6462
    %v6999 = vunpack.c.l.b16 %v6463
    %v7000 = vunpack.c.l.b16 %v6464
    %v7001 = vunpack.c.l.b16 %v6465
    %v7002 = vunpack.c.l.b16 %v6466
    %v7003 = vunpack.c.l.b16 %v6467
    %v7004 = vunpack.c.l.b16 %v6468
    %v7005 = vunpack.c.l.b16 %v6469
    %v7006 = vunpack.c.l.b16 %v6470
    %v7007 = vunpack.c.l.b16 %v6471
    %v7008 = vunpack.c.l.b16 %v6472
    %v7009 = vunpack.c.l.b16 %v6473
    %v7010 = vunpack.c.l.b16 %v6474
    %v7011 = vunpack.c.l.b16 %v6475
    %v7012 = vunpack.c.l.b16 %v6476
    %v7013 = vunpack.c.l.b16 %v6477
    %v7014 = vunpack.c.l.b16 %v6478
    %v7015 = vunpack.c.l.b16 %v6479
    %v7016 = vunpack.c.l.b16 %v6480
    %v7017 = vunpack.c.l.b16 %v6481
    %v7018 = vunpack.c.l.b16 %v6482
    %v7019 = vunpack.c.l.b16 %v6483
    %v7020 = vunpack.c.l.b16 %v6484
    %v7021 = vunpack.c.l.b16 %v6485
    %v7022 = vunpack.c.l.b16 %v6486
    %v7023 = vunpack.c.l.b16 %v6487
    %v7024 = vunpack.c.l.b16 %v6488
    %v7025 = vunpack.c.l.b16 %v6489
    %v7026 = vunpack.c.l.b16 %v6490
    %v7027 = vunpack.c.l.b16 %v6491
    %v7028 = vunpack.c.l.b16 %v6492
    %v7029 = vunpack.c.l.b16 %v6493
    %v7030 = vunpack.c.l.b16 %v6494
    %v7031 = vunpack.c.l.b16 %v6495
    %v7032 = vunpack.c.l.b16 %v6496
    %v7033 = vunpack.c.l.b16 %v6497
    %v7034 = vunpack.c.l.b16 %v6498
    %v7035 = vunpack.c.l.b16 %v6499
    %v7036 = vunpack.c.l.b16 %v6500
    %v7037 = vunpack.c.l.b16 %v6501
    %v7038 = vunpack.c.l.b16 %v6502
    %v7039 = vunpack.c.l.b16 %v6503
    %v7040 = vunpack.c.l.b16 %v6504
    %v7041 = vunpack.c.l.b16 %v6505
    %v7042 = vunpack.c.l.b16 %v6506
    %v7043 = vunpack.c.l.b16 %v6507
    %v7044 = vunpack.c.l.b16 %v6508
    %v7045 = vunpack.c.l.b16 %v6509
    %v7046 = vunpack.c.l.b16 %v6510
    %v7047 = vunpack.c.l.b16 %v6511
    %v7048 = vunpack.c.l.b16 %v6512
    %v7049 = vunpack.c.l.b16 %v6513
    %v7050 = vunpack.c.l.b16 %v6514
    %v7051 = vunpack.c.l.b16 %v6515
    %v7052 = vunpack.c.l.b16 %v6516
    %v7053 = vunpack.c.l.b16 %v6517
    %v7054 = vunpack.c.l.b16 %v6518
    %v7055 = vunpack.c.l.b16 %v6519
    %v7056 = vunpack.c.l.b16 %v6520
    %v7057 = vunpack.c.l.b16 %v6521
    %v7058 = vunpack.c.l.b16 %v6522
    %v7059 = vunpack.c.l.b16 %v6523
    %v7060 = vunpack.c.l.b16 %v6524
    %v7061 = vunpack.c.l.b16 %v6525
    %v7062 = vunpack.c.l.b16 %v6526
    %v7063 = vunpack.c.l.b16 %v6527
    %v7064 = vunpack.c.l.b16 %v6528
    %v7065 = vunpack.c.l.b16 %v6529
    %v7066 = vunpack.c.l.b16 %v6530
    %v7067 = vunpack.c.l.b16 %v6531
    %v7068 = vunpack.c.l.b16 %v6532
    %v7069 = vunpack.c.l.b16 %v6533
    %v7070 = vunpack.c.l.b16 %v6534
    %v7071 = vunpack.c.l.b16 %v6535
    %v7072 = vunpack.c.l.b16 %v6536
    %v7073 = vunpack.c.l.b16 %v6537
    %v7074 = vunpack.c.l.b16 %v6538
    %v7075 = vunpack.c.l.b16 %v6539
    %v7076 = vunpack.c.l.b16 %v6540
    %v7077 = vunpack.c.l.b16 %v6541
    %v7078 = vunpack.c.l.b16 %v6542
    %v7079 = vunpack.c.l.b16 %v6543
    %v7080 = vunpack.c.l.b16 %v6544
    %v7081 = vunpack.c.l.b16 %v6545
    %v7082 = vunpack.c.l.b16 %v6546
    %v7083 = vunpack.c.l.b16 %v6547
    %v7084 = vunpack.c.l.b16 %v6548
    %v7085 = vunpack.c.l.b16 %v6549
    %v7086 = vunpack.c.l.b16 %v6550
    %v7087 = vunpack.c.l.b16 %v6551
    %v7088 = vunpack.c.l.b16 %v6552
    %v7089 = vunpack.c.l.b16 %v6553
    %v7090 = vunpack.c.l.b16 %v6554
    %v7091 = vunpack.c.l.b16 %v6555
    %v7092 = vunpack.c.l.b16 %v6556
    %v7093 = vunpack.c.l.b16 %v6557
    %v7094 = vunpack.c.l.b16 %v6558
    %v7095 = vunpack.c.l.b16 %v6559
    %v7096 = vunpack.c.l.b16 %v6560
    %v7097 = vunpack.c.l.b16 %v6561
    %v7098 = vunpack.c.l.b16 %v6562
    %v7099 = vunpack.c.l.b16 %v6563
    %v7100 = vunpack.c.l.b16 %v6564
    %v7101 = vunpack.c.l.b16 %v6565
    %v7102 = vunpack.c.l.b16 %v6566
    %v7103 = vunpack.c.l.b16 %v6567
    %v7104 = vunpack.c.l.b16 %v6568
    %v7105 = vunpack.c.l.b16 %v6569
    %v7106 = vunpack.c.l.b16 %v6570
    %v7107 = vunpack.c.l.b16 %v6571
    %v7108 = vunpack.c.l.b16 %v6572
    %v7109 = vunpack.c.l.b16 %v6573
    %v7110 = vunpack.c.l.b16 %v6574
    %v7111 = vunpack.c.l.b16 %v6575
    %v7112 = vunpack.c.l.b16 %v6576
    %v7113 = vunpack.c.l.b16 %v6577
    %v7114 = vunpack.c.l.b16 %v6578
    %v7115 = vunpack.c.l.b16 %v6579
    %v7116 = vunpack.c.l.b16 %v6580
    %v7117 = vunpack.c.l.b16 %v6581
    %v7118 = vunpack.c.l.b16 %v6582
    %v7119 = vunpack.c.l.b16 %v6583
    %v7120 = vunpack.c.l.b16 %v6584
    %v7121 = vunpack.c.l.b16 %v6585
    %v7122 = vunpack.c.l.b16 %v6586
    %v7123 = vunpack.c.l.b16 %v6587
    %v7124 = vunpack.c.l.b16 %v6588
    %v7125 = vunpack.c.l.b16 %v6589
    %v7126 = vunpack.c.l.b16 %v6590
    %v7127 = vunpack.c.l.b16 %v6591
    %v7128 = vunpack.c.l.b16 %v6592
    %v7129 = vunpack.c.l.b16 %v6593
    %v7130 = vunpack.c.l.b16 %v6594
    %v7131 = vunpack.c.l.b16 %v6595
    %v7132 = vunpack.c.l.b16 %v6596
    %v7133 = vunpack.c.l.b16 %v6597
    %v7134 = vunpack.c.l.b16 %v6598
    %v7135 = vunpack.c.l.b16 %v6599
    %v7136 = vunpack.c.l.b16 %v6600
    %v7137 = vunpack.c.l.b16 %v6601
    %v7138 = vunpack.c.l.b16 %v6602
    %v7139 = vunpack.c.l.b16 %v6603
    %v7140 = vunpack.c.l.b16 %v6604
    %v7141 = vunpack.c.l.b16 %v6605
    %v7142 = vunpack.c.l.b16 %v6606
    %v7143 = vunpack.c.l.b16 %v6607
    %v7144 = vunpack.c.l.b16 %v6608
    %v7145 = vunpack.c.l.b16 %v6609
    %v7146 = vunpack.c.l.b16 %v6610
    %v7147 = vunpack.c.l.b16 %v6611
    %v7148 = vunpack.c.l.b16 %v6612
    %v7149 = vunpack.c.l.b16 %v6613
    %v7150 = vunpack.c.l.b16 %v6614
    %v7151 = vunpack.c.l.b16 %v6615
    %v7152 = vunpack.c.l.b16 %v6616
    %v7153 = vunpack.c.l.b16 %v6617
    %v7154 = vunpack.c.l.b16 %v6618
    %v7155 = vunpack.c.l.b16 %v6619
    %v7156 = vunpack.c.l.b16 %v6620
    %v7157 = vunpack.c.l.b16 %v6621
    %v7158 = vunpack.c.l.b16 %v6622
    %v7159 = vunpack.c.l.b16 %v6623
    %v7160 = vunpack.c.l.b16 %v6624
    %v7161 = vunpack.c.l.b16 %v6625
    %v7162 = vunpack.c.l.b16 %v6626
    %v7163 = vunpack.c.l.b16 %v6627
    %v7164 = vunpack.c.l.b16 %v6628
    %v7165 = vunpack.c.l.b16 %v6629
    %v7166 = vunpack.c.l.b16 %v6630
    %v7167 = vunpack.c.l.b16 %v6631
    %v7168 = vunpack.c.l.b16 %v6632
    %v7169 = vunpack.c.l.b16 %v6633
    %v7170 = vunpack.c.l.b16 %v6634
    %v7171 = vunpack.c.l.b16 %v6635
    %v7172 = vunpack.c.l.b16 %v6636
    %v7173 = vunpack.c.l.b16 %v6637
    %v7174 = vunpack.c.l.b16 %v6638
    %v7175 = vunpack.c.l.b16 %v6639
    %v7176 = vunpack.c.l.b16 %v6640
    %v7177 = vunpack.c.l.b16 %v6641
    %v7178 = vunpack.c.l.b16 %v6642
    %v7179 = vunpack.c.l.b16 %v6643
    %v7180 = vunpack.c.l.b16 %v6644
    %v7181 = vunpack.c.l.b16 %v6645
    %v7182 = vunpack.c.l.b16 %v6646
    %v7183 = vunpack.c.l.b16 %v6647
    %v7184 = vunpack.c.l.b16 %v6648
    %v7185 = vunpack.c.l.b16 %v6649
    %v7186 = vunpack.c.l.b16 %v6650
    %v7187 = vunpack.c.l.b16 %v6651
    %v7188 = vunpack.c.l.b16 %v6652
    %v7189 = vunpack.c.l.b16 %v6653
    %v7190 = vunpack.c.l.b16 %v6654
    %v7191 = vunpack.c.l.b16 %v6655
    %v7192 = vunpack.c.l.b16 %v6656
    %v7193 = vunpack.c.l.b16 %v6657
    %v7194 = vunpack.c.l.b16 %v6658
    %v7195 = vunpack.c.l.b16 %v6659
    %v7196 = vunpack.c.l.b16 %v6660
    %v7197 = vunpack.c.l.b16 %v6661
    %v7198 = vunpack.c.l.b16 %v6662
    %v7199 = vunpack.c.l.b16 %v6663
    %v7200 = vunpack.c.l.b16 %v6664
    %v7201 = vunpack.c.l.b16 %v6665
    %v7202 = vunpack.c.l.b16 %v6666
    %v7203 = vunpack.c.l.b16 %v6667
    %v7204 = vunpack.c.l.b16 %v6668
    %v7205 = vunpack.c.l.b16 %v6669
    %v7206 = vunpack.c.l.b16 %v6670
    %v7207 = vunpack.c.l.b16 %v6671
    %v7208 = vunpack.c.l.b16 %v6672
    %v7209 = vunpack.c.l.b16 %v6673
    %v7210 = vunpack.c.l.b16 %v6674
    %v7211 = vunpack.c.l.b16 %v6675
    %v7212 = vunpack.c.l.b16 %v6676
    %v7213 = vunpack.c.l.b16 %v6677
    %v7214 = vpack.c.b16 %v6959, %v6958
    %v7215 = vpack.c.b16 %v6961, %v6960
    %v7216 = vpack.c.b16 %v6963, %v6962
    %v7217 = vpack.c.b16 %v6965, %v6964
    %v7218 = vpack.c.b16 %v6967, %v6966
    %v7219 = vpack.c.b16 %v6969, %v6968
    %v7220 = vpack.c.b16 %v6971, %v6970
    %v7221 = vpack.c.b16 %v6973, %v6972
    %v7222 = vpack.c.b16 %v6975, %v6974
    %v7223 = vpack.c.b16 %v6977, %v6976
    %v7224 = vpack.c.b16 %v6979, %v6978
    %v7225 = vpack.c.b16 %v6981, %v6980
    %v7226 = vpack.c.b16 %v6983, %v6982
    %v7227 = vpack.c.b16 %v6985, %v6984
    %v7228 = vpack.c.b16 %v6987, %v6986
    %v7229 = vpack.c.b16 %v6989, %v6988
    %v7230 = vpack.c.b16 %v6991, %v6990
    %v7231 = vpack.c.b16 %v6993, %v6992
    %v7232 = vpack.c.b16 %v6995, %v6994
    %v7233 = vpack.c.b16 %v6997, %v6996
    %v7234 = vpack.c.b16 %v6999, %v6998
    %v7235 = vpack.c.b16 %v7001, %v7000
    %v7236 = vpack.c.b16 %v7003, %v7002
    %v7237 = vpack.c.b16 %v7005, %v7004
    %v7238 = vpack.c.b16 %v7007, %v7006
    %v7239 = vpack.c.b16 %v7009, %v7008
    %v7240 = vpack.c.b16 %v7011, %v7010
    %v7241 = vpack.c.b16 %v7013, %v7012
    %v7242 = vpack.c.b16 %v7015, %v7014
    %v7243 = vpack.c.b16 %v7017, %v7016
    %v7244 = vpack.c.b16 %v7019, %v7018
    %v7245 = vpack.c.b16 %v7021, %v7020
    %v7246 = vpack.c.b16 %v7023, %v7022
    %v7247 = vpack.c.b16 %v7025, %v7024
    %v7248 = vpack.c.b16 %v7027, %v7026
    %v7249 = vpack.c.b16 %v7029, %v7028
    %v7250 = vpack.c.b16 %v7031, %v7030
    %v7251 = vpack.c.b16 %v7033, %v7032
    %v7252 = vpack.c.b16 %v7035, %v7034
    %v7253 = vpack.c.b16 %v7037, %v7036
    %v7254 = vpack.c.b16 %v7039, %v7038
    %v7255 = vpack.c.b16 %v7041, %v7040
    %v7256 = vpack.c.b16 %v7043, %v7042
    %v7257 = vpack.c.b16 %v7045, %v7044
    %v7258 = vpack.c.b16 %v7047, %v7046
    %v7259 = vpack.c.b16 %v7049, %v7048
    %v7260 = vpack.c.b16 %v7051, %v7050
    %v7261 = vpack.c.b16 %v7053, %v7052
    %v7262 = vpack.c.b16 %v7055, %v7054
    %v7263 = vpack.c.b16 %v7057, %v7056
    %v7264 = vpack.c.b16 %v7059, %v7058
    %v7265 = vpack.c.b16 %v7061, %v7060
    %v7266 = vpack.c.b16 %v7063, %v7062
    %v7267 = vpack.c.b16 %v7065, %v7064
    %v7268 = vpack.c.b16 %v7067, %v7066
    %v7269 = vpack.c.b16 %v7069, %v7068
    %v7270 = vpack.c.b16 %v7071, %v7070
    %v7271 = vpack.c.b16 %v7073, %v7072
    %v7272 = vpack.c.b16 %v7075, %v7074
    %v7273 = vpack.c.b16 %v7077, %v7076
    %v7274 = vpack.c.b16 %v7079, %v7078
    %v7275 = vpack.c.b16 %v7081, %v7080
    %v7276 = vpack.c.b16 %v7083, %v7082
    %v7277 = vpack.c.b16 %v7085, %v7084
    %v7278 = vpack.c.b16 %v7087, %v7086
    %v7279 = vpack.c.b16 %v7089, %v7088
    %v7280 = vpack.c.b16 %v7091, %v7090
    %v7281 = vpack.c.b16 %v7093, %v7092
    %v7282 = vpack.c.b16 %v7095, %v7094
    %v7283 = vpack.c.b16 %v7097, %v7096
    %v7284 = vpack.c.b16 %v7099, %v7098
    %v7285 = vpack.c.b16 %v7101, %v7100
    %v7286 = vpack.c.b16 %v7103, %v7102
    %v7287 = vpack.c.b16 %v7105, %v7104
    %v7288 = vpack.c.b16 %v7107, %v7106
    %v7289 = vpack.c.b16 %v7109, %v7108
    %v7290 = vpack.c.b16 %v7111, %v7110
    %v7291 = vpack.c.b16 %v7113, %v7112
    %v7292 = vpack.c.b16 %v7115, %v7114
    %v7293 = vpack.c.b16 %v7117, %v7116
    %v7294 = vpack.c.b16 %v7119, %v7118
    %v7295 = vpack.c.b16 %v7121, %v7120
    %v7296 = vpack.c.b16 %v7123, %v7122
    %v7297 = vpack.c.b16 %v7125, %v7124
    %v7298 = vpack.c.b16 %v7127, %v7126
    %v7299 = vpack.c.b16 %v7129, %v7128
    %v7300 = vpack.c.b16 %v7131, %v7130
    %v7301 = vpack.c.b16 %v7133, %v7132
    %v7302 = vpack.c.b16 %v7135, %v7134
    %v7303 = vpack.c.b16 %v7137, %v7136
    %v7304 = vpack.c.b16 %v7139, %v7138
    %v7305 = vpack.c.b16 %v7141, %v7140
    %v7306 = vpack.c.b16 %v7143, %v7142
    %v7307 = vpack.c.b16 %v7145, %v7144
    %v7308 = vpack.c.b16 %v7147, %v7146
    %v7309 = vpack.c.b16 %v7149, %v7148
    %v7310 = vpack.c.b16 %v7151, %v7150
    %v7311 = vpack.c.b16 %v7153, %v7152
    %v7312 = vpack.c.b16 %v7155, %v7154
    %v7313 = vpack.c.b16 %v7157, %v7156
    %v7314 = vpack.c.b16 %v7159, %v7158
    %v7315 = vpack.c.b16 %v7161, %v7160
    %v7316 = vpack.c.b16 %v7163, %v7162
    %v7317 = vpack.c.b16 %v7165, %v7164
    %v7318 = vpack.c.b16 %v7167, %v7166
    %v7319 = vpack.c.b16 %v7169, %v7168
    %v7320 = vpack.c.b16 %v7171, %v7170
    %v7321 = vpack.c.b16 %v7173, %v7172
    %v7322 = vpack.c.b16 %v7175, %v7174
    %v7323 = vpack.c.b16 %v7177, %v7176
    %v7324 = vpack.c.b16 %v7179, %v7178
    %v7325 = vpack.c.b16 %v7181, %v7180
    %v7326 = vpack.c.b16 %v7183, %v7182
    %v7327 = vpack.c.b16 %v7185, %v7184
    %v7328 = vpack.c.b16 %v7187, %v7186
    %v7329 = vpack.c.b16 %v7189, %v7188
    %v7330 = vpack.c.b16 %v7191, %v7190
    %v7331 = vpack.c.b16 %v7193, %v7192
    %v7332 = vpack.c.b16 %v7195, %v7194
    %v7333 = vpack.c.b16 %v7197, %v7196
    %v7334 = vpack.c.b16 %v7199, %v7198
    %v7335 = vpack.c.b16 %v7201, %v7200
    %v7336 = vpack.c.b16 %v7203, %v7202
    %v7337 = vpack.c.b16 %v7205, %v7204
    %v7338 = vpack.c.b16 %v7207, %v7206
    %v7339 = vpack.c.b16 %v7209, %v7208
    %v7340 = vpack.c.b16 %v7211, %v7210
    %v7341 = vpack.c.b16 %v7213, %v7212
    %7470 = vmatprep.subr.bf16.mxu0 0
    %7471 = vmatpush1.bf16.msra.mxu0 %v7214
    %7472 = vmatprep.subr.bf16.mxu0 0
    %7473 = vmatpush1.bf16.msra.mxu0 %v7215
    %7474 = vmatprep.subr.bf16.mxu0 0
    %7475 = vmatpush1.bf16.msra.mxu0 %v7216
    %7476 = vmatprep.subr.bf16.mxu0 0
    %7477 = vmatpush1.bf16.msra.mxu0 %v7217
    %7478 = vmatprep.subr.bf16.mxu0 0
    %7479 = vmatpush1.bf16.msra.mxu0 %v7218
    %7480 = vmatprep.subr.bf16.mxu0 0
    %7481 = vmatpush1.bf16.msra.mxu0 %v7219
    %7482 = vmatprep.subr.bf16.mxu0 0
    %7483 = vmatpush1.bf16.msra.mxu0 %v7220
    %7484 = vmatprep.subr.bf16.mxu0 0
    %7485 = vmatpush1.bf16.msra.mxu0 %v7221
    %7486 = vmatprep.subr.bf16.mxu0 0
    %7487 = vmatpush1.bf16.msra.mxu0 %v7222
    %7488 = vmatprep.subr.bf16.mxu0 0
    %7489 = vmatpush1.bf16.msra.mxu0 %v7223
    %7490 = vmatprep.subr.bf16.mxu0 0
    %7491 = vmatpush1.bf16.msra.mxu0 %v7224
    %7492 = vmatprep.subr.bf16.mxu0 0
    %7493 = vmatpush1.bf16.msra.mxu0 %v7225
    %7494 = vmatprep.subr.bf16.mxu0 0
    %7495 = vmatpush1.bf16.msra.mxu0 %v7226
    %7496 = vmatprep.subr.bf16.mxu0 0
    %7497 = vmatpush1.bf16.msra.mxu0 %v7227
    %7498 = vmatprep.subr.bf16.mxu0 0
    %7499 = vmatpush1.bf16.msra.mxu0 %v7228
    %7500 = vmatprep.subr.bf16.mxu0 0
    %7501 = vmatpush1.bf16.msra.mxu0 %v7229
    %7502 = vmatprep.mubr.bf16.mxu0 %v6679
    %7503 = vmatmul.mubr.bf16.gmra.mrb[0].mxu0 %v6678
    %v7504 = vpop.f32.mrb[0].mxu0
    %v7505 = vadd.f32 %v6700, %v7504
    %v7506 = vpop.f32.mrb[0].mxu0
    %v7507 = vpop.f32.mrb[0].mxu0
    %v7508 = vpop.f32.mrb[0].mxu0
    %7509 = vdwg.mxu0
    %7510 = vmatprep.subr.bf16.mxu0 0
    %7511 = vmatpush1.bf16.msra.mxu0 %v7230
    %7512 = vmatprep.subr.bf16.mxu0 0
    %7513 = vmatpush1.bf16.msra.mxu0 %v7231
    %7514 = vmatprep.subr.bf16.mxu0 0
    %7515 = vmatpush1.bf16.msra.mxu0 %v7232
    %7516 = vmatprep.subr.bf16.mxu0 0
    %7517 = vmatpush1.bf16.msra.mxu0 %v7233
    %7518 = vmatprep.subr.bf16.mxu0 0
    %7519 = vmatpush1.bf16.msra.mxu0 %v7234
    %7520 = vmatprep.subr.bf16.mxu0 0
    %7521 = vmatpush1.bf16.msra.mxu0 %v7235
    %7522 = vmatprep.subr.bf16.mxu0 0
    %7523 = vmatpush1.bf16.msra.mxu0 %v7236
    %7524 = vmatprep.subr.bf16.mxu0 0
    %7525 = vmatpush1.bf16.msra.mxu0 %v7237
    %7526 = vmatprep.subr.bf16.mxu0 0
    %7527 = vmatpush1.bf16.msra.mxu0 %v7238
    %7528 = vmatprep.subr.bf16.mxu0 0
    %7529 = vmatpush1.bf16.msra.mxu0 %v7239
    %7530 = vmatprep.subr.bf16.mxu0 0
    %7531 = vmatpush1.bf16.msra.mxu0 %v7240
    %7532 = vmatprep.subr.bf16.mxu0 0
    %7533 = vmatpush1.bf16.msra.mxu0 %v7241
    %7534 = vmatprep.subr.bf16.mxu0 0
    %7535 = vmatpush1.bf16.msra.mxu0 %v7242
    %7536 = vmatprep.subr.bf16.mxu0 0
    %7537 = vmatpush1.bf16.msra.mxu0 %v7243
    %7538 = vmatprep.subr.bf16.mxu0 0
    %7539 = vmatpush1.bf16.msra.mxu0 %v7244
    %7540 = vmatprep.subr.bf16.mxu0 0
    %7541 = vmatpush1.bf16.msra.mxu0 %v7245
    %7542 = vmatprep.mubr.bf16.mxu0 %v6681
    %7543 = vmatmul.mubr.bf16.gmra.mrb[0].mxu0 %v6680
    %v7544 = vpop.f32.mrb[0].mxu0
    %v7545 = vadd.f32 %v7505, %v7544
    %v7546 = vpop.f32.mrb[0].mxu0
    %v7547 = vpop.f32.mrb[0].mxu0
    %v7548 = vpop.f32.mrb[0].mxu0
    %7549 = vdwg.mxu0
    %7550 = vmatprep.subr.bf16.mxu0 0
    %7551 = vmatpush1.bf16.msra.mxu0 %v7246
    %7552 = vmatprep.subr.bf16.mxu0 0
    %7553 = vmatpush1.bf16.msra.mxu0 %v7247
    %7554 = vmatprep.subr.bf16.mxu0 0
    %7555 = vmatpush1.bf16.msra.mxu0 %v7248
    %7556 = vmatprep.subr.bf16.mxu0 0
    %7557 = vmatpush1.bf16.msra.mxu0 %v7249
    %7558 = vmatprep.subr.bf16.mxu0 0
    %7559 = vmatpush1.bf16.msra.mxu0 %v7250
    %7560 = vmatprep.subr.bf16.mxu0 0
    %7561 = vmatpush1.bf16.msra.mxu0 %v7251
    %7562 = vmatprep.subr.bf16.mxu0 0
    %7563 = vmatpush1.bf16.msra.mxu0 %v7252
    %7564 = vmatprep.subr.bf16.mxu0 0
    %7565 = vmatpush1.bf16.msra.mxu0 %v7253
    %7566 = vmatprep.subr.bf16.mxu0 0
    %7567 = vmatpush1.bf16.msra.mxu0 %v7254
    %7568 = vmatprep.subr.bf16.mxu0 0
    %7569 = vmatpush1.bf16.msra.mxu0 %v7255
    %7570 = vmatprep.subr.bf16.mxu0 0
    %7571 = vmatpush1.bf16.msra.mxu0 %v7256
    %7572 = vmatprep.subr.bf16.mxu0 0
    %7573 = vmatpush1.bf16.msra.mxu0 %v7257
    %7574 = vmatprep.subr.bf16.mxu0 0
    %7575 = vmatpush1.bf16.msra.mxu0 %v7258
    %7576 = vmatprep.subr.bf16.mxu0 0
    %7577 = vmatpush1.bf16.msra.mxu0 %v7259
    %7578 = vmatprep.subr.bf16.mxu0 0
    %7579 = vmatpush1.bf16.msra.mxu0 %v7260
    %7580 = vmatprep.subr.bf16.mxu0 0
    %7581 = vmatpush1.bf16.msra.mxu0 %v7261
    %7582 = vmatprep.mubr.bf16.mxu0 %v6683
    %7583 = vmatmul.mubr.bf16.gmra.mrb[0].mxu0 %v6682
    %v7584 = vpop.f32.mrb[0].mxu0
    %v7585 = vadd.f32 %v7545, %v7584
    %v7586 = vpop.f32.mrb[0].mxu0
    %v7587 = vpop.f32.mrb[0].mxu0
    %v7588 = vpop.f32.mrb[0].mxu0
    %7589 = vdwg.mxu0
    %7590 = vmatprep.subr.bf16.mxu0 0
    %7591 = vmatpush1.bf16.msra.mxu0 %v7262
    %7592 = vmatprep.subr.bf16.mxu0 0
    %7593 = vmatpush1.bf16.msra.mxu0 %v7263
    %7594 = vmatprep.subr.bf16.mxu0 0
    %7595 = vmatpush1.bf16.msra.mxu0 %v7264
    %7596 = vmatprep.subr.bf16.mxu0 0
    %7597 = vmatpush1.bf16.msra.mxu0 %v7265
    %7598 = vmatprep.subr.bf16.mxu0 0
    %7599 = vmatpush1.bf16.msra.mxu0 %v7266
    %7600 = vmatprep.subr.bf16.mxu0 0
    %7601 = vmatpush1.bf16.msra.mxu0 %v7267
    %7602 = vmatprep.subr.bf16.mxu0 0
    %7603 = vmatpush1.bf16.msra.mxu0 %v7268
    %7604 = vmatprep.subr.bf16.mxu0 0
    %7605 = vmatpush1.bf16.msra.mxu0 %v7269
    %7606 = vmatprep.subr.bf16.mxu0 0
    %7607 = vmatpush1.bf16.msra.mxu0 %v7270
    %7608 = vmatprep.subr.bf16.mxu0 0
    %7609 = vmatpush1.bf16.msra.mxu0 %v7271
    %7610 = vmatprep.subr.bf16.mxu0 0
    %7611 = vmatpush1.bf16.msra.mxu0 %v7272
    %7612 = vmatprep.subr.bf16.mxu0 0
    %7613 = vmatpush1.bf16.msra.mxu0 %v7273
    %7614 = vmatprep.subr.bf16.mxu0 0
    %7615 = vmatpush1.bf16.msra.mxu0 %v7274
    %7616 = vmatprep.subr.bf16.mxu0 0
    %7617 = vmatpush1.bf16.msra.mxu0 %v7275
    %7618 = vmatprep.subr.bf16.mxu0 0
    %7619 = vmatpush1.bf16.msra.mxu0 %v7276
    %7620 = vmatprep.subr.bf16.mxu0 0
    %7621 = vmatpush1.bf16.msra.mxu0 %v7277
    %7622 = vmatprep.mubr.bf16.mxu0 %v6685
    %7623 = vmatmul.mubr.bf16.gmra.mrb[0].mxu0 %v6684
    %v7624 = vpop.f32.mrb[0].mxu0
    %v7625 = vadd.f32 %v7585, %v7624
    %v7626 = vpop.f32.mrb[0].mxu0
    %v7627 = vpop.f32.mrb[0].mxu0
    %v7628 = vpop.f32.mrb[0].mxu0
    %7629 = vdwg.mxu0
    %7630 = vmatprep.subr.bf16.mxu0 0
    %7631 = vmatpush1.bf16.msra.mxu0 %v7278
    %7632 = vmatprep.subr.bf16.mxu0 0
    %7633 = vmatpush1.bf16.msra.mxu0 %v7279
    %7634 = vmatprep.subr.bf16.mxu0 0
    %7635 = vmatpush1.bf16.msra.mxu0 %v7280
    %7636 = vmatprep.subr.bf16.mxu0 0
    %7637 = vmatpush1.bf16.msra.mxu0 %v7281
    %7638 = vmatprep.subr.bf16.mxu0 0
    %7639 = vmatpush1.bf16.msra.mxu0 %v7282
    %7640 = vmatprep.subr.bf16.mxu0 0
    %7641 = vmatpush1.bf16.msra.mxu0 %v7283
    %7642 = vmatprep.subr.bf16.mxu0 0
    %7643 = vmatpush1.bf16.msra.mxu0 %v7284
    %7644 = vmatprep.subr.bf16.mxu0 0
    %7645 = vmatpush1.bf16.msra.mxu0 %v7285
    %7646 = vmatprep.subr.bf16.mxu0 0
    %7647 = vmatpush1.bf16.msra.mxu0 %v7286
    %7648 = vmatprep.subr.bf16.mxu0 0
    %7649 = vmatpush1.bf16.msra.mxu0 %v7287
    %7650 = vmatprep.subr.bf16.mxu0 0
    %7651 = vmatpush1.bf16.msra.mxu0 %v7288
    %7652 = vmatprep.subr.bf16.mxu0 0
    %7653 = vmatpush1.bf16.msra.mxu0 %v7289
    %7654 = vmatprep.subr.bf16.mxu0 0
    %7655 = vmatpush1.bf16.msra.mxu0 %v7290
    %7656 = vmatprep.subr.bf16.mxu0 0
    %7657 = vmatpush1.bf16.msra.mxu0 %v7291
    %7658 = vmatprep.subr.bf16.mxu0 0
    %7659 = vmatpush1.bf16.msra.mxu0 %v7292
    %7660 = vmatprep.subr.bf16.mxu0 0
    %7661 = vmatpush1.bf16.msra.mxu0 %v7293
    %7662 = vmatprep.mubr.bf16.mxu0 %v6687
    %7663 = vmatmul.mubr.bf16.gmra.mrb[0].mxu0 %v6686
    %v7664 = vpop.f32.mrb[0].mxu0
    %v7665 = vadd.f32 %v7625, %v7664
    %v7666 = vpop.f32.mrb[0].mxu0
    %v7667 = vpop.f32.mrb[0].mxu0
    %v7668 = vpop.f32.mrb[0].mxu0
    %7669 = vdwg.mxu0
    %7670 = vmatprep.subr.bf16.mxu0 0
    %7671 = vmatpush1.bf16.msra.mxu0 %v7294
    %7672 = vmatprep.subr.bf16.mxu0 0
    %7673 = vmatpush1.bf16.msra.mxu0 %v7295
    %7674 = vmatprep.subr.bf16.mxu0 0
    %7675 = vmatpush1.bf16.msra.mxu0 %v7296
    %7676 = vmatprep.subr.bf16.mxu0 0
    %7677 = vmatpush1.bf16.msra.mxu0 %v7297
    %7678 = vmatprep.subr.bf16.mxu0 0
    %7679 = vmatpush1.bf16.msra.mxu0 %v7298
    %7680 = vmatprep.subr.bf16.mxu0 0
    %7681 = vmatpush1.bf16.msra.mxu0 %v7299
    %7682 = vmatprep.subr.bf16.mxu0 0
    %7683 = vmatpush1.bf16.msra.mxu0 %v7300
    %7684 = vmatprep.subr.bf16.mxu0 0
    %7685 = vmatpush1.bf16.msra.mxu0 %v7301
    %7686 = vmatprep.subr.bf16.mxu0 0
    %7687 = vmatpush1.bf16.msra.mxu0 %v7302
    %7688 = vmatprep.subr.bf16.mxu0 0
    %7689 = vmatpush1.bf16.msra.mxu0 %v7303
    %7690 = vmatprep.subr.bf16.mxu0 0
    %7691 = vmatpush1.bf16.msra.mxu0 %v7304
    %7692 = vmatprep.subr.bf16.mxu0 0
    %7693 = vmatpush1.bf16.msra.mxu0 %v7305
    %7694 = vmatprep.subr.bf16.mxu0 0
    %7695 = vmatpush1.bf16.msra.mxu0 %v7306
    %7696 = vmatprep.subr.bf16.mxu0 0
    %7697 = vmatpush1.bf16.msra.mxu0 %v7307
    %7698 = vmatprep.subr.bf16.mxu0 0
    %7699 = vmatpush1.bf16.msra.mxu0 %v7308
    %7700 = vmatprep.subr.bf16.mxu0 0
    %7701 = vmatpush1.bf16.msra.mxu0 %v7309
    %7702 = vmatprep.mubr.bf16.mxu0 %v6689
    %7703 = vmatmul.mubr.bf16.gmra.mrb[0].mxu0 %v6688
    %v7704 = vpop.f32.mrb[0].mxu0
    %v7705 = vadd.f32 %v7665, %v7704
    %v7706 = vpop.f32.mrb[0].mxu0
    %v7707 = vpop.f32.mrb[0].mxu0
    %v7708 = vpop.f32.mrb[0].mxu0
    %7709 = vdwg.mxu0
    %7710 = vmatprep.subr.bf16.mxu0 0
    %7711 = vmatpush1.bf16.msra.mxu0 %v7310
    %7712 = vmatprep.subr.bf16.mxu0 0
    %7713 = vmatpush1.bf16.msra.mxu0 %v7311
    %7714 = vmatprep.subr.bf16.mxu0 0
    %7715 = vmatpush1.bf16.msra.mxu0 %v7312
    %7716 = vmatprep.subr.bf16.mxu0 0
    %7717 = vmatpush1.bf16.msra.mxu0 %v7313
    %7718 = vmatprep.subr.bf16.mxu0 0
    %7719 = vmatpush1.bf16.msra.mxu0 %v7314
    %7720 = vmatprep.subr.bf16.mxu0 0
    %7721 = vmatpush1.bf16.msra.mxu0 %v7315
    %7722 = vmatprep.subr.bf16.mxu0 0
    %7723 = vmatpush1.bf16.msra.mxu0 %v7316
    %7724 = vmatprep.subr.bf16.mxu0 0
    %7725 = vmatpush1.bf16.msra.mxu0 %v7317
    %7726 = vmatprep.subr.bf16.mxu0 0
    %7727 = vmatpush1.bf16.msra.mxu0 %v7318
    %7728 = vmatprep.subr.bf16.mxu0 0
    %7729 = vmatpush1.bf16.msra.mxu0 %v7319
    %7730 = vmatprep.subr.bf16.mxu0 0
    %7731 = vmatpush1.bf16.msra.mxu0 %v7320
    %7732 = vmatprep.subr.bf16.mxu0 0
    %7733 = vmatpush1.bf16.msra.mxu0 %v7321
    %7734 = vmatprep.subr.bf16.mxu0 0
    %7735 = vmatpush1.bf16.msra.mxu0 %v7322
    %7736 = vmatprep.subr.bf16.mxu0 0
    %7737 = vmatpush1.bf16.msra.mxu0 %v7323
    %7738 = vmatprep.subr.bf16.mxu0 0
    %7739 = vmatpush1.bf16.msra.mxu0 %v7324
    %7740 = vmatprep.subr.bf16.mxu0 0
    %7741 = vmatpush1.bf16.msra.mxu0 %v7325
    %7742 = vmatprep.mubr.bf16.mxu0 %v6691
    %7743 = vmatmul.mubr.bf16.gmra.mrb[0].mxu0 %v6690
    %v7744 = vpop.f32.mrb[0].mxu0
    %v7745 = vadd.f32 %v7705, %v7744
    %v7746 = vpop.f32.mrb[0].mxu0
    %v7747 = vpop.f32.mrb[0].mxu0
    %v7748 = vpop.f32.mrb[0].mxu0
    %7749 = vdwg.mxu0
    %7750 = vmatprep.subr.bf16.mxu0 0
    %7751 = vmatpush1.bf16.msra.mxu0 %v7326
    %7752 = vmatprep.subr.bf16.mxu0 0
    %7753 = vmatpush1.bf16.msra.mxu0 %v7327
    %7754 = vmatprep.subr.bf16.mxu0 0
    %7755 = vmatpush1.bf16.msra.mxu0 %v7328
    %7756 = vmatprep.subr.bf16.mxu0 0
    %7757 = vmatpush1.bf16.msra.mxu0 %v7329
    %7758 = vmatprep.subr.bf16.mxu0 0
    %7759 = vmatpush1.bf16.msra.mxu0 %v7330
    %7760 = vmatprep.subr.bf16.mxu0 0
    %7761 = vmatpush1.bf16.msra.mxu0 %v7331
    %7762 = vmatprep.subr.bf16.mxu0 0
    %7763 = vmatpush1.bf16.msra.mxu0 %v7332
    %7764 = vmatprep.subr.bf16.mxu0 0
    %7765 = vmatpush1.bf16.msra.mxu0 %v7333
    %7766 = vmatprep.subr.bf16.mxu0 0
    %7767 = vmatpush1.bf16.msra.mxu0 %v7334
    %7768 = vmatprep.subr.bf16.mxu0 0
    %7769 = vmatpush1.bf16.msra.mxu0 %v7335
    %7770 = vmatprep.subr.bf16.mxu0 0
    %7771 = vmatpush1.bf16.msra.mxu0 %v7336
    %7772 = vmatprep.subr.bf16.mxu0 0
    %7773 = vmatpush1.bf16.msra.mxu0 %v7337
    %7774 = vmatprep.subr.bf16.mxu0 0
    %7775 = vmatpush1.bf16.msra.mxu0 %v7338
    %7776 = vmatprep.subr.bf16.mxu0 0
    %7777 = vmatpush1.bf16.msra.mxu0 %v7339
    %7778 = vmatprep.subr.bf16.mxu0 0
    %7779 = vmatpush1.bf16.msra.mxu0 %v7340
    %7780 = vmatprep.subr.bf16.mxu0 0
    %7781 = vmatpush1.bf16.msra.mxu0 %v7341
    %7782 = vmatprep.mubr.bf16.mxu0 %v6693
    %7783 = vmatmul.mubr.bf16.gmra.mrb[0].mxu0 %v6692
    %v7784 = vpop.f32.mrb[0].mxu0
    %v7785 = vadd.f32 %v7745, %v7784
    %v7786 = vpop.f32.mrb[0].mxu0
    %v7787 = vpop.f32.mrb[0].mxu0
    %v7788 = vpop.f32.mrb[0].mxu0
    %7789 = vdwg.mxu0
    %v7790 = vadd.f32 %v5793, %v7785
    %s7791 = scalar_lea.vmem %s8, 53
    %v7792 = vld [vmem:[%s7791] ss:$8 sm:$0x3]
    %s7793 = scalar_lea.vmem %s8, 54
    %v7794 = vld [vmem:[%s7793] ss:$8 sm:$0x3]
    %v7795 = vsel %vm221, %v7790, 0.0
    %7796 = vadd.xlane.f32.xlu0 %v7795
    %v7797 = vpop.xlane.xlu0 %7796
    %v7798 = vmul.f32 %v7797, %v225
    %v7799 = vsub.f32 %v7790, %v7798
    %v7800 = vmul.f32 %v7799, %v7799
    %v7801 = vsel %vm221, %v7800, 0.0
    %7802 = vadd.xlane.f32.xlu0 %v7801
    %v7803 = vpop.xlane.xlu0 %7802
    %v7804 = vmul.f32 %v7803, %v225
    %v7805 = vadd.f32 %v7804, 1e-05
    %v7806 = vrsqrt.pop %v7805
    %v7807 = vmul.f32 %v7799, %v7806
    %v7809 = vlaneseq
    %v7810 = vshrl.u32 %v7809, 7
    %v7811 = vsub.s32 0, %v7810
    %v7812 = vrot.slane %v7792, %v7811
    %v7814 = vmul.f32 %v7807, %v7812
    %v7816 = vlaneseq
    %v7817 = vshrl.u32 %v7816, 7
    %v7818 = vsub.s32 0, %v7817
    %v7819 = vrot.slane %v7794, %v7818
    %v7821 = vadd.f32 %v7814, %v7819
    %v7822 = vld [vmem:[%s8 + $0x40] sm:$0xff]
    %v7823 = vld [vmem:[%s8 + $0x50] sm:$0xff]
    %v7824 = vld [vmem:[%s8 + $0x60] sm:$0xff]
    %v7825 = vld [vmem:[%s8 + $0x70] sm:$0xff]
    %v7826 = vpack.c.bf16 %v7823, %v7822
    %v7827 = vpack.c.bf16 %v7825, %v7824
    %v7828 = vpack.c.bf16 %v7821, %v7821
    %s7829 = scalar_lea.vmem %s8, 128
    %v7830 = vld [vmem:[%s7829] ss:$8 sm:$0x3]
    %v7832 = vlaneseq
    %v7833 = vshrl.u32 %v7832, 7
    %v7834 = vsub.s32 0, %v7833
    %v7835 = vrot.slane %v7830, %v7834
    %v7838 = vsel %vm88, %v7828, 0
    %7840 = vmatprep.subr.bf16.mxu0 0
    %7841 = vmatpush1.bf16.msra.mxu0 %v7826
    %7842 = vmatprep.subr.bf16.mxu0 0
    %7843 = vmatpush1.bf16.msra.mxu0 %v7827
    %7844 = vmatprep.subr.bf16.mxu0 0
    %7845 = vmatpush1.bf16.msra.mxu0 0
    %7846 = vmatprep.subr.bf16.mxu0 0
    %7847 = vmatpush1.bf16.msra.mxu0 0
    %7848 = vmatprep.subr.bf16.mxu0 0
    %7849 = vmatpush1.bf16.msra.mxu0 0
    %7850 = vmatprep.subr.bf16.mxu0 0
    %7851 = vmatpush1.bf16.msra.mxu0 0
    %7852 = vmatprep.subr.bf16.mxu0 0
    %7853 = vmatpush1.bf16.msra.mxu0 0
    %7854 = vmatprep.subr.bf16.mxu0 0
    %7855 = vmatpush1.bf16.msra.mxu0 0
    %7856 = vmatprep.subr.bf16.mxu0 0
    %7857 = vmatpush1.bf16.msra.mxu0 0
    %7858 = vmatprep.subr.bf16.mxu0 0
    %7859 = vmatpush1.bf16.msra.mxu0 0
    %7860 = vmatprep.subr.bf16.mxu0 0
    %7861 = vmatpush1.bf16.msra.mxu0 0
    %7862 = vmatprep.subr.bf16.mxu0 0
    %7863 = vmatpush1.bf16.msra.mxu0 0
    %7864 = vmatprep.subr.bf16.mxu0 0
    %7865 = vmatpush1.bf16.msra.mxu0 0
    %7866 = vmatprep.subr.bf16.mxu0 0
    %7867 = vmatpush1.bf16.msra.mxu0 0
    %7868 = vmatprep.subr.bf16.mxu0 0
    %7869 = vmatpush1.bf16.msra.mxu0 0
    %7870 = vmatprep.subr.bf16.mxu0 0
    %7871 = vmatpush1.bf16.msra.mxu0 0
    %7872 = vmatprep.mubr.bf16.mxu0 0
    %7873 = vmatmul.mubr.bf16.gmra.mrb[0].mxu0 %v7838
    %v7874 = vpop.f32.mrb[0].mxu0
    %v7875 = vadd.f32 %v7835, %v7874
    %v7876 = vpop.f32.mrb[0].mxu0
    %v7877 = vpop.f32.mrb[0].mxu0
    %v7878 = vpop.f32.mrb[0].mxu0
    %7879 = vdwg.mxu0
    %v7880 = vsel %vm88, %v7821, 0.0
    %v7883 = vcombine.low %v7875, %v7880
    %v7885 = vunpack.c.l.s4 1983009808
    %v7886 = vunpack.c.0.s8 %v7885
    %v7887 = vlaneseq
    %v7888 = vshrl.u32 %v7887, 7
    %v7889 = vsub.s32 %v7886, %v7888
    %v7890 = vrot.slane %v7883, %v7889
    %7892 = vst [vmem:[#allocation2] sm:$0xf] %v7890
    // Predicated region
    $region38: #{tpu_custom_call.1} parent=1 // pred_check
      _
    $region39: #{tpu_custom_call.1} parent=1 // pred_check_branch
      %7894 = sbr.rel (0) target = $region41
    $region40: #{tpu_custom_call.1} parent=1 // pred_region
      %s7896 = ssub.s32 64, 64
      %7897 = vsyncadd [#allocation3], %s7896
      %s7899 = sshll.u32 [#allocation2], 4
      %s7900 = int_to_ptr.vmem [resolvable:$true] %s7899
      %7902 = dma.vmem_to_hbm [thread:$0]  %s7900, 64, %s9, [#allocation3]
    $region41: #{tpu_custom_call.1} parent=1 // pred_fallthru
      _
    // Predicated region
    $region42: #{tpu_custom_call.1} parent=1 // pred_check
      _
    $region43: #{tpu_custom_call.1} parent=1 // pred_check_branch
      %7904 = sbr.rel (0) target = $region45
    $region44: #{tpu_custom_call.1} parent=1 // pred_region
      %7905 = dma.done [#allocation3], 64
    $region45: #{tpu_custom_call.1} parent=1 // pred_fallthru
      _
    %7906 = vsyncpa [#allocation3], 1

</llo_original>
